<compile_context>
chip_gen: v7x
topology: tpu7x:2x2x1
jax: 0.10.0
libtpu: 0.0.40
codegen_flags: <defaults>
</compile_context>

<pallas_src>
import functools
import math

import jax
import jax.numpy as jnp
from jax.experimental import pallas as pl
from jax.experimental.pallas import tpu as pltpu

LEAKY_SLOPE = 0.01          # nn.LeakyReLU default
BN_EPS = 1e-5               # nn.BatchNorm1d default

ACT_DTYPE = jnp.bfloat16    # inter-layer activation dtype
MAX_L_TILE = 1024           # conv output lanes per tile (multiple of 128)
MAX_L_TILE_BN = 2048        # lanes per tile in the streaming BN/LeakyReLU pass
MAX_SINGLE_CO = 512         # keep a single output-channel tile up to this size
HALO = 128                  # halo lanes fetched from the next tile (>= K-1)
MAX_CHUNK_ROWS = 256        # target MXU contraction rows per chunk
VMEM_LIMIT = 40 * 1024 * 1024   # safe on v5e/v6e (128 MiB) and v7x (64 MiB/TC)


def _round_up(x, m):
    return (x + m - 1) // m * m


# --------------------------------------------------------------------------
# Kernel 1: Conv1d (valid, stride 1) + bias [+ optional fused tanh]
#           with multi-group (fused channel-concat) inputs and in-kernel
#           BatchNorm partial statistics accumulated across the length axis.
# --------------------------------------------------------------------------
def _conv_kernel(*refs, G, K, C_ins, chunks, L_T, L_out, num_l,
                 want_stats, fuse_tanh):
    # refs layout:
    #   [xa_0 (1,C_0,L_T), hb_0 (1,C_0,HALO), ..., xa_{G-1}, hb_{G-1},
    #    w (CO_T, R_total) bf16, b (CO_T, 1) f32,
    #    o (1, CO_T, L_T) out-dtype, [stats (1, CO_T, 128) f32],
    #    [s_acc (CO_T,1) f32, ss_acc (CO_T,1) f32]]
    n_in = 2 * G + 2
    w_ref = refs[2 * G]
    b_ref = refs[2 * G + 1]
    o_ref = refs[n_in]
    if want_stats:
        st_ref = refs[n_in + 1]
        s_acc = refs[n_in + 2]
        ss_acc = refs[n_in + 3]

    l = pl.program_id(2)

    xas = [refs[2 * g][0] for g in range(G)]        # (C_g, L_T)   bf16
    hbs = [refs[2 * g + 1][0] for g in range(G)]    # (C_g, HALO)  bf16

    # Chunked im2col + MXU accumulate: each chunk is <= MAX_CHUNK_ROWS
    # contraction rows, built from lane-shifted tap slices and consumed
    # immediately -> the full (K*C_in, L_T) im2col never exists.
    acc = None
    col = 0
    for chunk in chunks:
        slices = []
        rows = 0
        for (g, k) in chunk:
            if k == 0:
                slices.append(xas[g])
            else:
                slices.append(jnp.concatenate(
                    [xas[g][:, k:], hbs[g][:, :k]], axis=1))
            rows += C_ins[g]
        mat = slices[0] if len(slices) == 1 else jnp.concatenate(slices, axis=0)
        part = jnp.dot(w_ref[:, col:col + rows], mat,
                       preferred_element_type=jnp.float32)
        acc = part if acc is None else acc + part
        col += rows

    acc = acc + b_ref[...]                           # (CO_T, L_T) f32

    if want_stats:
        CO_T = s_acc.shape[0]

        @pl.when(l == 0)
        def _():
            s_acc[...] = jnp.zeros_like(s_acc)
            ss_acc[...] = jnp.zeros_like(ss_acc)

        def _accum(vals):
            s_acc[...] += jnp.sum(vals, axis=1, keepdims=True)
            ss_acc[...] += jnp.sum(vals * vals, axis=1, keepdims=True)

        if L_out % L_T != 0:
            # Only the ragged final tile pays for the validity mask.
            @pl.when(l == num_l - 1)
            def _():
                lane = jax.lax.broadcasted_iota(jnp.int32, acc.shape, 1)
                _accum(jnp.where(l * L_T + lane < L_out, acc, 0.0))

            @pl.when(l < num_l - 1)
            def _():
                _accum(acc)
        else:
            _accum(acc)

        @pl.when(l == num_l - 1)
        def _():
            st_ref[0] = jnp.concatenate(
                [s_acc[...], ss_acc[...],
                 jnp.zeros((CO_T, 126), jnp.float32)], axis=1)

    if fuse_tanh:
        acc = jnp.tanh(acc)
    o_ref[0] = acc.astype(o_ref.dtype)


# --------------------------------------------------------------------------
# Kernel 2: per-channel affine (BatchNorm scale/shift) + LeakyReLU (bf16 I/O)
# --------------------------------------------------------------------------
def _bn_leaky_kernel(y_ref, sc_ref, sh_ref, o_ref):
    z = y_ref[0].astype(jnp.float32) * sc_ref[...] + sh_ref[...]
    o_ref[0] = jnp.where(z > 0, z, LEAKY_SLOPE * z).astype(o_ref.dtype)


# --------------------------------------------------------------------------
# Wrappers
# --------------------------------------------------------------------------
def _conv_pass(xs, ws, bias, *, padding, fuse_tanh, want_stats, out_dtype):
    """Multi-group Conv1d: sum_g conv(xs[g], ws[g]) + bias.

    All xs share batch/length; ws[g] has shape (C_out, C_in_g, K).  Passing
    the decoder skip + upsampled tensors as two groups fuses crop_and_concat.
    """
    B, _, L = xs[0].shape
    C_out, _, K = ws[0].shape
    G = len(xs)
    C_ins = tuple(int(w.shape[1]) for w in ws)
    assert K - 1 <= HALO

    if padding > 0:
        xs = [jnp.pad(x, ((0, 0), (0, 0), (padding, padding))) for x in xs]
    Lp = L + 2 * padding
    L_out = Lp - K + 1

    # Lane-dense output tiles.
    L_T = min(MAX_L_TILE, _round_up(L_out, 128))
    num_l = -(-L_out // L_T)
    L_out_pad = num_l * L_T

    if C_out <= MAX_SINGLE_CO:
        C_out_pad = _round_up(C_out, 16)
        CO_T = C_out_pad
    else:
        CO_T = 128
        C_out_pad = _round_up(C_out, CO_T)
    num_co = C_out_pad // CO_T

    # Pad the input length so both the main tile and the 128-lane halo block
    # are always in range; only L_T + HALO lanes are DMA'd per grid step.
    Lx_pad = (num_l + 1) * L_T
    xs_p = [jnp.pad(x, ((0, 0), (0, 0), (0, Lx_pad - Lp))).astype(jnp.bfloat16)
            for x in xs]

    # Per-group weight -> (C_out, K*C_g) with tap-major columns; groups are
    # concatenated along the column axis to match the kernel's chunk order.
    w_cols = [jnp.transpose(w, (0, 2, 1)).reshape(C_out, K * c)
              for w, c in zip(ws, C_ins)]
    w_full = w_cols[0] if G == 1 else jnp.concatenate(w_cols, axis=1)
    R_total = int(w_full.shape[1])
    w_p = jnp.pad(w_full, ((0, C_out_pad - C_out), (0, 0))).astype(jnp.bfloat16)
    b_p = jnp.pad(bias, (0, C_out_pad - C_out)).reshape(C_out_pad, 1)
    b_p = b_p.astype(jnp.float32)

    # Greedy contraction chunking (<= MAX_CHUNK_ROWS rows per MXU call; a
    # single wide-channel tap may exceed it and forms its own chunk).
    chunks, cur, cur_rows = [], [], 0
    for g in range(G):
        for k in range(K):
            rows = C_ins[g]
            if cur and cur_rows + rows > MAX_CHUNK_ROWS:
                chunks.append(tuple(cur))
                cur, cur_rows = [], 0
            cur.append((g, k))
            cur_rows += rows
    chunks.append(tuple(cur))
    chunks = tuple(chunks)

    kernel = functools.partial(
        _conv_kernel, G=G, K=K, C_ins=C_ins, chunks=chunks, L_T=L_T,
        L_out=L_out, num_l=num_l, want_stats=want_stats, fuse_tanh=fuse_tanh)

    halo_blocks = L_T // 128
    in_specs = []
    call_args = []
    for g in range(G):
        c = C_ins[g]
        in_specs.append(pl.BlockSpec((1, c, L_T), lambda b, co, l: (b, 0, l)))
        in_specs.append(pl.BlockSpec(
            (1, c, HALO),
            lambda b, co, l, hb=halo_blocks: (b, 0, (l + 1) * hb)))
        call_args += [xs_p[g], xs_p[g]]
    in_specs.append(pl.BlockSpec((CO_T, R_total), lambda b, co, l: (co, 0)))
    in_specs.append(pl.BlockSpec((CO_T, 1), lambda b, co, l: (co, 0)))
    call_args += [w_p, b_p]

    out_specs = [pl.BlockSpec((1, CO_T, L_T), lambda b, co, l: (b, co, l))]
    out_shape = [jax.ShapeDtypeStruct((B, C_out_pad, L_out_pad), out_dtype)]
    scratch_shapes = []
    if want_stats:
        # Stats block stays resident across the (arbitrary) l axis and is
        # written exactly once per (b, co) as a full 128-lane block.
        out_specs.append(
            pl.BlockSpec((1, CO_T, 128), lambda b, co, l: (b, co, 0)))
        out_shape.append(
            jax.ShapeDtypeStruct((B, C_out_pad, 128), jnp.float32))
        scratch_shapes = [pltpu.VMEM((CO_T, 1), jnp.float32),
                          pltpu.VMEM((CO_T, 1), jnp.float32)]

    in_bytes = B * num_co * num_l * sum(c * (L_T + HALO) for c in C_ins) * 2
    w_bytes = B * num_co * num_l * CO_T * R_total * 2
    out_bytes = B * C_out_pad * L_out_pad * jnp.dtype(out_dtype).itemsize
    st_bytes = B * C_out_pad * 128 * 4 if want_stats else 0
    flops = 2 * B * C_out_pad * R_total * L_out_pad

    # TODO(synk): for B == 1 deep configs the grid can degenerate to a single
    # unit on v7x (2 TCs); fold batch into the length axis there.
    outs = pl.pallas_call(
        kernel,
        grid=(B, num_co, num_l),
        in_specs=in_specs,
        out_specs=tuple(out_specs),
        out_shape=tuple(out_shape),
        scratch_shapes=scratch_shapes,
        compiler_params=pltpu.CompilerParams(
            dimension_semantics=("parallel", "parallel",
                                 "arbitrary" if want_stats else "parallel"),
            vmem_limit_bytes=VMEM_LIMIT),
        cost_estimate=pl.CostEstimate(
            flops=int(flops),
            transcendentals=int(B * C_out_pad * L_out_pad) if fuse_tanh else 0,
            bytes_accessed=int(in_bytes + w_bytes + out_bytes + st_bytes)),
    )(*call_args)

    if want_stats:
        y_pad, partials = outs
    else:
        (y_pad,) = outs
        partials = None

    dims = (B, C_out, L_out, C_out_pad, L_out_pad, CO_T, L_T)
    return y_pad, partials, dims


def _bn_leaky_pass(y_pad, scale_p, shift_p, *, CO_T, L_T):
    B, C_out_pad, L_out_pad = y_pad.shape
    num_co = C_out_pad // CO_T

    # Pure streaming pass: use the largest lane tile (a multiple of the conv
    # tile that divides the padded length) up to MAX_L_TILE_BN.
    nlc = L_out_pad // L_T
    d = 1
    for cand in range(nlc, 0, -1):
        if nlc % cand == 0 and cand * L_T <= MAX_L_TILE_BN:
            d = cand
            break
    L_T_bn = d * L_T
    num_l = L_out_pad // L_T_bn

    def y_map(b, co, l): return (b, co, l)
    def p_map(b, co, l): return (co, 0)

    itemsize = jnp.dtype(y_pad.dtype).itemsize
    return pl.pallas_call(
        _bn_leaky_kernel,
        grid=(B, num_co, num_l),
        in_specs=[
            pl.BlockSpec((1, CO_T, L_T_bn), y_map),
            pl.BlockSpec((CO_T, 1), p_map),
            pl.BlockSpec((CO_T, 1), p_map),
        ],
        out_specs=pl.BlockSpec((1, CO_T, L_T_bn), y_map),
        out_shape=jax.ShapeDtypeStruct((B, C_out_pad, L_out_pad), y_pad.dtype),
        compiler_params=pltpu.CompilerParams(
            dimension_semantics=("parallel", "parallel", "parallel"),
            vmem_limit_bytes=VMEM_LIMIT),
        cost_estimate=pl.CostEstimate(
            flops=int(3 * B * C_out_pad * L_out_pad),
            transcendentals=0,
            bytes_accessed=int(2 * B * C_out_pad * L_out_pad * itemsize)),
    )(y_pad, scale_p, shift_p)


def conv_block(xs, ws, bias, gamma=None, beta=None, *,
               padding, use_bn, act):
    """Conv1d (stride 1, dilation 1) over channel groups + optional
    BatchNorm1d (training batch statistics) + activation."""
    fuse_tanh = (not use_bn) and act == "tanh"
    out_dtype = jnp.float32 if fuse_tanh else ACT_DTYPE
    y_pad, partials, dims = _conv_pass(
        xs, ws, bias, padding=padding, fuse_tanh=fuse_tanh,
        want_stats=use_bn, out_dtype=out_dtype)
    B, C_out, L_out, C_out_pad, L_out_pad, CO_T, L_T = dims

    if not use_bn:
        return y_pad[:, :C_out, :L_out]

    # BatchNorm1d training mode: per-channel batch statistics over (B, L_out),
    # biased variance, exactly as a freshly constructed PyTorch module does.
    # (No running stats -> eval() mode of a trained module is not reproduced.)
    s = jnp.sum(partials[:, :C_out, 0], axis=0)
    ss = jnp.sum(partials[:, :C_out, 1], axis=0)
    n = float(B * L_out)
    mean = s / n
    var = jnp.maximum(ss / n - mean * mean, 0.0)   # guard f32 cancellation
    scale = gamma * jax.lax.rsqrt(var + BN_EPS)
    shift = beta - mean * scale
    scale_p = jnp.zeros((C_out_pad, 1), jnp.float32).at[:C_out, 0].set(scale)
    shift_p = jnp.zeros((C_out_pad, 1), jnp.float32).at[:C_out, 0].set(shift)

    y = _bn_leaky_pass(y_pad, scale_p, shift_p, CO_T=CO_T, L_T=L_T)
    return y[:, :C_out, :L_out]


# --------------------------------------------------------------------------
# JAX glue, matching torch.nn.functional semantics exactly.
# TODO(synk): fusing the /2 downsample (lane de-interleave) into the BN /
# LeakyReLU kernel output would remove one more HBM read per encoder level.
# --------------------------------------------------------------------------
def downsample_half(x):
    # F.interpolate(scale_factor=0.5, mode='linear'), align_corners=False:
    #   out[d] = 0.5 * (x[2d] + x[2d+1])
    L = x.shape[-1]
    L_out = L // 2
    return 0.5 * (x[..., 0:2 * L_out:2] + x[..., 1:2 * L_out:2])


def upsample_double(x):
    # F.interpolate(scale_factor=2, mode='linear'), align_corners=False:
    #   out[2k]   = 0.75*x[k] + 0.25*x[max(k-1, 0)]
    #   out[2k+1] = 0.75*x[k] + 0.25*x[min(k+1, L-1)]
    L = x.shape[-1]
    lo = jnp.maximum(jnp.arange(L) - 1, 0)
    hi = jnp.minimum(jnp.arange(L) + 1, L - 1)
    even = 0.75 * x + 0.25 * x[..., lo]
    odd = 0.75 * x + 0.25 * x[..., hi]
    out = jnp.stack([even, odd], axis=-1)
    return out.reshape(x.shape[:-1] + (2 * L,))


def center_crop(x2, target_len):
    diff = x2.shape[2] - target_len
    if diff > 0:
        lo = diff // 2
        x2 = x2[:, :, lo:x2.shape[2] - (diff - lo)]
    return x2


# --------------------------------------------------------------------------
# Parameters (deterministic init, PyTorch-default-like uniform bounds)
# --------------------------------------------------------------------------
def _conv_init(key, c_out, c_in, k):
    k1, k2 = jax.random.split(key)
    bound = 1.0 / math.sqrt(c_in * k)
    return {
        "w": jax.random.uniform(k1, (c_out, c_in, k), jnp.float32, -bound, bound),
        "b": jax.random.uniform(k2, (c_out,), jnp.float32, -bound, bound),
        "gamma": jnp.ones((c_out,), jnp.float32),
        "beta": jnp.zeros((c_out,), jnp.float32),
    }


def init_params(key, n_sources, n_blocks, n_filters, filter_size,
                merge_filter_size):
    channels = [1] + [(i + 1) * n_filters for i in range(n_blocks + 1)]
    keys = jax.random.split(key, 2 * n_blocks + 2)
    params = {"enc": [], "dec": []}
    for i in range(n_blocks):
        params["enc"].append(
            _conv_init(keys[i], channels[i + 1], channels[i], filter_size))
    params["bottleneck"] = _conv_init(keys[n_blocks], channels[-1],
                                      channels[-2], filter_size)
    rev = channels[::-1]
    for i in range(n_blocks):
        params["dec"].append(
            _conv_init(keys[n_blocks + 1 + i], rev[i + 1],
                       rev[i] + rev[i + 1], merge_filter_size))
    params["out"] = _conv_init(keys[-1], 1, n_filters + 1, 1)
    return params


# --------------------------------------------------------------------------
# WaveUNet forward
# --------------------------------------------------------------------------
def waveunet_forward(params, x, *, n_sources, n_blocks, filter_size,
                     merge_filter_size, context=True):
    enc_pad = 0 if context else filter_size // 2
    dec_pad = 0 if context else merge_filter_size // 2

    original_audio = x
    feats = []
    for i in range(n_blocks):
        p = params["enc"][i]
        x = conv_block([x], [p["w"]], p["b"], p["gamma"], p["beta"],
                       padding=enc_pad, use_bn=True, act="leaky")
        feats.append(x)                    # DownsampleBlock.features
        x = downsample_half(x)

    p = params["bottleneck"]
    x = conv_block([x], [p["w"]], p["b"], p["gamma"], p["beta"],
                   padding=enc_pad, use_bn=True, act="leaky")

    # TODO(synk): conditioning branch (nn.Linear scale) skipped — module
    # default conditioning=None never builds/uses it.

    for i in range(n_blocks):
        p = params["dec"][i]
        x1 = upsample_double(x)
        skip = center_crop(feats[-i - 1], x1.shape[2])
        c_skip = skip.shape[1]
        # crop_and_concat fused into the conv by splitting the weight over the
        # (skip, upsampled) channel groups — the concat never hits HBM.
        x = conv_block([skip, x1],
                       [p["w"][:, :c_skip], p["w"][:, c_skip:]],
                       p["b"], p["gamma"], p["beta"],
                       padding=dec_pad, use_bn=True, act="leaky")

    p = params["out"]
    orig = center_crop(original_audio, x.shape[2])
    c_orig = orig.shape[1]
    # Final crop_and_concat + 1x1 Conv + Tanh, again via weight splitting.
    y = conv_block([orig, x],
                   [p["w"][:, :c_orig], p["w"][:, c_orig:]],
                   p["b"], padding=0, use_bn=False, act="tanh")

    # self.output is a single shared module applied n_sources times -> all
    # outputs are identical; compute once and stack copies (same semantics).
    return jnp.stack([y] * n_sources, axis=1)   # (B, n_sources, 1, L_final)


# --------------------------------------------------------------------------
if __name__ == "__main__":
    # Small but structurally faithful config (context=True default).
    N_SOURCES = 2
    N_BLOCKS = 2
    N_FILTERS = 8
    FILTER_SIZE = 15
    MERGE_FILTER_SIZE = 5
    B, L = 2, 200

    key = jax.random.PRNGKey(0)
    pkey, xkey = jax.random.split(key)
    params = init_params(pkey, N_SOURCES, N_BLOCKS, N_FILTERS,
                         FILTER_SIZE, MERGE_FILTER_SIZE)
    x = jax.random.normal(xkey, (B, 1, L), jnp.float32)

    fwd = jax.jit(functools.partial(
        waveunet_forward,
        n_sources=N_SOURCES, n_blocks=N_BLOCKS,
        filter_size=FILTER_SIZE, merge_filter_size=MERGE_FILTER_SIZE,
        context=True))

    out = fwd(params, x)
    jax.block_until_ready(out)
    assert out.ndim == 4
    assert out.shape[0] == B and out.shape[1] == N_SOURCES and out.shape[2] == 1
    assert bool(jnp.all(jnp.isfinite(out)))
    print("KERNEL_OK")
</pallas_src>

<mosaic_0001>
module attributes {stable_mosaic.version = 11 : i64} {
  func.func @_conv_kernel(%arg0: i32, %arg1: i32, %arg2: i32, %arg3: memref<1x1x256xbf16, #tpu.memory_space<vmem>>, %arg4: memref<1x1x128xbf16, #tpu.memory_space<vmem>>, %arg5: memref<16x15xbf16, #tpu.memory_space<vmem>>, %arg6: memref<16x1xf32, #tpu.memory_space<vmem>>, %arg7: memref<1x16x256xbf16, #tpu.memory_space<vmem>>, %arg8: memref<1x16x128xf32, #tpu.memory_space<vmem>>, %arg9: memref<16x1xf32, #tpu.memory_space<vmem>>, %arg10: memref<16x1xf32, #tpu.memory_space<vmem>>) attributes {dimension_semantics = [#tpu.dimension_semantics<parallel>, #tpu.dimension_semantics<parallel>, #tpu.dimension_semantics<arbitrary>], iteration_bounds = array<i64: 2, 1, 1>, scalar_prefetch = 0 : i64, scratch_operands = 2 : i64, tpu.core_type = #tpu.core_type<tc>, window_params = [{transform_indices = @transform_0, window_bounds = array<i64: 1, 1, 256>}, {transform_indices = @transform_1, window_bounds = array<i64: 1, 1, 128>}, {transform_indices = @transform_2, window_bounds = array<i64: 16, 15>}, {transform_indices = @transform_3, window_bounds = array<i64: 16, 1>}, {transform_indices = @transform_4, window_bounds = array<i64: 1, 16, 256>}, {transform_indices = @transform_5, window_bounds = array<i64: 1, 16, 128>}]} {
    %c0 = arith.constant 0 : index
    %c0_0 = arith.constant 0 : index
    %c0_1 = arith.constant 0 : index
    %0 = vector.load %arg3[%c0, %c0_0, %c0_1] : memref<1x1x256xbf16, #tpu.memory_space<vmem>>, vector<1x1x256xbf16>
    %1 = vector.shape_cast %0 : vector<1x1x256xbf16> to vector<1x256xbf16>
    %c0_2 = arith.constant 0 : index
    %c0_3 = arith.constant 0 : index
    %c0_4 = arith.constant 0 : index
    %2 = vector.load %arg4[%c0_2, %c0_3, %c0_4] : memref<1x1x128xbf16, #tpu.memory_space<vmem>>, vector<1x1x128xbf16>
    %3 = vector.shape_cast %2 : vector<1x1x128xbf16> to vector<1x128xbf16>
    %4 = vector.extract_strided_slice %1 {offsets = [0, 1], sizes = [1, 255], strides = [1, 1]} : vector<1x256xbf16> to vector<1x255xbf16>
    %5 = vector.extract_strided_slice %3 {offsets = [0, 0], sizes = [1, 1], strides = [1, 1]} : vector<1x128xbf16> to vector<1x1xbf16>
    %6 = tpu.concatenate %4, %5 in 1 : vector<1x255xbf16>, vector<1x1xbf16> -> vector<1x256xbf16>
    %7 = vector.extract_strided_slice %1 {offsets = [0, 2], sizes = [1, 254], strides = [1, 1]} : vector<1x256xbf16> to vector<1x254xbf16>
    %8 = vector.extract_strided_slice %3 {offsets = [0, 0], sizes = [1, 2], strides = [1, 1]} : vector<1x128xbf16> to vector<1x2xbf16>
    %9 = tpu.concatenate %7, %8 in 1 : vector<1x254xbf16>, vector<1x2xbf16> -> vector<1x256xbf16>
    %10 = vector.extract_strided_slice %1 {offsets = [0, 3], sizes = [1, 253], strides = [1, 1]} : vector<1x256xbf16> to vector<1x253xbf16>
    %11 = vector.extract_strided_slice %3 {offsets = [0, 0], sizes = [1, 3], strides = [1, 1]} : vector<1x128xbf16> to vector<1x3xbf16>
    %12 = tpu.concatenate %10, %11 in 1 : vector<1x253xbf16>, vector<1x3xbf16> -> vector<1x256xbf16>
    %13 = vector.extract_strided_slice %1 {offsets = [0, 4], sizes = [1, 252], strides = [1, 1]} : vector<1x256xbf16> to vector<1x252xbf16>
    %14 = vector.extract_strided_slice %3 {offsets = [0, 0], sizes = [1, 4], strides = [1, 1]} : vector<1x128xbf16> to vector<1x4xbf16>
    %15 = tpu.concatenate %13, %14 in 1 : vector<1x252xbf16>, vector<1x4xbf16> -> vector<1x256xbf16>
    %16 = vector.extract_strided_slice %1 {offsets = [0, 5], sizes = [1, 251], strides = [1, 1]} : vector<1x256xbf16> to vector<1x251xbf16>
    %17 = vector.extract_strided_slice %3 {offsets = [0, 0], sizes = [1, 5], strides = [1, 1]} : vector<1x128xbf16> to vector<1x5xbf16>
    %18 = tpu.concatenate %16, %17 in 1 : vector<1x251xbf16>, vector<1x5xbf16> -> vector<1x256xbf16>
    %19 = vector.extract_strided_slice %1 {offsets = [0, 6], sizes = [1, 250], strides = [1, 1]} : vector<1x256xbf16> to vector<1x250xbf16>
    %20 = vector.extract_strided_slice %3 {offsets = [0, 0], sizes = [1, 6], strides = [1, 1]} : vector<1x128xbf16> to vector<1x6xbf16>
    %21 = tpu.concatenate %19, %20 in 1 : vector<1x250xbf16>, vector<1x6xbf16> -> vector<1x256xbf16>
    %22 = vector.extract_strided_slice %1 {offsets = [0, 7], sizes = [1, 249], strides = [1, 1]} : vector<1x256xbf16> to vector<1x249xbf16>
    %23 = vector.extract_strided_slice %3 {offsets = [0, 0], sizes = [1, 7], strides = [1, 1]} : vector<1x128xbf16> to vector<1x7xbf16>
    %24 = tpu.concatenate %22, %23 in 1 : vector<1x249xbf16>, vector<1x7xbf16> -> vector<1x256xbf16>
    %25 = vector.extract_strided_slice %1 {offsets = [0, 8], sizes = [1, 248], strides = [1, 1]} : vector<1x256xbf16> to vector<1x248xbf16>
    %26 = vector.extract_strided_slice %3 {offsets = [0, 0], sizes = [1, 8], strides = [1, 1]} : vector<1x128xbf16> to vector<1x8xbf16>
    %27 = tpu.concatenate %25, %26 in 1 : vector<1x248xbf16>, vector<1x8xbf16> -> vector<1x256xbf16>
    %28 = vector.extract_strided_slice %1 {offsets = [0, 9], sizes = [1, 247], strides = [1, 1]} : vector<1x256xbf16> to vector<1x247xbf16>
    %29 = vector.extract_strided_slice %3 {offsets = [0, 0], sizes = [1, 9], strides = [1, 1]} : vector<1x128xbf16> to vector<1x9xbf16>
    %30 = tpu.concatenate %28, %29 in 1 : vector<1x247xbf16>, vector<1x9xbf16> -> vector<1x256xbf16>
    %31 = vector.extract_strided_slice %1 {offsets = [0, 10], sizes = [1, 246], strides = [1, 1]} : vector<1x256xbf16> to vector<1x246xbf16>
    %32 = vector.extract_strided_slice %3 {offsets = [0, 0], sizes = [1, 10], strides = [1, 1]} : vector<1x128xbf16> to vector<1x10xbf16>
    %33 = tpu.concatenate %31, %32 in 1 : vector<1x246xbf16>, vector<1x10xbf16> -> vector<1x256xbf16>
    %34 = vector.extract_strided_slice %1 {offsets = [0, 11], sizes = [1, 245], strides = [1, 1]} : vector<1x256xbf16> to vector<1x245xbf16>
    %35 = vector.extract_strided_slice %3 {offsets = [0, 0], sizes = [1, 11], strides = [1, 1]} : vector<1x128xbf16> to vector<1x11xbf16>
    %36 = tpu.concatenate %34, %35 in 1 : vector<1x245xbf16>, vector<1x11xbf16> -> vector<1x256xbf16>
    %37 = vector.extract_strided_slice %1 {offsets = [0, 12], sizes = [1, 244], strides = [1, 1]} : vector<1x256xbf16> to vector<1x244xbf16>
    %38 = vector.extract_strided_slice %3 {offsets = [0, 0], sizes = [1, 12], strides = [1, 1]} : vector<1x128xbf16> to vector<1x12xbf16>
    %39 = tpu.concatenate %37, %38 in 1 : vector<1x244xbf16>, vector<1x12xbf16> -> vector<1x256xbf16>
    %40 = vector.extract_strided_slice %1 {offsets = [0, 13], sizes = [1, 243], strides = [1, 1]} : vector<1x256xbf16> to vector<1x243xbf16>
    %41 = vector.extract_strided_slice %3 {offsets = [0, 0], sizes = [1, 13], strides = [1, 1]} : vector<1x128xbf16> to vector<1x13xbf16>
    %42 = tpu.concatenate %40, %41 in 1 : vector<1x243xbf16>, vector<1x13xbf16> -> vector<1x256xbf16>
    %43 = vector.extract_strided_slice %1 {offsets = [0, 14], sizes = [1, 242], strides = [1, 1]} : vector<1x256xbf16> to vector<1x242xbf16>
    %44 = vector.extract_strided_slice %3 {offsets = [0, 0], sizes = [1, 14], strides = [1, 1]} : vector<1x128xbf16> to vector<1x14xbf16>
    %45 = tpu.concatenate %43, %44 in 1 : vector<1x242xbf16>, vector<1x14xbf16> -> vector<1x256xbf16>
    %46 = tpu.concatenate %1, %6, %9, %12, %15, %18, %21, %24, %27, %30, %33, %36, %39, %42, %45 in 0 : vector<1x256xbf16>, vector<1x256xbf16>, vector<1x256xbf16>, vector<1x256xbf16>, vector<1x256xbf16>, vector<1x256xbf16>, vector<1x256xbf16>, vector<1x256xbf16>, vector<1x256xbf16>, vector<1x256xbf16>, vector<1x256xbf16>, vector<1x256xbf16>, vector<1x256xbf16>, vector<1x256xbf16>, vector<1x256xbf16> -> vector<15x256xbf16>
    %c0_5 = arith.constant 0 : index
    %c0_6 = arith.constant 0 : index
    %47 = vector.load %arg5[%c0_5, %c0_6] : memref<16x15xbf16, #tpu.memory_space<vmem>>, vector<16x15xbf16>
    %cst = arith.constant dense<0.000000e+00> : vector<16x256xf32>
    %48 = tpu.matmul %47, %46, %cst {dimension_numbers = #tpu.dot_dimension_numbers<[1], [0], [0], [1], [0, 0, 1, 1], [], []>} : vector<16x15xbf16>, vector<15x256xbf16>, vector<16x256xf32> -> vector<16x256xf32>
    %c0_7 = arith.constant 0 : index
    %c0_8 = arith.constant 0 : index
    %49 = vector.load %arg6[%c0_7, %c0_8] : memref<16x1xf32, #tpu.memory_space<vmem>>, vector<16x1xf32>
    %50 = vector.broadcast %49 : vector<16x1xf32> to vector<16x256xf32>
    %51 = arith.addf %48, %50 : vector<16x256xf32>
    %c0_i32 = arith.constant 0 : i32
    %52 = arith.cmpi eq, %arg2, %c0_i32 : i32
    %53 = arith.extui %52 : i1 to i32
    %c0_i32_9 = arith.constant 0 : i32
    %54 = arith.cmpi ne, %53, %c0_i32_9 : i32
    scf.if %54 {
      %cst_19 = arith.constant 0.000000e+00 : f32
      %68 = vector.broadcast %cst_19 : f32 to vector<16x1xf32>
      %c0_20 = arith.constant 0 : index
      %c0_21 = arith.constant 0 : index
      %69 = vector.load %arg9[%c0_20, %c0_21] : memref<16x1xf32, #tpu.memory_space<vmem>>, vector<16x1xf32>
      tpu.vector_store %arg9[%c0_20, %c0_21], %68 {strides = array<i32>} : memref<16x1xf32, #tpu.memory_space<vmem>>, vector<16x1xf32>,
      %cst_22 = arith.constant 0.000000e+00 : f32
      %70 = vector.broadcast %cst_22 : f32 to vector<16x1xf32>
      %c0_23 = arith.constant 0 : index
      %c0_24 = arith.constant 0 : index
      %71 = vector.load %arg10[%c0_23, %c0_24] : memref<16x1xf32, #tpu.memory_space<vmem>>, vector<16x1xf32>
      tpu.vector_store %arg10[%c0_23, %c0_24], %70 {strides = array<i32>} : memref<16x1xf32, #tpu.memory_space<vmem>>, vector<16x1xf32>,
    } else {
    }
    %c0_i32_10 = arith.constant 0 : i32
    %55 = arith.cmpi eq, %arg2, %c0_i32_10 : i32
    %56 = arith.extui %55 : i1 to i32
    %c0_i32_11 = arith.constant 0 : i32
    %57 = arith.cmpi ne, %56, %c0_i32_11 : i32
    scf.if %57 {
      %68 = tpu.iota {dimensions = array<i32: 1>} : vector<16x256xi32>
      %c256_i32 = arith.constant 256 : i32
      %69 = arith.muli %arg2, %c256_i32 : i32
      %70 = vector.broadcast %69 : i32 to vector<16x256xi32>
      %71 = arith.addi %70, %68 : vector<16x256xi32>
      %c186_i32 = arith.constant 186 : i32
      %72 = vector.broadcast %c186_i32 : i32 to vector<16x256xi32>
      %73 = arith.cmpi slt, %71, %72 : vector<16x256xi32>
      %cst_19 = arith.constant 0.000000e+00 : f32
      %74 = vector.broadcast %cst_19 : f32 to vector<16x256xf32>
      %75 = arith.select %73, %51, %74 : vector<16x256xi1>, vector<16x256xf32>
      %c0_20 = arith.constant 0 : index
      %c0_21 = arith.constant 0 : index
      %76 = vector.load %arg9[%c0_20, %c0_21] : memref<16x1xf32, #tpu.memory_space<vmem>>, vector<16x1xf32>
      %cst_22 = arith.constant dense<0.000000e+00> : vector<16xf32>
      %77 = vector.multi_reduction <add>, %75, %cst_22 [1] : vector<16x256xf32> to vector<16xf32>
      %78 = vector.shape_cast %77 : vector<16xf32> to vector<16x1xf32>
      %79 = arith.addf %76, %78 : vector<16x1xf32>
      %c0_23 = arith.constant 0 : index
      %c0_24 = arith.constant 0 : index
      %80 = vector.load %arg9[%c0_23, %c0_24] : memref<16x1xf32, #tpu.memory_space<vmem>>, vector<16x1xf32>
      tpu.vector_store %arg9[%c0_23, %c0_24], %79 {strides = array<i32>} : memref<16x1xf32, #tpu.memory_space<vmem>>, vector<16x1xf32>,
      %c0_25 = arith.constant 0 : index
      %c0_26 = arith.constant 0 : index
      %81 = vector.load %arg10[%c0_25, %c0_26] : memref<16x1xf32, #tpu.memory_space<vmem>>, vector<16x1xf32>
      %82 = arith.mulf %75, %75 : vector<16x256xf32>
      %cst_27 = arith.constant dense<0.000000e+00> : vector<16xf32>
      %83 = vector.multi_reduction <add>, %82, %cst_27 [1] : vector<16x256xf32> to vector<16xf32>
      %84 = vector.shape_cast %83 : vector<16xf32> to vector<16x1xf32>
      %85 = arith.addf %81, %84 : vector<16x1xf32>
      %c0_28 = arith.constant 0 : index
      %c0_29 = arith.constant 0 : index
      %86 = vector.load %arg10[%c0_28, %c0_29] : memref<16x1xf32, #tpu.memory_space<vmem>>, vector<16x1xf32>
      tpu.vector_store %arg10[%c0_28, %c0_29], %85 {strides = array<i32>} : memref<16x1xf32, #tpu.memory_space<vmem>>, vector<16x1xf32>,
    } else {
    }
    %c0_i32_12 = arith.constant 0 : i32
    %58 = arith.cmpi slt, %arg2, %c0_i32_12 : i32
    %59 = arith.extui %58 : i1 to i32
    %c0_i32_13 = arith.constant 0 : i32
    %60 = arith.cmpi ne, %59, %c0_i32_13 : i32
    scf.if %60 {
      %c0_19 = arith.constant 0 : index
      %c0_20 = arith.constant 0 : index
      %68 = vector.load %arg9[%c0_19, %c0_20] : memref<16x1xf32, #tpu.memory_space<vmem>>, vector<16x1xf32>
      %cst_21 = arith.constant dense<0.000000e+00> : vector<16xf32>
      %69 = vector.multi_reduction <add>, %51, %cst_21 [1] : vector<16x256xf32> to vector<16xf32>
      %70 = vector.shape_cast %69 : vector<16xf32> to vector<16x1xf32>
      %71 = arith.addf %68, %70 : vector<16x1xf32>
      %c0_22 = arith.constant 0 : index
      %c0_23 = arith.constant 0 : index
      %72 = vector.load %arg9[%c0_22, %c0_23] : memref<16x1xf32, #tpu.memory_space<vmem>>, vector<16x1xf32>
      tpu.vector_store %arg9[%c0_22, %c0_23], %71 {strides = array<i32>} : memref<16x1xf32, #tpu.memory_space<vmem>>, vector<16x1xf32>,
      %c0_24 = arith.constant 0 : index
      %c0_25 = arith.constant 0 : index
      %73 = vector.load %arg10[%c0_24, %c0_25] : memref<16x1xf32, #tpu.memory_space<vmem>>, vector<16x1xf32>
      %74 = arith.mulf %51, %51 : vector<16x256xf32>
      %cst_26 = arith.constant dense<0.000000e+00> : vector<16xf32>
      %75 = vector.multi_reduction <add>, %74, %cst_26 [1] : vector<16x256xf32> to vector<16xf32>
      %76 = vector.shape_cast %75 : vector<16xf32> to vector<16x1xf32>
      %77 = arith.addf %73, %76 : vector<16x1xf32>
      %c0_27 = arith.constant 0 : index
      %c0_28 = arith.constant 0 : index
      %78 = vector.load %arg10[%c0_27, %c0_28] : memref<16x1xf32, #tpu.memory_space<vmem>>, vector<16x1xf32>
      tpu.vector_store %arg10[%c0_27, %c0_28], %77 {strides = array<i32>} : memref<16x1xf32, #tpu.memory_space<vmem>>, vector<16x1xf32>,
    } else {
    }
    %c0_i32_14 = arith.constant 0 : i32
    %61 = arith.cmpi eq, %arg2, %c0_i32_14 : i32
    %62 = arith.extui %61 : i1 to i32
    %c0_i32_15 = arith.constant 0 : i32
    %63 = arith.cmpi ne, %62, %c0_i32_15 : i32
    scf.if %63 {
      %c0_19 = arith.constant 0 : index
      %c0_20 = arith.constant 0 : index
      %68 = vector.load %arg9[%c0_19, %c0_20] : memref<16x1xf32, #tpu.memory_space<vmem>>, vector<16x1xf32>
      %c0_21 = arith.constant 0 : index
      %c0_22 = arith.constant 0 : index
      %69 = vector.load %arg10[%c0_21, %c0_22] : memref<16x1xf32, #tpu.memory_space<vmem>>, vector<16x1xf32>
      %cst_23 = arith.constant 0.000000e+00 : f32
      %70 = vector.broadcast %cst_23 : f32 to vector<16x126xf32>
      %71 = tpu.concatenate %68, %69, %70 in 1 : vector<16x1xf32>, vector<16x1xf32>, vector<16x126xf32> -> vector<16x128xf32>
      %c0_24 = arith.constant 0 : index
      %c0_25 = arith.constant 0 : index
      %c0_26 = arith.constant 0 : index
      %72 = vector.load %arg8[%c0_24, %c0_25, %c0_26] : memref<1x16x128xf32, #tpu.memory_space<vmem>>, vector<1x16x128xf32>
      %73 = vector.shape_cast %72 : vector<1x16x128xf32> to vector<16x128xf32>
      %74 = vector.shape_cast %71 : vector<16x128xf32> to vector<1x16x128xf32>
      tpu.vector_store %arg8[%c0_24, %c0_25, %c0_26], %74 {strides = array<i32>} : memref<1x16x128xf32, #tpu.memory_space<vmem>>, vector<1x16x128xf32>,
    } else {
    }
    %64 = arith.truncf %51 : vector<16x256xf32> to vector<16x256xbf16>
    %c0_16 = arith.constant 0 : index
    %c0_17 = arith.constant 0 : index
    %c0_18 = arith.constant 0 : index
    %65 = vector.load %arg7[%c0_16, %c0_17, %c0_18] : memref<1x16x256xbf16, #tpu.memory_space<vmem>>, vector<1x16x256xbf16>
    %66 = vector.shape_cast %65 : vector<1x16x256xbf16> to vector<16x256xbf16>
    %67 = vector.shape_cast %64 : vector<16x256xbf16> to vector<1x16x256xbf16>
    tpu.vector_store %arg7[%c0_16, %c0_17, %c0_18], %67 {strides = array<i32>} : memref<1x16x256xbf16, #tpu.memory_space<vmem>>, vector<1x16x256xbf16>,
    return
  }
  func.func @transform_0(%arg0: i32, %arg1: i32, %arg2: i32) -> (i32, i32, i32) {
    %c0_i32 = arith.constant 0 : i32
    %c0_i32_0 = arith.constant 0 : i32
    return %arg0, %c0_i32, %arg2 : i32, i32, i32
  }
  func.func @transform_1(%arg0: i32, %arg1: i32, %arg2: i32) -> (i32, i32, i32) {
    %c1_i32 = arith.constant 1 : i32
    %0 = arith.addi %arg2, %c1_i32 : i32
    %c2_i32 = arith.constant 2 : i32
    %1 = arith.muli %0, %c2_i32 : i32
    %c0_i32 = arith.constant 0 : i32
    %c0_i32_0 = arith.constant 0 : i32
    return %arg0, %c0_i32, %1 : i32, i32, i32
  }
  func.func @transform_2(%arg0: i32, %arg1: i32, %arg2: i32) -> (i32, i32) {
    %c0_i32 = arith.constant 0 : i32
    %c0_i32_0 = arith.constant 0 : i32
    return %arg1, %c0_i32 : i32, i32
  }
  func.func @transform_3(%arg0: i32, %arg1: i32, %arg2: i32) -> (i32, i32) {
    %c0_i32 = arith.constant 0 : i32
    %c0_i32_0 = arith.constant 0 : i32
    return %arg1, %c0_i32 : i32, i32
  }
  func.func @transform_4(%arg0: i32, %arg1: i32, %arg2: i32) -> (i32, i32, i32) {
    %c0_i32 = arith.constant 0 : i32
    return %arg0, %arg1, %arg2 : i32, i32, i32
  }
  func.func @transform_5(%arg0: i32, %arg1: i32, %arg2: i32) -> (i32, i32, i32) {
    %c0_i32 = arith.constant 0 : i32
    %c0_i32_0 = arith.constant 0 : i32
    return %arg0, %arg1, %c0_i32 : i32, i32, i32
  }
}

module attributes {stable_mosaic.version = 11 : i64} {
  func.func @_bn_leaky_kernel(%arg0: i32, %arg1: i32, %arg2: i32, %arg3: memref<1x16x256xbf16, #tpu.memory_space<vmem>>, %arg4: memref<16x1xf32, #tpu.memory_space<vmem>>, %arg5: memref<16x1xf32, #tpu.memory_space<vmem>>, %arg6: memref<1x16x256xbf16, #tpu.memory_space<vmem>>) attributes {dimension_semantics = [#tpu.dimension_semantics<parallel>, #tpu.dimension_semantics<parallel>, #tpu.dimension_semantics<parallel>], iteration_bounds = array<i64: 2, 1, 1>, scalar_prefetch = 0 : i64, scratch_operands = 0 : i64, tpu.core_type = #tpu.core_type<tc>, window_params = [{transform_indices = @transform_0, window_bounds = array<i64: 1, 16, 256>}, {transform_indices = @transform_1, window_bounds = array<i64: 16, 1>}, {transform_indices = @transform_2, window_bounds = array<i64: 16, 1>}, {transform_indices = @transform_3, window_bounds = array<i64: 1, 16, 256>}]} {
    %c0 = arith.constant 0 : index
    %c0_0 = arith.constant 0 : index
    %c0_1 = arith.constant 0 : index
    %0 = vector.load %arg3[%c0, %c0_0, %c0_1] : memref<1x16x256xbf16, #tpu.memory_space<vmem>>, vector<1x16x256xbf16>
    %1 = vector.shape_cast %0 : vector<1x16x256xbf16> to vector<16x256xbf16>
    %2 = arith.extf %1 : vector<16x256xbf16> to vector<16x256xf32>
    %c0_2 = arith.constant 0 : index
    %c0_3 = arith.constant 0 : index
    %3 = vector.load %arg4[%c0_2, %c0_3] : memref<16x1xf32, #tpu.memory_space<vmem>>, vector<16x1xf32>
    %4 = vector.broadcast %3 : vector<16x1xf32> to vector<16x256xf32>
    %5 = arith.mulf %2, %4 : vector<16x256xf32>
    %c0_4 = arith.constant 0 : index
    %c0_5 = arith.constant 0 : index
    %6 = vector.load %arg5[%c0_4, %c0_5] : memref<16x1xf32, #tpu.memory_space<vmem>>, vector<16x1xf32>
    %7 = vector.broadcast %6 : vector<16x1xf32> to vector<16x256xf32>
    %8 = arith.addf %5, %7 : vector<16x256xf32>
    %cst = arith.constant 0.000000e+00 : f32
    %9 = vector.broadcast %cst : f32 to vector<16x256xf32>
    %10 = arith.cmpf ogt, %8, %9 : vector<16x256xf32>
    %cst_6 = arith.constant 0.00999999977 : f32
    %11 = vector.broadcast %cst_6 : f32 to vector<16x256xf32>
    %12 = arith.mulf %11, %8 : vector<16x256xf32>
    %13 = arith.select %10, %8, %12 : vector<16x256xi1>, vector<16x256xf32>
    %14 = arith.truncf %13 : vector<16x256xf32> to vector<16x256xbf16>
    %c0_7 = arith.constant 0 : index
    %c0_8 = arith.constant 0 : index
    %c0_9 = arith.constant 0 : index
    %15 = vector.load %arg6[%c0_7, %c0_8, %c0_9] : memref<1x16x256xbf16, #tpu.memory_space<vmem>>, vector<1x16x256xbf16>
    %16 = vector.shape_cast %15 : vector<1x16x256xbf16> to vector<16x256xbf16>
    %17 = vector.shape_cast %14 : vector<16x256xbf16> to vector<1x16x256xbf16>
    tpu.vector_store %arg6[%c0_7, %c0_8, %c0_9], %17 {strides = array<i32>} : memref<1x16x256xbf16, #tpu.memory_space<vmem>>, vector<1x16x256xbf16>,
    return
  }
  func.func @transform_0(%arg0: i32, %arg1: i32, %arg2: i32) -> (i32, i32, i32) {
    %c0_i32 = arith.constant 0 : i32
    return %arg0, %arg1, %arg2 : i32, i32, i32
  }
  func.func @transform_1(%arg0: i32, %arg1: i32, %arg2: i32) -> (i32, i32) {
    %c0_i32 = arith.constant 0 : i32
    %c0_i32_0 = arith.constant 0 : i32
    return %arg1, %c0_i32 : i32, i32
  }
  func.func @transform_2(%arg0: i32, %arg1: i32, %arg2: i32) -> (i32, i32) {
    %c0_i32 = arith.constant 0 : i32
    %c0_i32_0 = arith.constant 0 : i32
    return %arg1, %c0_i32 : i32, i32
  }
  func.func @transform_3(%arg0: i32, %arg1: i32, %arg2: i32) -> (i32, i32, i32) {
    %c0_i32 = arith.constant 0 : i32
    return %arg0, %arg1, %arg2 : i32, i32, i32
  }
}

module attributes {stable_mosaic.version = 11 : i64} {
  func.func @_bn_leaky_kernel(%arg0: i32, %arg1: i32, %arg2: i32, %arg3: memref<1x16x128xbf16, #tpu.memory_space<vmem>>, %arg4: memref<16x1xf32, #tpu.memory_space<vmem>>, %arg5: memref<16x1xf32, #tpu.memory_space<vmem>>, %arg6: memref<1x16x128xbf16, #tpu.memory_space<vmem>>) attributes {dimension_semantics = [#tpu.dimension_semantics<parallel>, #tpu.dimension_semantics<parallel>, #tpu.dimension_semantics<parallel>], iteration_bounds = array<i64: 2, 1, 1>, scalar_prefetch = 0 : i64, scratch_operands = 0 : i64, tpu.core_type = #tpu.core_type<tc>, window_params = [{transform_indices = @transform_0, window_bounds = array<i64: 1, 16, 128>}, {transform_indices = @transform_1, window_bounds = array<i64: 16, 1>}, {transform_indices = @transform_2, window_bounds = array<i64: 16, 1>}, {transform_indices = @transform_3, window_bounds = array<i64: 1, 16, 128>}]} {
    %c0 = arith.constant 0 : index
    %c0_0 = arith.constant 0 : index
    %c0_1 = arith.constant 0 : index
    %0 = vector.load %arg3[%c0, %c0_0, %c0_1] : memref<1x16x128xbf16, #tpu.memory_space<vmem>>, vector<1x16x128xbf16>
    %1 = vector.shape_cast %0 : vector<1x16x128xbf16> to vector<16x128xbf16>
    %2 = arith.extf %1 : vector<16x128xbf16> to vector<16x128xf32>
    %c0_2 = arith.constant 0 : index
    %c0_3 = arith.constant 0 : index
    %3 = vector.load %arg4[%c0_2, %c0_3] : memref<16x1xf32, #tpu.memory_space<vmem>>, vector<16x1xf32>
    %4 = vector.broadcast %3 : vector<16x1xf32> to vector<16x128xf32>
    %5 = arith.mulf %2, %4 : vector<16x128xf32>
    %c0_4 = arith.constant 0 : index
    %c0_5 = arith.constant 0 : index
    %6 = vector.load %arg5[%c0_4, %c0_5] : memref<16x1xf32, #tpu.memory_space<vmem>>, vector<16x1xf32>
    %7 = vector.broadcast %6 : vector<16x1xf32> to vector<16x128xf32>
    %8 = arith.addf %5, %7 : vector<16x128xf32>
    %cst = arith.constant 0.000000e+00 : f32
    %9 = vector.broadcast %cst : f32 to vector<16x128xf32>
    %10 = arith.cmpf ogt, %8, %9 : vector<16x128xf32>
    %cst_6 = arith.constant 0.00999999977 : f32
    %11 = vector.broadcast %cst_6 : f32 to vector<16x128xf32>
    %12 = arith.mulf %11, %8 : vector<16x128xf32>
    %13 = arith.select %10, %8, %12 : vector<16x128xi1>, vector<16x128xf32>
    %14 = arith.truncf %13 : vector<16x128xf32> to vector<16x128xbf16>
    %c0_7 = arith.constant 0 : index
    %c0_8 = arith.constant 0 : index
    %c0_9 = arith.constant 0 : index
    %15 = vector.load %arg6[%c0_7, %c0_8, %c0_9] : memref<1x16x128xbf16, #tpu.memory_space<vmem>>, vector<1x16x128xbf16>
    %16 = vector.shape_cast %15 : vector<1x16x128xbf16> to vector<16x128xbf16>
    %17 = vector.shape_cast %14 : vector<16x128xbf16> to vector<1x16x128xbf16>
    tpu.vector_store %arg6[%c0_7, %c0_8, %c0_9], %17 {strides = array<i32>} : memref<1x16x128xbf16, #tpu.memory_space<vmem>>, vector<1x16x128xbf16>,
    return
  }
  func.func @transform_0(%arg0: i32, %arg1: i32, %arg2: i32) -> (i32, i32, i32) {
    %c0_i32 = arith.constant 0 : i32
    return %arg0, %arg1, %arg2 : i32, i32, i32
  }
  func.func @transform_1(%arg0: i32, %arg1: i32, %arg2: i32) -> (i32, i32) {
    %c0_i32 = arith.constant 0 : i32
    %c0_i32_0 = arith.constant 0 : i32
    return %arg1, %c0_i32 : i32, i32
  }
  func.func @transform_2(%arg0: i32, %arg1: i32, %arg2: i32) -> (i32, i32) {
    %c0_i32 = arith.constant 0 : i32
    %c0_i32_0 = arith.constant 0 : i32
    return %arg1, %c0_i32 : i32, i32
  }
  func.func @transform_3(%arg0: i32, %arg1: i32, %arg2: i32) -> (i32, i32, i32) {
    %c0_i32 = arith.constant 0 : i32
    return %arg0, %arg1, %arg2 : i32, i32, i32
  }
}

module attributes {stable_mosaic.version = 11 : i64} {
  func.func @_conv_kernel(%arg0: i32, %arg1: i32, %arg2: i32, %arg3: memref<1x8x128xbf16, #tpu.memory_space<vmem>>, %arg4: memref<1x8x128xbf16, #tpu.memory_space<vmem>>, %arg5: memref<16x120xbf16, #tpu.memory_space<vmem>>, %arg6: memref<16x1xf32, #tpu.memory_space<vmem>>, %arg7: memref<1x16x128xbf16, #tpu.memory_space<vmem>>, %arg8: memref<1x16x128xf32, #tpu.memory_space<vmem>>, %arg9: memref<16x1xf32, #tpu.memory_space<vmem>>, %arg10: memref<16x1xf32, #tpu.memory_space<vmem>>) attributes {dimension_semantics = [#tpu.dimension_semantics<parallel>, #tpu.dimension_semantics<parallel>, #tpu.dimension_semantics<arbitrary>], iteration_bounds = array<i64: 2, 1, 1>, scalar_prefetch = 0 : i64, scratch_operands = 2 : i64, tpu.core_type = #tpu.core_type<tc>, window_params = [{transform_indices = @transform_0, window_bounds = array<i64: 1, 8, 128>}, {transform_indices = @transform_1, window_bounds = array<i64: 1, 8, 128>}, {transform_indices = @transform_2, window_bounds = array<i64: 16, 120>}, {transform_indices = @transform_3, window_bounds = array<i64: 16, 1>}, {transform_indices = @transform_4, window_bounds = array<i64: 1, 16, 128>}, {transform_indices = @transform_5, window_bounds = array<i64: 1, 16, 128>}]} {
    %c0 = arith.constant 0 : index
    %c0_0 = arith.constant 0 : index
    %c0_1 = arith.constant 0 : index
    %0 = vector.load %arg3[%c0, %c0_0, %c0_1] : memref<1x8x128xbf16, #tpu.memory_space<vmem>>, vector<1x8x128xbf16>
    %1 = vector.shape_cast %0 : vector<1x8x128xbf16> to vector<8x128xbf16>
    %c0_2 = arith.constant 0 : index
    %c0_3 = arith.constant 0 : index
    %c0_4 = arith.constant 0 : index
    %2 = vector.load %arg4[%c0_2, %c0_3, %c0_4] : memref<1x8x128xbf16, #tpu.memory_space<vmem>>, vector<1x8x128xbf16>
    %3 = vector.shape_cast %2 : vector<1x8x128xbf16> to vector<8x128xbf16>
    %4 = vector.extract_strided_slice %1 {offsets = [0, 1], sizes = [8, 127], strides = [1, 1]} : vector<8x128xbf16> to vector<8x127xbf16>
    %5 = vector.extract_strided_slice %3 {offsets = [0, 0], sizes = [8, 1], strides = [1, 1]} : vector<8x128xbf16> to vector<8x1xbf16>
    %6 = tpu.concatenate %4, %5 in 1 : vector<8x127xbf16>, vector<8x1xbf16> -> vector<8x128xbf16>
    %7 = vector.extract_strided_slice %1 {offsets = [0, 2], sizes = [8, 126], strides = [1, 1]} : vector<8x128xbf16> to vector<8x126xbf16>
    %8 = vector.extract_strided_slice %3 {offsets = [0, 0], sizes = [8, 2], strides = [1, 1]} : vector<8x128xbf16> to vector<8x2xbf16>
    %9 = tpu.concatenate %7, %8 in 1 : vector<8x126xbf16>, vector<8x2xbf16> -> vector<8x128xbf16>
    %10 = vector.extract_strided_slice %1 {offsets = [0, 3], sizes = [8, 125], strides = [1, 1]} : vector<8x128xbf16> to vector<8x125xbf16>
    %11 = vector.extract_strided_slice %3 {offsets = [0, 0], sizes = [8, 3], strides = [1, 1]} : vector<8x128xbf16> to vector<8x3xbf16>
    %12 = tpu.concatenate %10, %11 in 1 : vector<8x125xbf16>, vector<8x3xbf16> -> vector<8x128xbf16>
    %13 = vector.extract_strided_slice %1 {offsets = [0, 4], sizes = [8, 124], strides = [1, 1]} : vector<8x128xbf16> to vector<8x124xbf16>
    %14 = vector.extract_strided_slice %3 {offsets = [0, 0], sizes = [8, 4], strides = [1, 1]} : vector<8x128xbf16> to vector<8x4xbf16>
    %15 = tpu.concatenate %13, %14 in 1 : vector<8x124xbf16>, vector<8x4xbf16> -> vector<8x128xbf16>
    %16 = vector.extract_strided_slice %1 {offsets = [0, 5], sizes = [8, 123], strides = [1, 1]} : vector<8x128xbf16> to vector<8x123xbf16>
    %17 = vector.extract_strided_slice %3 {offsets = [0, 0], sizes = [8, 5], strides = [1, 1]} : vector<8x128xbf16> to vector<8x5xbf16>
    %18 = tpu.concatenate %16, %17 in 1 : vector<8x123xbf16>, vector<8x5xbf16> -> vector<8x128xbf16>
    %19 = vector.extract_strided_slice %1 {offsets = [0, 6], sizes = [8, 122], strides = [1, 1]} : vector<8x128xbf16> to vector<8x122xbf16>
    %20 = vector.extract_strided_slice %3 {offsets = [0, 0], sizes = [8, 6], strides = [1, 1]} : vector<8x128xbf16> to vector<8x6xbf16>
    %21 = tpu.concatenate %19, %20 in 1 : vector<8x122xbf16>, vector<8x6xbf16> -> vector<8x128xbf16>
    %22 = vector.extract_strided_slice %1 {offsets = [0, 7], sizes = [8, 121], strides = [1, 1]} : vector<8x128xbf16> to vector<8x121xbf16>
    %23 = vector.extract_strided_slice %3 {offsets = [0, 0], sizes = [8, 7], strides = [1, 1]} : vector<8x128xbf16> to vector<8x7xbf16>
    %24 = tpu.concatenate %22, %23 in 1 : vector<8x121xbf16>, vector<8x7xbf16> -> vector<8x128xbf16>
    %25 = vector.extract_strided_slice %1 {offsets = [0, 8], sizes = [8, 120], strides = [1, 1]} : vector<8x128xbf16> to vector<8x120xbf16>
    %26 = vector.extract_strided_slice %3 {offsets = [0, 0], sizes = [8, 8], strides = [1, 1]} : vector<8x128xbf16> to vector<8x8xbf16>
    %27 = tpu.concatenate %25, %26 in 1 : vector<8x120xbf16>, vector<8x8xbf16> -> vector<8x128xbf16>
    %28 = vector.extract_strided_slice %1 {offsets = [0, 9], sizes = [8, 119], strides = [1, 1]} : vector<8x128xbf16> to vector<8x119xbf16>
    %29 = vector.extract_strided_slice %3 {offsets = [0, 0], sizes = [8, 9], strides = [1, 1]} : vector<8x128xbf16> to vector<8x9xbf16>
    %30 = tpu.concatenate %28, %29 in 1 : vector<8x119xbf16>, vector<8x9xbf16> -> vector<8x128xbf16>
    %31 = vector.extract_strided_slice %1 {offsets = [0, 10], sizes = [8, 118], strides = [1, 1]} : vector<8x128xbf16> to vector<8x118xbf16>
    %32 = vector.extract_strided_slice %3 {offsets = [0, 0], sizes = [8, 10], strides = [1, 1]} : vector<8x128xbf16> to vector<8x10xbf16>
    %33 = tpu.concatenate %31, %32 in 1 : vector<8x118xbf16>, vector<8x10xbf16> -> vector<8x128xbf16>
    %34 = vector.extract_strided_slice %1 {offsets = [0, 11], sizes = [8, 117], strides = [1, 1]} : vector<8x128xbf16> to vector<8x117xbf16>
    %35 = vector.extract_strided_slice %3 {offsets = [0, 0], sizes = [8, 11], strides = [1, 1]} : vector<8x128xbf16> to vector<8x11xbf16>
    %36 = tpu.concatenate %34, %35 in 1 : vector<8x117xbf16>, vector<8x11xbf16> -> vector<8x128xbf16>
    %37 = vector.extract_strided_slice %1 {offsets = [0, 12], sizes = [8, 116], strides = [1, 1]} : vector<8x128xbf16> to vector<8x116xbf16>
    %38 = vector.extract_strided_slice %3 {offsets = [0, 0], sizes = [8, 12], strides = [1, 1]} : vector<8x128xbf16> to vector<8x12xbf16>
    %39 = tpu.concatenate %37, %38 in 1 : vector<8x116xbf16>, vector<8x12xbf16> -> vector<8x128xbf16>
    %40 = vector.extract_strided_slice %1 {offsets = [0, 13], sizes = [8, 115], strides = [1, 1]} : vector<8x128xbf16> to vector<8x115xbf16>
    %41 = vector.extract_strided_slice %3 {offsets = [0, 0], sizes = [8, 13], strides = [1, 1]} : vector<8x128xbf16> to vector<8x13xbf16>
    %42 = tpu.concatenate %40, %41 in 1 : vector<8x115xbf16>, vector<8x13xbf16> -> vector<8x128xbf16>
    %43 = vector.extract_strided_slice %1 {offsets = [0, 14], sizes = [8, 114], strides = [1, 1]} : vector<8x128xbf16> to vector<8x114xbf16>
    %44 = vector.extract_strided_slice %3 {offsets = [0, 0], sizes = [8, 14], strides = [1, 1]} : vector<8x128xbf16> to vector<8x14xbf16>
    %45 = tpu.concatenate %43, %44 in 1 : vector<8x114xbf16>, vector<8x14xbf16> -> vector<8x128xbf16>
    %46 = tpu.concatenate %1, %6, %9, %12, %15, %18, %21, %24, %27, %30, %33, %36, %39, %42, %45 in 0 : vector<8x128xbf16>, vector<8x128xbf16>, vector<8x128xbf16>, vector<8x128xbf16>, vector<8x128xbf16>, vector<8x128xbf16>, vector<8x128xbf16>, vector<8x128xbf16>, vector<8x128xbf16>, vector<8x128xbf16>, vector<8x128xbf16>, vector<8x128xbf16>, vector<8x128xbf16>, vector<8x128xbf16>, vector<8x128xbf16> -> vector<120x128xbf16>
    %c0_5 = arith.constant 0 : index
    %c0_6 = arith.constant 0 : index
    %47 = vector.load %arg5[%c0_5, %c0_6] : memref<16x120xbf16, #tpu.memory_space<vmem>>, vector<16x120xbf16>
    %cst = arith.constant dense<0.000000e+00> : vector<16x128xf32>
    %48 = tpu.matmul %47, %46, %cst {dimension_numbers = #tpu.dot_dimension_numbers<[1], [0], [0], [1], [0, 0, 1, 1], [], []>} : vector<16x120xbf16>, vector<120x128xbf16>, vector<16x128xf32> -> vector<16x128xf32>
    %c0_7 = arith.constant 0 : index
    %c0_8 = arith.constant 0 : index
    %49 = vector.load %arg6[%c0_7, %c0_8] : memref<16x1xf32, #tpu.memory_space<vmem>>, vector<16x1xf32>
    %50 = vector.broadcast %49 : vector<16x1xf32> to vector<16x128xf32>
    %51 = arith.addf %48, %50 : vector<16x128xf32>
    %c0_i32 = arith.constant 0 : i32
    %52 = arith.cmpi eq, %arg2, %c0_i32 : i32
    %53 = arith.extui %52 : i1 to i32
    %c0_i32_9 = arith.constant 0 : i32
    %54 = arith.cmpi ne, %53, %c0_i32_9 : i32
    scf.if %54 {
      %cst_19 = arith.constant 0.000000e+00 : f32
      %68 = vector.broadcast %cst_19 : f32 to vector<16x1xf32>
      %c0_20 = arith.constant 0 : index
      %c0_21 = arith.constant 0 : index
      %69 = vector.load %arg9[%c0_20, %c0_21] : memref<16x1xf32, #tpu.memory_space<vmem>>, vector<16x1xf32>
      tpu.vector_store %arg9[%c0_20, %c0_21], %68 {strides = array<i32>} : memref<16x1xf32, #tpu.memory_space<vmem>>, vector<16x1xf32>,
      %cst_22 = arith.constant 0.000000e+00 : f32
      %70 = vector.broadcast %cst_22 : f32 to vector<16x1xf32>
      %c0_23 = arith.constant 0 : index
      %c0_24 = arith.constant 0 : index
      %71 = vector.load %arg10[%c0_23, %c0_24] : memref<16x1xf32, #tpu.memory_space<vmem>>, vector<16x1xf32>
      tpu.vector_store %arg10[%c0_23, %c0_24], %70 {strides = array<i32>} : memref<16x1xf32, #tpu.memory_space<vmem>>, vector<16x1xf32>,
    } else {
    }
    %c0_i32_10 = arith.constant 0 : i32
    %55 = arith.cmpi eq, %arg2, %c0_i32_10 : i32
    %56 = arith.extui %55 : i1 to i32
    %c0_i32_11 = arith.constant 0 : i32
    %57 = arith.cmpi ne, %56, %c0_i32_11 : i32
    scf.if %57 {
      %68 = tpu.iota {dimensions = array<i32: 1>} : vector<16x128xi32>
      %c128_i32 = arith.constant 128 : i32
      %69 = arith.muli %arg2, %c128_i32 : i32
      %70 = vector.broadcast %69 : i32 to vector<16x128xi32>
      %71 = arith.addi %70, %68 : vector<16x128xi32>
      %c79_i32 = arith.constant 79 : i32
      %72 = vector.broadcast %c79_i32 : i32 to vector<16x128xi32>
      %73 = arith.cmpi slt, %71, %72 : vector<16x128xi32>
      %cst_19 = arith.constant 0.000000e+00 : f32
      %74 = vector.broadcast %cst_19 : f32 to vector<16x128xf32>
      %75 = arith.select %73, %51, %74 : vector<16x128xi1>, vector<16x128xf32>
      %c0_20 = arith.constant 0 : index
      %c0_21 = arith.constant 0 : index
      %76 = vector.load %arg9[%c0_20, %c0_21] : memref<16x1xf32, #tpu.memory_space<vmem>>, vector<16x1xf32>
      %cst_22 = arith.constant dense<0.000000e+00> : vector<16xf32>
      %77 = vector.multi_reduction <add>, %75, %cst_22 [1] : vector<16x128xf32> to vector<16xf32>
      %78 = vector.shape_cast %77 : vector<16xf32> to vector<16x1xf32>
      %79 = arith.addf %76, %78 : vector<16x1xf32>
      %c0_23 = arith.constant 0 : index
      %c0_24 = arith.constant 0 : index
      %80 = vector.load %arg9[%c0_23, %c0_24] : memref<16x1xf32, #tpu.memory_space<vmem>>, vector<16x1xf32>
      tpu.vector_store %arg9[%c0_23, %c0_24], %79 {strides = array<i32>} : memref<16x1xf32, #tpu.memory_space<vmem>>, vector<16x1xf32>,
      %c0_25 = arith.constant 0 : index
      %c0_26 = arith.constant 0 : index
      %81 = vector.load %arg10[%c0_25, %c0_26] : memref<16x1xf32, #tpu.memory_space<vmem>>, vector<16x1xf32>
      %82 = arith.mulf %75, %75 : vector<16x128xf32>
      %cst_27 = arith.constant dense<0.000000e+00> : vector<16xf32>
      %83 = vector.multi_reduction <add>, %82, %cst_27 [1] : vector<16x128xf32> to vector<16xf32>
      %84 = vector.shape_cast %83 : vector<16xf32> to vector<16x1xf32>
      %85 = arith.addf %81, %84 : vector<16x1xf32>
      %c0_28 = arith.constant 0 : index
      %c0_29 = arith.constant 0 : index
      %86 = vector.load %arg10[%c0_28, %c0_29] : memref<16x1xf32, #tpu.memory_space<vmem>>, vector<16x1xf32>
      tpu.vector_store %arg10[%c0_28, %c0_29], %85 {strides = array<i32>} : memref<16x1xf32, #tpu.memory_space<vmem>>, vector<16x1xf32>,
    } else {
    }
    %c0_i32_12 = arith.constant 0 : i32
    %58 = arith.cmpi slt, %arg2, %c0_i32_12 : i32
    %59 = arith.extui %58 : i1 to i32
    %c0_i32_13 = arith.constant 0 : i32
    %60 = arith.cmpi ne, %59, %c0_i32_13 : i32
    scf.if %60 {
      %c0_19 = arith.constant 0 : index
      %c0_20 = arith.constant 0 : index
      %68 = vector.load %arg9[%c0_19, %c0_20] : memref<16x1xf32, #tpu.memory_space<vmem>>, vector<16x1xf32>
      %cst_21 = arith.constant dense<0.000000e+00> : vector<16xf32>
      %69 = vector.multi_reduction <add>, %51, %cst_21 [1] : vector<16x128xf32> to vector<16xf32>
      %70 = vector.shape_cast %69 : vector<16xf32> to vector<16x1xf32>
      %71 = arith.addf %68, %70 : vector<16x1xf32>
      %c0_22 = arith.constant 0 : index
      %c0_23 = arith.constant 0 : index
      %72 = vector.load %arg9[%c0_22, %c0_23] : memref<16x1xf32, #tpu.memory_space<vmem>>, vector<16x1xf32>
      tpu.vector_store %arg9[%c0_22, %c0_23], %71 {strides = array<i32>} : memref<16x1xf32, #tpu.memory_space<vmem>>, vector<16x1xf32>,
      %c0_24 = arith.constant 0 : index
      %c0_25 = arith.constant 0 : index
      %73 = vector.load %arg10[%c0_24, %c0_25] : memref<16x1xf32, #tpu.memory_space<vmem>>, vector<16x1xf32>
      %74 = arith.mulf %51, %51 : vector<16x128xf32>
      %cst_26 = arith.constant dense<0.000000e+00> : vector<16xf32>
      %75 = vector.multi_reduction <add>, %74, %cst_26 [1] : vector<16x128xf32> to vector<16xf32>
      %76 = vector.shape_cast %75 : vector<16xf32> to vector<16x1xf32>
      %77 = arith.addf %73, %76 : vector<16x1xf32>
      %c0_27 = arith.constant 0 : index
      %c0_28 = arith.constant 0 : index
      %78 = vector.load %arg10[%c0_27, %c0_28] : memref<16x1xf32, #tpu.memory_space<vmem>>, vector<16x1xf32>
      tpu.vector_store %arg10[%c0_27, %c0_28], %77 {strides = array<i32>} : memref<16x1xf32, #tpu.memory_space<vmem>>, vector<16x1xf32>,
    } else {
    }
    %c0_i32_14 = arith.constant 0 : i32
    %61 = arith.cmpi eq, %arg2, %c0_i32_14 : i32
    %62 = arith.extui %61 : i1 to i32
    %c0_i32_15 = arith.constant 0 : i32
    %63 = arith.cmpi ne, %62, %c0_i32_15 : i32
    scf.if %63 {
      %c0_19 = arith.constant 0 : index
      %c0_20 = arith.constant 0 : index
      %68 = vector.load %arg9[%c0_19, %c0_20] : memref<16x1xf32, #tpu.memory_space<vmem>>, vector<16x1xf32>
      %c0_21 = arith.constant 0 : index
      %c0_22 = arith.constant 0 : index
      %69 = vector.load %arg10[%c0_21, %c0_22] : memref<16x1xf32, #tpu.memory_space<vmem>>, vector<16x1xf32>
      %cst_23 = arith.constant 0.000000e+00 : f32
      %70 = vector.broadcast %cst_23 : f32 to vector<16x126xf32>
      %71 = tpu.concatenate %68, %69, %70 in 1 : vector<16x1xf32>, vector<16x1xf32>, vector<16x126xf32> -> vector<16x128xf32>
      %c0_24 = arith.constant 0 : index
      %c0_25 = arith.constant 0 : index
      %c0_26 = arith.constant 0 : index
      %72 = vector.load %arg8[%c0_24, %c0_25, %c0_26] : memref<1x16x128xf32, #tpu.memory_space<vmem>>, vector<1x16x128xf32>
      %73 = vector.shape_cast %72 : vector<1x16x128xf32> to vector<16x128xf32>
      %74 = vector.shape_cast %71 : vector<16x128xf32> to vector<1x16x128xf32>
      tpu.vector_store %arg8[%c0_24, %c0_25, %c0_26], %74 {strides = array<i32>} : memref<1x16x128xf32, #tpu.memory_space<vmem>>, vector<1x16x128xf32>,
    } else {
    }
    %64 = arith.truncf %51 : vector<16x128xf32> to vector<16x128xbf16>
    %c0_16 = arith.constant 0 : index
    %c0_17 = arith.constant 0 : index
    %c0_18 = arith.constant 0 : index
    %65 = vector.load %arg7[%c0_16, %c0_17, %c0_18] : memref<1x16x128xbf16, #tpu.memory_space<vmem>>, vector<1x16x128xbf16>
    %66 = vector.shape_cast %65 : vector<1x16x128xbf16> to vector<16x128xbf16>
    %67 = vector.shape_cast %64 : vector<16x128xbf16> to vector<1x16x128xbf16>
    tpu.vector_store %arg7[%c0_16, %c0_17, %c0_18], %67 {strides = array<i32>} : memref<1x16x128xbf16, #tpu.memory_space<vmem>>, vector<1x16x128xbf16>,
    return
  }
  func.func @transform_0(%arg0: i32, %arg1: i32, %arg2: i32) -> (i32, i32, i32) {
    %c0_i32 = arith.constant 0 : i32
    %c0_i32_0 = arith.constant 0 : i32
    return %arg0, %c0_i32, %arg2 : i32, i32, i32
  }
  func.func @transform_1(%arg0: i32, %arg1: i32, %arg2: i32) -> (i32, i32, i32) {
    %c1_i32 = arith.constant 1 : i32
    %0 = arith.addi %arg2, %c1_i32 : i32
    %c1_i32_0 = arith.constant 1 : i32
    %1 = arith.muli %0, %c1_i32_0 : i32
    %c0_i32 = arith.constant 0 : i32
    %c0_i32_1 = arith.constant 0 : i32
    return %arg0, %c0_i32, %1 : i32, i32, i32
  }
  func.func @transform_2(%arg0: i32, %arg1: i32, %arg2: i32) -> (i32, i32) {
    %c0_i32 = arith.constant 0 : i32
    %c0_i32_0 = arith.constant 0 : i32
    return %arg1, %c0_i32 : i32, i32
  }
  func.func @transform_3(%arg0: i32, %arg1: i32, %arg2: i32) -> (i32, i32) {
    %c0_i32 = arith.constant 0 : i32
    %c0_i32_0 = arith.constant 0 : i32
    return %arg1, %c0_i32 : i32, i32
  }
  func.func @transform_4(%arg0: i32, %arg1: i32, %arg2: i32) -> (i32, i32, i32) {
    %c0_i32 = arith.constant 0 : i32
    return %arg0, %arg1, %arg2 : i32, i32, i32
  }
  func.func @transform_5(%arg0: i32, %arg1: i32, %arg2: i32) -> (i32, i32, i32) {
    %c0_i32 = arith.constant 0 : i32
    %c0_i32_0 = arith.constant 0 : i32
    return %arg0, %arg1, %c0_i32 : i32, i32, i32
  }
}

module attributes {stable_mosaic.version = 11 : i64} {
  func.func @_conv_kernel(%arg0: i32, %arg1: i32, %arg2: i32, %arg3: memref<1x16x128xbf16, #tpu.memory_space<vmem>>, %arg4: memref<1x16x128xbf16, #tpu.memory_space<vmem>>, %arg5: memref<32x240xbf16, #tpu.memory_space<vmem>>, %arg6: memref<32x1xf32, #tpu.memory_space<vmem>>, %arg7: memref<1x32x128xbf16, #tpu.memory_space<vmem>>, %arg8: memref<1x32x128xf32, #tpu.memory_space<vmem>>, %arg9: memref<32x1xf32, #tpu.memory_space<vmem>>, %arg10: memref<32x1xf32, #tpu.memory_space<vmem>>) attributes {dimension_semantics = [#tpu.dimension_semantics<parallel>, #tpu.dimension_semantics<parallel>, #tpu.dimension_semantics<arbitrary>], iteration_bounds = array<i64: 2, 1, 1>, scalar_prefetch = 0 : i64, scratch_operands = 2 : i64, tpu.core_type = #tpu.core_type<tc>, window_params = [{transform_indices = @transform_0, window_bounds = array<i64: 1, 16, 128>}, {transform_indices = @transform_1, window_bounds = array<i64: 1, 16, 128>}, {transform_indices = @transform_2, window_bounds = array<i64: 32, 240>}, {transform_indices = @transform_3, window_bounds = array<i64: 32, 1>}, {transform_indices = @transform_4, window_bounds = array<i64: 1, 32, 128>}, {transform_indices = @transform_5, window_bounds = array<i64: 1, 32, 128>}]} {
    %c0 = arith.constant 0 : index
    %c0_0 = arith.constant 0 : index
    %c0_1 = arith.constant 0 : index
    %0 = vector.load %arg3[%c0, %c0_0, %c0_1] : memref<1x16x128xbf16, #tpu.memory_space<vmem>>, vector<1x16x128xbf16>
    %1 = vector.shape_cast %0 : vector<1x16x128xbf16> to vector<16x128xbf16>
    %c0_2 = arith.constant 0 : index
    %c0_3 = arith.constant 0 : index
    %c0_4 = arith.constant 0 : index
    %2 = vector.load %arg4[%c0_2, %c0_3, %c0_4] : memref<1x16x128xbf16, #tpu.memory_space<vmem>>, vector<1x16x128xbf16>
    %3 = vector.shape_cast %2 : vector<1x16x128xbf16> to vector<16x128xbf16>
    %4 = vector.extract_strided_slice %1 {offsets = [0, 1], sizes = [16, 127], strides = [1, 1]} : vector<16x128xbf16> to vector<16x127xbf16>
    %5 = vector.extract_strided_slice %3 {offsets = [0, 0], sizes = [16, 1], strides = [1, 1]} : vector<16x128xbf16> to vector<16x1xbf16>
    %6 = tpu.concatenate %4, %5 in 1 : vector<16x127xbf16>, vector<16x1xbf16> -> vector<16x128xbf16>
    %7 = vector.extract_strided_slice %1 {offsets = [0, 2], sizes = [16, 126], strides = [1, 1]} : vector<16x128xbf16> to vector<16x126xbf16>
    %8 = vector.extract_strided_slice %3 {offsets = [0, 0], sizes = [16, 2], strides = [1, 1]} : vector<16x128xbf16> to vector<16x2xbf16>
    %9 = tpu.concatenate %7, %8 in 1 : vector<16x126xbf16>, vector<16x2xbf16> -> vector<16x128xbf16>
    %10 = vector.extract_strided_slice %1 {offsets = [0, 3], sizes = [16, 125], strides = [1, 1]} : vector<16x128xbf16> to vector<16x125xbf16>
    %11 = vector.extract_strided_slice %3 {offsets = [0, 0], sizes = [16, 3], strides = [1, 1]} : vector<16x128xbf16> to vector<16x3xbf16>
    %12 = tpu.concatenate %10, %11 in 1 : vector<16x125xbf16>, vector<16x3xbf16> -> vector<16x128xbf16>
    %13 = vector.extract_strided_slice %1 {offsets = [0, 4], sizes = [16, 124], strides = [1, 1]} : vector<16x128xbf16> to vector<16x124xbf16>
    %14 = vector.extract_strided_slice %3 {offsets = [0, 0], sizes = [16, 4], strides = [1, 1]} : vector<16x128xbf16> to vector<16x4xbf16>
    %15 = tpu.concatenate %13, %14 in 1 : vector<16x124xbf16>, vector<16x4xbf16> -> vector<16x128xbf16>
    %16 = vector.extract_strided_slice %1 {offsets = [0, 5], sizes = [16, 123], strides = [1, 1]} : vector<16x128xbf16> to vector<16x123xbf16>
    %17 = vector.extract_strided_slice %3 {offsets = [0, 0], sizes = [16, 5], strides = [1, 1]} : vector<16x128xbf16> to vector<16x5xbf16>
    %18 = tpu.concatenate %16, %17 in 1 : vector<16x123xbf16>, vector<16x5xbf16> -> vector<16x128xbf16>
    %19 = vector.extract_strided_slice %1 {offsets = [0, 6], sizes = [16, 122], strides = [1, 1]} : vector<16x128xbf16> to vector<16x122xbf16>
    %20 = vector.extract_strided_slice %3 {offsets = [0, 0], sizes = [16, 6], strides = [1, 1]} : vector<16x128xbf16> to vector<16x6xbf16>
    %21 = tpu.concatenate %19, %20 in 1 : vector<16x122xbf16>, vector<16x6xbf16> -> vector<16x128xbf16>
    %22 = vector.extract_strided_slice %1 {offsets = [0, 7], sizes = [16, 121], strides = [1, 1]} : vector<16x128xbf16> to vector<16x121xbf16>
    %23 = vector.extract_strided_slice %3 {offsets = [0, 0], sizes = [16, 7], strides = [1, 1]} : vector<16x128xbf16> to vector<16x7xbf16>
    %24 = tpu.concatenate %22, %23 in 1 : vector<16x121xbf16>, vector<16x7xbf16> -> vector<16x128xbf16>
    %25 = vector.extract_strided_slice %1 {offsets = [0, 8], sizes = [16, 120], strides = [1, 1]} : vector<16x128xbf16> to vector<16x120xbf16>
    %26 = vector.extract_strided_slice %3 {offsets = [0, 0], sizes = [16, 8], strides = [1, 1]} : vector<16x128xbf16> to vector<16x8xbf16>
    %27 = tpu.concatenate %25, %26 in 1 : vector<16x120xbf16>, vector<16x8xbf16> -> vector<16x128xbf16>
    %28 = vector.extract_strided_slice %1 {offsets = [0, 9], sizes = [16, 119], strides = [1, 1]} : vector<16x128xbf16> to vector<16x119xbf16>
    %29 = vector.extract_strided_slice %3 {offsets = [0, 0], sizes = [16, 9], strides = [1, 1]} : vector<16x128xbf16> to vector<16x9xbf16>
    %30 = tpu.concatenate %28, %29 in 1 : vector<16x119xbf16>, vector<16x9xbf16> -> vector<16x128xbf16>
    %31 = vector.extract_strided_slice %1 {offsets = [0, 10], sizes = [16, 118], strides = [1, 1]} : vector<16x128xbf16> to vector<16x118xbf16>
    %32 = vector.extract_strided_slice %3 {offsets = [0, 0], sizes = [16, 10], strides = [1, 1]} : vector<16x128xbf16> to vector<16x10xbf16>
    %33 = tpu.concatenate %31, %32 in 1 : vector<16x118xbf16>, vector<16x10xbf16> -> vector<16x128xbf16>
    %34 = vector.extract_strided_slice %1 {offsets = [0, 11], sizes = [16, 117], strides = [1, 1]} : vector<16x128xbf16> to vector<16x117xbf16>
    %35 = vector.extract_strided_slice %3 {offsets = [0, 0], sizes = [16, 11], strides = [1, 1]} : vector<16x128xbf16> to vector<16x11xbf16>
    %36 = tpu.concatenate %34, %35 in 1 : vector<16x117xbf16>, vector<16x11xbf16> -> vector<16x128xbf16>
    %37 = vector.extract_strided_slice %1 {offsets = [0, 12], sizes = [16, 116], strides = [1, 1]} : vector<16x128xbf16> to vector<16x116xbf16>
    %38 = vector.extract_strided_slice %3 {offsets = [0, 0], sizes = [16, 12], strides = [1, 1]} : vector<16x128xbf16> to vector<16x12xbf16>
    %39 = tpu.concatenate %37, %38 in 1 : vector<16x116xbf16>, vector<16x12xbf16> -> vector<16x128xbf16>
    %40 = vector.extract_strided_slice %1 {offsets = [0, 13], sizes = [16, 115], strides = [1, 1]} : vector<16x128xbf16> to vector<16x115xbf16>
    %41 = vector.extract_strided_slice %3 {offsets = [0, 0], sizes = [16, 13], strides = [1, 1]} : vector<16x128xbf16> to vector<16x13xbf16>
    %42 = tpu.concatenate %40, %41 in 1 : vector<16x115xbf16>, vector<16x13xbf16> -> vector<16x128xbf16>
    %43 = vector.extract_strided_slice %1 {offsets = [0, 14], sizes = [16, 114], strides = [1, 1]} : vector<16x128xbf16> to vector<16x114xbf16>
    %44 = vector.extract_strided_slice %3 {offsets = [0, 0], sizes = [16, 14], strides = [1, 1]} : vector<16x128xbf16> to vector<16x14xbf16>
    %45 = tpu.concatenate %43, %44 in 1 : vector<16x114xbf16>, vector<16x14xbf16> -> vector<16x128xbf16>
    %46 = tpu.concatenate %1, %6, %9, %12, %15, %18, %21, %24, %27, %30, %33, %36, %39, %42, %45 in 0 : vector<16x128xbf16>, vector<16x128xbf16>, vector<16x128xbf16>, vector<16x128xbf16>, vector<16x128xbf16>, vector<16x128xbf16>, vector<16x128xbf16>, vector<16x128xbf16>, vector<16x128xbf16>, vector<16x128xbf16>, vector<16x128xbf16>, vector<16x128xbf16>, vector<16x128xbf16>, vector<16x128xbf16>, vector<16x128xbf16> -> vector<240x128xbf16>
    %c0_5 = arith.constant 0 : index
    %c0_6 = arith.constant 0 : index
    %47 = vector.load %arg5[%c0_5, %c0_6] : memref<32x240xbf16, #tpu.memory_space<vmem>>, vector<32x240xbf16>
    %cst = arith.constant dense<0.000000e+00> : vector<32x128xf32>
    %48 = tpu.matmul %47, %46, %cst {dimension_numbers = #tpu.dot_dimension_numbers<[1], [0], [0], [1], [0, 0, 1, 1], [], []>} : vector<32x240xbf16>, vector<240x128xbf16>, vector<32x128xf32> -> vector<32x128xf32>
    %c0_7 = arith.constant 0 : index
    %c0_8 = arith.constant 0 : index
    %49 = vector.load %arg6[%c0_7, %c0_8] : memref<32x1xf32, #tpu.memory_space<vmem>>, vector<32x1xf32>
    %50 = vector.broadcast %49 : vector<32x1xf32> to vector<32x128xf32>
    %51 = arith.addf %48, %50 : vector<32x128xf32>
    %c0_i32 = arith.constant 0 : i32
    %52 = arith.cmpi eq, %arg2, %c0_i32 : i32
    %53 = arith.extui %52 : i1 to i32
    %c0_i32_9 = arith.constant 0 : i32
    %54 = arith.cmpi ne, %53, %c0_i32_9 : i32
    scf.if %54 {
      %cst_19 = arith.constant 0.000000e+00 : f32
      %68 = vector.broadcast %cst_19 : f32 to vector<32x1xf32>
      %c0_20 = arith.constant 0 : index
      %c0_21 = arith.constant 0 : index
      %69 = vector.load %arg9[%c0_20, %c0_21] : memref<32x1xf32, #tpu.memory_space<vmem>>, vector<32x1xf32>
      tpu.vector_store %arg9[%c0_20, %c0_21], %68 {strides = array<i32>} : memref<32x1xf32, #tpu.memory_space<vmem>>, vector<32x1xf32>,
      %cst_22 = arith.constant 0.000000e+00 : f32
      %70 = vector.broadcast %cst_22 : f32 to vector<32x1xf32>
      %c0_23 = arith.constant 0 : index
      %c0_24 = arith.constant 0 : index
      %71 = vector.load %arg10[%c0_23, %c0_24] : memref<32x1xf32, #tpu.memory_space<vmem>>, vector<32x1xf32>
      tpu.vector_store %arg10[%c0_23, %c0_24], %70 {strides = array<i32>} : memref<32x1xf32, #tpu.memory_space<vmem>>, vector<32x1xf32>,
    } else {
    }
    %c0_i32_10 = arith.constant 0 : i32
    %55 = arith.cmpi eq, %arg2, %c0_i32_10 : i32
    %56 = arith.extui %55 : i1 to i32
    %c0_i32_11 = arith.constant 0 : i32
    %57 = arith.cmpi ne, %56, %c0_i32_11 : i32
    scf.if %57 {
      %68 = tpu.iota {dimensions = array<i32: 1>} : vector<32x128xi32>
      %c128_i32 = arith.constant 128 : i32
      %69 = arith.muli %arg2, %c128_i32 : i32
      %70 = vector.broadcast %69 : i32 to vector<32x128xi32>
      %71 = arith.addi %70, %68 : vector<32x128xi32>
      %c25_i32 = arith.constant 25 : i32
      %72 = vector.broadcast %c25_i32 : i32 to vector<32x128xi32>
      %73 = arith.cmpi slt, %71, %72 : vector<32x128xi32>
      %cst_19 = arith.constant 0.000000e+00 : f32
      %74 = vector.broadcast %cst_19 : f32 to vector<32x128xf32>
      %75 = arith.select %73, %51, %74 : vector<32x128xi1>, vector<32x128xf32>
      %c0_20 = arith.constant 0 : index
      %c0_21 = arith.constant 0 : index
      %76 = vector.load %arg9[%c0_20, %c0_21] : memref<32x1xf32, #tpu.memory_space<vmem>>, vector<32x1xf32>
      %cst_22 = arith.constant dense<0.000000e+00> : vector<32xf32>
      %77 = vector.multi_reduction <add>, %75, %cst_22 [1] : vector<32x128xf32> to vector<32xf32>
      %78 = vector.shape_cast %77 : vector<32xf32> to vector<32x1xf32>
      %79 = arith.addf %76, %78 : vector<32x1xf32>
      %c0_23 = arith.constant 0 : index
      %c0_24 = arith.constant 0 : index
      %80 = vector.load %arg9[%c0_23, %c0_24] : memref<32x1xf32, #tpu.memory_space<vmem>>, vector<32x1xf32>
      tpu.vector_store %arg9[%c0_23, %c0_24], %79 {strides = array<i32>} : memref<32x1xf32, #tpu.memory_space<vmem>>, vector<32x1xf32>,
      %c0_25 = arith.constant 0 : index
      %c0_26 = arith.constant 0 : index
      %81 = vector.load %arg10[%c0_25, %c0_26] : memref<32x1xf32, #tpu.memory_space<vmem>>, vector<32x1xf32>
      %82 = arith.mulf %75, %75 : vector<32x128xf32>
      %cst_27 = arith.constant dense<0.000000e+00> : vector<32xf32>
      %83 = vector.multi_reduction <add>, %82, %cst_27 [1] : vector<32x128xf32> to vector<32xf32>
      %84 = vector.shape_cast %83 : vector<32xf32> to vector<32x1xf32>
      %85 = arith.addf %81, %84 : vector<32x1xf32>
      %c0_28 = arith.constant 0 : index
      %c0_29 = arith.constant 0 : index
      %86 = vector.load %arg10[%c0_28, %c0_29] : memref<32x1xf32, #tpu.memory_space<vmem>>, vector<32x1xf32>
      tpu.vector_store %arg10[%c0_28, %c0_29], %85 {strides = array<i32>} : memref<32x1xf32, #tpu.memory_space<vmem>>, vector<32x1xf32>,
    } else {
    }
    %c0_i32_12 = arith.constant 0 : i32
    %58 = arith.cmpi slt, %arg2, %c0_i32_12 : i32
    %59 = arith.extui %58 : i1 to i32
    %c0_i32_13 = arith.constant 0 : i32
    %60 = arith.cmpi ne, %59, %c0_i32_13 : i32
    scf.if %60 {
      %c0_19 = arith.constant 0 : index
      %c0_20 = arith.constant 0 : index
      %68 = vector.load %arg9[%c0_19, %c0_20] : memref<32x1xf32, #tpu.memory_space<vmem>>, vector<32x1xf32>
      %cst_21 = arith.constant dense<0.000000e+00> : vector<32xf32>
      %69 = vector.multi_reduction <add>, %51, %cst_21 [1] : vector<32x128xf32> to vector<32xf32>
      %70 = vector.shape_cast %69 : vector<32xf32> to vector<32x1xf32>
      %71 = arith.addf %68, %70 : vector<32x1xf32>
      %c0_22 = arith.constant 0 : index
      %c0_23 = arith.constant 0 : index
      %72 = vector.load %arg9[%c0_22, %c0_23] : memref<32x1xf32, #tpu.memory_space<vmem>>, vector<32x1xf32>
      tpu.vector_store %arg9[%c0_22, %c0_23], %71 {strides = array<i32>} : memref<32x1xf32, #tpu.memory_space<vmem>>, vector<32x1xf32>,
      %c0_24 = arith.constant 0 : index
      %c0_25 = arith.constant 0 : index
      %73 = vector.load %arg10[%c0_24, %c0_25] : memref<32x1xf32, #tpu.memory_space<vmem>>, vector<32x1xf32>
      %74 = arith.mulf %51, %51 : vector<32x128xf32>
      %cst_26 = arith.constant dense<0.000000e+00> : vector<32xf32>
      %75 = vector.multi_reduction <add>, %74, %cst_26 [1] : vector<32x128xf32> to vector<32xf32>
      %76 = vector.shape_cast %75 : vector<32xf32> to vector<32x1xf32>
      %77 = arith.addf %73, %76 : vector<32x1xf32>
      %c0_27 = arith.constant 0 : index
      %c0_28 = arith.constant 0 : index
      %78 = vector.load %arg10[%c0_27, %c0_28] : memref<32x1xf32, #tpu.memory_space<vmem>>, vector<32x1xf32>
      tpu.vector_store %arg10[%c0_27, %c0_28], %77 {strides = array<i32>} : memref<32x1xf32, #tpu.memory_space<vmem>>, vector<32x1xf32>,
    } else {
    }
    %c0_i32_14 = arith.constant 0 : i32
    %61 = arith.cmpi eq, %arg2, %c0_i32_14 : i32
    %62 = arith.extui %61 : i1 to i32
    %c0_i32_15 = arith.constant 0 : i32
    %63 = arith.cmpi ne, %62, %c0_i32_15 : i32
    scf.if %63 {
      %c0_19 = arith.constant 0 : index
      %c0_20 = arith.constant 0 : index
      %68 = vector.load %arg9[%c0_19, %c0_20] : memref<32x1xf32, #tpu.memory_space<vmem>>, vector<32x1xf32>
      %c0_21 = arith.constant 0 : index
      %c0_22 = arith.constant 0 : index
      %69 = vector.load %arg10[%c0_21, %c0_22] : memref<32x1xf32, #tpu.memory_space<vmem>>, vector<32x1xf32>
      %cst_23 = arith.constant 0.000000e+00 : f32
      %70 = vector.broadcast %cst_23 : f32 to vector<32x126xf32>
      %71 = tpu.concatenate %68, %69, %70 in 1 : vector<32x1xf32>, vector<32x1xf32>, vector<32x126xf32> -> vector<32x128xf32>
      %c0_24 = arith.constant 0 : index
      %c0_25 = arith.constant 0 : index
      %c0_26 = arith.constant 0 : index
      %72 = vector.load %arg8[%c0_24, %c0_25, %c0_26] : memref<1x32x128xf32, #tpu.memory_space<vmem>>, vector<1x32x128xf32>
      %73 = vector.shape_cast %72 : vector<1x32x128xf32> to vector<32x128xf32>
      %74 = vector.shape_cast %71 : vector<32x128xf32> to vector<1x32x128xf32>
      tpu.vector_store %arg8[%c0_24, %c0_25, %c0_26], %74 {strides = array<i32>} : memref<1x32x128xf32, #tpu.memory_space<vmem>>, vector<1x32x128xf32>,
    } else {
    }
    %64 = arith.truncf %51 : vector<32x128xf32> to vector<32x128xbf16>
    %c0_16 = arith.constant 0 : index
    %c0_17 = arith.constant 0 : index
    %c0_18 = arith.constant 0 : index
    %65 = vector.load %arg7[%c0_16, %c0_17, %c0_18] : memref<1x32x128xbf16, #tpu.memory_space<vmem>>, vector<1x32x128xbf16>
    %66 = vector.shape_cast %65 : vector<1x32x128xbf16> to vector<32x128xbf16>
    %67 = vector.shape_cast %64 : vector<32x128xbf16> to vector<1x32x128xbf16>
    tpu.vector_store %arg7[%c0_16, %c0_17, %c0_18], %67 {strides = array<i32>} : memref<1x32x128xbf16, #tpu.memory_space<vmem>>, vector<1x32x128xbf16>,
    return
  }
  func.func @transform_0(%arg0: i32, %arg1: i32, %arg2: i32) -> (i32, i32, i32) {
    %c0_i32 = arith.constant 0 : i32
    %c0_i32_0 = arith.constant 0 : i32
    return %arg0, %c0_i32, %arg2 : i32, i32, i32
  }
  func.func @transform_1(%arg0: i32, %arg1: i32, %arg2: i32) -> (i32, i32, i32) {
    %c1_i32 = arith.constant 1 : i32
    %0 = arith.addi %arg2, %c1_i32 : i32
    %c1_i32_0 = arith.constant 1 : i32
    %1 = arith.muli %0, %c1_i32_0 : i32
    %c0_i32 = arith.constant 0 : i32
    %c0_i32_1 = arith.constant 0 : i32
    return %arg0, %c0_i32, %1 : i32, i32, i32
  }
  func.func @transform_2(%arg0: i32, %arg1: i32, %arg2: i32) -> (i32, i32) {
    %c0_i32 = arith.constant 0 : i32
    %c0_i32_0 = arith.constant 0 : i32
    return %arg1, %c0_i32 : i32, i32
  }
  func.func @transform_3(%arg0: i32, %arg1: i32, %arg2: i32) -> (i32, i32) {
    %c0_i32 = arith.constant 0 : i32
    %c0_i32_0 = arith.constant 0 : i32
    return %arg1, %c0_i32 : i32, i32
  }
  func.func @transform_4(%arg0: i32, %arg1: i32, %arg2: i32) -> (i32, i32, i32) {
    %c0_i32 = arith.constant 0 : i32
    return %arg0, %arg1, %arg2 : i32, i32, i32
  }
  func.func @transform_5(%arg0: i32, %arg1: i32, %arg2: i32) -> (i32, i32, i32) {
    %c0_i32 = arith.constant 0 : i32
    %c0_i32_0 = arith.constant 0 : i32
    return %arg0, %arg1, %c0_i32 : i32, i32, i32
  }
}

module attributes {stable_mosaic.version = 11 : i64} {
  func.func @_bn_leaky_kernel(%arg0: i32, %arg1: i32, %arg2: i32, %arg3: memref<1x32x128xbf16, #tpu.memory_space<vmem>>, %arg4: memref<32x1xf32, #tpu.memory_space<vmem>>, %arg5: memref<32x1xf32, #tpu.memory_space<vmem>>, %arg6: memref<1x32x128xbf16, #tpu.memory_space<vmem>>) attributes {dimension_semantics = [#tpu.dimension_semantics<parallel>, #tpu.dimension_semantics<parallel>, #tpu.dimension_semantics<parallel>], iteration_bounds = array<i64: 2, 1, 1>, scalar_prefetch = 0 : i64, scratch_operands = 0 : i64, tpu.core_type = #tpu.core_type<tc>, window_params = [{transform_indices = @transform_0, window_bounds = array<i64: 1, 32, 128>}, {transform_indices = @transform_1, window_bounds = array<i64: 32, 1>}, {transform_indices = @transform_2, window_bounds = array<i64: 32, 1>}, {transform_indices = @transform_3, window_bounds = array<i64: 1, 32, 128>}]} {
    %c0 = arith.constant 0 : index
    %c0_0 = arith.constant 0 : index
    %c0_1 = arith.constant 0 : index
    %0 = vector.load %arg3[%c0, %c0_0, %c0_1] : memref<1x32x128xbf16, #tpu.memory_space<vmem>>, vector<1x32x128xbf16>
    %1 = vector.shape_cast %0 : vector<1x32x128xbf16> to vector<32x128xbf16>
    %2 = arith.extf %1 : vector<32x128xbf16> to vector<32x128xf32>
    %c0_2 = arith.constant 0 : index
    %c0_3 = arith.constant 0 : index
    %3 = vector.load %arg4[%c0_2, %c0_3] : memref<32x1xf32, #tpu.memory_space<vmem>>, vector<32x1xf32>
    %4 = vector.broadcast %3 : vector<32x1xf32> to vector<32x128xf32>
    %5 = arith.mulf %2, %4 : vector<32x128xf32>
    %c0_4 = arith.constant 0 : index
    %c0_5 = arith.constant 0 : index
    %6 = vector.load %arg5[%c0_4, %c0_5] : memref<32x1xf32, #tpu.memory_space<vmem>>, vector<32x1xf32>
    %7 = vector.broadcast %6 : vector<32x1xf32> to vector<32x128xf32>
    %8 = arith.addf %5, %7 : vector<32x128xf32>
    %cst = arith.constant 0.000000e+00 : f32
    %9 = vector.broadcast %cst : f32 to vector<32x128xf32>
    %10 = arith.cmpf ogt, %8, %9 : vector<32x128xf32>
    %cst_6 = arith.constant 0.00999999977 : f32
    %11 = vector.broadcast %cst_6 : f32 to vector<32x128xf32>
    %12 = arith.mulf %11, %8 : vector<32x128xf32>
    %13 = arith.select %10, %8, %12 : vector<32x128xi1>, vector<32x128xf32>
    %14 = arith.truncf %13 : vector<32x128xf32> to vector<32x128xbf16>
    %c0_7 = arith.constant 0 : index
    %c0_8 = arith.constant 0 : index
    %c0_9 = arith.constant 0 : index
    %15 = vector.load %arg6[%c0_7, %c0_8, %c0_9] : memref<1x32x128xbf16, #tpu.memory_space<vmem>>, vector<1x32x128xbf16>
    %16 = vector.shape_cast %15 : vector<1x32x128xbf16> to vector<32x128xbf16>
    %17 = vector.shape_cast %14 : vector<32x128xbf16> to vector<1x32x128xbf16>
    tpu.vector_store %arg6[%c0_7, %c0_8, %c0_9], %17 {strides = array<i32>} : memref<1x32x128xbf16, #tpu.memory_space<vmem>>, vector<1x32x128xbf16>,
    return
  }
  func.func @transform_0(%arg0: i32, %arg1: i32, %arg2: i32) -> (i32, i32, i32) {
    %c0_i32 = arith.constant 0 : i32
    return %arg0, %arg1, %arg2 : i32, i32, i32
  }
  func.func @transform_1(%arg0: i32, %arg1: i32, %arg2: i32) -> (i32, i32) {
    %c0_i32 = arith.constant 0 : i32
    %c0_i32_0 = arith.constant 0 : i32
    return %arg1, %c0_i32 : i32, i32
  }
  func.func @transform_2(%arg0: i32, %arg1: i32, %arg2: i32) -> (i32, i32) {
    %c0_i32 = arith.constant 0 : i32
    %c0_i32_0 = arith.constant 0 : i32
    return %arg1, %c0_i32 : i32, i32
  }
  func.func @transform_3(%arg0: i32, %arg1: i32, %arg2: i32) -> (i32, i32, i32) {
    %c0_i32 = arith.constant 0 : i32
    return %arg0, %arg1, %arg2 : i32, i32, i32
  }
}

module attributes {stable_mosaic.version = 11 : i64} {
  func.func @_conv_kernel(%arg0: i32, %arg1: i32, %arg2: i32, %arg3: memref<1x16x128xbf16, #tpu.memory_space<vmem>>, %arg4: memref<1x16x128xbf16, #tpu.memory_space<vmem>>, %arg5: memref<1x24x128xbf16, #tpu.memory_space<vmem>>, %arg6: memref<1x24x128xbf16, #tpu.memory_space<vmem>>, %arg7: memref<16x200xbf16, #tpu.memory_space<vmem>>, %arg8: memref<16x1xf32, #tpu.memory_space<vmem>>, %arg9: memref<1x16x128xbf16, #tpu.memory_space<vmem>>, %arg10: memref<1x16x128xf32, #tpu.memory_space<vmem>>, %arg11: memref<16x1xf32, #tpu.memory_space<vmem>>, %arg12: memref<16x1xf32, #tpu.memory_space<vmem>>) attributes {dimension_semantics = [#tpu.dimension_semantics<parallel>, #tpu.dimension_semantics<parallel>, #tpu.dimension_semantics<arbitrary>], iteration_bounds = array<i64: 2, 1, 1>, scalar_prefetch = 0 : i64, scratch_operands = 2 : i64, tpu.core_type = #tpu.core_type<tc>, window_params = [{transform_indices = @transform_0, window_bounds = array<i64: 1, 16, 128>}, {transform_indices = @transform_1, window_bounds = array<i64: 1, 16, 128>}, {transform_indices = @transform_2, window_bounds = array<i64: 1, 24, 128>}, {transform_indices = @transform_3, window_bounds = array<i64: 1, 24, 128>}, {transform_indices = @transform_4, window_bounds = array<i64: 16, 200>}, {transform_indices = @transform_5, window_bounds = array<i64: 16, 1>}, {transform_indices = @transform_6, window_bounds = array<i64: 1, 16, 128>}, {transform_indices = @transform_7, window_bounds = array<i64: 1, 16, 128>}]} {
    %c0 = arith.constant 0 : index
    %c0_0 = arith.constant 0 : index
    %c0_1 = arith.constant 0 : index
    %0 = vector.load %arg3[%c0, %c0_0, %c0_1] : memref<1x16x128xbf16, #tpu.memory_space<vmem>>, vector<1x16x128xbf16>
    %1 = vector.shape_cast %0 : vector<1x16x128xbf16> to vector<16x128xbf16>
    %c0_2 = arith.constant 0 : index
    %c0_3 = arith.constant 0 : index
    %c0_4 = arith.constant 0 : index
    %2 = vector.load %arg5[%c0_2, %c0_3, %c0_4] : memref<1x24x128xbf16, #tpu.memory_space<vmem>>, vector<1x24x128xbf16>
    %3 = vector.shape_cast %2 : vector<1x24x128xbf16> to vector<24x128xbf16>
    %c0_5 = arith.constant 0 : index
    %c0_6 = arith.constant 0 : index
    %c0_7 = arith.constant 0 : index
    %4 = vector.load %arg4[%c0_5, %c0_6, %c0_7] : memref<1x16x128xbf16, #tpu.memory_space<vmem>>, vector<1x16x128xbf16>
    %5 = vector.shape_cast %4 : vector<1x16x128xbf16> to vector<16x128xbf16>
    %c0_8 = arith.constant 0 : index
    %c0_9 = arith.constant 0 : index
    %c0_10 = arith.constant 0 : index
    %6 = vector.load %arg6[%c0_8, %c0_9, %c0_10] : memref<1x24x128xbf16, #tpu.memory_space<vmem>>, vector<1x24x128xbf16>
    %7 = vector.shape_cast %6 : vector<1x24x128xbf16> to vector<24x128xbf16>
    %8 = vector.extract_strided_slice %1 {offsets = [0, 1], sizes = [16, 127], strides = [1, 1]} : vector<16x128xbf16> to vector<16x127xbf16>
    %9 = vector.extract_strided_slice %5 {offsets = [0, 0], sizes = [16, 1], strides = [1, 1]} : vector<16x128xbf16> to vector<16x1xbf16>
    %10 = tpu.concatenate %8, %9 in 1 : vector<16x127xbf16>, vector<16x1xbf16> -> vector<16x128xbf16>
    %11 = vector.extract_strided_slice %1 {offsets = [0, 2], sizes = [16, 126], strides = [1, 1]} : vector<16x128xbf16> to vector<16x126xbf16>
    %12 = vector.extract_strided_slice %5 {offsets = [0, 0], sizes = [16, 2], strides = [1, 1]} : vector<16x128xbf16> to vector<16x2xbf16>
    %13 = tpu.concatenate %11, %12 in 1 : vector<16x126xbf16>, vector<16x2xbf16> -> vector<16x128xbf16>
    %14 = vector.extract_strided_slice %1 {offsets = [0, 3], sizes = [16, 125], strides = [1, 1]} : vector<16x128xbf16> to vector<16x125xbf16>
    %15 = vector.extract_strided_slice %5 {offsets = [0, 0], sizes = [16, 3], strides = [1, 1]} : vector<16x128xbf16> to vector<16x3xbf16>
    %16 = tpu.concatenate %14, %15 in 1 : vector<16x125xbf16>, vector<16x3xbf16> -> vector<16x128xbf16>
    %17 = vector.extract_strided_slice %1 {offsets = [0, 4], sizes = [16, 124], strides = [1, 1]} : vector<16x128xbf16> to vector<16x124xbf16>
    %18 = vector.extract_strided_slice %5 {offsets = [0, 0], sizes = [16, 4], strides = [1, 1]} : vector<16x128xbf16> to vector<16x4xbf16>
    %19 = tpu.concatenate %17, %18 in 1 : vector<16x124xbf16>, vector<16x4xbf16> -> vector<16x128xbf16>
    %20 = vector.extract_strided_slice %3 {offsets = [0, 1], sizes = [24, 127], strides = [1, 1]} : vector<24x128xbf16> to vector<24x127xbf16>
    %21 = vector.extract_strided_slice %7 {offsets = [0, 0], sizes = [24, 1], strides = [1, 1]} : vector<24x128xbf16> to vector<24x1xbf16>
    %22 = tpu.concatenate %20, %21 in 1 : vector<24x127xbf16>, vector<24x1xbf16> -> vector<24x128xbf16>
    %23 = vector.extract_strided_slice %3 {offsets = [0, 2], sizes = [24, 126], strides = [1, 1]} : vector<24x128xbf16> to vector<24x126xbf16>
    %24 = vector.extract_strided_slice %7 {offsets = [0, 0], sizes = [24, 2], strides = [1, 1]} : vector<24x128xbf16> to vector<24x2xbf16>
    %25 = tpu.concatenate %23, %24 in 1 : vector<24x126xbf16>, vector<24x2xbf16> -> vector<24x128xbf16>
    %26 = vector.extract_strided_slice %3 {offsets = [0, 3], sizes = [24, 125], strides = [1, 1]} : vector<24x128xbf16> to vector<24x125xbf16>
    %27 = vector.extract_strided_slice %7 {offsets = [0, 0], sizes = [24, 3], strides = [1, 1]} : vector<24x128xbf16> to vector<24x3xbf16>
    %28 = tpu.concatenate %26, %27 in 1 : vector<24x125xbf16>, vector<24x3xbf16> -> vector<24x128xbf16>
    %29 = vector.extract_strided_slice %3 {offsets = [0, 4], sizes = [24, 124], strides = [1, 1]} : vector<24x128xbf16> to vector<24x124xbf16>
    %30 = vector.extract_strided_slice %7 {offsets = [0, 0], sizes = [24, 4], strides = [1, 1]} : vector<24x128xbf16> to vector<24x4xbf16>
    %31 = tpu.concatenate %29, %30 in 1 : vector<24x124xbf16>, vector<24x4xbf16> -> vector<24x128xbf16>
    %32 = tpu.concatenate %1, %10, %13, %16, %19, %3, %22, %25, %28, %31 in 0 : vector<16x128xbf16>, vector<16x128xbf16>, vector<16x128xbf16>, vector<16x128xbf16>, vector<16x128xbf16>, vector<24x128xbf16>, vector<24x128xbf16>, vector<24x128xbf16>, vector<24x128xbf16>, vector<24x128xbf16> -> vector<200x128xbf16>
    %c0_11 = arith.constant 0 : index
    %c0_12 = arith.constant 0 : index
    %33 = vector.load %arg7[%c0_11, %c0_12] : memref<16x200xbf16, #tpu.memory_space<vmem>>, vector<16x200xbf16>
    %cst = arith.constant dense<0.000000e+00> : vector<16x128xf32>
    %34 = tpu.matmul %33, %32, %cst {dimension_numbers = #tpu.dot_dimension_numbers<[1], [0], [0], [1], [0, 0, 1, 1], [], []>} : vector<16x200xbf16>, vector<200x128xbf16>, vector<16x128xf32> -> vector<16x128xf32>
    %c0_13 = arith.constant 0 : index
    %c0_14 = arith.constant 0 : index
    %35 = vector.load %arg8[%c0_13, %c0_14] : memref<16x1xf32, #tpu.memory_space<vmem>>, vector<16x1xf32>
    %36 = vector.broadcast %35 : vector<16x1xf32> to vector<16x128xf32>
    %37 = arith.addf %34, %36 : vector<16x128xf32>
    %c0_i32 = arith.constant 0 : i32
    %38 = arith.cmpi eq, %arg2, %c0_i32 : i32
    %39 = arith.extui %38 : i1 to i32
    %c0_i32_15 = arith.constant 0 : i32
    %40 = arith.cmpi ne, %39, %c0_i32_15 : i32
    scf.if %40 {
      %cst_25 = arith.constant 0.000000e+00 : f32
      %54 = vector.broadcast %cst_25 : f32 to vector<16x1xf32>
      %c0_26 = arith.constant 0 : index
      %c0_27 = arith.constant 0 : index
      %55 = vector.load %arg11[%c0_26, %c0_27] : memref<16x1xf32, #tpu.memory_space<vmem>>, vector<16x1xf32>
      tpu.vector_store %arg11[%c0_26, %c0_27], %54 {strides = array<i32>} : memref<16x1xf32, #tpu.memory_space<vmem>>, vector<16x1xf32>,
      %cst_28 = arith.constant 0.000000e+00 : f32
      %56 = vector.broadcast %cst_28 : f32 to vector<16x1xf32>
      %c0_29 = arith.constant 0 : index
      %c0_30 = arith.constant 0 : index
      %57 = vector.load %arg12[%c0_29, %c0_30] : memref<16x1xf32, #tpu.memory_space<vmem>>, vector<16x1xf32>
      tpu.vector_store %arg12[%c0_29, %c0_30], %56 {strides = array<i32>} : memref<16x1xf32, #tpu.memory_space<vmem>>, vector<16x1xf32>,
    } else {
    }
    %c0_i32_16 = arith.constant 0 : i32
    %41 = arith.cmpi eq, %arg2, %c0_i32_16 : i32
    %42 = arith.extui %41 : i1 to i32
    %c0_i32_17 = arith.constant 0 : i32
    %43 = arith.cmpi ne, %42, %c0_i32_17 : i32
    scf.if %43 {
      %54 = tpu.iota {dimensions = array<i32: 1>} : vector<16x128xi32>
      %c128_i32 = arith.constant 128 : i32
      %55 = arith.muli %arg2, %c128_i32 : i32
      %56 = vector.broadcast %55 : i32 to vector<16x128xi32>
      %57 = arith.addi %56, %54 : vector<16x128xi32>
      %c46_i32 = arith.constant 46 : i32
      %58 = vector.broadcast %c46_i32 : i32 to vector<16x128xi32>
      %59 = arith.cmpi slt, %57, %58 : vector<16x128xi32>
      %cst_25 = arith.constant 0.000000e+00 : f32
      %60 = vector.broadcast %cst_25 : f32 to vector<16x128xf32>
      %61 = arith.select %59, %37, %60 : vector<16x128xi1>, vector<16x128xf32>
      %c0_26 = arith.constant 0 : index
      %c0_27 = arith.constant 0 : index
      %62 = vector.load %arg11[%c0_26, %c0_27] : memref<16x1xf32, #tpu.memory_space<vmem>>, vector<16x1xf32>
      %cst_28 = arith.constant dense<0.000000e+00> : vector<16xf32>
      %63 = vector.multi_reduction <add>, %61, %cst_28 [1] : vector<16x128xf32> to vector<16xf32>
      %64 = vector.shape_cast %63 : vector<16xf32> to vector<16x1xf32>
      %65 = arith.addf %62, %64 : vector<16x1xf32>
      %c0_29 = arith.constant 0 : index
      %c0_30 = arith.constant 0 : index
      %66 = vector.load %arg11[%c0_29, %c0_30] : memref<16x1xf32, #tpu.memory_space<vmem>>, vector<16x1xf32>
      tpu.vector_store %arg11[%c0_29, %c0_30], %65 {strides = array<i32>} : memref<16x1xf32, #tpu.memory_space<vmem>>, vector<16x1xf32>,
      %c0_31 = arith.constant 0 : index
      %c0_32 = arith.constant 0 : index
      %67 = vector.load %arg12[%c0_31, %c0_32] : memref<16x1xf32, #tpu.memory_space<vmem>>, vector<16x1xf32>
      %68 = arith.mulf %61, %61 : vector<16x128xf32>
      %cst_33 = arith.constant dense<0.000000e+00> : vector<16xf32>
      %69 = vector.multi_reduction <add>, %68, %cst_33 [1] : vector<16x128xf32> to vector<16xf32>
      %70 = vector.shape_cast %69 : vector<16xf32> to vector<16x1xf32>
      %71 = arith.addf %67, %70 : vector<16x1xf32>
      %c0_34 = arith.constant 0 : index
      %c0_35 = arith.constant 0 : index
      %72 = vector.load %arg12[%c0_34, %c0_35] : memref<16x1xf32, #tpu.memory_space<vmem>>, vector<16x1xf32>
      tpu.vector_store %arg12[%c0_34, %c0_35], %71 {strides = array<i32>} : memref<16x1xf32, #tpu.memory_space<vmem>>, vector<16x1xf32>,
    } else {
    }
    %c0_i32_18 = arith.constant 0 : i32
    %44 = arith.cmpi slt, %arg2, %c0_i32_18 : i32
    %45 = arith.extui %44 : i1 to i32
    %c0_i32_19 = arith.constant 0 : i32
    %46 = arith.cmpi ne, %45, %c0_i32_19 : i32
    scf.if %46 {
      %c0_25 = arith.constant 0 : index
      %c0_26 = arith.constant 0 : index
      %54 = vector.load %arg11[%c0_25, %c0_26] : memref<16x1xf32, #tpu.memory_space<vmem>>, vector<16x1xf32>
      %cst_27 = arith.constant dense<0.000000e+00> : vector<16xf32>
      %55 = vector.multi_reduction <add>, %37, %cst_27 [1] : vector<16x128xf32> to vector<16xf32>
      %56 = vector.shape_cast %55 : vector<16xf32> to vector<16x1xf32>
      %57 = arith.addf %54, %56 : vector<16x1xf32>
      %c0_28 = arith.constant 0 : index
      %c0_29 = arith.constant 0 : index
      %58 = vector.load %arg11[%c0_28, %c0_29] : memref<16x1xf32, #tpu.memory_space<vmem>>, vector<16x1xf32>
      tpu.vector_store %arg11[%c0_28, %c0_29], %57 {strides = array<i32>} : memref<16x1xf32, #tpu.memory_space<vmem>>, vector<16x1xf32>,
      %c0_30 = arith.constant 0 : index
      %c0_31 = arith.constant 0 : index
      %59 = vector.load %arg12[%c0_30, %c0_31] : memref<16x1xf32, #tpu.memory_space<vmem>>, vector<16x1xf32>
      %60 = arith.mulf %37, %37 : vector<16x128xf32>
      %cst_32 = arith.constant dense<0.000000e+00> : vector<16xf32>
      %61 = vector.multi_reduction <add>, %60, %cst_32 [1] : vector<16x128xf32> to vector<16xf32>
      %62 = vector.shape_cast %61 : vector<16xf32> to vector<16x1xf32>
      %63 = arith.addf %59, %62 : vector<16x1xf32>
      %c0_33 = arith.constant 0 : index
      %c0_34 = arith.constant 0 : index
      %64 = vector.load %arg12[%c0_33, %c0_34] : memref<16x1xf32, #tpu.memory_space<vmem>>, vector<16x1xf32>
      tpu.vector_store %arg12[%c0_33, %c0_34], %63 {strides = array<i32>} : memref<16x1xf32, #tpu.memory_space<vmem>>, vector<16x1xf32>,
    } else {
    }
    %c0_i32_20 = arith.constant 0 : i32
    %47 = arith.cmpi eq, %arg2, %c0_i32_20 : i32
    %48 = arith.extui %47 : i1 to i32
    %c0_i32_21 = arith.constant 0 : i32
    %49 = arith.cmpi ne, %48, %c0_i32_21 : i32
    scf.if %49 {
      %c0_25 = arith.constant 0 : index
      %c0_26 = arith.constant 0 : index
      %54 = vector.load %arg11[%c0_25, %c0_26] : memref<16x1xf32, #tpu.memory_space<vmem>>, vector<16x1xf32>
      %c0_27 = arith.constant 0 : index
      %c0_28 = arith.constant 0 : index
      %55 = vector.load %arg12[%c0_27, %c0_28] : memref<16x1xf32, #tpu.memory_space<vmem>>, vector<16x1xf32>
      %cst_29 = arith.constant 0.000000e+00 : f32
      %56 = vector.broadcast %cst_29 : f32 to vector<16x126xf32>
      %57 = tpu.concatenate %54, %55, %56 in 1 : vector<16x1xf32>, vector<16x1xf32>, vector<16x126xf32> -> vector<16x128xf32>
      %c0_30 = arith.constant 0 : index
      %c0_31 = arith.constant 0 : index
      %c0_32 = arith.constant 0 : index
      %58 = vector.load %arg10[%c0_30, %c0_31, %c0_32] : memref<1x16x128xf32, #tpu.memory_space<vmem>>, vector<1x16x128xf32>
      %59 = vector.shape_cast %58 : vector<1x16x128xf32> to vector<16x128xf32>
      %60 = vector.shape_cast %57 : vector<16x128xf32> to vector<1x16x128xf32>
      tpu.vector_store %arg10[%c0_30, %c0_31, %c0_32], %60 {strides = array<i32>} : memref<1x16x128xf32, #tpu.memory_space<vmem>>, vector<1x16x128xf32>,
    } else {
    }
    %50 = arith.truncf %37 : vector<16x128xf32> to vector<16x128xbf16>
    %c0_22 = arith.constant 0 : index
    %c0_23 = arith.constant 0 : index
    %c0_24 = arith.constant 0 : index
    %51 = vector.load %arg9[%c0_22, %c0_23, %c0_24] : memref<1x16x128xbf16, #tpu.memory_space<vmem>>, vector<1x16x128xbf16>
    %52 = vector.shape_cast %51 : vector<1x16x128xbf16> to vector<16x128xbf16>
    %53 = vector.shape_cast %50 : vector<16x128xbf16> to vector<1x16x128xbf16>
    tpu.vector_store %arg9[%c0_22, %c0_23, %c0_24], %53 {strides = array<i32>} : memref<1x16x128xbf16, #tpu.memory_space<vmem>>, vector<1x16x128xbf16>,
    return
  }
  func.func @transform_0(%arg0: i32, %arg1: i32, %arg2: i32) -> (i32, i32, i32) {
    %c0_i32 = arith.constant 0 : i32
    %c0_i32_0 = arith.constant 0 : i32
    return %arg0, %c0_i32, %arg2 : i32, i32, i32
  }
  func.func @transform_1(%arg0: i32, %arg1: i32, %arg2: i32) -> (i32, i32, i32) {
    %c1_i32 = arith.constant 1 : i32
    %0 = arith.addi %arg2, %c1_i32 : i32
    %c1_i32_0 = arith.constant 1 : i32
    %1 = arith.muli %0, %c1_i32_0 : i32
    %c0_i32 = arith.constant 0 : i32
    %c0_i32_1 = arith.constant 0 : i32
    return %arg0, %c0_i32, %1 : i32, i32, i32
  }
  func.func @transform_2(%arg0: i32, %arg1: i32, %arg2: i32) -> (i32, i32, i32) {
    %c0_i32 = arith.constant 0 : i32
    %c0_i32_0 = arith.constant 0 : i32
    return %arg0, %c0_i32, %arg2 : i32, i32, i32
  }
  func.func @transform_3(%arg0: i32, %arg1: i32, %arg2: i32) -> (i32, i32, i32) {
    %c1_i32 = arith.constant 1 : i32
    %0 = arith.addi %arg2, %c1_i32 : i32
    %c1_i32_0 = arith.constant 1 : i32
    %1 = arith.muli %0, %c1_i32_0 : i32
    %c0_i32 = arith.constant 0 : i32
    %c0_i32_1 = arith.constant 0 : i32
    return %arg0, %c0_i32, %1 : i32, i32, i32
  }
  func.func @transform_4(%arg0: i32, %arg1: i32, %arg2: i32) -> (i32, i32) {
    %c0_i32 = arith.constant 0 : i32
    %c0_i32_0 = arith.constant 0 : i32
    return %arg1, %c0_i32 : i32, i32
  }
  func.func @transform_5(%arg0: i32, %arg1: i32, %arg2: i32) -> (i32, i32) {
    %c0_i32 = arith.constant 0 : i32
    %c0_i32_0 = arith.constant 0 : i32
    return %arg1, %c0_i32 : i32, i32
  }
  func.func @transform_6(%arg0: i32, %arg1: i32, %arg2: i32) -> (i32, i32, i32) {
    %c0_i32 = arith.constant 0 : i32
    return %arg0, %arg1, %arg2 : i32, i32, i32
  }
  func.func @transform_7(%arg0: i32, %arg1: i32, %arg2: i32) -> (i32, i32, i32) {
    %c0_i32 = arith.constant 0 : i32
    %c0_i32_0 = arith.constant 0 : i32
    return %arg0, %arg1, %c0_i32 : i32, i32, i32
  }
}

module attributes {stable_mosaic.version = 11 : i64} {
  func.func @_conv_kernel(%arg0: i32, %arg1: i32, %arg2: i32, %arg3: memref<1x8x128xbf16, #tpu.memory_space<vmem>>, %arg4: memref<1x8x128xbf16, #tpu.memory_space<vmem>>, %arg5: memref<1x16x128xbf16, #tpu.memory_space<vmem>>, %arg6: memref<1x16x128xbf16, #tpu.memory_space<vmem>>, %arg7: memref<16x120xbf16, #tpu.memory_space<vmem>>, %arg8: memref<16x1xf32, #tpu.memory_space<vmem>>, %arg9: memref<1x16x128xbf16, #tpu.memory_space<vmem>>, %arg10: memref<1x16x128xf32, #tpu.memory_space<vmem>>, %arg11: memref<16x1xf32, #tpu.memory_space<vmem>>, %arg12: memref<16x1xf32, #tpu.memory_space<vmem>>) attributes {dimension_semantics = [#tpu.dimension_semantics<parallel>, #tpu.dimension_semantics<parallel>, #tpu.dimension_semantics<arbitrary>], iteration_bounds = array<i64: 2, 1, 1>, scalar_prefetch = 0 : i64, scratch_operands = 2 : i64, tpu.core_type = #tpu.core_type<tc>, window_params = [{transform_indices = @transform_0, window_bounds = array<i64: 1, 8, 128>}, {transform_indices = @transform_1, window_bounds = array<i64: 1, 8, 128>}, {transform_indices = @transform_2, window_bounds = array<i64: 1, 16, 128>}, {transform_indices = @transform_3, window_bounds = array<i64: 1, 16, 128>}, {transform_indices = @transform_4, window_bounds = array<i64: 16, 120>}, {transform_indices = @transform_5, window_bounds = array<i64: 16, 1>}, {transform_indices = @transform_6, window_bounds = array<i64: 1, 16, 128>}, {transform_indices = @transform_7, window_bounds = array<i64: 1, 16, 128>}]} {
    %c0 = arith.constant 0 : index
    %c0_0 = arith.constant 0 : index
    %c0_1 = arith.constant 0 : index
    %0 = vector.load %arg3[%c0, %c0_0, %c0_1] : memref<1x8x128xbf16, #tpu.memory_space<vmem>>, vector<1x8x128xbf16>
    %1 = vector.shape_cast %0 : vector<1x8x128xbf16> to vector<8x128xbf16>
    %c0_2 = arith.constant 0 : index
    %c0_3 = arith.constant 0 : index
    %c0_4 = arith.constant 0 : index
    %2 = vector.load %arg5[%c0_2, %c0_3, %c0_4] : memref<1x16x128xbf16, #tpu.memory_space<vmem>>, vector<1x16x128xbf16>
    %3 = vector.shape_cast %2 : vector<1x16x128xbf16> to vector<16x128xbf16>
    %c0_5 = arith.constant 0 : index
    %c0_6 = arith.constant 0 : index
    %c0_7 = arith.constant 0 : index
    %4 = vector.load %arg4[%c0_5, %c0_6, %c0_7] : memref<1x8x128xbf16, #tpu.memory_space<vmem>>, vector<1x8x128xbf16>
    %5 = vector.shape_cast %4 : vector<1x8x128xbf16> to vector<8x128xbf16>
    %c0_8 = arith.constant 0 : index
    %c0_9 = arith.constant 0 : index
    %c0_10 = arith.constant 0 : index
    %6 = vector.load %arg6[%c0_8, %c0_9, %c0_10] : memref<1x16x128xbf16, #tpu.memory_space<vmem>>, vector<1x16x128xbf16>
    %7 = vector.shape_cast %6 : vector<1x16x128xbf16> to vector<16x128xbf16>
    %8 = vector.extract_strided_slice %1 {offsets = [0, 1], sizes = [8, 127], strides = [1, 1]} : vector<8x128xbf16> to vector<8x127xbf16>
    %9 = vector.extract_strided_slice %5 {offsets = [0, 0], sizes = [8, 1], strides = [1, 1]} : vector<8x128xbf16> to vector<8x1xbf16>
    %10 = tpu.concatenate %8, %9 in 1 : vector<8x127xbf16>, vector<8x1xbf16> -> vector<8x128xbf16>
    %11 = vector.extract_strided_slice %1 {offsets = [0, 2], sizes = [8, 126], strides = [1, 1]} : vector<8x128xbf16> to vector<8x126xbf16>
    %12 = vector.extract_strided_slice %5 {offsets = [0, 0], sizes = [8, 2], strides = [1, 1]} : vector<8x128xbf16> to vector<8x2xbf16>
    %13 = tpu.concatenate %11, %12 in 1 : vector<8x126xbf16>, vector<8x2xbf16> -> vector<8x128xbf16>
    %14 = vector.extract_strided_slice %1 {offsets = [0, 3], sizes = [8, 125], strides = [1, 1]} : vector<8x128xbf16> to vector<8x125xbf16>
    %15 = vector.extract_strided_slice %5 {offsets = [0, 0], sizes = [8, 3], strides = [1, 1]} : vector<8x128xbf16> to vector<8x3xbf16>
    %16 = tpu.concatenate %14, %15 in 1 : vector<8x125xbf16>, vector<8x3xbf16> -> vector<8x128xbf16>
    %17 = vector.extract_strided_slice %1 {offsets = [0, 4], sizes = [8, 124], strides = [1, 1]} : vector<8x128xbf16> to vector<8x124xbf16>
    %18 = vector.extract_strided_slice %5 {offsets = [0, 0], sizes = [8, 4], strides = [1, 1]} : vector<8x128xbf16> to vector<8x4xbf16>
    %19 = tpu.concatenate %17, %18 in 1 : vector<8x124xbf16>, vector<8x4xbf16> -> vector<8x128xbf16>
    %20 = vector.extract_strided_slice %3 {offsets = [0, 1], sizes = [16, 127], strides = [1, 1]} : vector<16x128xbf16> to vector<16x127xbf16>
    %21 = vector.extract_strided_slice %7 {offsets = [0, 0], sizes = [16, 1], strides = [1, 1]} : vector<16x128xbf16> to vector<16x1xbf16>
    %22 = tpu.concatenate %20, %21 in 1 : vector<16x127xbf16>, vector<16x1xbf16> -> vector<16x128xbf16>
    %23 = vector.extract_strided_slice %3 {offsets = [0, 2], sizes = [16, 126], strides = [1, 1]} : vector<16x128xbf16> to vector<16x126xbf16>
    %24 = vector.extract_strided_slice %7 {offsets = [0, 0], sizes = [16, 2], strides = [1, 1]} : vector<16x128xbf16> to vector<16x2xbf16>
    %25 = tpu.concatenate %23, %24 in 1 : vector<16x126xbf16>, vector<16x2xbf16> -> vector<16x128xbf16>
    %26 = vector.extract_strided_slice %3 {offsets = [0, 3], sizes = [16, 125], strides = [1, 1]} : vector<16x128xbf16> to vector<16x125xbf16>
    %27 = vector.extract_strided_slice %7 {offsets = [0, 0], sizes = [16, 3], strides = [1, 1]} : vector<16x128xbf16> to vector<16x3xbf16>
    %28 = tpu.concatenate %26, %27 in 1 : vector<16x125xbf16>, vector<16x3xbf16> -> vector<16x128xbf16>
    %29 = vector.extract_strided_slice %3 {offsets = [0, 4], sizes = [16, 124], strides = [1, 1]} : vector<16x128xbf16> to vector<16x124xbf16>
    %30 = vector.extract_strided_slice %7 {offsets = [0, 0], sizes = [16, 4], strides = [1, 1]} : vector<16x128xbf16> to vector<16x4xbf16>
    %31 = tpu.concatenate %29, %30 in 1 : vector<16x124xbf16>, vector<16x4xbf16> -> vector<16x128xbf16>
    %32 = tpu.concatenate %1, %10, %13, %16, %19, %3, %22, %25, %28, %31 in 0 : vector<8x128xbf16>, vector<8x128xbf16>, vector<8x128xbf16>, vector<8x128xbf16>, vector<8x128xbf16>, vector<16x128xbf16>, vector<16x128xbf16>, vector<16x128xbf16>, vector<16x128xbf16>, vector<16x128xbf16> -> vector<120x128xbf16>
    %c0_11 = arith.constant 0 : index
    %c0_12 = arith.constant 0 : index
    %33 = vector.load %arg7[%c0_11, %c0_12] : memref<16x120xbf16, #tpu.memory_space<vmem>>, vector<16x120xbf16>
    %cst = arith.constant dense<0.000000e+00> : vector<16x128xf32>
    %34 = tpu.matmul %33, %32, %cst {dimension_numbers = #tpu.dot_dimension_numbers<[1], [0], [0], [1], [0, 0, 1, 1], [], []>} : vector<16x120xbf16>, vector<120x128xbf16>, vector<16x128xf32> -> vector<16x128xf32>
    %c0_13 = arith.constant 0 : index
    %c0_14 = arith.constant 0 : index
    %35 = vector.load %arg8[%c0_13, %c0_14] : memref<16x1xf32, #tpu.memory_space<vmem>>, vector<16x1xf32>
    %36 = vector.broadcast %35 : vector<16x1xf32> to vector<16x128xf32>
    %37 = arith.addf %34, %36 : vector<16x128xf32>
    %c0_i32 = arith.constant 0 : i32
    %38 = arith.cmpi eq, %arg2, %c0_i32 : i32
    %39 = arith.extui %38 : i1 to i32
    %c0_i32_15 = arith.constant 0 : i32
    %40 = arith.cmpi ne, %39, %c0_i32_15 : i32
    scf.if %40 {
      %cst_25 = arith.constant 0.000000e+00 : f32
      %54 = vector.broadcast %cst_25 : f32 to vector<16x1xf32>
      %c0_26 = arith.constant 0 : index
      %c0_27 = arith.constant 0 : index
      %55 = vector.load %arg11[%c0_26, %c0_27] : memref<16x1xf32, #tpu.memory_space<vmem>>, vector<16x1xf32>
      tpu.vector_store %arg11[%c0_26, %c0_27], %54 {strides = array<i32>} : memref<16x1xf32, #tpu.memory_space<vmem>>, vector<16x1xf32>,
      %cst_28 = arith.constant 0.000000e+00 : f32
      %56 = vector.broadcast %cst_28 : f32 to vector<16x1xf32>
      %c0_29 = arith.constant 0 : index
      %c0_30 = arith.constant 0 : index
      %57 = vector.load %arg12[%c0_29, %c0_30] : memref<16x1xf32, #tpu.memory_space<vmem>>, vector<16x1xf32>
      tpu.vector_store %arg12[%c0_29, %c0_30], %56 {strides = array<i32>} : memref<16x1xf32, #tpu.memory_space<vmem>>, vector<16x1xf32>,
    } else {
    }
    %c0_i32_16 = arith.constant 0 : i32
    %41 = arith.cmpi eq, %arg2, %c0_i32_16 : i32
    %42 = arith.extui %41 : i1 to i32
    %c0_i32_17 = arith.constant 0 : i32
    %43 = arith.cmpi ne, %42, %c0_i32_17 : i32
    scf.if %43 {
      %54 = tpu.iota {dimensions = array<i32: 1>} : vector<16x128xi32>
      %c128_i32 = arith.constant 128 : i32
      %55 = arith.muli %arg2, %c128_i32 : i32
      %56 = vector.broadcast %55 : i32 to vector<16x128xi32>
      %57 = arith.addi %56, %54 : vector<16x128xi32>
      %c88_i32 = arith.constant 88 : i32
      %58 = vector.broadcast %c88_i32 : i32 to vector<16x128xi32>
      %59 = arith.cmpi slt, %57, %58 : vector<16x128xi32>
      %cst_25 = arith.constant 0.000000e+00 : f32
      %60 = vector.broadcast %cst_25 : f32 to vector<16x128xf32>
      %61 = arith.select %59, %37, %60 : vector<16x128xi1>, vector<16x128xf32>
      %c0_26 = arith.constant 0 : index
      %c0_27 = arith.constant 0 : index
      %62 = vector.load %arg11[%c0_26, %c0_27] : memref<16x1xf32, #tpu.memory_space<vmem>>, vector<16x1xf32>
      %cst_28 = arith.constant dense<0.000000e+00> : vector<16xf32>
      %63 = vector.multi_reduction <add>, %61, %cst_28 [1] : vector<16x128xf32> to vector<16xf32>
      %64 = vector.shape_cast %63 : vector<16xf32> to vector<16x1xf32>
      %65 = arith.addf %62, %64 : vector<16x1xf32>
      %c0_29 = arith.constant 0 : index
      %c0_30 = arith.constant 0 : index
      %66 = vector.load %arg11[%c0_29, %c0_30] : memref<16x1xf32, #tpu.memory_space<vmem>>, vector<16x1xf32>
      tpu.vector_store %arg11[%c0_29, %c0_30], %65 {strides = array<i32>} : memref<16x1xf32, #tpu.memory_space<vmem>>, vector<16x1xf32>,
      %c0_31 = arith.constant 0 : index
      %c0_32 = arith.constant 0 : index
      %67 = vector.load %arg12[%c0_31, %c0_32] : memref<16x1xf32, #tpu.memory_space<vmem>>, vector<16x1xf32>
      %68 = arith.mulf %61, %61 : vector<16x128xf32>
      %cst_33 = arith.constant dense<0.000000e+00> : vector<16xf32>
      %69 = vector.multi_reduction <add>, %68, %cst_33 [1] : vector<16x128xf32> to vector<16xf32>
      %70 = vector.shape_cast %69 : vector<16xf32> to vector<16x1xf32>
      %71 = arith.addf %67, %70 : vector<16x1xf32>
      %c0_34 = arith.constant 0 : index
      %c0_35 = arith.constant 0 : index
      %72 = vector.load %arg12[%c0_34, %c0_35] : memref<16x1xf32, #tpu.memory_space<vmem>>, vector<16x1xf32>
      tpu.vector_store %arg12[%c0_34, %c0_35], %71 {strides = array<i32>} : memref<16x1xf32, #tpu.memory_space<vmem>>, vector<16x1xf32>,
    } else {
    }
    %c0_i32_18 = arith.constant 0 : i32
    %44 = arith.cmpi slt, %arg2, %c0_i32_18 : i32
    %45 = arith.extui %44 : i1 to i32
    %c0_i32_19 = arith.constant 0 : i32
    %46 = arith.cmpi ne, %45, %c0_i32_19 : i32
    scf.if %46 {
      %c0_25 = arith.constant 0 : index
      %c0_26 = arith.constant 0 : index
      %54 = vector.load %arg11[%c0_25, %c0_26] : memref<16x1xf32, #tpu.memory_space<vmem>>, vector<16x1xf32>
      %cst_27 = arith.constant dense<0.000000e+00> : vector<16xf32>
      %55 = vector.multi_reduction <add>, %37, %cst_27 [1] : vector<16x128xf32> to vector<16xf32>
      %56 = vector.shape_cast %55 : vector<16xf32> to vector<16x1xf32>
      %57 = arith.addf %54, %56 : vector<16x1xf32>
      %c0_28 = arith.constant 0 : index
      %c0_29 = arith.constant 0 : index
      %58 = vector.load %arg11[%c0_28, %c0_29] : memref<16x1xf32, #tpu.memory_space<vmem>>, vector<16x1xf32>
      tpu.vector_store %arg11[%c0_28, %c0_29], %57 {strides = array<i32>} : memref<16x1xf32, #tpu.memory_space<vmem>>, vector<16x1xf32>,
      %c0_30 = arith.constant 0 : index
      %c0_31 = arith.constant 0 : index
      %59 = vector.load %arg12[%c0_30, %c0_31] : memref<16x1xf32, #tpu.memory_space<vmem>>, vector<16x1xf32>
      %60 = arith.mulf %37, %37 : vector<16x128xf32>
      %cst_32 = arith.constant dense<0.000000e+00> : vector<16xf32>
      %61 = vector.multi_reduction <add>, %60, %cst_32 [1] : vector<16x128xf32> to vector<16xf32>
      %62 = vector.shape_cast %61 : vector<16xf32> to vector<16x1xf32>
      %63 = arith.addf %59, %62 : vector<16x1xf32>
      %c0_33 = arith.constant 0 : index
      %c0_34 = arith.constant 0 : index
      %64 = vector.load %arg12[%c0_33, %c0_34] : memref<16x1xf32, #tpu.memory_space<vmem>>, vector<16x1xf32>
      tpu.vector_store %arg12[%c0_33, %c0_34], %63 {strides = array<i32>} : memref<16x1xf32, #tpu.memory_space<vmem>>, vector<16x1xf32>,
    } else {
    }
    %c0_i32_20 = arith.constant 0 : i32
    %47 = arith.cmpi eq, %arg2, %c0_i32_20 : i32
    %48 = arith.extui %47 : i1 to i32
    %c0_i32_21 = arith.constant 0 : i32
    %49 = arith.cmpi ne, %48, %c0_i32_21 : i32
    scf.if %49 {
      %c0_25 = arith.constant 0 : index
      %c0_26 = arith.constant 0 : index
      %54 = vector.load %arg11[%c0_25, %c0_26] : memref<16x1xf32, #tpu.memory_space<vmem>>, vector<16x1xf32>
      %c0_27 = arith.constant 0 : index
      %c0_28 = arith.constant 0 : index
      %55 = vector.load %arg12[%c0_27, %c0_28] : memref<16x1xf32, #tpu.memory_space<vmem>>, vector<16x1xf32>
      %cst_29 = arith.constant 0.000000e+00 : f32
      %56 = vector.broadcast %cst_29 : f32 to vector<16x126xf32>
      %57 = tpu.concatenate %54, %55, %56 in 1 : vector<16x1xf32>, vector<16x1xf32>, vector<16x126xf32> -> vector<16x128xf32>
      %c0_30 = arith.constant 0 : index
      %c0_31 = arith.constant 0 : index
      %c0_32 = arith.constant 0 : index
      %58 = vector.load %arg10[%c0_30, %c0_31, %c0_32] : memref<1x16x128xf32, #tpu.memory_space<vmem>>, vector<1x16x128xf32>
      %59 = vector.shape_cast %58 : vector<1x16x128xf32> to vector<16x128xf32>
      %60 = vector.shape_cast %57 : vector<16x128xf32> to vector<1x16x128xf32>
      tpu.vector_store %arg10[%c0_30, %c0_31, %c0_32], %60 {strides = array<i32>} : memref<1x16x128xf32, #tpu.memory_space<vmem>>, vector<1x16x128xf32>,
    } else {
    }
    %50 = arith.truncf %37 : vector<16x128xf32> to vector<16x128xbf16>
    %c0_22 = arith.constant 0 : index
    %c0_23 = arith.constant 0 : index
    %c0_24 = arith.constant 0 : index
    %51 = vector.load %arg9[%c0_22, %c0_23, %c0_24] : memref<1x16x128xbf16, #tpu.memory_space<vmem>>, vector<1x16x128xbf16>
    %52 = vector.shape_cast %51 : vector<1x16x128xbf16> to vector<16x128xbf16>
    %53 = vector.shape_cast %50 : vector<16x128xbf16> to vector<1x16x128xbf16>
    tpu.vector_store %arg9[%c0_22, %c0_23, %c0_24], %53 {strides = array<i32>} : memref<1x16x128xbf16, #tpu.memory_space<vmem>>, vector<1x16x128xbf16>,
    return
  }
  func.func @transform_0(%arg0: i32, %arg1: i32, %arg2: i32) -> (i32, i32, i32) {
    %c0_i32 = arith.constant 0 : i32
    %c0_i32_0 = arith.constant 0 : i32
    return %arg0, %c0_i32, %arg2 : i32, i32, i32
  }
  func.func @transform_1(%arg0: i32, %arg1: i32, %arg2: i32) -> (i32, i32, i32) {
    %c1_i32 = arith.constant 1 : i32
    %0 = arith.addi %arg2, %c1_i32 : i32
    %c1_i32_0 = arith.constant 1 : i32
    %1 = arith.muli %0, %c1_i32_0 : i32
    %c0_i32 = arith.constant 0 : i32
    %c0_i32_1 = arith.constant 0 : i32
    return %arg0, %c0_i32, %1 : i32, i32, i32
  }
  func.func @transform_2(%arg0: i32, %arg1: i32, %arg2: i32) -> (i32, i32, i32) {
    %c0_i32 = arith.constant 0 : i32
    %c0_i32_0 = arith.constant 0 : i32
    return %arg0, %c0_i32, %arg2 : i32, i32, i32
  }
  func.func @transform_3(%arg0: i32, %arg1: i32, %arg2: i32) -> (i32, i32, i32) {
    %c1_i32 = arith.constant 1 : i32
    %0 = arith.addi %arg2, %c1_i32 : i32
    %c1_i32_0 = arith.constant 1 : i32
    %1 = arith.muli %0, %c1_i32_0 : i32
    %c0_i32 = arith.constant 0 : i32
    %c0_i32_1 = arith.constant 0 : i32
    return %arg0, %c0_i32, %1 : i32, i32, i32
  }
  func.func @transform_4(%arg0: i32, %arg1: i32, %arg2: i32) -> (i32, i32) {
    %c0_i32 = arith.constant 0 : i32
    %c0_i32_0 = arith.constant 0 : i32
    return %arg1, %c0_i32 : i32, i32
  }
  func.func @transform_5(%arg0: i32, %arg1: i32, %arg2: i32) -> (i32, i32) {
    %c0_i32 = arith.constant 0 : i32
    %c0_i32_0 = arith.constant 0 : i32
    return %arg1, %c0_i32 : i32, i32
  }
  func.func @transform_6(%arg0: i32, %arg1: i32, %arg2: i32) -> (i32, i32, i32) {
    %c0_i32 = arith.constant 0 : i32
    return %arg0, %arg1, %arg2 : i32, i32, i32
  }
  func.func @transform_7(%arg0: i32, %arg1: i32, %arg2: i32) -> (i32, i32, i32) {
    %c0_i32 = arith.constant 0 : i32
    %c0_i32_0 = arith.constant 0 : i32
    return %arg0, %arg1, %c0_i32 : i32, i32, i32
  }
}

module attributes {stable_mosaic.version = 11 : i64} {
  func.func @_conv_kernel(%arg0: i32, %arg1: i32, %arg2: i32, %arg3: memref<1x1x128xbf16, #tpu.memory_space<vmem>>, %arg4: memref<1x1x128xbf16, #tpu.memory_space<vmem>>, %arg5: memref<1x8x128xbf16, #tpu.memory_space<vmem>>, %arg6: memref<1x8x128xbf16, #tpu.memory_space<vmem>>, %arg7: memref<16x9xbf16, #tpu.memory_space<vmem>>, %arg8: memref<16x1xf32, #tpu.memory_space<vmem>>, %arg9: memref<1x16x128xf32, #tpu.memory_space<vmem>>) attributes {dimension_semantics = [#tpu.dimension_semantics<parallel>, #tpu.dimension_semantics<parallel>, #tpu.dimension_semantics<parallel>], iteration_bounds = array<i64: 2, 1, 1>, scalar_prefetch = 0 : i64, scratch_operands = 0 : i64, tpu.core_type = #tpu.core_type<tc>, window_params = [{transform_indices = @transform_0, window_bounds = array<i64: 1, 1, 128>}, {transform_indices = @transform_1, window_bounds = array<i64: 1, 1, 128>}, {transform_indices = @transform_2, window_bounds = array<i64: 1, 8, 128>}, {transform_indices = @transform_3, window_bounds = array<i64: 1, 8, 128>}, {transform_indices = @transform_4, window_bounds = array<i64: 16, 9>}, {transform_indices = @transform_5, window_bounds = array<i64: 16, 1>}, {transform_indices = @transform_6, window_bounds = array<i64: 1, 16, 128>}]} {
    %c0 = arith.constant 0 : index
    %c0_0 = arith.constant 0 : index
    %c0_1 = arith.constant 0 : index
    %0 = vector.load %arg3[%c0, %c0_0, %c0_1] : memref<1x1x128xbf16, #tpu.memory_space<vmem>>, vector<1x1x128xbf16>
    %1 = vector.shape_cast %0 : vector<1x1x128xbf16> to vector<1x128xbf16>
    %c0_2 = arith.constant 0 : index
    %c0_3 = arith.constant 0 : index
    %c0_4 = arith.constant 0 : index
    %2 = vector.load %arg5[%c0_2, %c0_3, %c0_4] : memref<1x8x128xbf16, #tpu.memory_space<vmem>>, vector<1x8x128xbf16>
    %3 = vector.shape_cast %2 : vector<1x8x128xbf16> to vector<8x128xbf16>
    %4 = tpu.concatenate %1, %3 in 0 : vector<1x128xbf16>, vector<8x128xbf16> -> vector<9x128xbf16>
    %c0_5 = arith.constant 0 : index
    %c0_6 = arith.constant 0 : index
    %5 = vector.load %arg7[%c0_5, %c0_6] : memref<16x9xbf16, #tpu.memory_space<vmem>>, vector<16x9xbf16>
    %cst = arith.constant dense<0.000000e+00> : vector<16x128xf32>
    %6 = tpu.matmul %5, %4, %cst {dimension_numbers = #tpu.dot_dimension_numbers<[1], [0], [0], [1], [0, 0, 1, 1], [], []>} : vector<16x9xbf16>, vector<9x128xbf16>, vector<16x128xf32> -> vector<16x128xf32>
    %c0_7 = arith.constant 0 : index
    %c0_8 = arith.constant 0 : index
    %7 = vector.load %arg8[%c0_7, %c0_8] : memref<16x1xf32, #tpu.memory_space<vmem>>, vector<16x1xf32>
    %8 = vector.broadcast %7 : vector<16x1xf32> to vector<16x128xf32>
    %9 = arith.addf %6, %8 : vector<16x128xf32>
    %10 = math.tanh %9 : vector<16x128xf32>
    %c0_9 = arith.constant 0 : index
    %c0_10 = arith.constant 0 : index
    %c0_11 = arith.constant 0 : index
    %11 = vector.load %arg9[%c0_9, %c0_10, %c0_11] : memref<1x16x128xf32, #tpu.memory_space<vmem>>, vector<1x16x128xf32>
    %12 = vector.shape_cast %11 : vector<1x16x128xf32> to vector<16x128xf32>
    %13 = vector.shape_cast %10 : vector<16x128xf32> to vector<1x16x128xf32>
    tpu.vector_store %arg9[%c0_9, %c0_10, %c0_11], %13 {strides = array<i32>} : memref<1x16x128xf32, #tpu.memory_space<vmem>>, vector<1x16x128xf32>,
    return
  }
  func.func @transform_0(%arg0: i32, %arg1: i32, %arg2: i32) -> (i32, i32, i32) {
    %c0_i32 = arith.constant 0 : i32
    %c0_i32_0 = arith.constant 0 : i32
    return %arg0, %c0_i32, %arg2 : i32, i32, i32
  }
  func.func @transform_1(%arg0: i32, %arg1: i32, %arg2: i32) -> (i32, i32, i32) {
    %c1_i32 = arith.constant 1 : i32
    %0 = arith.addi %arg2, %c1_i32 : i32
    %c1_i32_0 = arith.constant 1 : i32
    %1 = arith.muli %0, %c1_i32_0 : i32
    %c0_i32 = arith.constant 0 : i32
    %c0_i32_1 = arith.constant 0 : i32
    return %arg0, %c0_i32, %1 : i32, i32, i32
  }
  func.func @transform_2(%arg0: i32, %arg1: i32, %arg2: i32) -> (i32, i32, i32) {
    %c0_i32 = arith.constant 0 : i32
    %c0_i32_0 = arith.constant 0 : i32
    return %arg0, %c0_i32, %arg2 : i32, i32, i32
  }
  func.func @transform_3(%arg0: i32, %arg1: i32, %arg2: i32) -> (i32, i32, i32) {
    %c1_i32 = arith.constant 1 : i32
    %0 = arith.addi %arg2, %c1_i32 : i32
    %c1_i32_0 = arith.constant 1 : i32
    %1 = arith.muli %0, %c1_i32_0 : i32
    %c0_i32 = arith.constant 0 : i32
    %c0_i32_1 = arith.constant 0 : i32
    return %arg0, %c0_i32, %1 : i32, i32, i32
  }
  func.func @transform_4(%arg0: i32, %arg1: i32, %arg2: i32) -> (i32, i32) {
    %c0_i32 = arith.constant 0 : i32
    %c0_i32_0 = arith.constant 0 : i32
    return %arg1, %c0_i32 : i32, i32
  }
  func.func @transform_5(%arg0: i32, %arg1: i32, %arg2: i32) -> (i32, i32) {
    %c0_i32 = arith.constant 0 : i32
    %c0_i32_0 = arith.constant 0 : i32
    return %arg1, %c0_i32 : i32, i32
  }
  func.func @transform_6(%arg0: i32, %arg1: i32, %arg2: i32) -> (i32, i32, i32) {
    %c0_i32 = arith.constant 0 : i32
    return %arg0, %arg1, %arg2 : i32, i32, i32
  }
}

</mosaic_0001>

<llo_original>
// kernel: waveunet_forward.12
$region0: #{waveunet_forward.12}
  #allocation0 [shape = 'u32[]', space=smem, size = 0x4, offset = 0x4, fixed_abs, tag = 'smem constant byte address 0x4 - core index']
  #allocation1 [shape = 'u32[144,128]{1,0:T(1,128)}', space=vmem, size = 0x12000, scoped, tag = 'internal scratch']
  %s0 = inlined_call_operand.vmem [shape: bf16[2,16,256], index: 0, kind: input, shape index: {}]
  %s1 = inlined_call_operand.vmem [shape: f32[16,1], index: 1, kind: input, shape index: {}]
  %s2 = inlined_call_operand.vmem [shape: f32[16,1], index: 2, kind: input, shape index: {}]
  %s3 = inlined_call_operand.vmem [shape: bf16[2,16,256], index: 3, kind: output, shape index: {}]
  %s4 = sld [smem:[#allocation0]]
  $region45: #{waveunet_forward.12} parent=0
    _
  %s6 = ssub.s32 1, %s4
  %s7 = scalar_select 0, %s6, %s4
  loop: start=0, step=1, limit=4
  $region2: #{waveunet_forward.12} parent=0 // loop_pre_header
    _
  $region3: #{waveunet_forward.12} parent=0 // loop_header
    %s9 = sphi 0, %s13
    %p10 = scmp.ge.s32.totalorder %s9, 4
    %s16 = sphi 0, %s35
    %s17 = sphi 0, %s31
    %s18 = sphi 0, %s27
    %s19 = sphi 0, %s16
    %s20 = sphi 0, %s17
    %s21 = sphi 0, %s18
    %s22 = sphi 0, %s19
    %s23 = sphi 0, %s20
    %s24 = sphi 0, %s21
    %s42 = sphi 0, %s44
    %s45 = sphi 0, %s42
    %s46 = sphi 0, %s45
    %s62 = sphi 0, %s46
    %s68 = sphi 0, %s70
    %s71 = sphi 0, %s68
    %s72 = sphi 0, %s71
    %s88 = sphi 0, %s72
    %s94 = sphi 0, %s96
    %s97 = sphi 0, %s94
    %s98 = sphi 0, %s97
    %s114 = sphi 0, %s98
    %s124 = sphi 0, %s126
    %s127 = sphi 0, %s124
    %s128 = sphi 0, %s127
    %s144 = sphi 0, %s128
  $region4: #{waveunet_forward.12} parent=0 // loop_header_branch
    %12 = sbr.rel (%p10) target = $region8
  $region5: #{waveunet_forward.12} parent=0 // loop_body
    %s14 = ssub.s32 %s9, 1
    %s15 = ssub.s32 %s9, 2
    %s25 = sadd.s32 1, %s18
    %p26 = scmp.ge.s32.totalorder %s25, 1
    %s27 = scalar_select %p26, 0, %s25
    %s28 = sadd.s32 1, %s17
    %s29 = scalar_select %p26, %s28, %s17
    %p30 = scmp.ge.s32.totalorder %s29, 1
    %s31 = scalar_select %p30, 0, %s29
    %s32 = sadd.s32 1, %s16
    %s33 = scalar_select %p30, %s32, %s16
    %p34 = scmp.ge.s32.totalorder %s33, 2
    %s35 = scalar_select %p34, 0, %s33
    %s36 = ssub.s32 %s16, %s35
    %s37 = ssub.s32 %s17, %s31
    %s38 = sor.u32 %s36, %s37
    %s39 = ssub.s32 %s18, %s27
    %s40 = sor.u32 %s38, %s39
    %p41 = scmp.eq.s32.totalorder %s40, 0
    %s43 = sadd.s32 %s42, 1
    %s44 = scalar_select %p41, %s42, %s43
    %p47 = pneg %p41
    %p48 = scmp.eq.s32.totalorder %s9, 1
    %p49 = por %p47, %p48
    %p50 = scmp.ne.s32.totalorder %s42, %s45
    %p51 = scmp.eq.s32.totalorder %s9, 0
    %p52 = por %p50, %p51
    %p53 = scmp.ne.s32.totalorder %s42, %s45
    %p54 = scmp.eq.s32.totalorder %s14, 1
    %p55 = por %p53, %p54
    %p56 = scmp.ne.s32.totalorder %s45, %s46
    %p57 = scmp.eq.s32.totalorder %s14, 0
    %p58 = por %p56, %p57
    %p59 = scmp.ne.s32.totalorder %s45, %s46
    %p60 = scmp.eq.s32.totalorder %s15, 1
    %p61 = por %p59, %p60
    %p63 = scmp.ne.s32.totalorder %s46, %s62
    %p64 = scmp.eq.s32.totalorder %s15, 0
    %p65 = por %p63, %p64
    %s66 = ssub.s32 %s17, %s31
    %p67 = scmp.eq.s32.totalorder %s66, 0
    %s69 = sadd.s32 %s68, 1
    %s70 = scalar_select %p67, %s68, %s69
    %p73 = pneg %p67
    %p74 = scmp.eq.s32.totalorder %s9, 1
    %p75 = por %p73, %p74
    %p76 = scmp.ne.s32.totalorder %s68, %s71
    %p77 = scmp.eq.s32.totalorder %s9, 0
    %p78 = por %p76, %p77
    %p79 = scmp.ne.s32.totalorder %s68, %s71
    %p80 = scmp.eq.s32.totalorder %s14, 1
    %p81 = por %p79, %p80
    %p82 = scmp.ne.s32.totalorder %s71, %s72
    %p83 = scmp.eq.s32.totalorder %s14, 0
    %p84 = por %p82, %p83
    %p85 = scmp.ne.s32.totalorder %s71, %s72
    %p86 = scmp.eq.s32.totalorder %s15, 1
    %p87 = por %p85, %p86
    %p89 = scmp.ne.s32.totalorder %s72, %s88
    %p90 = scmp.eq.s32.totalorder %s15, 0
    %p91 = por %p89, %p90
    %s92 = ssub.s32 %s17, %s31
    %p93 = scmp.eq.s32.totalorder %s92, 0
    %s95 = sadd.s32 %s94, 1
    %s96 = scalar_select %p93, %s94, %s95
    %p99 = pneg %p93
    %p100 = scmp.eq.s32.totalorder %s9, 1
    %p101 = por %p99, %p100
    %p102 = scmp.ne.s32.totalorder %s94, %s97
    %p103 = scmp.eq.s32.totalorder %s9, 0
    %p104 = por %p102, %p103
    %p105 = scmp.ne.s32.totalorder %s94, %s97
    %p106 = scmp.eq.s32.totalorder %s14, 1
    %p107 = por %p105, %p106
    %p108 = scmp.ne.s32.totalorder %s97, %s98
    %p109 = scmp.eq.s32.totalorder %s14, 0
    %p110 = por %p108, %p109
    %p111 = scmp.ne.s32.totalorder %s97, %s98
    %p112 = scmp.eq.s32.totalorder %s15, 1
    %p113 = por %p111, %p112
    %p115 = scmp.ne.s32.totalorder %s98, %s114
    %p116 = scmp.eq.s32.totalorder %s15, 0
    %p117 = por %p115, %p116
    %s118 = ssub.s32 %s16, %s35
    %s119 = ssub.s32 %s17, %s31
    %s120 = sor.u32 %s118, %s119
    %s121 = ssub.s32 %s18, %s27
    %s122 = sor.u32 %s120, %s121
    %p123 = scmp.eq.s32.totalorder %s122, 0
    %s125 = sadd.s32 %s124, 1
    %s126 = scalar_select %p123, %s124, %s125
    %p129 = pneg %p123
    %p130 = scmp.eq.s32.totalorder %s9, 1
    %p131 = por %p129, %p130
    %p132 = scmp.ne.s32.totalorder %s124, %s127
    %p133 = scmp.eq.s32.totalorder %s9, 0
    %p134 = por %p132, %p133
    %p135 = scmp.ne.s32.totalorder %s124, %s127
    %p136 = scmp.eq.s32.totalorder %s14, 1
    %p137 = por %p135, %p136
    %p138 = scmp.ne.s32.totalorder %s127, %s128
    %p139 = scmp.eq.s32.totalorder %s14, 0
    %p140 = por %p138, %p139
    %p141 = scmp.ne.s32.totalorder %s127, %s128
    %p142 = scmp.eq.s32.totalorder %s15, 1
    %p143 = por %p141, %p142
    %p145 = scmp.ne.s32.totalorder %s128, %s144
    %p146 = scmp.eq.s32.totalorder %s15, 0
    %p147 = por %p145, %p146
    %p148 = scmp.le.s32.totalorder 1, %s9
    %p149 = scmp.lt.s32.totalorder %s9, 3
    %p150 = pnand %p148, %p149
    %p151 = pneg %p150
    // Predicated region
    $region9: #{waveunet_forward.12} parent=5 // pred_check
      _
    $region10: #{waveunet_forward.12} parent=5 // pred_check_branch
      %153 = sbr.rel (%p150) target = $region12
    $region11: #{waveunet_forward.12} parent=5 // pred_region
      %s154 = ssub.s32 %s9, 1
      // Predicated region
      $region13: #{waveunet_forward.12} parent=11 // pred_check
        %p155 = pneg %p84
      $region14: #{waveunet_forward.12} parent=11 // pred_check_branch
        %157 = sbr.rel (%p155) target = $region16
      $region15: #{waveunet_forward.12} parent=11 // pred_region
        %s158 = smul.u32 2, %s20
        %p159 = scmp.lt.s32.totalorder %s158, 1
        %s160 = scalar_select %p159, %s158, 1
        %s161 = smul.addr %s160, 8
        %s162 = scalar_lea.vmem %s1, %s161
        %s163 = smul.u32 2, %s20
      $region16: #{waveunet_forward.12} parent=11 // pred_fallthru
        _
      // Predicated region
      $region17: #{waveunet_forward.12} parent=11 // pred_check
        %p164 = pneg %p110
      $region18: #{waveunet_forward.12} parent=11 // pred_check_branch
        %166 = sbr.rel (%p164) target = $region20
      $region19: #{waveunet_forward.12} parent=11 // pred_region
        %s167 = smul.u32 2, %s20
        %p168 = scmp.lt.s32.totalorder %s167, 1
        %s169 = scalar_select %p168, %s167, 1
        %s170 = smul.addr %s169, 8
        %s171 = scalar_lea.vmem %s2, %s170
        %s172 = smul.u32 2, %s20
      $region20: #{waveunet_forward.12} parent=11 // pred_fallthru
        _
    $region12: #{waveunet_forward.12} parent=5 // pred_fallthru
      _
    %p173 = scmp.lt.s32.totalorder %s9, 2
    // Predicated region
    $region21: #{waveunet_forward.12} parent=5 // pred_check
      %p174 = pneg %p173
    $region22: #{waveunet_forward.12} parent=5 // pred_check_branch
      %176 = sbr.rel (%p174) target = $region24
    $region23: #{waveunet_forward.12} parent=5 // pred_region
      // Predicated region
      $region25: #{waveunet_forward.12} parent=23 // pred_check
        %p177 = pneg %p52
      $region26: #{waveunet_forward.12} parent=23 // pred_check_branch
        %179 = sbr.rel (%p177) target = $region28
      $region27: #{waveunet_forward.12} parent=23 // pred_region
        %s180 = smul.u32 2, %s17
        %s181 = smul.u32 2, %s18
        %p182 = scmp.lt.s32.totalorder %s16, 1
        %s183 = scalar_select %p182, %s16, 1
        %p184 = scmp.lt.s32.totalorder %s180, 1
        %s185 = scalar_select %p184, %s180, 1
        %p186 = scmp.lt.s32.totalorder %s181, 1
        %s187 = scalar_select %p186, %s181, 1
        %s188 = smul.addr %s185, 2
        %s189 = sadd.s32 %s187, %s188
        %s190 = smul.addr %s183, 4
        %s191 = sadd.s32 %s189, %s190
        %s192 = smul.addr %s191, 4
        %s193 = scalar_lea.vmem %s0, %s192
        %s194 = smul.u32 2, %s17
        %s195 = smul.u32 2, %s18
      $region28: #{waveunet_forward.12} parent=23 // pred_fallthru
        _
    $region24: #{waveunet_forward.12} parent=5 // pred_fallthru
      _
    %p196 = scmp.le.s32.totalorder 1, %s9
    %p197 = scmp.lt.s32.totalorder %s9, 3
    %p198 = pnand %p196, %p197
    %p199 = pneg %p198
    // Predicated region
    $region29: #{waveunet_forward.12} parent=5 // pred_check
      _
    $region30: #{waveunet_forward.12} parent=5 // pred_check_branch
      %201 = sbr.rel (%p198) target = $region32
    $region31: #{waveunet_forward.12} parent=5 // pred_region
      %s202 = ssub.s32 %s9, 1
      %s203 = smul.u32 2, %s20
      %s204 = smul.u32 2, %s21
      %p205 = scmp.lt.s32.totalorder %s19, 1
      %s206 = scalar_select %p205, %s19, 1
      %p207 = scmp.lt.s32.totalorder %s203, 1
      %s208 = scalar_select %p207, %s203, 1
      %p209 = scmp.lt.s32.totalorder %s204, 1
      %s210 = scalar_select %p209, %s204, 1
      %s211 = smul.addr %s208, 2
      %s212 = sadd.s32 %s210, %s211
      %s213 = smul.addr %s206, 4
      %s214 = sadd.s32 %s212, %s213
      %s215 = smul.addr %s214, 4
      %s216 = scalar_lea.vmem %s0, %s215
      %p217 = pneg %p58
      %p218 = pneg %p55
      %s219 = smul.u32 2, %s20
      %p220 = scmp.lt.s32.totalorder %s219, 1
      %s221 = scalar_select %p220, %s219, 1
      %s222 = smul.addr %s221, 8
      %s223 = scalar_lea.vmem %s1, %s222
      %p224 = pneg %p84
      %p225 = pneg %p81
      %s226 = smul.u32 2, %s20
      %p227 = scmp.lt.s32.totalorder %s226, 1
      %s228 = scalar_select %p227, %s226, 1
      %s229 = smul.addr %s228, 8
      %s230 = scalar_lea.vmem %s2, %s229
      %p231 = pneg %p110
      %p232 = pneg %p107
      %p233 = pneg %p140
      %p234 = pneg %p137
      %s235 = smul.u32 2, %s20
      %s236 = smul.u32 2, %s21
      %p237 = scmp.lt.s32.totalorder %s19, 1
      %s238 = scalar_select %p237, %s19, 1
      %p239 = scmp.lt.s32.totalorder %s235, 1
      %s240 = scalar_select %p239, %s235, 1
      %p241 = scmp.lt.s32.totalorder %s236, 1
      %s242 = scalar_select %p241, %s236, 1
      %s243 = smul.addr %s240, 2
      %s244 = sadd.s32 %s242, %s243
      %s245 = smul.addr %s238, 4
      %s246 = sadd.s32 %s244, %s245
      %s247 = smul.addr %s246, 4
      %s248 = scalar_lea.vmem %s3, %s247
      %s249 = smul.u32 2, %s20
      %s250 = smul.u32 2, %s21
      %p251 = scmp.lt.s32.totalorder %s19, 1
      %s252 = scalar_select %p251, %s19, 1
      %p253 = scmp.lt.s32.totalorder %s249, 1
      %s254 = scalar_select %p253, %s249, 1
      %p255 = scmp.lt.s32.totalorder %s250, 1
      %s256 = scalar_select %p255, %s250, 1
      %s257 = smul.addr %s254, 2
      %s258 = sadd.s32 %s256, %s257
      %s259 = smul.addr %s252, 4
      %s260 = sadd.s32 %s258, %s259
      %s261 = smul.addr %s260, 4
      %s262 = scalar_lea.vmem %s0, %s261
      %s263 = smul.u32 2, %s20
      %s264 = smul.u32 2, %s21
      %s265 = smul.u32 2, %s20
      %p266 = scmp.lt.s32.totalorder %s265, 1
      %s267 = scalar_select %p266, %s265, 1
      %s268 = smul.addr %s267, 8
      %s269 = scalar_lea.vmem %s1, %s268
      %s270 = smul.u32 2, %s20
      %s271 = smul.u32 2, %s20
      %p272 = scmp.lt.s32.totalorder %s271, 1
      %s273 = scalar_select %p272, %s271, 1
      %s274 = smul.addr %s273, 8
      %s275 = scalar_lea.vmem %s2, %s274
      %s276 = smul.u32 2, %s20
      %s277 = smul.u32 2, %s20
      %s278 = smul.u32 2, %s21
      %p279 = scmp.lt.s32.totalorder %s19, 1
      %s280 = scalar_select %p279, %s19, 1
      %p281 = scmp.lt.s32.totalorder %s277, 1
      %s282 = scalar_select %p281, %s277, 1
      %p283 = scmp.lt.s32.totalorder %s278, 1
      %s284 = scalar_select %p283, %s278, 1
      %s285 = smul.addr %s282, 2
      %s286 = sadd.s32 %s284, %s285
      %s287 = smul.addr %s280, 4
      %s288 = sadd.s32 %s286, %s287
      %s289 = smul.addr %s288, 4
      %s290 = scalar_lea.vmem %s3, %s289
      %s291 = smul.u32 2, %s20
      %s292 = smul.u32 2, %s21
      %v293 = vld [vmem:[%s262] sm:$0xff]
      %v294 = vld [vmem:[%s262 + $0x8] sm:$0xff]
      %v295 = vunpack.c.l.bf16 %v293
      %v296 = vunpack.c.h.bf16 %v293
      %v297 = vunpack.c.l.bf16 %v294
      %v298 = vunpack.c.h.bf16 %v294
      %v299 = vld [vmem:[%s269] sm:$0xff]
      %v300 = vld [vmem:[%s269 + $0x8] sm:$0xff]
      %302 = vset.pattern.permute.xlu0 0
      %303 = vperm.xlu0 %302, %v299
      %v304 = vpop.permute.xlu0 %303
      %307 = vset.pattern.permute.xlu0 0
      %308 = vperm.xlu0 %307, %v300
      %v309 = vpop.permute.xlu0 %308
      %v311 = vmul.f32 %v295, %v304
      %v312 = vmul.f32 %v296, %v304
      %v313 = vmul.f32 %v297, %v309
      %v314 = vmul.f32 %v298, %v309
      %v315 = vld [vmem:[%s275] sm:$0xff]
      %v316 = vld [vmem:[%s275 + $0x8] sm:$0xff]
      %318 = vset.pattern.permute.xlu0 0
      %319 = vperm.xlu0 %318, %v315
      %v320 = vpop.permute.xlu0 %319
      %323 = vset.pattern.permute.xlu0 0
      %324 = vperm.xlu0 %323, %v316
      %v325 = vpop.permute.xlu0 %324
      %v327 = vadd.f32 %v311, %v320
      %v328 = vadd.f32 %v312, %v320
      %v329 = vadd.f32 %v313, %v325
      %v330 = vadd.f32 %v314, %v325
      %vm331 = vcmp.gt.f32.partialorder %v327, 0.0
      %vm332 = vcmp.gt.f32.partialorder %v328, 0.0
      %vm333 = vcmp.gt.f32.partialorder %v329, 0.0
      %vm334 = vcmp.gt.f32.partialorder %v330, 0.0
      %v335 = vmul.f32 %v327, 0.01
      %v336 = vmul.f32 %v328, 0.01
      %v337 = vmul.f32 %v329, 0.01
      %v338 = vmul.f32 %v330, 0.01
      %v339 = vsel %vm331, %v327, %v335
      %v340 = vsel %vm332, %v328, %v336
      %v341 = vsel %vm333, %v329, %v337
      %v342 = vsel %vm334, %v330, %v338
      %v343 = vpack.c.bf16 %v341, %v339
      %v344 = vpack.c.bf16 %v342, %v340
      %v347 = vunpack.c.l.b16 %v343
      %v348 = vunpack.c.l.b16 %v344
      %v349 = vunpack.c.h.b16 %v343
      %v350 = vunpack.c.h.b16 %v344
      %v351 = vpack.c.b16 %v348, %v347
      %v352 = vpack.c.b16 %v350, %v349
      %355 = vst [vmem:[%s290] sm:$0xff] %v351
      %356 = vst [vmem:[%s290 + $0x8] sm:$0xff] %v352
      %s357 = smul.u32 2, %s20
      %s358 = smul.u32 2, %s21
      %p359 = scmp.lt.s32.totalorder %s19, 1
      %s360 = scalar_select %p359, %s19, 1
      %p361 = scmp.lt.s32.totalorder %s357, 1
      %s362 = scalar_select %p361, %s357, 1
      %p363 = scmp.lt.s32.totalorder %s358, 1
      %s364 = scalar_select %p363, %s358, 1
      %s365 = smul.addr %s362, 2
      %s366 = sadd.s32 %s364, %s365
      %s367 = smul.addr %s360, 4
      %s368 = sadd.s32 %s366, %s367
      %s369 = smul.addr %s368, 4
      %s370 = scalar_lea.vmem %s3, %s369
      // Predicated region
      $region33: #{waveunet_forward.12} parent=31 // pred_check
        %p371 = pneg %p137
      $region34: #{waveunet_forward.12} parent=31 // pred_check_branch
        %373 = sbr.rel (%p371) target = $region36
      $region35: #{waveunet_forward.12} parent=31 // pred_region
        %s374 = smul.u32 2, %s20
        %s375 = smul.u32 2, %s21
      $region36: #{waveunet_forward.12} parent=31 // pred_fallthru
        _
    $region32: #{waveunet_forward.12} parent=5 // pred_fallthru
      _
    %p376 = scmp.le.s32.totalorder 2, %s9
    // Predicated region
    $region37: #{waveunet_forward.12} parent=5 // pred_check
      %p377 = pneg %p376
    $region38: #{waveunet_forward.12} parent=5 // pred_check_branch
      %379 = sbr.rel (%p377) target = $region40
    $region39: #{waveunet_forward.12} parent=5 // pred_region
      %s380 = ssub.s32 %s9, 2
      // Predicated region
      $region41: #{waveunet_forward.12} parent=39 // pred_check
        %p381 = pneg %p143
      $region42: #{waveunet_forward.12} parent=39 // pred_check_branch
        %383 = sbr.rel (%p381) target = $region44
      $region43: #{waveunet_forward.12} parent=39 // pred_region
        %s384 = smul.u32 2, %s23
        %s385 = smul.u32 2, %s24
        %p386 = scmp.lt.s32.totalorder %s22, 1
        %s387 = scalar_select %p386, %s22, 1
        %p388 = scmp.lt.s32.totalorder %s384, 1
        %s389 = scalar_select %p388, %s384, 1
        %p390 = scmp.lt.s32.totalorder %s385, 1
        %s391 = scalar_select %p390, %s385, 1
        %s392 = smul.addr %s389, 2
        %s393 = sadd.s32 %s391, %s392
        %s394 = smul.addr %s387, 4
        %s395 = sadd.s32 %s393, %s394
        %s396 = smul.addr %s395, 4
        %s397 = scalar_lea.vmem %s3, %s396
      $region44: #{waveunet_forward.12} parent=39 // pred_fallthru
        _
    $region40: #{waveunet_forward.12} parent=5 // pred_fallthru
      _
  $region6: #{waveunet_forward.12} parent=0 // loop_footer
    %s13 = sadd.s32 1, %s9
  $region7: #{waveunet_forward.12} parent=0 // loop_footer_branch
    %8 = sbr.rel target = $region3
  $region8: #{waveunet_forward.12} parent=0 // loop_exit
    _

// kernel: waveunet_forward.11
$region0: #{waveunet_forward.11}
  #allocation0 [shape = 'u32[]', space=smem, size = 0x4, offset = 0x4, fixed_abs, tag = 'smem constant byte address 0x4 - core index']
  #allocation1 [shape = 'u32[144,128]{1,0:T(1,128)}', space=vmem, size = 0x12000, scoped, tag = 'internal scratch']
  #allocation2 [shape = 'f32[16,1]{1,0:T(8,128)}', space=vmem, size = 0x2000, scoped, tag = 'scratch operand']
  #allocation3 [shape = 'f32[16,1]{1,0:T(8,128)}', space=vmem, size = 0x2000, scoped, tag = 'scratch operand']
  %s0 = inlined_call_operand.vmem [shape: bf16[2,1,512], index: 0, kind: input, shape index: {}, may-alias: {0,1}]
  %s1 = inlined_call_operand.vmem [shape: bf16[2,1,512], index: 1, kind: input, shape index: {}, may-alias: {0,1}]
  %s2 = inlined_call_operand.vmem [shape: bf16[16,15], index: 2, kind: input, shape index: {}]
  %s3 = inlined_call_operand.vmem [shape: f32[16,1], index: 3, kind: input, shape index: {}]
  %s4 = inlined_call_operand.vmem [shape: bf16[2,16,256], index: 4, kind: output, shape index: {0}]
  %s5 = inlined_call_operand.vmem [shape: f32[2,16,128], index: 5, kind: output, shape index: {1}]
  %6 = xla_tuple %s4, %s5
  %s7 = sld [smem:[#allocation0]]
  $region69: #{waveunet_forward.11} parent=0
    _
  %s9 = ssub.s32 1, %s7
  %s10 = scalar_select 0, %s9, %s7
  loop: start=0, step=1, limit=4
  $region2: #{waveunet_forward.11} parent=0 // loop_pre_header
    _
  $region3: #{waveunet_forward.11} parent=0 // loop_header
    %s12 = sphi 0, %s16
    %p13 = scmp.ge.s32.totalorder %s12, 4
    %s19 = sphi 0, %s38
    %s20 = sphi 0, %s34
    %s21 = sphi 0, %s30
    %s22 = sphi 0, %s19
    %s23 = sphi 0, %s20
    %s24 = sphi 0, %s21
    %s25 = sphi 0, %s22
    %s26 = sphi 0, %s23
    %s27 = sphi 0, %s24
    %s43 = sphi 0, %s45
    %s46 = sphi 0, %s43
    %s47 = sphi 0, %s46
    %s63 = sphi 0, %s47
    %s75 = sphi 0, %s77
    %s78 = sphi 0, %s75
    %s79 = sphi 0, %s78
    %s95 = sphi 0, %s79
    %s101 = sphi 0, %s103
    %s104 = sphi 0, %s101
    %s105 = sphi 0, %s104
    %s121 = sphi 0, %s105
    %s127 = sphi 0, %s129
    %s130 = sphi 0, %s127
    %s131 = sphi 0, %s130
    %s147 = sphi 0, %s131
    %s157 = sphi 0, %s159
    %s160 = sphi 0, %s157
    %s161 = sphi 0, %s160
    %s177 = sphi 0, %s161
    %s185 = sphi 0, %s187
    %s188 = sphi 0, %s185
    %s189 = sphi 0, %s188
    %s205 = sphi 0, %s189
  $region4: #{waveunet_forward.11} parent=0 // loop_header_branch
    %15 = sbr.rel (%p13) target = $region8
  $region5: #{waveunet_forward.11} parent=0 // loop_body
    %s17 = ssub.s32 %s12, 1
    %s18 = ssub.s32 %s12, 2
    %s28 = sadd.s32 1, %s21
    %p29 = scmp.ge.s32.totalorder %s28, 1
    %s30 = scalar_select %p29, 0, %s28
    %s31 = sadd.s32 1, %s20
    %s32 = scalar_select %p29, %s31, %s20
    %p33 = scmp.ge.s32.totalorder %s32, 1
    %s34 = scalar_select %p33, 0, %s32
    %s35 = sadd.s32 1, %s19
    %s36 = scalar_select %p33, %s35, %s19
    %p37 = scmp.ge.s32.totalorder %s36, 2
    %s38 = scalar_select %p37, 0, %s36
    %s39 = ssub.s32 %s19, %s38
    %s40 = ssub.s32 %s21, %s30
    %s41 = sor.u32 %s39, %s40
    %p42 = scmp.eq.s32.totalorder %s41, 0
    %s44 = sadd.s32 %s43, 1
    %s45 = scalar_select %p42, %s43, %s44
    %p48 = pneg %p42
    %p49 = scmp.eq.s32.totalorder %s12, 1
    %p50 = por %p48, %p49
    %p51 = scmp.ne.s32.totalorder %s43, %s46
    %p52 = scmp.eq.s32.totalorder %s12, 0
    %p53 = por %p51, %p52
    %p54 = scmp.ne.s32.totalorder %s43, %s46
    %p55 = scmp.eq.s32.totalorder %s17, 1
    %p56 = por %p54, %p55
    %p57 = scmp.ne.s32.totalorder %s46, %s47
    %p58 = scmp.eq.s32.totalorder %s17, 0
    %p59 = por %p57, %p58
    %p60 = scmp.ne.s32.totalorder %s46, %s47
    %p61 = scmp.eq.s32.totalorder %s18, 1
    %p62 = por %p60, %p61
    %p64 = scmp.ne.s32.totalorder %s47, %s63
    %p65 = scmp.eq.s32.totalorder %s18, 0
    %p66 = por %p64, %p65
    %s67 = sadd.s32 %s21, 1
    %s68 = smul.u32 %s67, 2
    %s69 = sadd.s32 %s30, 1
    %s70 = smul.u32 %s69, 2
    %s71 = ssub.s32 %s19, %s38
    %s72 = ssub.s32 %s68, %s70
    %s73 = sor.u32 %s71, %s72
    %p74 = scmp.eq.s32.totalorder %s73, 0
    %s76 = sadd.s32 %s75, 1
    %s77 = scalar_select %p74, %s75, %s76
    %p80 = pneg %p74
    %p81 = scmp.eq.s32.totalorder %s12, 1
    %p82 = por %p80, %p81
    %p83 = scmp.ne.s32.totalorder %s75, %s78
    %p84 = scmp.eq.s32.totalorder %s12, 0
    %p85 = por %p83, %p84
    %p86 = scmp.ne.s32.totalorder %s75, %s78
    %p87 = scmp.eq.s32.totalorder %s17, 1
    %p88 = por %p86, %p87
    %p89 = scmp.ne.s32.totalorder %s78, %s79
    %p90 = scmp.eq.s32.totalorder %s17, 0
    %p91 = por %p89, %p90
    %p92 = scmp.ne.s32.totalorder %s78, %s79
    %p93 = scmp.eq.s32.totalorder %s18, 1
    %p94 = por %p92, %p93
    %p96 = scmp.ne.s32.totalorder %s79, %s95
    %p97 = scmp.eq.s32.totalorder %s18, 0
    %p98 = por %p96, %p97
    %s99 = ssub.s32 %s20, %s34
    %p100 = scmp.eq.s32.totalorder %s99, 0
    %s102 = sadd.s32 %s101, 1
    %s103 = scalar_select %p100, %s101, %s102
    %p106 = pneg %p100
    %p107 = scmp.eq.s32.totalorder %s12, 1
    %p108 = por %p106, %p107
    %p109 = scmp.ne.s32.totalorder %s101, %s104
    %p110 = scmp.eq.s32.totalorder %s12, 0
    %p111 = por %p109, %p110
    %p112 = scmp.ne.s32.totalorder %s101, %s104
    %p113 = scmp.eq.s32.totalorder %s17, 1
    %p114 = por %p112, %p113
    %p115 = scmp.ne.s32.totalorder %s104, %s105
    %p116 = scmp.eq.s32.totalorder %s17, 0
    %p117 = por %p115, %p116
    %p118 = scmp.ne.s32.totalorder %s104, %s105
    %p119 = scmp.eq.s32.totalorder %s18, 1
    %p120 = por %p118, %p119
    %p122 = scmp.ne.s32.totalorder %s105, %s121
    %p123 = scmp.eq.s32.totalorder %s18, 0
    %p124 = por %p122, %p123
    %s125 = ssub.s32 %s20, %s34
    %p126 = scmp.eq.s32.totalorder %s125, 0
    %s128 = sadd.s32 %s127, 1
    %s129 = scalar_select %p126, %s127, %s128
    %p132 = pneg %p126
    %p133 = scmp.eq.s32.totalorder %s12, 1
    %p134 = por %p132, %p133
    %p135 = scmp.ne.s32.totalorder %s127, %s130
    %p136 = scmp.eq.s32.totalorder %s12, 0
    %p137 = por %p135, %p136
    %p138 = scmp.ne.s32.totalorder %s127, %s130
    %p139 = scmp.eq.s32.totalorder %s17, 1
    %p140 = por %p138, %p139
    %p141 = scmp.ne.s32.totalorder %s130, %s131
    %p142 = scmp.eq.s32.totalorder %s17, 0
    %p143 = por %p141, %p142
    %p144 = scmp.ne.s32.totalorder %s130, %s131
    %p145 = scmp.eq.s32.totalorder %s18, 1
    %p146 = por %p144, %p145
    %p148 = scmp.ne.s32.totalorder %s131, %s147
    %p149 = scmp.eq.s32.totalorder %s18, 0
    %p150 = por %p148, %p149
    %s151 = ssub.s32 %s19, %s38
    %s152 = ssub.s32 %s20, %s34
    %s153 = sor.u32 %s151, %s152
    %s154 = ssub.s32 %s21, %s30
    %s155 = sor.u32 %s153, %s154
    %p156 = scmp.eq.s32.totalorder %s155, 0
    %s158 = sadd.s32 %s157, 1
    %s159 = scalar_select %p156, %s157, %s158
    %p162 = pneg %p156
    %p163 = scmp.eq.s32.totalorder %s12, 1
    %p164 = por %p162, %p163
    %p165 = scmp.ne.s32.totalorder %s157, %s160
    %p166 = scmp.eq.s32.totalorder %s12, 0
    %p167 = por %p165, %p166
    %p168 = scmp.ne.s32.totalorder %s157, %s160
    %p169 = scmp.eq.s32.totalorder %s17, 1
    %p170 = por %p168, %p169
    %p171 = scmp.ne.s32.totalorder %s160, %s161
    %p172 = scmp.eq.s32.totalorder %s17, 0
    %p173 = por %p171, %p172
    %p174 = scmp.ne.s32.totalorder %s160, %s161
    %p175 = scmp.eq.s32.totalorder %s18, 1
    %p176 = por %p174, %p175
    %p178 = scmp.ne.s32.totalorder %s161, %s177
    %p179 = scmp.eq.s32.totalorder %s18, 0
    %p180 = por %p178, %p179
    %s181 = ssub.s32 %s19, %s38
    %s182 = ssub.s32 %s20, %s34
    %s183 = sor.u32 %s181, %s182
    %p184 = scmp.eq.s32.totalorder %s183, 0
    %s186 = sadd.s32 %s185, 1
    %s187 = scalar_select %p184, %s185, %s186
    %p190 = pneg %p184
    %p191 = scmp.eq.s32.totalorder %s12, 1
    %p192 = por %p190, %p191
    %p193 = scmp.ne.s32.totalorder %s185, %s188
    %p194 = scmp.eq.s32.totalorder %s12, 0
    %p195 = por %p193, %p194
    %p196 = scmp.ne.s32.totalorder %s185, %s188
    %p197 = scmp.eq.s32.totalorder %s17, 1
    %p198 = por %p196, %p197
    %p199 = scmp.ne.s32.totalorder %s188, %s189
    %p200 = scmp.eq.s32.totalorder %s17, 0
    %p201 = por %p199, %p200
    %p202 = scmp.ne.s32.totalorder %s188, %s189
    %p203 = scmp.eq.s32.totalorder %s18, 1
    %p204 = por %p202, %p203
    %p206 = scmp.ne.s32.totalorder %s189, %s205
    %p207 = scmp.eq.s32.totalorder %s18, 0
    %p208 = por %p206, %p207
    %p209 = scmp.le.s32.totalorder 1, %s12
    %p210 = scmp.lt.s32.totalorder %s12, 3
    %p211 = pnand %p209, %p210
    %p212 = pneg %p211
    // Predicated region
    $region9: #{waveunet_forward.11} parent=5 // pred_check
      _
    $region10: #{waveunet_forward.11} parent=5 // pred_check_branch
      %214 = sbr.rel (%p211) target = $region12
    $region11: #{waveunet_forward.11} parent=5 // pred_region
      %s215 = ssub.s32 %s12, 1
      // Predicated region
      $region13: #{waveunet_forward.11} parent=11 // pred_check
        %p216 = pneg %p117
      $region14: #{waveunet_forward.11} parent=11 // pred_check_branch
        %218 = sbr.rel (%p216) target = $region16
      $region15: #{waveunet_forward.11} parent=11 // pred_region
        %s219 = smul.u32 2, %s23
        %p220 = scmp.lt.s32.totalorder %s219, 1
        %s221 = scalar_select %p220, %s219, 1
        %s222 = smul.addr %s221, 4
        %s223 = scalar_lea.vmem %s2, %s222
        %s224 = smul.u32 2, %s23
      $region16: #{waveunet_forward.11} parent=11 // pred_fallthru
        _
      // Predicated region
      $region17: #{waveunet_forward.11} parent=11 // pred_check
        %p225 = pneg %p143
      $region18: #{waveunet_forward.11} parent=11 // pred_check_branch
        %227 = sbr.rel (%p225) target = $region20
      $region19: #{waveunet_forward.11} parent=11 // pred_region
        %s228 = smul.u32 2, %s23
        %p229 = scmp.lt.s32.totalorder %s228, 1
        %s230 = scalar_select %p229, %s228, 1
        %s231 = smul.addr %s230, 8
        %s232 = scalar_lea.vmem %s3, %s231
        %s233 = smul.u32 2, %s23
      $region20: #{waveunet_forward.11} parent=11 // pred_fallthru
        _
    $region12: #{waveunet_forward.11} parent=5 // pred_fallthru
      _
    %p234 = scmp.lt.s32.totalorder %s12, 2
    // Predicated region
    $region21: #{waveunet_forward.11} parent=5 // pred_check
      %p235 = pneg %p234
    $region22: #{waveunet_forward.11} parent=5 // pred_check_branch
      %237 = sbr.rel (%p235) target = $region24
    $region23: #{waveunet_forward.11} parent=5 // pred_region
      // Predicated region
      $region25: #{waveunet_forward.11} parent=23 // pred_check
        %p238 = pneg %p53
      $region26: #{waveunet_forward.11} parent=23 // pred_check_branch
        %240 = sbr.rel (%p238) target = $region28
      $region27: #{waveunet_forward.11} parent=23 // pred_region
        %s241 = smul.u32 2, %s21
        %p242 = scmp.lt.s32.totalorder %s19, 1
        %s243 = scalar_select %p242, %s19, 1
        %p244 = scmp.lt.s32.totalorder %s241, 3
        %s245 = scalar_select %p244, %s241, 3
        %s246 = smul.addr %s243, 4
        %s247 = sadd.s32 %s245, %s246
        %s248 = scalar_lea.vmem %s0, %s247
        %s249 = smul.u32 2, %s21
      $region28: #{waveunet_forward.11} parent=23 // pred_fallthru
        _
      // Predicated region
      $region29: #{waveunet_forward.11} parent=23 // pred_check
        %p250 = pneg %p85
      $region30: #{waveunet_forward.11} parent=23 // pred_check_branch
        %252 = sbr.rel (%p250) target = $region32
      $region31: #{waveunet_forward.11} parent=23 // pred_region
        %s253 = sadd.s32 %s21, 1
        %s254 = smul.u32 %s253, 2
        %p255 = scmp.lt.s32.totalorder %s19, 1
        %s256 = scalar_select %p255, %s19, 1
        %p257 = scmp.lt.s32.totalorder %s254, 3
        %s258 = scalar_select %p257, %s254, 3
        %s259 = smul.addr %s256, 4
        %s260 = sadd.s32 %s258, %s259
        %s261 = scalar_lea.vmem %s1, %s260
        %s262 = sadd.s32 %s21, 1
        %s263 = smul.u32 %s262, 2
      $region32: #{waveunet_forward.11} parent=23 // pred_fallthru
        _
    $region24: #{waveunet_forward.11} parent=5 // pred_fallthru
      _
    %p264 = scmp.le.s32.totalorder 1, %s12
    %p265 = scmp.lt.s32.totalorder %s12, 3
    %p266 = pnand %p264, %p265
    %p267 = pneg %p266
    // Predicated region
    $region33: #{waveunet_forward.11} parent=5 // pred_check
      _
    $region34: #{waveunet_forward.11} parent=5 // pred_check_branch
      %269 = sbr.rel (%p266) target = $region36
    $region35: #{waveunet_forward.11} parent=5 // pred_region
      %s270 = ssub.s32 %s12, 1
      %s271 = smul.u32 2, %s24
      %p272 = scmp.lt.s32.totalorder %s22, 1
      %s273 = scalar_select %p272, %s22, 1
      %p274 = scmp.lt.s32.totalorder %s271, 3
      %s275 = scalar_select %p274, %s271, 3
      %s276 = smul.addr %s273, 4
      %s277 = sadd.s32 %s275, %s276
      %s278 = scalar_lea.vmem %s0, %s277
      %p279 = pneg %p59
      %p280 = pneg %p56
      %s281 = sadd.s32 %s24, 1
      %s282 = smul.u32 %s281, 2
      %p283 = scmp.lt.s32.totalorder %s22, 1
      %s284 = scalar_select %p283, %s22, 1
      %p285 = scmp.lt.s32.totalorder %s282, 3
      %s286 = scalar_select %p285, %s282, 3
      %s287 = smul.addr %s284, 4
      %s288 = sadd.s32 %s286, %s287
      %s289 = scalar_lea.vmem %s1, %s288
      %p290 = pneg %p91
      %p291 = pneg %p88
      %s292 = smul.u32 2, %s23
      %p293 = scmp.lt.s32.totalorder %s292, 1
      %s294 = scalar_select %p293, %s292, 1
      %s295 = smul.addr %s294, 4
      %s296 = scalar_lea.vmem %s2, %s295
      %p297 = pneg %p117
      %p298 = pneg %p114
      %s299 = smul.u32 2, %s23
      %p300 = scmp.lt.s32.totalorder %s299, 1
      %s301 = scalar_select %p300, %s299, 1
      %s302 = smul.addr %s301, 8
      %s303 = scalar_lea.vmem %s3, %s302
      %p304 = pneg %p143
      %p305 = pneg %p140
      %p306 = pneg %p173
      %p307 = pneg %p170
      %s308 = smul.u32 2, %s23
      %s309 = smul.u32 2, %s24
      %p310 = scmp.lt.s32.totalorder %s22, 1
      %s311 = scalar_select %p310, %s22, 1
      %p312 = scmp.lt.s32.totalorder %s308, 1
      %s313 = scalar_select %p312, %s308, 1
      %p314 = scmp.lt.s32.totalorder %s309, 1
      %s315 = scalar_select %p314, %s309, 1
      %s316 = smul.addr %s313, 2
      %s317 = sadd.s32 %s315, %s316
      %s318 = smul.addr %s311, 4
      %s319 = sadd.s32 %s317, %s318
      %s320 = smul.addr %s319, 4
      %s321 = scalar_lea.vmem %s4, %s320
      %p322 = pneg %p201
      %p323 = pneg %p198
      %s324 = smul.u32 2, %s23
      %p325 = scmp.lt.s32.totalorder %s22, 1
      %s326 = scalar_select %p325, %s22, 1
      %p327 = scmp.lt.s32.totalorder %s324, 1
      %s328 = scalar_select %p327, %s324, 1
      %s329 = smul.addr %s326, 2
      %s330 = sadd.s32 %s328, %s329
      %s331 = smul.addr %s330, 8
      %s332 = scalar_lea.vmem %s5, %s331
      %s333 = smul.u32 2, %s24
      %p334 = scmp.lt.s32.totalorder %s22, 1
      %s335 = scalar_select %p334, %s22, 1
      %p336 = scmp.lt.s32.totalorder %s333, 3
      %s337 = scalar_select %p336, %s333, 3
      %s338 = smul.addr %s335, 4
      %s339 = sadd.s32 %s337, %s338
      %s340 = scalar_lea.vmem %s0, %s339
      %s341 = smul.u32 2, %s24
      %s342 = sadd.s32 %s24, 1
      %s343 = smul.u32 %s342, 2
      %p344 = scmp.lt.s32.totalorder %s22, 1
      %s345 = scalar_select %p344, %s22, 1
      %p346 = scmp.lt.s32.totalorder %s343, 3
      %s347 = scalar_select %p346, %s343, 3
      %s348 = smul.addr %s345, 4
      %s349 = sadd.s32 %s347, %s348
      %s350 = scalar_lea.vmem %s1, %s349
      %s351 = sadd.s32 %s24, 1
      %s352 = smul.u32 %s351, 2
      %s353 = smul.u32 2, %s23
      %p354 = scmp.lt.s32.totalorder %s353, 1
      %s355 = scalar_select %p354, %s353, 1
      %s356 = smul.addr %s355, 4
      %s357 = scalar_lea.vmem %s2, %s356
      %s358 = smul.u32 2, %s23
      %s359 = smul.u32 2, %s23
      %p360 = scmp.lt.s32.totalorder %s359, 1
      %s361 = scalar_select %p360, %s359, 1
      %s362 = smul.addr %s361, 8
      %s363 = scalar_lea.vmem %s3, %s362
      %s364 = smul.u32 2, %s23
      %s365 = smul.u32 2, %s23
      %s366 = smul.u32 2, %s24
      %p367 = scmp.lt.s32.totalorder %s22, 1
      %s368 = scalar_select %p367, %s22, 1
      %p369 = scmp.lt.s32.totalorder %s365, 1
      %s370 = scalar_select %p369, %s365, 1
      %p371 = scmp.lt.s32.totalorder %s366, 1
      %s372 = scalar_select %p371, %s366, 1
      %s373 = smul.addr %s370, 2
      %s374 = sadd.s32 %s372, %s373
      %s375 = smul.addr %s368, 4
      %s376 = sadd.s32 %s374, %s375
      %s377 = smul.addr %s376, 4
      %s378 = scalar_lea.vmem %s4, %s377
      %s379 = smul.u32 2, %s23
      %s380 = smul.u32 2, %s24
      %s381 = smul.u32 2, %s23
      %p382 = scmp.lt.s32.totalorder %s22, 1
      %s383 = scalar_select %p382, %s22, 1
      %p384 = scmp.lt.s32.totalorder %s381, 1
      %s385 = scalar_select %p384, %s381, 1
      %s386 = smul.addr %s383, 2
      %s387 = sadd.s32 %s385, %s386
      %s388 = smul.addr %s387, 8
      %s389 = scalar_lea.vmem %s5, %s388
      %s390 = smul.u32 2, %s23
      %v392 = vld [vmem:[%s340] sm:$0x3]
      %v393 = vld [vmem:[%s350] sm:$0x1]
      %v396 = vunpack.c.l.s4 1966171168
      %v397 = vunpack.c.0.s8 %v396
      %v398 = vlaneseq
      %v399 = vshrl.u32 %v398, 7
      %v400 = vsub.s32 %v397, %v399
      %v401 = vrot.slane %v392, %v400
      %v402 = vcombine.high %v401, %v401
      %v404 = vunpack.c.l.s4 1966171168
      %v405 = vunpack.c.0.s8 %v404
      %v406 = vlaneseq
      %v407 = vshrl.u32 %v406, 7
      %v408 = vsub.s32 %v405, %v407
      %v409 = vrot.slane %v401, %v408
      %v411 = vunpack.c.l.s4 1966171168
      %v412 = vunpack.c.0.s8 %v411
      %v413 = vlaneseq
      %v414 = vshrl.u32 %v413, 7
      %v415 = vsub.s32 %v412, %v414
      %v416 = vrot.slane %v402, %v415
      %417 = vrot.lane.b32.xlu0 %v409, 127
      %v418 = vpop.permute.xlu0 %417
      %419 = vrot.lane.b32.xlu0 %v416, 127
      %v420 = vpop.permute.xlu0 %419
      %vm421 = vcmask 1039360
      %v422 = vsel %vm421, %v418, %v420
      %v425 = vunpack.c.l.s4 1966171168
      %v426 = vunpack.c.0.s8 %v425
      %v427 = vlaneseq
      %v428 = vshrl.u32 %v427, 7
      %v429 = vsub.s32 %v426, %v428
      %v430 = vrot.slane %v393, %v429
      %v432 = vunpack.c.l.s4 1966171168
      %v433 = vunpack.c.0.s8 %v432
      %v434 = vlaneseq
      %v435 = vshrl.u32 %v434, 7
      %v436 = vsub.s32 %v433, %v435
      %v437 = vrot.slane %v430, %v436
      %438 = vrot.lane.b32.xlu0 %v437, 127
      %v439 = vpop.permute.xlu0 %438
      %vm440 = vcmask 1039360
      %v443 = vsel %vm440, %v420, %v439
      %444 = vrot.lane.b32.xlu0 %v409, 126
      %v445 = vpop.permute.xlu0 %444
      %446 = vrot.lane.b32.xlu0 %v416, 126
      %v447 = vpop.permute.xlu0 %446
      %vm448 = vcmask 1031168
      %v449 = vsel %vm448, %v445, %v447
      %450 = vrot.lane.b32.xlu0 %v437, 126
      %v451 = vpop.permute.xlu0 %450
      %vm452 = vcmask 1031168
      %v455 = vsel %vm452, %v447, %v451
      %456 = vrot.lane.b32.xlu0 %v409, 125
      %v457 = vpop.permute.xlu0 %456
      %458 = vrot.lane.b32.xlu0 %v416, 125
      %v459 = vpop.permute.xlu0 %458
      %vm460 = vcmask 1022976
      %v461 = vsel %vm460, %v457, %v459
      %462 = vrot.lane.b32.xlu0 %v437, 125
      %v463 = vpop.permute.xlu0 %462
      %vm464 = vcmask 1022976
      %v467 = vsel %vm464, %v459, %v463
      %468 = vrot.lane.b32.xlu0 %v409, 124
      %v469 = vpop.permute.xlu0 %468
      %470 = vrot.lane.b32.xlu0 %v416, 124
      %v471 = vpop.permute.xlu0 %470
      %vm472 = vcmask 1014784
      %v473 = vsel %vm472, %v469, %v471
      %474 = vrot.lane.b32.xlu0 %v437, 124
      %v475 = vpop.permute.xlu0 %474
      %vm476 = vcmask 1014784
      %v479 = vsel %vm476, %v471, %v475
      %480 = vrot.lane.b32.xlu0 %v409, 123
      %v481 = vpop.permute.xlu0 %480
      %482 = vrot.lane.b32.xlu0 %v416, 123
      %v483 = vpop.permute.xlu0 %482
      %vm484 = vcmask 1006592
      %v485 = vsel %vm484, %v481, %v483
      %486 = vrot.lane.b32.xlu0 %v437, 123
      %v487 = vpop.permute.xlu0 %486
      %vm488 = vcmask 1006592
      %v491 = vsel %vm488, %v483, %v487
      %492 = vrot.lane.b32.xlu0 %v409, 122
      %v493 = vpop.permute.xlu0 %492
      %494 = vrot.lane.b32.xlu0 %v416, 122
      %v495 = vpop.permute.xlu0 %494
      %vm496 = vcmask 998400
      %v497 = vsel %vm496, %v493, %v495
      %498 = vrot.lane.b32.xlu0 %v437, 122
      %v499 = vpop.permute.xlu0 %498
      %vm500 = vcmask 998400
      %v503 = vsel %vm500, %v495, %v499
      %504 = vrot.lane.b32.xlu0 %v409, 121
      %v505 = vpop.permute.xlu0 %504
      %506 = vrot.lane.b32.xlu0 %v416, 121
      %v507 = vpop.permute.xlu0 %506
      %vm508 = vcmask 990208
      %v509 = vsel %vm508, %v505, %v507
      %510 = vrot.lane.b32.xlu0 %v437, 121
      %v511 = vpop.permute.xlu0 %510
      %vm512 = vcmask 990208
      %v515 = vsel %vm512, %v507, %v511
      %516 = vrot.lane.b32.xlu0 %v409, 120
      %v517 = vpop.permute.xlu0 %516
      %518 = vrot.lane.b32.xlu0 %v416, 120
      %v519 = vpop.permute.xlu0 %518
      %vm520 = vcmask 982016
      %v521 = vsel %vm520, %v517, %v519
      %522 = vrot.lane.b32.xlu0 %v437, 120
      %v523 = vpop.permute.xlu0 %522
      %vm524 = vcmask 982016
      %v527 = vsel %vm524, %v519, %v523
      %528 = vrot.lane.b32.xlu0 %v409, 119
      %v529 = vpop.permute.xlu0 %528
      %530 = vrot.lane.b32.xlu0 %v416, 119
      %v531 = vpop.permute.xlu0 %530
      %vm532 = vcmask 973824
      %v533 = vsel %vm532, %v529, %v531
      %534 = vrot.lane.b32.xlu0 %v437, 119
      %v535 = vpop.permute.xlu0 %534
      %vm536 = vcmask 973824
      %v539 = vsel %vm536, %v531, %v535
      %540 = vrot.lane.b32.xlu0 %v409, 118
      %v541 = vpop.permute.xlu0 %540
      %542 = vrot.lane.b32.xlu0 %v416, 118
      %v543 = vpop.permute.xlu0 %542
      %vm544 = vcmask 965632
      %v545 = vsel %vm544, %v541, %v543
      %546 = vrot.lane.b32.xlu0 %v437, 118
      %v547 = vpop.permute.xlu0 %546
      %vm548 = vcmask 965632
      %v551 = vsel %vm548, %v543, %v547
      %552 = vrot.lane.b32.xlu0 %v409, 117
      %v553 = vpop.permute.xlu0 %552
      %554 = vrot.lane.b32.xlu0 %v416, 117
      %v555 = vpop.permute.xlu0 %554
      %vm556 = vcmask 957440
      %v557 = vsel %vm556, %v553, %v555
      %558 = vrot.lane.b32.xlu0 %v437, 117
      %v559 = vpop.permute.xlu0 %558
      %vm560 = vcmask 957440
      %v563 = vsel %vm560, %v555, %v559
      %564 = vrot.lane.b32.xlu0 %v409, 116
      %v565 = vpop.permute.xlu0 %564
      %566 = vrot.lane.b32.xlu0 %v416, 116
      %v567 = vpop.permute.xlu0 %566
      %vm568 = vcmask 949248
      %v569 = vsel %vm568, %v565, %v567
      %570 = vrot.lane.b32.xlu0 %v437, 116
      %v571 = vpop.permute.xlu0 %570
      %vm572 = vcmask 949248
      %v575 = vsel %vm572, %v567, %v571
      %576 = vrot.lane.b32.xlu0 %v409, 115
      %v577 = vpop.permute.xlu0 %576
      %578 = vrot.lane.b32.xlu0 %v416, 115
      %v579 = vpop.permute.xlu0 %578
      %vm580 = vcmask 941056
      %v581 = vsel %vm580, %v577, %v579
      %582 = vrot.lane.b32.xlu0 %v437, 115
      %v583 = vpop.permute.xlu0 %582
      %vm584 = vcmask 941056
      %v587 = vsel %vm584, %v579, %v583
      %588 = vrot.lane.b32.xlu0 %v409, 114
      %v589 = vpop.permute.xlu0 %588
      %590 = vrot.lane.b32.xlu0 %v416, 114
      %v591 = vpop.permute.xlu0 %590
      %vm592 = vcmask 932864
      %v593 = vsel %vm592, %v589, %v591
      %594 = vrot.lane.b32.xlu0 %v437, 114
      %v595 = vpop.permute.xlu0 %594
      %vm596 = vcmask 932864
      %v599 = vsel %vm596, %v591, %v595
      %v603 = vshll.u32 %v422, 16
      %v605 = vshll.u32 %v443, 16
      %v610 = vrot.slane %v449, 7
      %v611 = vrot.slane %v455, 7
      %v613 = vshll.u32 %v461, 16
      %v615 = vrot.slane %v613, 7
      %v616 = vshll.u32 %v467, 16
      %v618 = vrot.slane %v616, 7
      %v622 = vrot.slane %v473, 6
      %v623 = vrot.slane %v479, 6
      %v625 = vshll.u32 %v485, 16
      %v627 = vrot.slane %v625, 6
      %v628 = vshll.u32 %v491, 16
      %v630 = vrot.slane %v628, 6
      %v634 = vrot.slane %v497, 5
      %v635 = vrot.slane %v503, 5
      %v637 = vshll.u32 %v509, 16
      %v639 = vrot.slane %v637, 5
      %v640 = vshll.u32 %v515, 16
      %v642 = vrot.slane %v640, 5
      %v646 = vrot.slane %v521, 4
      %v647 = vrot.slane %v527, 4
      %v649 = vshll.u32 %v533, 16
      %v651 = vrot.slane %v649, 4
      %v652 = vshll.u32 %v539, 16
      %v654 = vrot.slane %v652, 4
      %v658 = vrot.slane %v545, 3
      %v659 = vrot.slane %v551, 3
      %v661 = vshll.u32 %v557, 16
      %v663 = vrot.slane %v661, 3
      %v664 = vshll.u32 %v563, 16
      %v666 = vrot.slane %v664, 3
      %v670 = vrot.slane %v569, 2
      %v671 = vrot.slane %v575, 2
      %v673 = vshll.u32 %v581, 16
      %v675 = vrot.slane %v673, 2
      %v676 = vshll.u32 %v587, 16
      %v678 = vrot.slane %v676, 2
      %v682 = vrot.slane %v593, 1
      %v683 = vrot.slane %v599, 1
      %vm684 = vcmask 1040384
      %vm685 = vsmask.f32 256
      %vm686 = vmand %vm684, %vm685
      %v687 = vsel %vm686, %v409, %v603
      %v688 = vsel %vm686, %v416, %v605
      %vm689 = vcmask 1040384
      %v692 = vsel %vm689, %v687, %v610
      %v696 = vsel %vm689, %v688, %v611
      %vm698 = vcmask 1041408
      %vm699 = vsmask.f32 1280
      %vm700 = vmand %vm698, %vm699
      %v701 = vsel %vm700, %v692, %v615
      %v702 = vsel %vm700, %v696, %v618
      %vm703 = vcmask 1041408
      %v706 = vsel %vm703, %v701, %v622
      %v710 = vsel %vm703, %v702, %v623
      %vm712 = vcmask 1042432
      %vm713 = vsmask.f32 2304
      %vm714 = vmand %vm712, %vm713
      %v715 = vsel %vm714, %v706, %v627
      %v716 = vsel %vm714, %v710, %v630
      %vm717 = vcmask 1042432
      %v720 = vsel %vm717, %v715, %v634
      %v724 = vsel %vm717, %v716, %v635
      %vm726 = vcmask 1043456
      %vm727 = vsmask.f32 3328
      %vm728 = vmand %vm726, %vm727
      %v729 = vsel %vm728, %v720, %v639
      %v730 = vsel %vm728, %v724, %v642
      %vm731 = vcmask 1043456
      %v734 = vsel %vm731, %v729, %v646
      %v738 = vsel %vm731, %v730, %v647
      %vm740 = vcmask 1044480
      %vm741 = vsmask.f32 4352
      %vm742 = vmand %vm740, %vm741
      %v743 = vsel %vm742, %v734, %v651
      %v744 = vsel %vm742, %v738, %v654
      %vm745 = vcmask 1044480
      %v748 = vsel %vm745, %v743, %v658
      %v752 = vsel %vm745, %v744, %v659
      %vm754 = vcmask 1045504
      %vm755 = vsmask.f32 5376
      %vm756 = vmand %vm754, %vm755
      %v757 = vsel %vm756, %v748, %v663
      %v758 = vsel %vm756, %v752, %v666
      %vm759 = vcmask 1045504
      %v762 = vsel %vm759, %v757, %v670
      %v766 = vsel %vm759, %v758, %v671
      %vm768 = vcmask 1046528
      %vm769 = vsmask.f32 6400
      %vm770 = vmand %vm768, %vm769
      %v771 = vsel %vm770, %v762, %v675
      %v772 = vsel %vm770, %v766, %v678
      %vm773 = vcmask 1046528
      %v776 = vsel %vm773, %v771, %v682
      %v779 = vsel %vm773, %v772, %v683
      %v780 = vld [vmem:[%s357] sm:$0xf]
      %v781 = vld [vmem:[%s357 + $0x4] sm:$0xf]
      %v782 = vld [vmem:[%s363] sm:$0xff]
      %v783 = vld [vmem:[%s363 + $0x8] sm:$0xff]
      %785 = vset.pattern.permute.xlu0 0
      %786 = vperm.xlu0 %785, %v782
      %v787 = vpop.permute.xlu0 %786
      %790 = vset.pattern.permute.xlu0 0
      %791 = vperm.xlu0 %790, %v783
      %v792 = vpop.permute.xlu0 %791
      %v796 = vunpack.c.l.b16 %v780
      %v797 = vunpack.c.l.b16 %v781
      %v798 = vpack.c.b16 %v797, %v796
      %vm799 = vcmask 121856
      %v801 = vsel %vm799, %v798, 0
      %vm803 = vcmask 1047552
      %v804 = vsel %vm773, 4294967295, 65535
      %v805 = vsel %vm803, %v804, 0
      %v806 = vand.u32 %v776, %v805
      %v808 = vand.u32 %v779, %v805
      %810 = vmatprep.subr.bf16.mxu0 %v808
      %811 = vmatpush1.bf16.msra.mxu0 %v806
      %812 = vmatprep.subr.bf16.mxu0 0
      %813 = vmatpush1.bf16.msra.mxu0 0
      %814 = vmatprep.subr.bf16.mxu0 0
      %815 = vmatpush1.bf16.msra.mxu0 0
      %816 = vmatprep.subr.bf16.mxu0 0
      %817 = vmatpush1.bf16.msra.mxu0 0
      %818 = vmatprep.subr.bf16.mxu0 0
      %819 = vmatpush1.bf16.msra.mxu0 0
      %820 = vmatprep.subr.bf16.mxu0 0
      %821 = vmatpush1.bf16.msra.mxu0 0
      %822 = vmatprep.subr.bf16.mxu0 0
      %823 = vmatpush1.bf16.msra.mxu0 0
      %824 = vmatprep.subr.bf16.mxu0 0
      %825 = vmatpush1.bf16.msra.mxu0 0
      %826 = vmatprep.subr.bf16.mxu0 0
      %827 = vmatpush1.bf16.msra.mxu0 0
      %828 = vmatprep.subr.bf16.mxu0 0
      %829 = vmatpush1.bf16.msra.mxu0 0
      %830 = vmatprep.subr.bf16.mxu0 0
      %831 = vmatpush1.bf16.msra.mxu0 0
      %832 = vmatprep.subr.bf16.mxu0 0
      %833 = vmatpush1.bf16.msra.mxu0 0
      %834 = vmatprep.subr.bf16.mxu0 0
      %835 = vmatpush1.bf16.msra.mxu0 0
      %836 = vmatprep.subr.bf16.mxu0 0
      %837 = vmatpush1.bf16.msra.mxu0 0
      %838 = vmatprep.subr.bf16.mxu0 0
      %839 = vmatpush1.bf16.msra.mxu0 0
      %840 = vmatprep.subr.bf16.mxu0 0
      %841 = vmatpush1.bf16.msra.mxu0 0
      %842 = vmatprep.mubr.bf16.mxu0 0
      %843 = vmatmul.mubr.bf16.gmra.mrb[0].mxu0 %v801
      %v844 = vpop.f32.mrb[0].mxu0
      %v845 = vadd.f32 %v787, %v844
      %v846 = vpop.f32.mrb[0].mxu0
      %v847 = vadd.f32 %v787, %v846
      %v848 = vpop.f32.mrb[0].mxu0
      %v849 = vadd.f32 %v792, %v848
      %v850 = vpop.f32.mrb[0].mxu0
      %v851 = vadd.f32 %v792, %v850
      %852 = vdwg.mxu0
      %p853 = scmp.eq.s32.totalorder %s24, 0
      // Predicated region
      $region37: #{waveunet_forward.11} parent=35 // pred_check
        %p854 = pneg %p853
      $region38: #{waveunet_forward.11} parent=35 // pred_check_branch
        %856 = sbr.rel (%p854) target = $region40
      $region39: #{waveunet_forward.11} parent=35 // pred_region
        %vm857 = vcmask 7168
        %858 = vst.msk [vmem:[#allocation2] sm:$0xff] %vm857, 0.0
        %859 = vst.msk [vmem:[#allocation2 + $0x8] sm:$0xff] %vm857, 0.0
        %860 = vst.msk [vmem:[#allocation3] sm:$0xff] %vm857, 0.0
        %861 = vst.msk [vmem:[#allocation3 + $0x8] sm:$0xff] %vm857, 0.0
        %v862 = vlaneseq
        %v863 = vand.u32 %v862, 127
        %v864 = vadd.s32 %v863, 128
        %s865 = smul.u32 %s24, 256
        %v866 = vstv %s865
        %v867 = vadd.s32 %v866, %v863
        %v868 = vadd.s32 %v866, %v864
        %vm869 = vcmp.lt.s32.totalorder %v867, 186
        %vm870 = vcmp.lt.s32.totalorder %v868, 186
        %v871 = vsel %vm869, %v845, 0.0
        %v872 = vsel %vm870, %v847, 0.0
        %v873 = vsel %vm869, %v849, 0.0
        %v874 = vsel %vm870, %v851, 0.0
        %v875 = vld [vmem:[#allocation2] sm:$0xff]
        %v876 = vld [vmem:[#allocation2 + $0x8] sm:$0xff]
        %v877 = vadd.f32 %v871, %v872
        %878 = vadd.xlane.f32.xlu0 %v877
        %v879 = vpop.xlane.xlu0 %878
        %v880 = vadd.f32 %v873, %v874
        %881 = vadd.xlane.f32.xlu0 %v880
        %v882 = vpop.xlane.xlu0 %881
        %v883 = vadd.f32 %v875, %v879
        %v884 = vadd.f32 %v876, %v882
        %885 = vst.msk [vmem:[#allocation2] sm:$0xff] %vm857, %v883
        %886 = vst.msk [vmem:[#allocation2 + $0x8] sm:$0xff] %vm857, %v884
        %v887 = vld [vmem:[#allocation3] sm:$0xff]
        %v888 = vld [vmem:[#allocation3 + $0x8] sm:$0xff]
        %v889 = vmul.f32 %v871, %v871
        %v890 = vmul.f32 %v872, %v872
        %v891 = vmul.f32 %v873, %v873
        %v892 = vmul.f32 %v874, %v874
        %v893 = vadd.f32 %v889, %v890
        %894 = vadd.xlane.f32.xlu0 %v893
        %v895 = vpop.xlane.xlu0 %894
        %v896 = vadd.f32 %v891, %v892
        %897 = vadd.xlane.f32.xlu0 %v896
        %v898 = vpop.xlane.xlu0 %897
        %v899 = vadd.f32 %v887, %v895
        %v900 = vadd.f32 %v888, %v898
        %901 = vst.msk [vmem:[#allocation3] sm:$0xff] %vm857, %v899
        %902 = vst.msk [vmem:[#allocation3 + $0x8] sm:$0xff] %vm857, %v900
      $region40: #{waveunet_forward.11} parent=35 // pred_fallthru
        _
      %p903 = scmp.lt.s32.totalorder %s24, 0
      // Predicated region
      $region41: #{waveunet_forward.11} parent=35 // pred_check
        %p904 = pneg %p903
      $region42: #{waveunet_forward.11} parent=35 // pred_check_branch
        %906 = sbr.rel (%p904) target = $region44
      $region43: #{waveunet_forward.11} parent=35 // pred_region
        %v907 = vld [vmem:[#allocation2] sm:$0xff]
        %v908 = vld [vmem:[#allocation2 + $0x8] sm:$0xff]
        %v909 = vadd.f32 %v845, %v847
        %910 = vadd.xlane.f32.xlu0 %v909
        %v911 = vpop.xlane.xlu0 %910
        %v912 = vadd.f32 %v849, %v851
        %913 = vadd.xlane.f32.xlu0 %v912
        %v914 = vpop.xlane.xlu0 %913
        %v915 = vadd.f32 %v907, %v911
        %v916 = vadd.f32 %v908, %v914
        %vm917 = vcmask 7168
        %918 = vst.msk [vmem:[#allocation2] sm:$0xff] %vm917, %v915
        %919 = vst.msk [vmem:[#allocation2 + $0x8] sm:$0xff] %vm917, %v916
        %v920 = vld [vmem:[#allocation3] sm:$0xff]
        %v921 = vld [vmem:[#allocation3 + $0x8] sm:$0xff]
        %v922 = vmul.f32 %v845, %v845
        %v923 = vmul.f32 %v847, %v847
        %v924 = vmul.f32 %v849, %v849
        %v925 = vmul.f32 %v851, %v851
        %v926 = vadd.f32 %v922, %v923
        %927 = vadd.xlane.f32.xlu0 %v926
        %v928 = vpop.xlane.xlu0 %927
        %v929 = vadd.f32 %v924, %v925
        %930 = vadd.xlane.f32.xlu0 %v929
        %v931 = vpop.xlane.xlu0 %930
        %v932 = vadd.f32 %v920, %v928
        %v933 = vadd.f32 %v921, %v931
        %934 = vst.msk [vmem:[#allocation3] sm:$0xff] %vm917, %v932
        %935 = vst.msk [vmem:[#allocation3 + $0x8] sm:$0xff] %vm917, %v933
      $region44: #{waveunet_forward.11} parent=35 // pred_fallthru
        _
      // Predicated region
      $region45: #{waveunet_forward.11} parent=35 // pred_check
        %p936 = pneg %p853
      $region46: #{waveunet_forward.11} parent=35 // pred_check_branch
        %938 = sbr.rel (%p936) target = $region48
      $region47: #{waveunet_forward.11} parent=35 // pred_region
        %v939 = vld [vmem:[#allocation2] sm:$0xff]
        %v940 = vld [vmem:[#allocation2 + $0x8] sm:$0xff]
        %v941 = vld [vmem:[#allocation3] sm:$0xff]
        %v942 = vld [vmem:[#allocation3 + $0x8] sm:$0xff]
        %945 = vrot.lane.b32.xlu0 %v941, 1
        %v946 = vpop.permute.xlu0 %945
        %947 = vrot.lane.b32.xlu0 %v942, 1
        %v948 = vpop.permute.xlu0 %947
        %vm951 = vcmask 7168
        %v952 = vsel %vm951, %v939, %v946
        %v953 = vsel %vm951, %v940, %v948
        %vm954 = vcmask 15360
        %v955 = vsel %vm954, %v952, 0.0
        %v956 = vsel %vm954, %v953, 0.0
        %957 = vst [vmem:[%s389] sm:$0xff] %v955
        %958 = vst [vmem:[%s389 + $0x8] sm:$0xff] %v956
      $region48: #{waveunet_forward.11} parent=35 // pred_fallthru
        _
      %v959 = vpack.c.bf16 %v849, %v845
      %v960 = vpack.c.bf16 %v851, %v847
      %v963 = vunpack.c.l.b16 %v959
      %v964 = vunpack.c.l.b16 %v960
      %v965 = vunpack.c.h.b16 %v959
      %v966 = vunpack.c.h.b16 %v960
      %v967 = vpack.c.b16 %v964, %v963
      %v968 = vpack.c.b16 %v966, %v965
      %971 = vst [vmem:[%s378] sm:$0xff] %v967
      %972 = vst [vmem:[%s378 + $0x8] sm:$0xff] %v968
      %s973 = smul.u32 2, %s23
      %s974 = smul.u32 2, %s24
      %p975 = scmp.lt.s32.totalorder %s22, 1
      %s976 = scalar_select %p975, %s22, 1
      %p977 = scmp.lt.s32.totalorder %s973, 1
      %s978 = scalar_select %p977, %s973, 1
      %p979 = scmp.lt.s32.totalorder %s974, 1
      %s980 = scalar_select %p979, %s974, 1
      %s981 = smul.addr %s978, 2
      %s982 = sadd.s32 %s980, %s981
      %s983 = smul.addr %s976, 4
      %s984 = sadd.s32 %s982, %s983
      %s985 = smul.addr %s984, 4
      %s986 = scalar_lea.vmem %s4, %s985
      %s987 = smul.u32 2, %s23
      %p988 = scmp.lt.s32.totalorder %s22, 1
      %s989 = scalar_select %p988, %s22, 1
      %p990 = scmp.lt.s32.totalorder %s987, 1
      %s991 = scalar_select %p990, %s987, 1
      %s992 = smul.addr %s989, 2
      %s993 = sadd.s32 %s991, %s992
      %s994 = smul.addr %s993, 8
      %s995 = scalar_lea.vmem %s5, %s994
      // Predicated region
      $region49: #{waveunet_forward.11} parent=35 // pred_check
        %p996 = pneg %p170
      $region50: #{waveunet_forward.11} parent=35 // pred_check_branch
        %998 = sbr.rel (%p996) target = $region52
      $region51: #{waveunet_forward.11} parent=35 // pred_region
        %s999 = smul.u32 2, %s23
        %s1000 = smul.u32 2, %s24
      $region52: #{waveunet_forward.11} parent=35 // pred_fallthru
        _
      // Predicated region
      $region53: #{waveunet_forward.11} parent=35 // pred_check
        %p1001 = pneg %p198
      $region54: #{waveunet_forward.11} parent=35 // pred_check_branch
        %1003 = sbr.rel (%p1001) target = $region56
      $region55: #{waveunet_forward.11} parent=35 // pred_region
        %s1004 = smul.u32 2, %s23
      $region56: #{waveunet_forward.11} parent=35 // pred_fallthru
        _
    $region36: #{waveunet_forward.11} parent=5 // pred_fallthru
      _
    %p1005 = scmp.le.s32.totalorder 2, %s12
    // Predicated region
    $region57: #{waveunet_forward.11} parent=5 // pred_check
      %p1006 = pneg %p1005
    $region58: #{waveunet_forward.11} parent=5 // pred_check_branch
      %1008 = sbr.rel (%p1006) target = $region60
    $region59: #{waveunet_forward.11} parent=5 // pred_region
      %s1009 = ssub.s32 %s12, 2
      // Predicated region
      $region61: #{waveunet_forward.11} parent=59 // pred_check
        %p1010 = pneg %p176
      $region62: #{waveunet_forward.11} parent=59 // pred_check_branch
        %1012 = sbr.rel (%p1010) target = $region64
      $region63: #{waveunet_forward.11} parent=59 // pred_region
        %s1013 = smul.u32 2, %s26
        %s1014 = smul.u32 2, %s27
        %p1015 = scmp.lt.s32.totalorder %s25, 1
        %s1016 = scalar_select %p1015, %s25, 1
        %p1017 = scmp.lt.s32.totalorder %s1013, 1
        %s1018 = scalar_select %p1017, %s1013, 1
        %p1019 = scmp.lt.s32.totalorder %s1014, 1
        %s1020 = scalar_select %p1019, %s1014, 1
        %s1021 = smul.addr %s1018, 2
        %s1022 = sadd.s32 %s1020, %s1021
        %s1023 = smul.addr %s1016, 4
        %s1024 = sadd.s32 %s1022, %s1023
        %s1025 = smul.addr %s1024, 4
        %s1026 = scalar_lea.vmem %s4, %s1025
      $region64: #{waveunet_forward.11} parent=59 // pred_fallthru
        _
      // Predicated region
      $region65: #{waveunet_forward.11} parent=59 // pred_check
        %p1027 = pneg %p204
      $region66: #{waveunet_forward.11} parent=59 // pred_check_branch
        %1029 = sbr.rel (%p1027) target = $region68
      $region67: #{waveunet_forward.11} parent=59 // pred_region
        %s1030 = smul.u32 2, %s26
        %p1031 = scmp.lt.s32.totalorder %s25, 1
        %s1032 = scalar_select %p1031, %s25, 1
        %p1033 = scmp.lt.s32.totalorder %s1030, 1
        %s1034 = scalar_select %p1033, %s1030, 1
        %s1035 = smul.addr %s1032, 2
        %s1036 = sadd.s32 %s1034, %s1035
        %s1037 = smul.addr %s1036, 8
        %s1038 = scalar_lea.vmem %s5, %s1037
      $region68: #{waveunet_forward.11} parent=59 // pred_fallthru
        _
    $region60: #{waveunet_forward.11} parent=5 // pred_fallthru
      _
  $region6: #{waveunet_forward.11} parent=0 // loop_footer
    %s16 = sadd.s32 1, %s12
  $region7: #{waveunet_forward.11} parent=0 // loop_footer_branch
    %11 = sbr.rel target = $region3
  $region8: #{waveunet_forward.11} parent=0 // loop_exit
    _

// kernel: waveunet_forward.14
$region0: #{waveunet_forward.14}
  #allocation0 [shape = 'u32[]', space=smem, size = 0x4, offset = 0x4, fixed_abs, tag = 'smem constant byte address 0x4 - core index']
  #allocation1 [shape = 'u32[144,128]{1,0:T(1,128)}', space=vmem, size = 0x12000, scoped, tag = 'internal scratch']
  %s0 = inlined_call_operand.vmem [shape: bf16[2,16,128], index: 0, kind: input, shape index: {}]
  %s1 = inlined_call_operand.vmem [shape: f32[16,1], index: 1, kind: input, shape index: {}]
  %s2 = inlined_call_operand.vmem [shape: f32[16,1], index: 2, kind: input, shape index: {}]
  %s3 = inlined_call_operand.vmem [shape: bf16[2,16,128], index: 3, kind: output, shape index: {}]
  %s4 = sld [smem:[#allocation0]]
  $region45: #{waveunet_forward.14} parent=0
    _
  %s6 = ssub.s32 1, %s4
  %s7 = scalar_select 0, %s6, %s4
  loop: start=0, step=1, limit=4
  $region2: #{waveunet_forward.14} parent=0 // loop_pre_header
    _
  $region3: #{waveunet_forward.14} parent=0 // loop_header
    %s9 = sphi 0, %s13
    %p10 = scmp.ge.s32.totalorder %s9, 4
    %s16 = sphi 0, %s35
    %s17 = sphi 0, %s31
    %s18 = sphi 0, %s27
    %s19 = sphi 0, %s16
    %s20 = sphi 0, %s17
    %s21 = sphi 0, %s18
    %s22 = sphi 0, %s19
    %s23 = sphi 0, %s20
    %s24 = sphi 0, %s21
    %s42 = sphi 0, %s44
    %s45 = sphi 0, %s42
    %s46 = sphi 0, %s45
    %s62 = sphi 0, %s46
    %s68 = sphi 0, %s70
    %s71 = sphi 0, %s68
    %s72 = sphi 0, %s71
    %s88 = sphi 0, %s72
    %s94 = sphi 0, %s96
    %s97 = sphi 0, %s94
    %s98 = sphi 0, %s97
    %s114 = sphi 0, %s98
    %s124 = sphi 0, %s126
    %s127 = sphi 0, %s124
    %s128 = sphi 0, %s127
    %s144 = sphi 0, %s128
  $region4: #{waveunet_forward.14} parent=0 // loop_header_branch
    %12 = sbr.rel (%p10) target = $region8
  $region5: #{waveunet_forward.14} parent=0 // loop_body
    %s14 = ssub.s32 %s9, 1
    %s15 = ssub.s32 %s9, 2
    %s25 = sadd.s32 1, %s18
    %p26 = scmp.ge.s32.totalorder %s25, 1
    %s27 = scalar_select %p26, 0, %s25
    %s28 = sadd.s32 1, %s17
    %s29 = scalar_select %p26, %s28, %s17
    %p30 = scmp.ge.s32.totalorder %s29, 1
    %s31 = scalar_select %p30, 0, %s29
    %s32 = sadd.s32 1, %s16
    %s33 = scalar_select %p30, %s32, %s16
    %p34 = scmp.ge.s32.totalorder %s33, 2
    %s35 = scalar_select %p34, 0, %s33
    %s36 = ssub.s32 %s16, %s35
    %s37 = ssub.s32 %s17, %s31
    %s38 = sor.u32 %s36, %s37
    %s39 = ssub.s32 %s18, %s27
    %s40 = sor.u32 %s38, %s39
    %p41 = scmp.eq.s32.totalorder %s40, 0
    %s43 = sadd.s32 %s42, 1
    %s44 = scalar_select %p41, %s42, %s43
    %p47 = pneg %p41
    %p48 = scmp.eq.s32.totalorder %s9, 1
    %p49 = por %p47, %p48
    %p50 = scmp.ne.s32.totalorder %s42, %s45
    %p51 = scmp.eq.s32.totalorder %s9, 0
    %p52 = por %p50, %p51
    %p53 = scmp.ne.s32.totalorder %s42, %s45
    %p54 = scmp.eq.s32.totalorder %s14, 1
    %p55 = por %p53, %p54
    %p56 = scmp.ne.s32.totalorder %s45, %s46
    %p57 = scmp.eq.s32.totalorder %s14, 0
    %p58 = por %p56, %p57
    %p59 = scmp.ne.s32.totalorder %s45, %s46
    %p60 = scmp.eq.s32.totalorder %s15, 1
    %p61 = por %p59, %p60
    %p63 = scmp.ne.s32.totalorder %s46, %s62
    %p64 = scmp.eq.s32.totalorder %s15, 0
    %p65 = por %p63, %p64
    %s66 = ssub.s32 %s17, %s31
    %p67 = scmp.eq.s32.totalorder %s66, 0
    %s69 = sadd.s32 %s68, 1
    %s70 = scalar_select %p67, %s68, %s69
    %p73 = pneg %p67
    %p74 = scmp.eq.s32.totalorder %s9, 1
    %p75 = por %p73, %p74
    %p76 = scmp.ne.s32.totalorder %s68, %s71
    %p77 = scmp.eq.s32.totalorder %s9, 0
    %p78 = por %p76, %p77
    %p79 = scmp.ne.s32.totalorder %s68, %s71
    %p80 = scmp.eq.s32.totalorder %s14, 1
    %p81 = por %p79, %p80
    %p82 = scmp.ne.s32.totalorder %s71, %s72
    %p83 = scmp.eq.s32.totalorder %s14, 0
    %p84 = por %p82, %p83
    %p85 = scmp.ne.s32.totalorder %s71, %s72
    %p86 = scmp.eq.s32.totalorder %s15, 1
    %p87 = por %p85, %p86
    %p89 = scmp.ne.s32.totalorder %s72, %s88
    %p90 = scmp.eq.s32.totalorder %s15, 0
    %p91 = por %p89, %p90
    %s92 = ssub.s32 %s17, %s31
    %p93 = scmp.eq.s32.totalorder %s92, 0
    %s95 = sadd.s32 %s94, 1
    %s96 = scalar_select %p93, %s94, %s95
    %p99 = pneg %p93
    %p100 = scmp.eq.s32.totalorder %s9, 1
    %p101 = por %p99, %p100
    %p102 = scmp.ne.s32.totalorder %s94, %s97
    %p103 = scmp.eq.s32.totalorder %s9, 0
    %p104 = por %p102, %p103
    %p105 = scmp.ne.s32.totalorder %s94, %s97
    %p106 = scmp.eq.s32.totalorder %s14, 1
    %p107 = por %p105, %p106
    %p108 = scmp.ne.s32.totalorder %s97, %s98
    %p109 = scmp.eq.s32.totalorder %s14, 0
    %p110 = por %p108, %p109
    %p111 = scmp.ne.s32.totalorder %s97, %s98
    %p112 = scmp.eq.s32.totalorder %s15, 1
    %p113 = por %p111, %p112
    %p115 = scmp.ne.s32.totalorder %s98, %s114
    %p116 = scmp.eq.s32.totalorder %s15, 0
    %p117 = por %p115, %p116
    %s118 = ssub.s32 %s16, %s35
    %s119 = ssub.s32 %s17, %s31
    %s120 = sor.u32 %s118, %s119
    %s121 = ssub.s32 %s18, %s27
    %s122 = sor.u32 %s120, %s121
    %p123 = scmp.eq.s32.totalorder %s122, 0
    %s125 = sadd.s32 %s124, 1
    %s126 = scalar_select %p123, %s124, %s125
    %p129 = pneg %p123
    %p130 = scmp.eq.s32.totalorder %s9, 1
    %p131 = por %p129, %p130
    %p132 = scmp.ne.s32.totalorder %s124, %s127
    %p133 = scmp.eq.s32.totalorder %s9, 0
    %p134 = por %p132, %p133
    %p135 = scmp.ne.s32.totalorder %s124, %s127
    %p136 = scmp.eq.s32.totalorder %s14, 1
    %p137 = por %p135, %p136
    %p138 = scmp.ne.s32.totalorder %s127, %s128
    %p139 = scmp.eq.s32.totalorder %s14, 0
    %p140 = por %p138, %p139
    %p141 = scmp.ne.s32.totalorder %s127, %s128
    %p142 = scmp.eq.s32.totalorder %s15, 1
    %p143 = por %p141, %p142
    %p145 = scmp.ne.s32.totalorder %s128, %s144
    %p146 = scmp.eq.s32.totalorder %s15, 0
    %p147 = por %p145, %p146
    %p148 = scmp.le.s32.totalorder 1, %s9
    %p149 = scmp.lt.s32.totalorder %s9, 3
    %p150 = pnand %p148, %p149
    %p151 = pneg %p150
    // Predicated region
    $region9: #{waveunet_forward.14} parent=5 // pred_check
      _
    $region10: #{waveunet_forward.14} parent=5 // pred_check_branch
      %153 = sbr.rel (%p150) target = $region12
    $region11: #{waveunet_forward.14} parent=5 // pred_region
      %s154 = ssub.s32 %s9, 1
      // Predicated region
      $region13: #{waveunet_forward.14} parent=11 // pred_check
        %p155 = pneg %p84
      $region14: #{waveunet_forward.14} parent=11 // pred_check_branch
        %157 = sbr.rel (%p155) target = $region16
      $region15: #{waveunet_forward.14} parent=11 // pred_region
        %s158 = smul.u32 2, %s20
        %p159 = scmp.lt.s32.totalorder %s158, 1
        %s160 = scalar_select %p159, %s158, 1
        %s161 = smul.addr %s160, 8
        %s162 = scalar_lea.vmem %s1, %s161
        %s163 = smul.u32 2, %s20
      $region16: #{waveunet_forward.14} parent=11 // pred_fallthru
        _
      // Predicated region
      $region17: #{waveunet_forward.14} parent=11 // pred_check
        %p164 = pneg %p110
      $region18: #{waveunet_forward.14} parent=11 // pred_check_branch
        %166 = sbr.rel (%p164) target = $region20
      $region19: #{waveunet_forward.14} parent=11 // pred_region
        %s167 = smul.u32 2, %s20
        %p168 = scmp.lt.s32.totalorder %s167, 1
        %s169 = scalar_select %p168, %s167, 1
        %s170 = smul.addr %s169, 8
        %s171 = scalar_lea.vmem %s2, %s170
        %s172 = smul.u32 2, %s20
      $region20: #{waveunet_forward.14} parent=11 // pred_fallthru
        _
    $region12: #{waveunet_forward.14} parent=5 // pred_fallthru
      _
    %p173 = scmp.lt.s32.totalorder %s9, 2
    // Predicated region
    $region21: #{waveunet_forward.14} parent=5 // pred_check
      %p174 = pneg %p173
    $region22: #{waveunet_forward.14} parent=5 // pred_check_branch
      %176 = sbr.rel (%p174) target = $region24
    $region23: #{waveunet_forward.14} parent=5 // pred_region
      // Predicated region
      $region25: #{waveunet_forward.14} parent=23 // pred_check
        %p177 = pneg %p52
      $region26: #{waveunet_forward.14} parent=23 // pred_check_branch
        %179 = sbr.rel (%p177) target = $region28
      $region27: #{waveunet_forward.14} parent=23 // pred_region
        %s180 = smul.u32 2, %s17
        %p181 = scmp.lt.s32.totalorder %s16, 1
        %s182 = scalar_select %p181, %s16, 1
        %p183 = scmp.lt.s32.totalorder %s180, 1
        %s184 = scalar_select %p183, %s180, 1
        %p185 = scmp.lt.s32.totalorder %s18, 0
        %s186 = scalar_select %p185, %s18, 0
        %s187 = sadd.s32 %s186, %s184
        %s188 = smul.addr %s182, 2
        %s189 = sadd.s32 %s187, %s188
        %s190 = smul.addr %s189, 4
        %s191 = scalar_lea.vmem %s0, %s190
        %s192 = smul.u32 2, %s17
      $region28: #{waveunet_forward.14} parent=23 // pred_fallthru
        _
    $region24: #{waveunet_forward.14} parent=5 // pred_fallthru
      _
    %p193 = scmp.le.s32.totalorder 1, %s9
    %p194 = scmp.lt.s32.totalorder %s9, 3
    %p195 = pnand %p193, %p194
    %p196 = pneg %p195
    // Predicated region
    $region29: #{waveunet_forward.14} parent=5 // pred_check
      _
    $region30: #{waveunet_forward.14} parent=5 // pred_check_branch
      %198 = sbr.rel (%p195) target = $region32
    $region31: #{waveunet_forward.14} parent=5 // pred_region
      %s199 = ssub.s32 %s9, 1
      %s200 = smul.u32 2, %s20
      %p201 = scmp.lt.s32.totalorder %s19, 1
      %s202 = scalar_select %p201, %s19, 1
      %p203 = scmp.lt.s32.totalorder %s200, 1
      %s204 = scalar_select %p203, %s200, 1
      %p205 = scmp.lt.s32.totalorder %s21, 0
      %s206 = scalar_select %p205, %s21, 0
      %s207 = sadd.s32 %s206, %s204
      %s208 = smul.addr %s202, 2
      %s209 = sadd.s32 %s207, %s208
      %s210 = smul.addr %s209, 4
      %s211 = scalar_lea.vmem %s0, %s210
      %p212 = pneg %p58
      %p213 = pneg %p55
      %s214 = smul.u32 2, %s20
      %p215 = scmp.lt.s32.totalorder %s214, 1
      %s216 = scalar_select %p215, %s214, 1
      %s217 = smul.addr %s216, 8
      %s218 = scalar_lea.vmem %s1, %s217
      %p219 = pneg %p84
      %p220 = pneg %p81
      %s221 = smul.u32 2, %s20
      %p222 = scmp.lt.s32.totalorder %s221, 1
      %s223 = scalar_select %p222, %s221, 1
      %s224 = smul.addr %s223, 8
      %s225 = scalar_lea.vmem %s2, %s224
      %p226 = pneg %p110
      %p227 = pneg %p107
      %p228 = pneg %p140
      %p229 = pneg %p137
      %s230 = smul.u32 2, %s20
      %p231 = scmp.lt.s32.totalorder %s19, 1
      %s232 = scalar_select %p231, %s19, 1
      %p233 = scmp.lt.s32.totalorder %s230, 1
      %s234 = scalar_select %p233, %s230, 1
      %p235 = scmp.lt.s32.totalorder %s21, 0
      %s236 = scalar_select %p235, %s21, 0
      %s237 = sadd.s32 %s236, %s234
      %s238 = smul.addr %s232, 2
      %s239 = sadd.s32 %s237, %s238
      %s240 = smul.addr %s239, 4
      %s241 = scalar_lea.vmem %s3, %s240
      %s242 = smul.u32 2, %s20
      %p243 = scmp.lt.s32.totalorder %s19, 1
      %s244 = scalar_select %p243, %s19, 1
      %p245 = scmp.lt.s32.totalorder %s242, 1
      %s246 = scalar_select %p245, %s242, 1
      %p247 = scmp.lt.s32.totalorder %s21, 0
      %s248 = scalar_select %p247, %s21, 0
      %s249 = sadd.s32 %s248, %s246
      %s250 = smul.addr %s244, 2
      %s251 = sadd.s32 %s249, %s250
      %s252 = smul.addr %s251, 4
      %s253 = scalar_lea.vmem %s0, %s252
      %s254 = smul.u32 2, %s20
      %s255 = smul.u32 2, %s20
      %p256 = scmp.lt.s32.totalorder %s255, 1
      %s257 = scalar_select %p256, %s255, 1
      %s258 = smul.addr %s257, 8
      %s259 = scalar_lea.vmem %s1, %s258
      %s260 = smul.u32 2, %s20
      %s261 = smul.u32 2, %s20
      %p262 = scmp.lt.s32.totalorder %s261, 1
      %s263 = scalar_select %p262, %s261, 1
      %s264 = smul.addr %s263, 8
      %s265 = scalar_lea.vmem %s2, %s264
      %s266 = smul.u32 2, %s20
      %s267 = smul.u32 2, %s20
      %p268 = scmp.lt.s32.totalorder %s19, 1
      %s269 = scalar_select %p268, %s19, 1
      %p270 = scmp.lt.s32.totalorder %s267, 1
      %s271 = scalar_select %p270, %s267, 1
      %p272 = scmp.lt.s32.totalorder %s21, 0
      %s273 = scalar_select %p272, %s21, 0
      %s274 = sadd.s32 %s273, %s271
      %s275 = smul.addr %s269, 2
      %s276 = sadd.s32 %s274, %s275
      %s277 = smul.addr %s276, 4
      %s278 = scalar_lea.vmem %s3, %s277
      %s279 = smul.u32 2, %s20
      %v280 = vld [vmem:[%s253] sm:$0xf]
      %v281 = vld [vmem:[%s253 + $0x4] sm:$0xf]
      %v282 = vunpack.c.l.bf16 %v280
      %v283 = vunpack.c.l.bf16 %v281
      %v284 = vld [vmem:[%s259] sm:$0xff]
      %v285 = vld [vmem:[%s259 + $0x8] sm:$0xff]
      %287 = vset.pattern.permute.xlu0 0
      %288 = vperm.xlu0 %287, %v284
      %v289 = vpop.permute.xlu0 %288
      %292 = vset.pattern.permute.xlu0 0
      %293 = vperm.xlu0 %292, %v285
      %v294 = vpop.permute.xlu0 %293
      %v296 = vmul.f32 %v282, %v289
      %v297 = vmul.f32 %v283, %v294
      %v298 = vld [vmem:[%s265] sm:$0xff]
      %v299 = vld [vmem:[%s265 + $0x8] sm:$0xff]
      %301 = vset.pattern.permute.xlu0 0
      %302 = vperm.xlu0 %301, %v298
      %v303 = vpop.permute.xlu0 %302
      %306 = vset.pattern.permute.xlu0 0
      %307 = vperm.xlu0 %306, %v299
      %v308 = vpop.permute.xlu0 %307
      %v310 = vadd.f32 %v296, %v303
      %v311 = vadd.f32 %v297, %v308
      %vm312 = vcmp.gt.f32.partialorder %v310, 0.0
      %vm313 = vcmp.gt.f32.partialorder %v311, 0.0
      %v314 = vmul.f32 %v310, 0.01
      %v315 = vmul.f32 %v311, 0.01
      %v316 = vsel %vm312, %v310, %v314
      %v317 = vsel %vm313, %v311, %v315
      %v318 = vpack.c.bf16 %v317, %v316
      %v320 = vunpack.c.l.b16 %v318
      %v321 = vunpack.c.h.b16 %v318
      %v322 = vpack.c.b16 %v320, %v320
      %v323 = vpack.c.b16 %v321, %v321
      %326 = vst [vmem:[%s278] sm:$0xf] %v322
      %327 = vst [vmem:[%s278 + $0x4] sm:$0xf] %v323
      %s328 = smul.u32 2, %s20
      %p329 = scmp.lt.s32.totalorder %s19, 1
      %s330 = scalar_select %p329, %s19, 1
      %p331 = scmp.lt.s32.totalorder %s328, 1
      %s332 = scalar_select %p331, %s328, 1
      %p333 = scmp.lt.s32.totalorder %s21, 0
      %s334 = scalar_select %p333, %s21, 0
      %s335 = sadd.s32 %s334, %s332
      %s336 = smul.addr %s330, 2
      %s337 = sadd.s32 %s335, %s336
      %s338 = smul.addr %s337, 4
      %s339 = scalar_lea.vmem %s3, %s338
      // Predicated region
      $region33: #{waveunet_forward.14} parent=31 // pred_check
        %p340 = pneg %p137
      $region34: #{waveunet_forward.14} parent=31 // pred_check_branch
        %342 = sbr.rel (%p340) target = $region36
      $region35: #{waveunet_forward.14} parent=31 // pred_region
        %s343 = smul.u32 2, %s20
      $region36: #{waveunet_forward.14} parent=31 // pred_fallthru
        _
    $region32: #{waveunet_forward.14} parent=5 // pred_fallthru
      _
    %p344 = scmp.le.s32.totalorder 2, %s9
    // Predicated region
    $region37: #{waveunet_forward.14} parent=5 // pred_check
      %p345 = pneg %p344
    $region38: #{waveunet_forward.14} parent=5 // pred_check_branch
      %347 = sbr.rel (%p345) target = $region40
    $region39: #{waveunet_forward.14} parent=5 // pred_region
      %s348 = ssub.s32 %s9, 2
      // Predicated region
      $region41: #{waveunet_forward.14} parent=39 // pred_check
        %p349 = pneg %p143
      $region42: #{waveunet_forward.14} parent=39 // pred_check_branch
        %351 = sbr.rel (%p349) target = $region44
      $region43: #{waveunet_forward.14} parent=39 // pred_region
        %s352 = smul.u32 2, %s23
        %p353 = scmp.lt.s32.totalorder %s22, 1
        %s354 = scalar_select %p353, %s22, 1
        %p355 = scmp.lt.s32.totalorder %s352, 1
        %s356 = scalar_select %p355, %s352, 1
        %p357 = scmp.lt.s32.totalorder %s24, 0
        %s358 = scalar_select %p357, %s24, 0
        %s359 = sadd.s32 %s358, %s356
        %s360 = smul.addr %s354, 2
        %s361 = sadd.s32 %s359, %s360
        %s362 = smul.addr %s361, 4
        %s363 = scalar_lea.vmem %s3, %s362
      $region44: #{waveunet_forward.14} parent=39 // pred_fallthru
        _
    $region40: #{waveunet_forward.14} parent=5 // pred_fallthru
      _
  $region6: #{waveunet_forward.14} parent=0 // loop_footer
    %s13 = sadd.s32 1, %s9
  $region7: #{waveunet_forward.14} parent=0 // loop_footer_branch
    %8 = sbr.rel target = $region3
  $region8: #{waveunet_forward.14} parent=0 // loop_exit
    _

// kernel: waveunet_forward.13
$region0: #{waveunet_forward.13}
  #allocation0 [shape = 'u32[]', space=smem, size = 0x4, offset = 0x4, fixed_abs, tag = 'smem constant byte address 0x4 - core index']
  #allocation1 [shape = 'u32[144,128]{1,0:T(1,128)}', space=vmem, size = 0x12000, scoped, tag = 'internal scratch']
  #allocation2 [shape = 'f32[16,1]{1,0:T(8,128)}', space=vmem, size = 0x2000, scoped, tag = 'scratch operand']
  #allocation3 [shape = 'f32[16,1]{1,0:T(8,128)}', space=vmem, size = 0x2000, scoped, tag = 'scratch operand']
  %s0 = inlined_call_operand.vmem [shape: bf16[2,8,256], index: 0, kind: input, shape index: {}, may-alias: {0,1}]
  %s1 = inlined_call_operand.vmem [shape: bf16[2,8,256], index: 1, kind: input, shape index: {}, may-alias: {0,1}]
  %s2 = inlined_call_operand.vmem [shape: bf16[16,120], index: 2, kind: input, shape index: {}]
  %s3 = inlined_call_operand.vmem [shape: f32[16,1], index: 3, kind: input, shape index: {}]
  %s4 = inlined_call_operand.vmem [shape: bf16[2,16,128], index: 4, kind: output, shape index: {0}]
  %s5 = inlined_call_operand.vmem [shape: f32[2,16,128], index: 5, kind: output, shape index: {1}]
  %6 = xla_tuple %s4, %s5
  %s7 = sld [smem:[#allocation0]]
  $region69: #{waveunet_forward.13} parent=0
    _
  %s9 = ssub.s32 1, %s7
  %s10 = scalar_select 0, %s9, %s7
  loop: start=0, step=1, limit=4
  $region2: #{waveunet_forward.13} parent=0 // loop_pre_header
    _
  $region3: #{waveunet_forward.13} parent=0 // loop_header
    %s12 = sphi 0, %s16
    %p13 = scmp.ge.s32.totalorder %s12, 4
    %s19 = sphi 0, %s38
    %s20 = sphi 0, %s34
    %s21 = sphi 0, %s30
    %s22 = sphi 0, %s19
    %s23 = sphi 0, %s20
    %s24 = sphi 0, %s21
    %s25 = sphi 0, %s22
    %s26 = sphi 0, %s23
    %s27 = sphi 0, %s24
    %s43 = sphi 0, %s45
    %s46 = sphi 0, %s43
    %s47 = sphi 0, %s46
    %s63 = sphi 0, %s47
    %s73 = sphi 0, %s75
    %s76 = sphi 0, %s73
    %s77 = sphi 0, %s76
    %s93 = sphi 0, %s77
    %s99 = sphi 0, %s101
    %s102 = sphi 0, %s99
    %s103 = sphi 0, %s102
    %s119 = sphi 0, %s103
    %s125 = sphi 0, %s127
    %s128 = sphi 0, %s125
    %s129 = sphi 0, %s128
    %s145 = sphi 0, %s129
    %s155 = sphi 0, %s157
    %s158 = sphi 0, %s155
    %s159 = sphi 0, %s158
    %s175 = sphi 0, %s159
    %s183 = sphi 0, %s185
    %s186 = sphi 0, %s183
    %s187 = sphi 0, %s186
    %s203 = sphi 0, %s187
  $region4: #{waveunet_forward.13} parent=0 // loop_header_branch
    %15 = sbr.rel (%p13) target = $region8
  $region5: #{waveunet_forward.13} parent=0 // loop_body
    %s17 = ssub.s32 %s12, 1
    %s18 = ssub.s32 %s12, 2
    %s28 = sadd.s32 1, %s21
    %p29 = scmp.ge.s32.totalorder %s28, 1
    %s30 = scalar_select %p29, 0, %s28
    %s31 = sadd.s32 1, %s20
    %s32 = scalar_select %p29, %s31, %s20
    %p33 = scmp.ge.s32.totalorder %s32, 1
    %s34 = scalar_select %p33, 0, %s32
    %s35 = sadd.s32 1, %s19
    %s36 = scalar_select %p33, %s35, %s19
    %p37 = scmp.ge.s32.totalorder %s36, 2
    %s38 = scalar_select %p37, 0, %s36
    %s39 = ssub.s32 %s19, %s38
    %s40 = ssub.s32 %s21, %s30
    %s41 = sor.u32 %s39, %s40
    %p42 = scmp.eq.s32.totalorder %s41, 0
    %s44 = sadd.s32 %s43, 1
    %s45 = scalar_select %p42, %s43, %s44
    %p48 = pneg %p42
    %p49 = scmp.eq.s32.totalorder %s12, 1
    %p50 = por %p48, %p49
    %p51 = scmp.ne.s32.totalorder %s43, %s46
    %p52 = scmp.eq.s32.totalorder %s12, 0
    %p53 = por %p51, %p52
    %p54 = scmp.ne.s32.totalorder %s43, %s46
    %p55 = scmp.eq.s32.totalorder %s17, 1
    %p56 = por %p54, %p55
    %p57 = scmp.ne.s32.totalorder %s46, %s47
    %p58 = scmp.eq.s32.totalorder %s17, 0
    %p59 = por %p57, %p58
    %p60 = scmp.ne.s32.totalorder %s46, %s47
    %p61 = scmp.eq.s32.totalorder %s18, 1
    %p62 = por %p60, %p61
    %p64 = scmp.ne.s32.totalorder %s47, %s63
    %p65 = scmp.eq.s32.totalorder %s18, 0
    %p66 = por %p64, %p65
    %s67 = sadd.s32 %s21, 1
    %s68 = sadd.s32 %s30, 1
    %s69 = ssub.s32 %s19, %s38
    %s70 = ssub.s32 %s67, %s68
    %s71 = sor.u32 %s69, %s70
    %p72 = scmp.eq.s32.totalorder %s71, 0
    %s74 = sadd.s32 %s73, 1
    %s75 = scalar_select %p72, %s73, %s74
    %p78 = pneg %p72
    %p79 = scmp.eq.s32.totalorder %s12, 1
    %p80 = por %p78, %p79
    %p81 = scmp.ne.s32.totalorder %s73, %s76
    %p82 = scmp.eq.s32.totalorder %s12, 0
    %p83 = por %p81, %p82
    %p84 = scmp.ne.s32.totalorder %s73, %s76
    %p85 = scmp.eq.s32.totalorder %s17, 1
    %p86 = por %p84, %p85
    %p87 = scmp.ne.s32.totalorder %s76, %s77
    %p88 = scmp.eq.s32.totalorder %s17, 0
    %p89 = por %p87, %p88
    %p90 = scmp.ne.s32.totalorder %s76, %s77
    %p91 = scmp.eq.s32.totalorder %s18, 1
    %p92 = por %p90, %p91
    %p94 = scmp.ne.s32.totalorder %s77, %s93
    %p95 = scmp.eq.s32.totalorder %s18, 0
    %p96 = por %p94, %p95
    %s97 = ssub.s32 %s20, %s34
    %p98 = scmp.eq.s32.totalorder %s97, 0
    %s100 = sadd.s32 %s99, 1
    %s101 = scalar_select %p98, %s99, %s100
    %p104 = pneg %p98
    %p105 = scmp.eq.s32.totalorder %s12, 1
    %p106 = por %p104, %p105
    %p107 = scmp.ne.s32.totalorder %s99, %s102
    %p108 = scmp.eq.s32.totalorder %s12, 0
    %p109 = por %p107, %p108
    %p110 = scmp.ne.s32.totalorder %s99, %s102
    %p111 = scmp.eq.s32.totalorder %s17, 1
    %p112 = por %p110, %p111
    %p113 = scmp.ne.s32.totalorder %s102, %s103
    %p114 = scmp.eq.s32.totalorder %s17, 0
    %p115 = por %p113, %p114
    %p116 = scmp.ne.s32.totalorder %s102, %s103
    %p117 = scmp.eq.s32.totalorder %s18, 1
    %p118 = por %p116, %p117
    %p120 = scmp.ne.s32.totalorder %s103, %s119
    %p121 = scmp.eq.s32.totalorder %s18, 0
    %p122 = por %p120, %p121
    %s123 = ssub.s32 %s20, %s34
    %p124 = scmp.eq.s32.totalorder %s123, 0
    %s126 = sadd.s32 %s125, 1
    %s127 = scalar_select %p124, %s125, %s126
    %p130 = pneg %p124
    %p131 = scmp.eq.s32.totalorder %s12, 1
    %p132 = por %p130, %p131
    %p133 = scmp.ne.s32.totalorder %s125, %s128
    %p134 = scmp.eq.s32.totalorder %s12, 0
    %p135 = por %p133, %p134
    %p136 = scmp.ne.s32.totalorder %s125, %s128
    %p137 = scmp.eq.s32.totalorder %s17, 1
    %p138 = por %p136, %p137
    %p139 = scmp.ne.s32.totalorder %s128, %s129
    %p140 = scmp.eq.s32.totalorder %s17, 0
    %p141 = por %p139, %p140
    %p142 = scmp.ne.s32.totalorder %s128, %s129
    %p143 = scmp.eq.s32.totalorder %s18, 1
    %p144 = por %p142, %p143
    %p146 = scmp.ne.s32.totalorder %s129, %s145
    %p147 = scmp.eq.s32.totalorder %s18, 0
    %p148 = por %p146, %p147
    %s149 = ssub.s32 %s19, %s38
    %s150 = ssub.s32 %s20, %s34
    %s151 = sor.u32 %s149, %s150
    %s152 = ssub.s32 %s21, %s30
    %s153 = sor.u32 %s151, %s152
    %p154 = scmp.eq.s32.totalorder %s153, 0
    %s156 = sadd.s32 %s155, 1
    %s157 = scalar_select %p154, %s155, %s156
    %p160 = pneg %p154
    %p161 = scmp.eq.s32.totalorder %s12, 1
    %p162 = por %p160, %p161
    %p163 = scmp.ne.s32.totalorder %s155, %s158
    %p164 = scmp.eq.s32.totalorder %s12, 0
    %p165 = por %p163, %p164
    %p166 = scmp.ne.s32.totalorder %s155, %s158
    %p167 = scmp.eq.s32.totalorder %s17, 1
    %p168 = por %p166, %p167
    %p169 = scmp.ne.s32.totalorder %s158, %s159
    %p170 = scmp.eq.s32.totalorder %s17, 0
    %p171 = por %p169, %p170
    %p172 = scmp.ne.s32.totalorder %s158, %s159
    %p173 = scmp.eq.s32.totalorder %s18, 1
    %p174 = por %p172, %p173
    %p176 = scmp.ne.s32.totalorder %s159, %s175
    %p177 = scmp.eq.s32.totalorder %s18, 0
    %p178 = por %p176, %p177
    %s179 = ssub.s32 %s19, %s38
    %s180 = ssub.s32 %s20, %s34
    %s181 = sor.u32 %s179, %s180
    %p182 = scmp.eq.s32.totalorder %s181, 0
    %s184 = sadd.s32 %s183, 1
    %s185 = scalar_select %p182, %s183, %s184
    %p188 = pneg %p182
    %p189 = scmp.eq.s32.totalorder %s12, 1
    %p190 = por %p188, %p189
    %p191 = scmp.ne.s32.totalorder %s183, %s186
    %p192 = scmp.eq.s32.totalorder %s12, 0
    %p193 = por %p191, %p192
    %p194 = scmp.ne.s32.totalorder %s183, %s186
    %p195 = scmp.eq.s32.totalorder %s17, 1
    %p196 = por %p194, %p195
    %p197 = scmp.ne.s32.totalorder %s186, %s187
    %p198 = scmp.eq.s32.totalorder %s17, 0
    %p199 = por %p197, %p198
    %p200 = scmp.ne.s32.totalorder %s186, %s187
    %p201 = scmp.eq.s32.totalorder %s18, 1
    %p202 = por %p200, %p201
    %p204 = scmp.ne.s32.totalorder %s187, %s203
    %p205 = scmp.eq.s32.totalorder %s18, 0
    %p206 = por %p204, %p205
    %p207 = scmp.le.s32.totalorder 1, %s12
    %p208 = scmp.lt.s32.totalorder %s12, 3
    %p209 = pnand %p207, %p208
    %p210 = pneg %p209
    // Predicated region
    $region9: #{waveunet_forward.13} parent=5 // pred_check
      _
    $region10: #{waveunet_forward.13} parent=5 // pred_check_branch
      %212 = sbr.rel (%p209) target = $region12
    $region11: #{waveunet_forward.13} parent=5 // pred_region
      %s213 = ssub.s32 %s12, 1
      // Predicated region
      $region13: #{waveunet_forward.13} parent=11 // pred_check
        %p214 = pneg %p115
      $region14: #{waveunet_forward.13} parent=11 // pred_check_branch
        %216 = sbr.rel (%p214) target = $region16
      $region15: #{waveunet_forward.13} parent=11 // pred_region
        %s217 = smul.u32 2, %s23
        %p218 = scmp.lt.s32.totalorder %s217, 1
        %s219 = scalar_select %p218, %s217, 1
        %s220 = smul.addr %s219, 4
        %s221 = scalar_lea.vmem %s2, %s220
        %s222 = smul.u32 2, %s23
      $region16: #{waveunet_forward.13} parent=11 // pred_fallthru
        _
      // Predicated region
      $region17: #{waveunet_forward.13} parent=11 // pred_check
        %p223 = pneg %p141
      $region18: #{waveunet_forward.13} parent=11 // pred_check_branch
        %225 = sbr.rel (%p223) target = $region20
      $region19: #{waveunet_forward.13} parent=11 // pred_region
        %s226 = smul.u32 2, %s23
        %p227 = scmp.lt.s32.totalorder %s226, 1
        %s228 = scalar_select %p227, %s226, 1
        %s229 = smul.addr %s228, 8
        %s230 = scalar_lea.vmem %s3, %s229
        %s231 = smul.u32 2, %s23
      $region20: #{waveunet_forward.13} parent=11 // pred_fallthru
        _
    $region12: #{waveunet_forward.13} parent=5 // pred_fallthru
      _
    %p232 = scmp.lt.s32.totalorder %s12, 2
    // Predicated region
    $region21: #{waveunet_forward.13} parent=5 // pred_check
      %p233 = pneg %p232
    $region22: #{waveunet_forward.13} parent=5 // pred_check_branch
      %235 = sbr.rel (%p233) target = $region24
    $region23: #{waveunet_forward.13} parent=5 // pred_region
      // Predicated region
      $region25: #{waveunet_forward.13} parent=23 // pred_check
        %p236 = pneg %p53
      $region26: #{waveunet_forward.13} parent=23 // pred_check_branch
        %238 = sbr.rel (%p236) target = $region28
      $region27: #{waveunet_forward.13} parent=23 // pred_region
        %p239 = scmp.lt.s32.totalorder %s19, 1
        %s240 = scalar_select %p239, %s19, 1
        %p241 = scmp.lt.s32.totalorder %s21, 1
        %s242 = scalar_select %p241, %s21, 1
        %s243 = smul.addr %s240, 2
        %s244 = sadd.s32 %s242, %s243
        %s245 = smul.addr %s244, 4
        %s246 = scalar_lea.vmem %s0, %s245
      $region28: #{waveunet_forward.13} parent=23 // pred_fallthru
        _
      // Predicated region
      $region29: #{waveunet_forward.13} parent=23 // pred_check
        %p247 = pneg %p83
      $region30: #{waveunet_forward.13} parent=23 // pred_check_branch
        %249 = sbr.rel (%p247) target = $region32
      $region31: #{waveunet_forward.13} parent=23 // pred_region
        %s250 = sadd.s32 %s21, 1
        %p251 = scmp.lt.s32.totalorder %s19, 1
        %s252 = scalar_select %p251, %s19, 1
        %p253 = scmp.lt.s32.totalorder %s250, 1
        %s254 = scalar_select %p253, %s250, 1
        %s255 = smul.addr %s252, 2
        %s256 = sadd.s32 %s254, %s255
        %s257 = smul.addr %s256, 4
        %s258 = scalar_lea.vmem %s1, %s257
        %s259 = sadd.s32 %s21, 1
      $region32: #{waveunet_forward.13} parent=23 // pred_fallthru
        _
    $region24: #{waveunet_forward.13} parent=5 // pred_fallthru
      _
    %p260 = scmp.le.s32.totalorder 1, %s12
    %p261 = scmp.lt.s32.totalorder %s12, 3
    %p262 = pnand %p260, %p261
    %p263 = pneg %p262
    // Predicated region
    $region33: #{waveunet_forward.13} parent=5 // pred_check
      _
    $region34: #{waveunet_forward.13} parent=5 // pred_check_branch
      %265 = sbr.rel (%p262) target = $region36
    $region35: #{waveunet_forward.13} parent=5 // pred_region
      %s266 = ssub.s32 %s12, 1
      %p267 = scmp.lt.s32.totalorder %s22, 1
      %s268 = scalar_select %p267, %s22, 1
      %p269 = scmp.lt.s32.totalorder %s24, 1
      %s270 = scalar_select %p269, %s24, 1
      %s271 = smul.addr %s268, 2
      %s272 = sadd.s32 %s270, %s271
      %s273 = smul.addr %s272, 4
      %s274 = scalar_lea.vmem %s0, %s273
      %p275 = pneg %p59
      %p276 = pneg %p56
      %s277 = sadd.s32 %s24, 1
      %p278 = scmp.lt.s32.totalorder %s22, 1
      %s279 = scalar_select %p278, %s22, 1
      %p280 = scmp.lt.s32.totalorder %s277, 1
      %s281 = scalar_select %p280, %s277, 1
      %s282 = smul.addr %s279, 2
      %s283 = sadd.s32 %s281, %s282
      %s284 = smul.addr %s283, 4
      %s285 = scalar_lea.vmem %s1, %s284
      %p286 = pneg %p89
      %p287 = pneg %p86
      %s288 = smul.u32 2, %s23
      %p289 = scmp.lt.s32.totalorder %s288, 1
      %s290 = scalar_select %p289, %s288, 1
      %s291 = smul.addr %s290, 4
      %s292 = scalar_lea.vmem %s2, %s291
      %p293 = pneg %p115
      %p294 = pneg %p112
      %s295 = smul.u32 2, %s23
      %p296 = scmp.lt.s32.totalorder %s295, 1
      %s297 = scalar_select %p296, %s295, 1
      %s298 = smul.addr %s297, 8
      %s299 = scalar_lea.vmem %s3, %s298
      %p300 = pneg %p141
      %p301 = pneg %p138
      %p302 = pneg %p171
      %p303 = pneg %p168
      %s304 = smul.u32 2, %s23
      %p305 = scmp.lt.s32.totalorder %s22, 1
      %s306 = scalar_select %p305, %s22, 1
      %p307 = scmp.lt.s32.totalorder %s304, 1
      %s308 = scalar_select %p307, %s304, 1
      %p309 = scmp.lt.s32.totalorder %s24, 0
      %s310 = scalar_select %p309, %s24, 0
      %s311 = sadd.s32 %s310, %s308
      %s312 = smul.addr %s306, 2
      %s313 = sadd.s32 %s311, %s312
      %s314 = smul.addr %s313, 4
      %s315 = scalar_lea.vmem %s4, %s314
      %p316 = pneg %p199
      %p317 = pneg %p196
      %s318 = smul.u32 2, %s23
      %p319 = scmp.lt.s32.totalorder %s22, 1
      %s320 = scalar_select %p319, %s22, 1
      %p321 = scmp.lt.s32.totalorder %s318, 1
      %s322 = scalar_select %p321, %s318, 1
      %s323 = smul.addr %s320, 2
      %s324 = sadd.s32 %s322, %s323
      %s325 = smul.addr %s324, 8
      %s326 = scalar_lea.vmem %s5, %s325
      %p327 = scmp.lt.s32.totalorder %s22, 1
      %s328 = scalar_select %p327, %s22, 1
      %p329 = scmp.lt.s32.totalorder %s24, 1
      %s330 = scalar_select %p329, %s24, 1
      %s331 = smul.addr %s328, 2
      %s332 = sadd.s32 %s330, %s331
      %s333 = smul.addr %s332, 4
      %s334 = scalar_lea.vmem %s0, %s333
      %s335 = sadd.s32 %s24, 1
      %p336 = scmp.lt.s32.totalorder %s22, 1
      %s337 = scalar_select %p336, %s22, 1
      %p338 = scmp.lt.s32.totalorder %s335, 1
      %s339 = scalar_select %p338, %s335, 1
      %s340 = smul.addr %s337, 2
      %s341 = sadd.s32 %s339, %s340
      %s342 = smul.addr %s341, 4
      %s343 = scalar_lea.vmem %s1, %s342
      %s344 = sadd.s32 %s24, 1
      %s345 = smul.u32 2, %s23
      %p346 = scmp.lt.s32.totalorder %s345, 1
      %s347 = scalar_select %p346, %s345, 1
      %s348 = smul.addr %s347, 4
      %s349 = scalar_lea.vmem %s2, %s348
      %s350 = smul.u32 2, %s23
      %s351 = smul.u32 2, %s23
      %p352 = scmp.lt.s32.totalorder %s351, 1
      %s353 = scalar_select %p352, %s351, 1
      %s354 = smul.addr %s353, 8
      %s355 = scalar_lea.vmem %s3, %s354
      %s356 = smul.u32 2, %s23
      %s357 = smul.u32 2, %s23
      %p358 = scmp.lt.s32.totalorder %s22, 1
      %s359 = scalar_select %p358, %s22, 1
      %p360 = scmp.lt.s32.totalorder %s357, 1
      %s361 = scalar_select %p360, %s357, 1
      %p362 = scmp.lt.s32.totalorder %s24, 0
      %s363 = scalar_select %p362, %s24, 0
      %s364 = sadd.s32 %s363, %s361
      %s365 = smul.addr %s359, 2
      %s366 = sadd.s32 %s364, %s365
      %s367 = smul.addr %s366, 4
      %s368 = scalar_lea.vmem %s4, %s367
      %s369 = smul.u32 2, %s23
      %s370 = smul.u32 2, %s23
      %p371 = scmp.lt.s32.totalorder %s22, 1
      %s372 = scalar_select %p371, %s22, 1
      %p373 = scmp.lt.s32.totalorder %s370, 1
      %s374 = scalar_select %p373, %s370, 1
      %s375 = smul.addr %s372, 2
      %s376 = sadd.s32 %s374, %s375
      %s377 = smul.addr %s376, 8
      %s378 = scalar_lea.vmem %s5, %s377
      %s379 = smul.u32 2, %s23
      %v381 = vld [vmem:[%s334] sm:$0xf]
      %v382 = vld [vmem:[%s343] sm:$0xf]
      %v384 = vunpack.c.l.b16 %v381
      %v385 = vpack.c.b16 %v384, %v384
      %386 = vrot.lane.b32.xlu0 %v385, 127
      %v387 = vpop.permute.xlu0 %386
      %v389 = vunpack.c.l.b16 %v382
      %v390 = vpack.c.b16 %v389, %v389
      %391 = vrot.lane.b32.xlu0 %v390, 127
      %v392 = vpop.permute.xlu0 %391
      %vm393 = vcmask 1039360
      %v396 = vsel %vm393, %v387, %v392
      %397 = vrot.lane.b32.xlu0 %v385, 126
      %v398 = vpop.permute.xlu0 %397
      %399 = vrot.lane.b32.xlu0 %v390, 126
      %v400 = vpop.permute.xlu0 %399
      %vm401 = vcmask 1031168
      %v404 = vsel %vm401, %v398, %v400
      %405 = vrot.lane.b32.xlu0 %v385, 125
      %v406 = vpop.permute.xlu0 %405
      %407 = vrot.lane.b32.xlu0 %v390, 125
      %v408 = vpop.permute.xlu0 %407
      %vm409 = vcmask 1022976
      %v412 = vsel %vm409, %v406, %v408
      %413 = vrot.lane.b32.xlu0 %v385, 124
      %v414 = vpop.permute.xlu0 %413
      %415 = vrot.lane.b32.xlu0 %v390, 124
      %v416 = vpop.permute.xlu0 %415
      %vm417 = vcmask 1014784
      %v420 = vsel %vm417, %v414, %v416
      %421 = vrot.lane.b32.xlu0 %v385, 123
      %v422 = vpop.permute.xlu0 %421
      %423 = vrot.lane.b32.xlu0 %v390, 123
      %v424 = vpop.permute.xlu0 %423
      %vm425 = vcmask 1006592
      %v428 = vsel %vm425, %v422, %v424
      %429 = vrot.lane.b32.xlu0 %v385, 122
      %v430 = vpop.permute.xlu0 %429
      %431 = vrot.lane.b32.xlu0 %v390, 122
      %v432 = vpop.permute.xlu0 %431
      %vm433 = vcmask 998400
      %v436 = vsel %vm433, %v430, %v432
      %437 = vrot.lane.b32.xlu0 %v385, 121
      %v438 = vpop.permute.xlu0 %437
      %439 = vrot.lane.b32.xlu0 %v390, 121
      %v440 = vpop.permute.xlu0 %439
      %vm441 = vcmask 990208
      %v444 = vsel %vm441, %v438, %v440
      %445 = vrot.lane.b32.xlu0 %v385, 120
      %v446 = vpop.permute.xlu0 %445
      %447 = vrot.lane.b32.xlu0 %v390, 120
      %v448 = vpop.permute.xlu0 %447
      %vm449 = vcmask 982016
      %v452 = vsel %vm449, %v446, %v448
      %453 = vrot.lane.b32.xlu0 %v385, 119
      %v454 = vpop.permute.xlu0 %453
      %455 = vrot.lane.b32.xlu0 %v390, 119
      %v456 = vpop.permute.xlu0 %455
      %vm457 = vcmask 973824
      %v460 = vsel %vm457, %v454, %v456
      %461 = vrot.lane.b32.xlu0 %v385, 118
      %v462 = vpop.permute.xlu0 %461
      %463 = vrot.lane.b32.xlu0 %v390, 118
      %v464 = vpop.permute.xlu0 %463
      %vm465 = vcmask 965632
      %v468 = vsel %vm465, %v462, %v464
      %469 = vrot.lane.b32.xlu0 %v385, 117
      %v470 = vpop.permute.xlu0 %469
      %471 = vrot.lane.b32.xlu0 %v390, 117
      %v472 = vpop.permute.xlu0 %471
      %vm473 = vcmask 957440
      %v476 = vsel %vm473, %v470, %v472
      %477 = vrot.lane.b32.xlu0 %v385, 116
      %v478 = vpop.permute.xlu0 %477
      %479 = vrot.lane.b32.xlu0 %v390, 116
      %v480 = vpop.permute.xlu0 %479
      %vm481 = vcmask 949248
      %v484 = vsel %vm481, %v478, %v480
      %485 = vrot.lane.b32.xlu0 %v385, 115
      %v486 = vpop.permute.xlu0 %485
      %487 = vrot.lane.b32.xlu0 %v390, 115
      %v488 = vpop.permute.xlu0 %487
      %vm489 = vcmask 941056
      %v492 = vsel %vm489, %v486, %v488
      %493 = vrot.lane.b32.xlu0 %v385, 114
      %v494 = vpop.permute.xlu0 %493
      %495 = vrot.lane.b32.xlu0 %v390, 114
      %v496 = vpop.permute.xlu0 %495
      %vm497 = vcmask 932864
      %v500 = vsel %vm497, %v494, %v496
      %v502 = vrot.slane %v396, 4
      %v504 = vrot.slane %v412, 4
      %v506 = vrot.slane %v428, 4
      %v508 = vrot.slane %v444, 4
      %v510 = vrot.slane %v460, 4
      %v512 = vrot.slane %v476, 4
      %v514 = vrot.slane %v492, 4
      %vm515 = vcmask 1043456
      %v518 = vsel %vm515, %v381, %v502
      %v521 = vsel %vm515, %v404, %v504
      %v524 = vsel %vm515, %v420, %v506
      %v527 = vsel %vm515, %v436, %v508
      %v530 = vsel %vm515, %v452, %v510
      %v533 = vsel %vm515, %v468, %v512
      %v536 = vsel %vm515, %v484, %v514
      %v538 = vld [vmem:[%s349] sm:$0xf]
      %v539 = vld [vmem:[%s349 + $0x4] sm:$0xf]
      %v540 = vld [vmem:[%s355] sm:$0xff]
      %v541 = vld [vmem:[%s355 + $0x8] sm:$0xff]
      %543 = vset.pattern.permute.xlu0 0
      %544 = vperm.xlu0 %543, %v540
      %v545 = vpop.permute.xlu0 %544
      %548 = vset.pattern.permute.xlu0 0
      %549 = vperm.xlu0 %548, %v541
      %v550 = vpop.permute.xlu0 %549
      %v554 = vunpack.c.l.b16 %v538
      %v555 = vunpack.c.l.b16 %v539
      %v556 = vpack.c.b16 %v555, %v554
      %v558 = vsel %vm449, %v556, 0
      %v560 = vsel %vm515, %v500, 0
      %562 = vmatprep.subr.bf16.mxu0 0
      %563 = vmatpush1.bf16.msra.mxu0 %v518
      %564 = vmatprep.subr.bf16.mxu0 0
      %565 = vmatpush1.bf16.msra.mxu0 %v521
      %566 = vmatprep.subr.bf16.mxu0 0
      %567 = vmatpush1.bf16.msra.mxu0 %v524
      %568 = vmatprep.subr.bf16.mxu0 0
      %569 = vmatpush1.bf16.msra.mxu0 %v527
      %570 = vmatprep.subr.bf16.mxu0 0
      %571 = vmatpush1.bf16.msra.mxu0 %v530
      %572 = vmatprep.subr.bf16.mxu0 0
      %573 = vmatpush1.bf16.msra.mxu0 %v533
      %574 = vmatprep.subr.bf16.mxu0 0
      %575 = vmatpush1.bf16.msra.mxu0 %v536
      %576 = vmatprep.subr.bf16.mxu0 0
      %577 = vmatpush1.bf16.msra.mxu0 %v560
      %578 = vmatprep.subr.bf16.mxu0 0
      %579 = vmatpush1.bf16.msra.mxu0 0
      %580 = vmatprep.subr.bf16.mxu0 0
      %581 = vmatpush1.bf16.msra.mxu0 0
      %582 = vmatprep.subr.bf16.mxu0 0
      %583 = vmatpush1.bf16.msra.mxu0 0
      %584 = vmatprep.subr.bf16.mxu0 0
      %585 = vmatpush1.bf16.msra.mxu0 0
      %586 = vmatprep.subr.bf16.mxu0 0
      %587 = vmatpush1.bf16.msra.mxu0 0
      %588 = vmatprep.subr.bf16.mxu0 0
      %589 = vmatpush1.bf16.msra.mxu0 0
      %590 = vmatprep.subr.bf16.mxu0 0
      %591 = vmatpush1.bf16.msra.mxu0 0
      %592 = vmatprep.subr.bf16.mxu0 0
      %593 = vmatpush1.bf16.msra.mxu0 0
      %594 = vmatprep.mubr.bf16.mxu0 0
      %595 = vmatmul.mubr.bf16.gmra.mrb[0].mxu0 %v558
      %v596 = vpop.f32.mrb[0].mxu0
      %v597 = vadd.f32 %v545, %v596
      %v598 = vpop.f32.mrb[0].mxu0
      %v599 = vpop.f32.mrb[0].mxu0
      %v600 = vadd.f32 %v550, %v599
      %v601 = vpop.f32.mrb[0].mxu0
      %602 = vdwg.mxu0
      %p603 = scmp.eq.s32.totalorder %s24, 0
      // Predicated region
      $region37: #{waveunet_forward.13} parent=35 // pred_check
        %p604 = pneg %p603
      $region38: #{waveunet_forward.13} parent=35 // pred_check_branch
        %606 = sbr.rel (%p604) target = $region40
      $region39: #{waveunet_forward.13} parent=35 // pred_region
        %vm607 = vcmask 7168
        %608 = vst.msk [vmem:[#allocation2] sm:$0xff] %vm607, 0.0
        %609 = vst.msk [vmem:[#allocation2 + $0x8] sm:$0xff] %vm607, 0.0
        %610 = vst.msk [vmem:[#allocation3] sm:$0xff] %vm607, 0.0
        %611 = vst.msk [vmem:[#allocation3 + $0x8] sm:$0xff] %vm607, 0.0
        %v612 = vlaneseq
        %v613 = vand.u32 %v612, 127
        %s614 = smul.u32 %s24, 128
        %v615 = vstv %s614
        %v616 = vadd.s32 %v615, %v613
        %vm617 = vcmp.lt.s32.totalorder %v616, 79
        %v618 = vsel %vm617, %v597, 0.0
        %v619 = vsel %vm617, %v600, 0.0
        %v620 = vld [vmem:[#allocation2] sm:$0xff]
        %v621 = vld [vmem:[#allocation2 + $0x8] sm:$0xff]
        %622 = vadd.xlane.f32.xlu0 %v618
        %v623 = vpop.xlane.xlu0 %622
        %624 = vadd.xlane.f32.xlu0 %v619
        %v625 = vpop.xlane.xlu0 %624
        %v626 = vadd.f32 %v620, %v623
        %v627 = vadd.f32 %v621, %v625
        %628 = vst.msk [vmem:[#allocation2] sm:$0xff] %vm607, %v626
        %629 = vst.msk [vmem:[#allocation2 + $0x8] sm:$0xff] %vm607, %v627
        %v630 = vld [vmem:[#allocation3] sm:$0xff]
        %v631 = vld [vmem:[#allocation3 + $0x8] sm:$0xff]
        %v632 = vmul.f32 %v618, %v618
        %v633 = vmul.f32 %v619, %v619
        %634 = vadd.xlane.f32.xlu0 %v632
        %v635 = vpop.xlane.xlu0 %634
        %636 = vadd.xlane.f32.xlu0 %v633
        %v637 = vpop.xlane.xlu0 %636
        %v638 = vadd.f32 %v630, %v635
        %v639 = vadd.f32 %v631, %v637
        %640 = vst.msk [vmem:[#allocation3] sm:$0xff] %vm607, %v638
        %641 = vst.msk [vmem:[#allocation3 + $0x8] sm:$0xff] %vm607, %v639
      $region40: #{waveunet_forward.13} parent=35 // pred_fallthru
        _
      %p642 = scmp.lt.s32.totalorder %s24, 0
      // Predicated region
      $region41: #{waveunet_forward.13} parent=35 // pred_check
        %p643 = pneg %p642
      $region42: #{waveunet_forward.13} parent=35 // pred_check_branch
        %645 = sbr.rel (%p643) target = $region44
      $region43: #{waveunet_forward.13} parent=35 // pred_region
        %v646 = vld [vmem:[#allocation2] sm:$0xff]
        %v647 = vld [vmem:[#allocation2 + $0x8] sm:$0xff]
        %648 = vadd.xlane.f32.xlu0 %v597
        %v649 = vpop.xlane.xlu0 %648
        %650 = vadd.xlane.f32.xlu0 %v600
        %v651 = vpop.xlane.xlu0 %650
        %v652 = vadd.f32 %v646, %v649
        %v653 = vadd.f32 %v647, %v651
        %vm654 = vcmask 7168
        %655 = vst.msk [vmem:[#allocation2] sm:$0xff] %vm654, %v652
        %656 = vst.msk [vmem:[#allocation2 + $0x8] sm:$0xff] %vm654, %v653
        %v657 = vld [vmem:[#allocation3] sm:$0xff]
        %v658 = vld [vmem:[#allocation3 + $0x8] sm:$0xff]
        %v659 = vmul.f32 %v597, %v597
        %v660 = vmul.f32 %v600, %v600
        %661 = vadd.xlane.f32.xlu0 %v659
        %v662 = vpop.xlane.xlu0 %661
        %663 = vadd.xlane.f32.xlu0 %v660
        %v664 = vpop.xlane.xlu0 %663
        %v665 = vadd.f32 %v657, %v662
        %v666 = vadd.f32 %v658, %v664
        %667 = vst.msk [vmem:[#allocation3] sm:$0xff] %vm654, %v665
        %668 = vst.msk [vmem:[#allocation3 + $0x8] sm:$0xff] %vm654, %v666
      $region44: #{waveunet_forward.13} parent=35 // pred_fallthru
        _
      // Predicated region
      $region45: #{waveunet_forward.13} parent=35 // pred_check
        %p669 = pneg %p603
      $region46: #{waveunet_forward.13} parent=35 // pred_check_branch
        %671 = sbr.rel (%p669) target = $region48
      $region47: #{waveunet_forward.13} parent=35 // pred_region
        %v672 = vld [vmem:[#allocation2] sm:$0xff]
        %v673 = vld [vmem:[#allocation2 + $0x8] sm:$0xff]
        %v674 = vld [vmem:[#allocation3] sm:$0xff]
        %v675 = vld [vmem:[#allocation3 + $0x8] sm:$0xff]
        %678 = vrot.lane.b32.xlu0 %v674, 1
        %v679 = vpop.permute.xlu0 %678
        %680 = vrot.lane.b32.xlu0 %v675, 1
        %v681 = vpop.permute.xlu0 %680
        %vm684 = vcmask 7168
        %v685 = vsel %vm684, %v672, %v679
        %v686 = vsel %vm684, %v673, %v681
        %vm687 = vcmask 15360
        %v688 = vsel %vm687, %v685, 0.0
        %v689 = vsel %vm687, %v686, 0.0
        %690 = vst [vmem:[%s378] sm:$0xff] %v688
        %691 = vst [vmem:[%s378 + $0x8] sm:$0xff] %v689
      $region48: #{waveunet_forward.13} parent=35 // pred_fallthru
        _
      %v692 = vpack.c.bf16 %v600, %v597
      %v694 = vunpack.c.l.b16 %v692
      %v695 = vunpack.c.h.b16 %v692
      %v696 = vpack.c.b16 %v694, %v694
      %v697 = vpack.c.b16 %v695, %v695
      %700 = vst [vmem:[%s368] sm:$0xf] %v696
      %701 = vst [vmem:[%s368 + $0x4] sm:$0xf] %v697
      %s702 = smul.u32 2, %s23
      %p703 = scmp.lt.s32.totalorder %s22, 1
      %s704 = scalar_select %p703, %s22, 1
      %p705 = scmp.lt.s32.totalorder %s702, 1
      %s706 = scalar_select %p705, %s702, 1
      %p707 = scmp.lt.s32.totalorder %s24, 0
      %s708 = scalar_select %p707, %s24, 0
      %s709 = sadd.s32 %s708, %s706
      %s710 = smul.addr %s704, 2
      %s711 = sadd.s32 %s709, %s710
      %s712 = smul.addr %s711, 4
      %s713 = scalar_lea.vmem %s4, %s712
      %s714 = smul.u32 2, %s23
      %p715 = scmp.lt.s32.totalorder %s22, 1
      %s716 = scalar_select %p715, %s22, 1
      %p717 = scmp.lt.s32.totalorder %s714, 1
      %s718 = scalar_select %p717, %s714, 1
      %s719 = smul.addr %s716, 2
      %s720 = sadd.s32 %s718, %s719
      %s721 = smul.addr %s720, 8
      %s722 = scalar_lea.vmem %s5, %s721
      // Predicated region
      $region49: #{waveunet_forward.13} parent=35 // pred_check
        %p723 = pneg %p168
      $region50: #{waveunet_forward.13} parent=35 // pred_check_branch
        %725 = sbr.rel (%p723) target = $region52
      $region51: #{waveunet_forward.13} parent=35 // pred_region
        %s726 = smul.u32 2, %s23
      $region52: #{waveunet_forward.13} parent=35 // pred_fallthru
        _
      // Predicated region
      $region53: #{waveunet_forward.13} parent=35 // pred_check
        %p727 = pneg %p196
      $region54: #{waveunet_forward.13} parent=35 // pred_check_branch
        %729 = sbr.rel (%p727) target = $region56
      $region55: #{waveunet_forward.13} parent=35 // pred_region
        %s730 = smul.u32 2, %s23
      $region56: #{waveunet_forward.13} parent=35 // pred_fallthru
        _
    $region36: #{waveunet_forward.13} parent=5 // pred_fallthru
      _
    %p731 = scmp.le.s32.totalorder 2, %s12
    // Predicated region
    $region57: #{waveunet_forward.13} parent=5 // pred_check
      %p732 = pneg %p731
    $region58: #{waveunet_forward.13} parent=5 // pred_check_branch
      %734 = sbr.rel (%p732) target = $region60
    $region59: #{waveunet_forward.13} parent=5 // pred_region
      %s735 = ssub.s32 %s12, 2
      // Predicated region
      $region61: #{waveunet_forward.13} parent=59 // pred_check
        %p736 = pneg %p174
      $region62: #{waveunet_forward.13} parent=59 // pred_check_branch
        %738 = sbr.rel (%p736) target = $region64
      $region63: #{waveunet_forward.13} parent=59 // pred_region
        %s739 = smul.u32 2, %s26
        %p740 = scmp.lt.s32.totalorder %s25, 1
        %s741 = scalar_select %p740, %s25, 1
        %p742 = scmp.lt.s32.totalorder %s739, 1
        %s743 = scalar_select %p742, %s739, 1
        %p744 = scmp.lt.s32.totalorder %s27, 0
        %s745 = scalar_select %p744, %s27, 0
        %s746 = sadd.s32 %s745, %s743
        %s747 = smul.addr %s741, 2
        %s748 = sadd.s32 %s746, %s747
        %s749 = smul.addr %s748, 4
        %s750 = scalar_lea.vmem %s4, %s749
      $region64: #{waveunet_forward.13} parent=59 // pred_fallthru
        _
      // Predicated region
      $region65: #{waveunet_forward.13} parent=59 // pred_check
        %p751 = pneg %p202
      $region66: #{waveunet_forward.13} parent=59 // pred_check_branch
        %753 = sbr.rel (%p751) target = $region68
      $region67: #{waveunet_forward.13} parent=59 // pred_region
        %s754 = smul.u32 2, %s26
        %p755 = scmp.lt.s32.totalorder %s25, 1
        %s756 = scalar_select %p755, %s25, 1
        %p757 = scmp.lt.s32.totalorder %s754, 1
        %s758 = scalar_select %p757, %s754, 1
        %s759 = smul.addr %s756, 2
        %s760 = sadd.s32 %s758, %s759
        %s761 = smul.addr %s760, 8
        %s762 = scalar_lea.vmem %s5, %s761
      $region68: #{waveunet_forward.13} parent=59 // pred_fallthru
        _
    $region60: #{waveunet_forward.13} parent=5 // pred_fallthru
      _
  $region6: #{waveunet_forward.13} parent=0 // loop_footer
    %s16 = sadd.s32 1, %s12
  $region7: #{waveunet_forward.13} parent=0 // loop_footer_branch
    %11 = sbr.rel target = $region3
  $region8: #{waveunet_forward.13} parent=0 // loop_exit
    _

// kernel: waveunet_forward.15
$region0: #{waveunet_forward.15}
  #allocation0 [shape = 'u32[]', space=smem, size = 0x4, offset = 0x4, fixed_abs, tag = 'smem constant byte address 0x4 - core index']
  #allocation1 [shape = 'u32[144,128]{1,0:T(1,128)}', space=vmem, size = 0x12000, scoped, tag = 'internal scratch']
  #allocation2 [shape = 'f32[32,1]{1,0:T(8,128)}', space=vmem, size = 0x4000, scoped, tag = 'scratch operand']
  #allocation3 [shape = 'f32[32,1]{1,0:T(8,128)}', space=vmem, size = 0x4000, scoped, tag = 'scratch operand']
  %s0 = inlined_call_operand.vmem [shape: bf16[2,16,256], index: 0, kind: input, shape index: {}, may-alias: {0,1}]
  %s1 = inlined_call_operand.vmem [shape: bf16[2,16,256], index: 1, kind: input, shape index: {}, may-alias: {0,1}]
  %s2 = inlined_call_operand.vmem [shape: bf16[32,240], index: 2, kind: input, shape index: {}]
  %s3 = inlined_call_operand.vmem [shape: f32[32,1], index: 3, kind: input, shape index: {}]
  %s4 = inlined_call_operand.vmem [shape: bf16[2,32,128], index: 4, kind: output, shape index: {0}]
  %s5 = inlined_call_operand.vmem [shape: f32[2,32,128], index: 5, kind: output, shape index: {1}]
  %6 = xla_tuple %s4, %s5
  %s7 = sld [smem:[#allocation0]]
  $region151: #{waveunet_forward.15} parent=0
    _
  %s9 = ssub.s32 1, %s7
  %s10 = scalar_select 0, %s9, %s7
  $region1: #{waveunet_forward.15} parent=0
    #allocation4 [shape = 'u8[8192]{0}', space=vmem, size = 0x2000, scoped, tag = 'input window, operand 0']
    #allocation5 [shape = 'u8[8192]{0}', space=vmem, size = 0x2000, scoped, tag = 'input window, operand 1']
    loop: start=0, step=1, limit=4
    $region2: #{waveunet_forward.15} parent=1 // loop_pre_header
      _
    $region3: #{waveunet_forward.15} parent=1 // loop_header
      %s12 = sphi 0, %s16
      %p13 = scmp.ge.s32.totalorder %s12, 4
      %s19 = sphi 0, %s38
      %s20 = sphi 0, %s34
      %s21 = sphi 0, %s30
      %s22 = sphi 0, %s19
      %s23 = sphi 0, %s20
      %s24 = sphi 0, %s21
      %s25 = sphi 0, %s22
      %s26 = sphi 0, %s23
      %s27 = sphi 0, %s24
      %s43 = sphi 0, %s45
      %s46 = sphi 0, %s43
      %s47 = sphi 0, %s46
      %s63 = sphi 0, %s47
      %s73 = sphi 0, %s75
      %s76 = sphi 0, %s73
      %s77 = sphi 0, %s76
      %s93 = sphi 0, %s77
      %s99 = sphi 0, %s101
      %s102 = sphi 0, %s99
      %s103 = sphi 0, %s102
      %s119 = sphi 0, %s103
      %s125 = sphi 0, %s127
      %s128 = sphi 0, %s125
      %s129 = sphi 0, %s128
      %s145 = sphi 0, %s129
      %s155 = sphi 0, %s157
      %s158 = sphi 0, %s155
      %s159 = sphi 0, %s158
      %s175 = sphi 0, %s159
      %s183 = sphi 0, %s185
      %s186 = sphi 0, %s183
      %s187 = sphi 0, %s186
      %s203 = sphi 0, %s187
    $region4: #{waveunet_forward.15} parent=1 // loop_header_branch
      %15 = sbr.rel (%p13) target = $region8
    $region5: #{waveunet_forward.15} parent=1 // loop_body
      %s17 = ssub.s32 %s12, 1
      %s18 = ssub.s32 %s12, 2
      %s28 = sadd.s32 1, %s21
      %p29 = scmp.ge.s32.totalorder %s28, 1
      %s30 = scalar_select %p29, 0, %s28
      %s31 = sadd.s32 1, %s20
      %s32 = scalar_select %p29, %s31, %s20
      %p33 = scmp.ge.s32.totalorder %s32, 1
      %s34 = scalar_select %p33, 0, %s32
      %s35 = sadd.s32 1, %s19
      %s36 = scalar_select %p33, %s35, %s19
      %p37 = scmp.ge.s32.totalorder %s36, 2
      %s38 = scalar_select %p37, 0, %s36
      %s39 = ssub.s32 %s19, %s38
      %s40 = ssub.s32 %s21, %s30
      %s41 = sor.u32 %s39, %s40
      %p42 = scmp.eq.s32.totalorder %s41, 0
      %s44 = sadd.s32 %s43, 1
      %s45 = scalar_select %p42, %s43, %s44
      %p48 = pneg %p42
      %p49 = scmp.eq.s32.totalorder %s12, 1
      %p50 = por %p48, %p49
      %p51 = scmp.ne.s32.totalorder %s43, %s46
      %p52 = scmp.eq.s32.totalorder %s12, 0
      %p53 = por %p51, %p52
      %p54 = scmp.ne.s32.totalorder %s43, %s46
      %p55 = scmp.eq.s32.totalorder %s17, 1
      %p56 = por %p54, %p55
      %p57 = scmp.ne.s32.totalorder %s46, %s47
      %p58 = scmp.eq.s32.totalorder %s17, 0
      %p59 = por %p57, %p58
      %p60 = scmp.ne.s32.totalorder %s46, %s47
      %p61 = scmp.eq.s32.totalorder %s18, 1
      %p62 = por %p60, %p61
      %p64 = scmp.ne.s32.totalorder %s47, %s63
      %p65 = scmp.eq.s32.totalorder %s18, 0
      %p66 = por %p64, %p65
      %s67 = sadd.s32 %s21, 1
      %s68 = sadd.s32 %s30, 1
      %s69 = ssub.s32 %s19, %s38
      %s70 = ssub.s32 %s67, %s68
      %s71 = sor.u32 %s69, %s70
      %p72 = scmp.eq.s32.totalorder %s71, 0
      %s74 = sadd.s32 %s73, 1
      %s75 = scalar_select %p72, %s73, %s74
      %p78 = pneg %p72
      %p79 = scmp.eq.s32.totalorder %s12, 1
      %p80 = por %p78, %p79
      %p81 = scmp.ne.s32.totalorder %s73, %s76
      %p82 = scmp.eq.s32.totalorder %s12, 0
      %p83 = por %p81, %p82
      %p84 = scmp.ne.s32.totalorder %s73, %s76
      %p85 = scmp.eq.s32.totalorder %s17, 1
      %p86 = por %p84, %p85
      %p87 = scmp.ne.s32.totalorder %s76, %s77
      %p88 = scmp.eq.s32.totalorder %s17, 0
      %p89 = por %p87, %p88
      %p90 = scmp.ne.s32.totalorder %s76, %s77
      %p91 = scmp.eq.s32.totalorder %s18, 1
      %p92 = por %p90, %p91
      %p94 = scmp.ne.s32.totalorder %s77, %s93
      %p95 = scmp.eq.s32.totalorder %s18, 0
      %p96 = por %p94, %p95
      %s97 = ssub.s32 %s20, %s34
      %p98 = scmp.eq.s32.totalorder %s97, 0
      %s100 = sadd.s32 %s99, 1
      %s101 = scalar_select %p98, %s99, %s100
      %p104 = pneg %p98
      %p105 = scmp.eq.s32.totalorder %s12, 1
      %p106 = por %p104, %p105
      %p107 = scmp.ne.s32.totalorder %s99, %s102
      %p108 = scmp.eq.s32.totalorder %s12, 0
      %p109 = por %p107, %p108
      %p110 = scmp.ne.s32.totalorder %s99, %s102
      %p111 = scmp.eq.s32.totalorder %s17, 1
      %p112 = por %p110, %p111
      %p113 = scmp.ne.s32.totalorder %s102, %s103
      %p114 = scmp.eq.s32.totalorder %s17, 0
      %p115 = por %p113, %p114
      %p116 = scmp.ne.s32.totalorder %s102, %s103
      %p117 = scmp.eq.s32.totalorder %s18, 1
      %p118 = por %p116, %p117
      %p120 = scmp.ne.s32.totalorder %s103, %s119
      %p121 = scmp.eq.s32.totalorder %s18, 0
      %p122 = por %p120, %p121
      %s123 = ssub.s32 %s20, %s34
      %p124 = scmp.eq.s32.totalorder %s123, 0
      %s126 = sadd.s32 %s125, 1
      %s127 = scalar_select %p124, %s125, %s126
      %p130 = pneg %p124
      %p131 = scmp.eq.s32.totalorder %s12, 1
      %p132 = por %p130, %p131
      %p133 = scmp.ne.s32.totalorder %s125, %s128
      %p134 = scmp.eq.s32.totalorder %s12, 0
      %p135 = por %p133, %p134
      %p136 = scmp.ne.s32.totalorder %s125, %s128
      %p137 = scmp.eq.s32.totalorder %s17, 1
      %p138 = por %p136, %p137
      %p139 = scmp.ne.s32.totalorder %s128, %s129
      %p140 = scmp.eq.s32.totalorder %s17, 0
      %p141 = por %p139, %p140
      %p142 = scmp.ne.s32.totalorder %s128, %s129
      %p143 = scmp.eq.s32.totalorder %s18, 1
      %p144 = por %p142, %p143
      %p146 = scmp.ne.s32.totalorder %s129, %s145
      %p147 = scmp.eq.s32.totalorder %s18, 0
      %p148 = por %p146, %p147
      %s149 = ssub.s32 %s19, %s38
      %s150 = ssub.s32 %s20, %s34
      %s151 = sor.u32 %s149, %s150
      %s152 = ssub.s32 %s21, %s30
      %s153 = sor.u32 %s151, %s152
      %p154 = scmp.eq.s32.totalorder %s153, 0
      %s156 = sadd.s32 %s155, 1
      %s157 = scalar_select %p154, %s155, %s156
      %p160 = pneg %p154
      %p161 = scmp.eq.s32.totalorder %s12, 1
      %p162 = por %p160, %p161
      %p163 = scmp.ne.s32.totalorder %s155, %s158
      %p164 = scmp.eq.s32.totalorder %s12, 0
      %p165 = por %p163, %p164
      %p166 = scmp.ne.s32.totalorder %s155, %s158
      %p167 = scmp.eq.s32.totalorder %s17, 1
      %p168 = por %p166, %p167
      %p169 = scmp.ne.s32.totalorder %s158, %s159
      %p170 = scmp.eq.s32.totalorder %s17, 0
      %p171 = por %p169, %p170
      %p172 = scmp.ne.s32.totalorder %s158, %s159
      %p173 = scmp.eq.s32.totalorder %s18, 1
      %p174 = por %p172, %p173
      %p176 = scmp.ne.s32.totalorder %s159, %s175
      %p177 = scmp.eq.s32.totalorder %s18, 0
      %p178 = por %p176, %p177
      %s179 = ssub.s32 %s19, %s38
      %s180 = ssub.s32 %s20, %s34
      %s181 = sor.u32 %s179, %s180
      %p182 = scmp.eq.s32.totalorder %s181, 0
      %s184 = sadd.s32 %s183, 1
      %s185 = scalar_select %p182, %s183, %s184
      %p188 = pneg %p182
      %p189 = scmp.eq.s32.totalorder %s12, 1
      %p190 = por %p188, %p189
      %p191 = scmp.ne.s32.totalorder %s183, %s186
      %p192 = scmp.eq.s32.totalorder %s12, 0
      %p193 = por %p191, %p192
      %p194 = scmp.ne.s32.totalorder %s183, %s186
      %p195 = scmp.eq.s32.totalorder %s17, 1
      %p196 = por %p194, %p195
      %p197 = scmp.ne.s32.totalorder %s186, %s187
      %p198 = scmp.eq.s32.totalorder %s17, 0
      %p199 = por %p197, %p198
      %p200 = scmp.ne.s32.totalorder %s186, %s187
      %p201 = scmp.eq.s32.totalorder %s18, 1
      %p202 = por %p200, %p201
      %p204 = scmp.ne.s32.totalorder %s187, %s203
      %p205 = scmp.eq.s32.totalorder %s18, 0
      %p206 = por %p204, %p205
      %p207 = scmp.le.s32.totalorder 1, %s12
      %p208 = scmp.lt.s32.totalorder %s12, 3
      %p209 = pnand %p207, %p208
      %p210 = pneg %p209
      // Predicated region
      $region9: #{waveunet_forward.15} parent=5 // pred_check
        _
      $region10: #{waveunet_forward.15} parent=5 // pred_check_branch
        %212 = sbr.rel (%p209) target = $region12
      $region11: #{waveunet_forward.15} parent=5 // pred_region
        %s213 = ssub.s32 %s12, 1
        // Predicated region
        $region13: #{waveunet_forward.15} parent=11 // pred_check
          %p214 = pneg %p115
        $region14: #{waveunet_forward.15} parent=11 // pred_check_branch
          %216 = sbr.rel (%p214) target = $region16
        $region15: #{waveunet_forward.15} parent=11 // pred_region
          %s217 = smul.u32 4, %s23
          %p218 = scmp.lt.s32.totalorder %s217, 3
          %s219 = scalar_select %p218, %s217, 3
          %s220 = smul.addr %s219, 2
          %s221 = smul.addr %s220, 4
          %s222 = scalar_lea.vmem %s2, %s221
          %s223 = smul.u32 4, %s23
        $region16: #{waveunet_forward.15} parent=11 // pred_fallthru
          _
        // Predicated region
        $region17: #{waveunet_forward.15} parent=11 // pred_check
          %p224 = pneg %p141
        $region18: #{waveunet_forward.15} parent=11 // pred_check_branch
          %226 = sbr.rel (%p224) target = $region20
        $region19: #{waveunet_forward.15} parent=11 // pred_region
          %s227 = smul.u32 4, %s23
          %p228 = scmp.lt.s32.totalorder %s227, 3
          %s229 = scalar_select %p228, %s227, 3
          %s230 = smul.addr %s229, 8
          %s231 = scalar_lea.vmem %s3, %s230
          %s232 = smul.u32 4, %s23
        $region20: #{waveunet_forward.15} parent=11 // pred_fallthru
          _
      $region12: #{waveunet_forward.15} parent=5 // pred_fallthru
        _
      %p233 = scmp.lt.s32.totalorder %s12, 2
      // Predicated region
      $region21: #{waveunet_forward.15} parent=5 // pred_check
        %p234 = pneg %p233
      $region22: #{waveunet_forward.15} parent=5 // pred_check_branch
        %236 = sbr.rel (%p234) target = $region24
      $region23: #{waveunet_forward.15} parent=5 // pred_region
        // Predicated region
        $region25: #{waveunet_forward.15} parent=23 // pred_check
          %p237 = pneg %p53
        $region26: #{waveunet_forward.15} parent=23 // pred_check_branch
          %239 = sbr.rel (%p237) target = $region28
        $region27: #{waveunet_forward.15} parent=23 // pred_region
          %s240 = sand.u32 %s43, 1
          %s241 = sand.u32 %s43, 1
          %s242 = smul.addr %s241, 8
          %s243 = scalar_lea.vmem [#allocation4], %s242
          %s244 = smul.addr %s19, 4
          %s245 = sadd.s32 %s21, %s244
          %s246 = smul.addr %s245, 4
          %s247 = scalar_lea.vmem %s0, %s246
          // Predicated region
          $region29: #{waveunet_forward.15} parent=27 // pred_check
            _
          $region30: #{waveunet_forward.15} parent=27 // pred_check_branch
            %249 = sbr.rel (0) target = $region32
          $region31: #{waveunet_forward.15} parent=27 // pred_region
            // Predicated region
            $region33: #{waveunet_forward.15} parent=31 // pred_check
              _
            $region34: #{waveunet_forward.15} parent=31 // pred_check_branch
              %251 = sbr.rel target = $region36
            $region35: #{waveunet_forward.15} parent=31 // pred_region
              // Predicated region
              $region48: #{waveunet_forward.15} parent=35 // pred_check
                _
              $region49: #{waveunet_forward.15} parent=35 // pred_check_branch
                %268 = sbr.rel (0) target = $region51
              $region50: #{waveunet_forward.15} parent=35 // pred_region
                loop: start=0, step=1, limit=1
                $region52: #{waveunet_forward.15} parent=50 // loop_pre_header
                  _
                $region53: #{waveunet_forward.15} parent=50 // loop_header
                  %s270 = sphi 0, %s274
                  %p271 = scmp.ge.s32.totalorder %s270, 1
                  %s275 = sphi %s247, %s247
                  %s276 = sphi %s243, %s243
                $region54: #{waveunet_forward.15} parent=50 // loop_header_branch
                  %273 = sbr.rel (%p271) target = $region58
                $region55: #{waveunet_forward.15} parent=50 // loop_body
                  _
                $region56: #{waveunet_forward.15} parent=50 // loop_footer
                  %s274 = sadd.s32 1, %s270
                $region57: #{waveunet_forward.15} parent=50 // loop_footer_branch
                  %269 = sbr.rel target = $region53
                $region58: #{waveunet_forward.15} parent=50 // loop_exit
                  _
                loop: start=0, step=1, limit=1
                $region59: #{waveunet_forward.15} parent=50 // loop_pre_header
                  _
                $region60: #{waveunet_forward.15} parent=50 // loop_header
                  %s279 = sphi 0, %s283
                  %p280 = scmp.ge.s32.totalorder %s279, 1
                  %s284 = sphi %s247, %s247
                  %s285 = sphi %s243, %s243
                $region61: #{waveunet_forward.15} parent=50 // loop_header_branch
                  %282 = sbr.rel (%p280) target = $region65
                $region62: #{waveunet_forward.15} parent=50 // loop_body
                  %v286 = vld [vmem:[%s284] sm:$0xf]
                  %287 = vst [vmem:[%s285] sm:$0xf] %v286
                  %v288 = vld [vmem:[%s284 + $0x8] sm:$0xf]
                  %289 = vst [vmem:[%s285 + $0x4] sm:$0xf] %v288
                $region63: #{waveunet_forward.15} parent=50 // loop_footer
                  %s283 = sadd.s32 1, %s279
                $region64: #{waveunet_forward.15} parent=50 // loop_footer_branch
                  %278 = sbr.rel target = $region60
                $region65: #{waveunet_forward.15} parent=50 // loop_exit
                  _
              $region51: #{waveunet_forward.15} parent=35 // pred_fallthru
                _
            $region36: #{waveunet_forward.15} parent=31 // pred_fallthru
              _
            // Predicated region
            $region37: #{waveunet_forward.15} parent=31 // pred_check
              _
            $region38: #{waveunet_forward.15} parent=31 // pred_check_branch
              %253 = sbr.rel (0) target = $region40
            $region39: #{waveunet_forward.15} parent=31 // pred_region
              loop: start=0, step=1, limit=1
              $region41: #{waveunet_forward.15} parent=39 // loop_pre_header
                _
              $region42: #{waveunet_forward.15} parent=39 // loop_header
                %s256 = sphi 0, %s260
                %p257 = scmp.ge.s32.totalorder %s256, 1
                %s261 = sphi %s247, %s247
                %s262 = sphi %s243, %s243
              $region43: #{waveunet_forward.15} parent=39 // loop_header_branch
                %259 = sbr.rel (%p257) target = $region47
              $region44: #{waveunet_forward.15} parent=39 // loop_body
                %v263 = vld [vmem:[%s261] sm:$0xf]
                %264 = vst [vmem:[%s262] sm:$0xf] %v263
                %v265 = vld [vmem:[%s261 + $0x8] sm:$0xf]
                %266 = vst [vmem:[%s262 + $0x4] sm:$0xf] %v265
              $region45: #{waveunet_forward.15} parent=39 // loop_footer
                %s260 = sadd.s32 1, %s256
              $region46: #{waveunet_forward.15} parent=39 // loop_footer_branch
                %255 = sbr.rel target = $region42
              $region47: #{waveunet_forward.15} parent=39 // loop_exit
                _
            $region40: #{waveunet_forward.15} parent=31 // pred_fallthru
              _
          $region32: #{waveunet_forward.15} parent=27 // pred_fallthru
            _
          %290 = vnop
        $region28: #{waveunet_forward.15} parent=23 // pred_fallthru
          _
        // Predicated region
        $region66: #{waveunet_forward.15} parent=23 // pred_check
          %p291 = pneg %p83
        $region67: #{waveunet_forward.15} parent=23 // pred_check_branch
          %293 = sbr.rel (%p291) target = $region69
        $region68: #{waveunet_forward.15} parent=23 // pred_region
          %s294 = sand.u32 %s73, 1
          %s295 = sand.u32 %s73, 1
          %s296 = smul.addr %s295, 8
          %s297 = scalar_lea.vmem [#allocation5], %s296
          %s298 = sadd.s32 %s21, 1
          %s299 = smul.addr %s19, 4
          %s300 = sadd.s32 %s298, %s299
          %s301 = smul.addr %s300, 4
          %s302 = scalar_lea.vmem %s1, %s301
          // Predicated region
          $region70: #{waveunet_forward.15} parent=68 // pred_check
            _
          $region71: #{waveunet_forward.15} parent=68 // pred_check_branch
            %304 = sbr.rel (0) target = $region73
          $region72: #{waveunet_forward.15} parent=68 // pred_region
            // Predicated region
            $region74: #{waveunet_forward.15} parent=72 // pred_check
              _
            $region75: #{waveunet_forward.15} parent=72 // pred_check_branch
              %306 = sbr.rel target = $region77
            $region76: #{waveunet_forward.15} parent=72 // pred_region
              // Predicated region
              $region89: #{waveunet_forward.15} parent=76 // pred_check
                _
              $region90: #{waveunet_forward.15} parent=76 // pred_check_branch
                %323 = sbr.rel (0) target = $region92
              $region91: #{waveunet_forward.15} parent=76 // pred_region
                loop: start=0, step=1, limit=1
                $region93: #{waveunet_forward.15} parent=91 // loop_pre_header
                  _
                $region94: #{waveunet_forward.15} parent=91 // loop_header
                  %s325 = sphi 0, %s329
                  %p326 = scmp.ge.s32.totalorder %s325, 1
                  %s330 = sphi %s302, %s302
                  %s331 = sphi %s297, %s297
                $region95: #{waveunet_forward.15} parent=91 // loop_header_branch
                  %328 = sbr.rel (%p326) target = $region99
                $region96: #{waveunet_forward.15} parent=91 // loop_body
                  _
                $region97: #{waveunet_forward.15} parent=91 // loop_footer
                  %s329 = sadd.s32 1, %s325
                $region98: #{waveunet_forward.15} parent=91 // loop_footer_branch
                  %324 = sbr.rel target = $region94
                $region99: #{waveunet_forward.15} parent=91 // loop_exit
                  _
                loop: start=0, step=1, limit=1
                $region100: #{waveunet_forward.15} parent=91 // loop_pre_header
                  _
                $region101: #{waveunet_forward.15} parent=91 // loop_header
                  %s334 = sphi 0, %s338
                  %p335 = scmp.ge.s32.totalorder %s334, 1
                  %s339 = sphi %s302, %s302
                  %s340 = sphi %s297, %s297
                $region102: #{waveunet_forward.15} parent=91 // loop_header_branch
                  %337 = sbr.rel (%p335) target = $region106
                $region103: #{waveunet_forward.15} parent=91 // loop_body
                  %v341 = vld [vmem:[%s339] sm:$0xf]
                  %342 = vst [vmem:[%s340] sm:$0xf] %v341
                  %v343 = vld [vmem:[%s339 + $0x8] sm:$0xf]
                  %344 = vst [vmem:[%s340 + $0x4] sm:$0xf] %v343
                $region104: #{waveunet_forward.15} parent=91 // loop_footer
                  %s338 = sadd.s32 1, %s334
                $region105: #{waveunet_forward.15} parent=91 // loop_footer_branch
                  %333 = sbr.rel target = $region101
                $region106: #{waveunet_forward.15} parent=91 // loop_exit
                  _
              $region92: #{waveunet_forward.15} parent=76 // pred_fallthru
                _
            $region77: #{waveunet_forward.15} parent=72 // pred_fallthru
              _
            // Predicated region
            $region78: #{waveunet_forward.15} parent=72 // pred_check
              _
            $region79: #{waveunet_forward.15} parent=72 // pred_check_branch
              %308 = sbr.rel (0) target = $region81
            $region80: #{waveunet_forward.15} parent=72 // pred_region
              loop: start=0, step=1, limit=1
              $region82: #{waveunet_forward.15} parent=80 // loop_pre_header
                _
              $region83: #{waveunet_forward.15} parent=80 // loop_header
                %s311 = sphi 0, %s315
                %p312 = scmp.ge.s32.totalorder %s311, 1
                %s316 = sphi %s302, %s302
                %s317 = sphi %s297, %s297
              $region84: #{waveunet_forward.15} parent=80 // loop_header_branch
                %314 = sbr.rel (%p312) target = $region88
              $region85: #{waveunet_forward.15} parent=80 // loop_body
                %v318 = vld [vmem:[%s316] sm:$0xf]
                %319 = vst [vmem:[%s317] sm:$0xf] %v318
                %v320 = vld [vmem:[%s316 + $0x8] sm:$0xf]
                %321 = vst [vmem:[%s317 + $0x4] sm:$0xf] %v320
              $region86: #{waveunet_forward.15} parent=80 // loop_footer
                %s315 = sadd.s32 1, %s311
              $region87: #{waveunet_forward.15} parent=80 // loop_footer_branch
                %310 = sbr.rel target = $region83
              $region88: #{waveunet_forward.15} parent=80 // loop_exit
                _
            $region81: #{waveunet_forward.15} parent=72 // pred_fallthru
              _
          $region73: #{waveunet_forward.15} parent=68 // pred_fallthru
            _
          %345 = vnop
        $region69: #{waveunet_forward.15} parent=23 // pred_fallthru
          _
      $region24: #{waveunet_forward.15} parent=5 // pred_fallthru
        _
      %p346 = scmp.le.s32.totalorder 1, %s12
      %p347 = scmp.lt.s32.totalorder %s12, 3
      %p348 = pnand %p346, %p347
      %p349 = pneg %p348
      // Predicated region
      $region107: #{waveunet_forward.15} parent=5 // pred_check
        _
      $region108: #{waveunet_forward.15} parent=5 // pred_check_branch
        %351 = sbr.rel (%p348) target = $region110
      $region109: #{waveunet_forward.15} parent=5 // pred_region
        %s352 = ssub.s32 %s12, 1
        %s353 = sand.u32 %s46, 1
        %s354 = sand.u32 %s46, 1
        %s355 = smul.addr %s354, 8
        %s356 = scalar_lea.vmem [#allocation4], %s355
        // Predicated region
        $region111: #{waveunet_forward.15} parent=109 // pred_check
          %p357 = pneg %p59
        $region112: #{waveunet_forward.15} parent=109 // pred_check_branch
          %359 = sbr.rel (%p357) target = $region114
        $region113: #{waveunet_forward.15} parent=109 // pred_region
          _
        $region114: #{waveunet_forward.15} parent=109 // pred_fallthru
          _
        %s360 = sand.u32 %s76, 1
        %s361 = sand.u32 %s76, 1
        %s362 = smul.addr %s361, 8
        %s363 = scalar_lea.vmem [#allocation5], %s362
        // Predicated region
        $region115: #{waveunet_forward.15} parent=109 // pred_check
          %p364 = pneg %p89
        $region116: #{waveunet_forward.15} parent=109 // pred_check_branch
          %366 = sbr.rel (%p364) target = $region118
        $region117: #{waveunet_forward.15} parent=109 // pred_region
          _
        $region118: #{waveunet_forward.15} parent=109 // pred_fallthru
          _
        %s367 = sand.u32 %s46, 1
        %s368 = sand.u32 %s46, 1
        %s369 = smul.addr %s368, 8
        %s370 = scalar_lea.vmem [#allocation4], %s369
        %p371 = pneg %p59
        %p372 = pneg %p56
        %s373 = sand.u32 %s76, 1
        %s374 = sand.u32 %s76, 1
        %s375 = smul.addr %s374, 8
        %s376 = scalar_lea.vmem [#allocation5], %s375
        %p377 = pneg %p89
        %p378 = pneg %p86
        %s379 = smul.u32 4, %s23
        %p380 = scmp.lt.s32.totalorder %s379, 3
        %s381 = scalar_select %p380, %s379, 3
        %s382 = smul.addr %s381, 2
        %s383 = smul.addr %s382, 4
        %s384 = scalar_lea.vmem %s2, %s383
        %p385 = pneg %p115
        %p386 = pneg %p112
        %s387 = smul.u32 4, %s23
        %p388 = scmp.lt.s32.totalorder %s387, 3
        %s389 = scalar_select %p388, %s387, 3
        %s390 = smul.addr %s389, 8
        %s391 = scalar_lea.vmem %s3, %s390
        %p392 = pneg %p141
        %p393 = pneg %p138
        %p394 = pneg %p171
        %p395 = pneg %p168
        %s396 = smul.u32 4, %s23
        %p397 = scmp.lt.s32.totalorder %s22, 1
        %s398 = scalar_select %p397, %s22, 1
        %p399 = scmp.lt.s32.totalorder %s396, 3
        %s400 = scalar_select %p399, %s396, 3
        %p401 = scmp.lt.s32.totalorder %s24, 0
        %s402 = scalar_select %p401, %s24, 0
        %s403 = sadd.s32 %s402, %s400
        %s404 = smul.addr %s398, 4
        %s405 = sadd.s32 %s403, %s404
        %s406 = smul.addr %s405, 4
        %s407 = scalar_lea.vmem %s4, %s406
        %p408 = pneg %p199
        %p409 = pneg %p196
        %s410 = smul.u32 4, %s23
        %p411 = scmp.lt.s32.totalorder %s22, 1
        %s412 = scalar_select %p411, %s22, 1
        %p413 = scmp.lt.s32.totalorder %s410, 3
        %s414 = scalar_select %p413, %s410, 3
        %s415 = smul.addr %s412, 4
        %s416 = sadd.s32 %s414, %s415
        %s417 = smul.addr %s416, 8
        %s418 = scalar_lea.vmem %s5, %s417
        %s419 = sadd.s32 %s24, 1
        %s420 = smul.u32 4, %s23
        %p421 = scmp.lt.s32.totalorder %s420, 3
        %s422 = scalar_select %p421, %s420, 3
        %s423 = smul.addr %s422, 2
        %s424 = smul.addr %s423, 4
        %s425 = scalar_lea.vmem %s2, %s424
        %s426 = smul.u32 4, %s23
        %s427 = smul.u32 4, %s23
        %p428 = scmp.lt.s32.totalorder %s427, 3
        %s429 = scalar_select %p428, %s427, 3
        %s430 = smul.addr %s429, 8
        %s431 = scalar_lea.vmem %s3, %s430
        %s432 = smul.u32 4, %s23
        %s433 = smul.u32 4, %s23
        %p434 = scmp.lt.s32.totalorder %s22, 1
        %s435 = scalar_select %p434, %s22, 1
        %p436 = scmp.lt.s32.totalorder %s433, 3
        %s437 = scalar_select %p436, %s433, 3
        %p438 = scmp.lt.s32.totalorder %s24, 0
        %s439 = scalar_select %p438, %s24, 0
        %s440 = sadd.s32 %s439, %s437
        %s441 = smul.addr %s435, 4
        %s442 = sadd.s32 %s440, %s441
        %s443 = smul.addr %s442, 4
        %s444 = scalar_lea.vmem %s4, %s443
        %s445 = smul.u32 4, %s23
        %s446 = smul.u32 4, %s23
        %p447 = scmp.lt.s32.totalorder %s22, 1
        %s448 = scalar_select %p447, %s22, 1
        %p449 = scmp.lt.s32.totalorder %s446, 3
        %s450 = scalar_select %p449, %s446, 3
        %s451 = smul.addr %s448, 4
        %s452 = sadd.s32 %s450, %s451
        %s453 = smul.addr %s452, 8
        %s454 = scalar_lea.vmem %s5, %s453
        %s455 = smul.u32 4, %s23
        %v457 = vld [vmem:[%s356] sm:$0xf]
        %v458 = vld [vmem:[%s356 + $0x4] sm:$0xf]
        %v459 = vld [vmem:[%s363] sm:$0xf]
        %v460 = vld [vmem:[%s363 + $0x4] sm:$0xf]
        %v463 = vunpack.c.l.b16 %v457
        %v464 = vunpack.c.l.b16 %v458
        %v465 = vpack.c.b16 %v464, %v463
        %466 = vrot.lane.b32.xlu0 %v465, 127
        %v467 = vpop.permute.xlu0 %466
        %v470 = vunpack.c.l.b16 %v459
        %v471 = vunpack.c.l.b16 %v460
        %v472 = vpack.c.b16 %v471, %v470
        %473 = vrot.lane.b32.xlu0 %v472, 127
        %v474 = vpop.permute.xlu0 %473
        %vm475 = vcmask 1039360
        %v478 = vsel %vm475, %v467, %v474
        %480 = vrot.lane.b32.xlu0 %v465, 126
        %v481 = vpop.permute.xlu0 %480
        %482 = vrot.lane.b32.xlu0 %v472, 126
        %v483 = vpop.permute.xlu0 %482
        %vm484 = vcmask 1031168
        %v487 = vsel %vm484, %v481, %v483
        %489 = vrot.lane.b32.xlu0 %v465, 125
        %v490 = vpop.permute.xlu0 %489
        %491 = vrot.lane.b32.xlu0 %v472, 125
        %v492 = vpop.permute.xlu0 %491
        %vm493 = vcmask 1022976
        %v496 = vsel %vm493, %v490, %v492
        %498 = vrot.lane.b32.xlu0 %v465, 124
        %v499 = vpop.permute.xlu0 %498
        %500 = vrot.lane.b32.xlu0 %v472, 124
        %v501 = vpop.permute.xlu0 %500
        %vm502 = vcmask 1014784
        %v505 = vsel %vm502, %v499, %v501
        %507 = vrot.lane.b32.xlu0 %v465, 123
        %v508 = vpop.permute.xlu0 %507
        %509 = vrot.lane.b32.xlu0 %v472, 123
        %v510 = vpop.permute.xlu0 %509
        %vm511 = vcmask 1006592
        %v514 = vsel %vm511, %v508, %v510
        %516 = vrot.lane.b32.xlu0 %v465, 122
        %v517 = vpop.permute.xlu0 %516
        %518 = vrot.lane.b32.xlu0 %v472, 122
        %v519 = vpop.permute.xlu0 %518
        %vm520 = vcmask 998400
        %v523 = vsel %vm520, %v517, %v519
        %525 = vrot.lane.b32.xlu0 %v465, 121
        %v526 = vpop.permute.xlu0 %525
        %527 = vrot.lane.b32.xlu0 %v472, 121
        %v528 = vpop.permute.xlu0 %527
        %vm529 = vcmask 990208
        %v532 = vsel %vm529, %v526, %v528
        %534 = vrot.lane.b32.xlu0 %v465, 120
        %v535 = vpop.permute.xlu0 %534
        %536 = vrot.lane.b32.xlu0 %v472, 120
        %v537 = vpop.permute.xlu0 %536
        %vm538 = vcmask 982016
        %v541 = vsel %vm538, %v535, %v537
        %543 = vrot.lane.b32.xlu0 %v465, 119
        %v544 = vpop.permute.xlu0 %543
        %545 = vrot.lane.b32.xlu0 %v472, 119
        %v546 = vpop.permute.xlu0 %545
        %vm547 = vcmask 973824
        %v550 = vsel %vm547, %v544, %v546
        %552 = vrot.lane.b32.xlu0 %v465, 118
        %v553 = vpop.permute.xlu0 %552
        %554 = vrot.lane.b32.xlu0 %v472, 118
        %v555 = vpop.permute.xlu0 %554
        %vm556 = vcmask 965632
        %v559 = vsel %vm556, %v553, %v555
        %561 = vrot.lane.b32.xlu0 %v465, 117
        %v562 = vpop.permute.xlu0 %561
        %563 = vrot.lane.b32.xlu0 %v472, 117
        %v564 = vpop.permute.xlu0 %563
        %vm565 = vcmask 957440
        %v568 = vsel %vm565, %v562, %v564
        %570 = vrot.lane.b32.xlu0 %v465, 116
        %v571 = vpop.permute.xlu0 %570
        %572 = vrot.lane.b32.xlu0 %v472, 116
        %v573 = vpop.permute.xlu0 %572
        %vm574 = vcmask 949248
        %v577 = vsel %vm574, %v571, %v573
        %579 = vrot.lane.b32.xlu0 %v465, 115
        %v580 = vpop.permute.xlu0 %579
        %581 = vrot.lane.b32.xlu0 %v472, 115
        %v582 = vpop.permute.xlu0 %581
        %vm583 = vcmask 941056
        %v586 = vsel %vm583, %v580, %v582
        %588 = vrot.lane.b32.xlu0 %v465, 114
        %v589 = vpop.permute.xlu0 %588
        %590 = vrot.lane.b32.xlu0 %v472, 114
        %v591 = vpop.permute.xlu0 %590
        %vm592 = vcmask 932864
        %v595 = vsel %vm592, %v589, %v591
        %v598 = vld [vmem:[%s425] sm:$0xff]
        %v599 = vld [vmem:[%s425 + $0x8] sm:$0xff]
        %v600 = vld [vmem:[%s425 + $0x10] sm:$0xff]
        %v601 = vld [vmem:[%s425 + $0x18] sm:$0xff]
        %v602 = vld [vmem:[%s431] sm:$0xff]
        %v603 = vld [vmem:[%s431 + $0x8] sm:$0xff]
        %v604 = vld [vmem:[%s431 + $0x10] sm:$0xff]
        %v605 = vld [vmem:[%s431 + $0x18] sm:$0xff]
        %607 = vset.pattern.permute.xlu0 0
        %608 = vperm.xlu0 %607, %v602
        %v609 = vpop.permute.xlu0 %608
        %612 = vset.pattern.permute.xlu0 0
        %613 = vperm.xlu0 %612, %v603
        %v614 = vpop.permute.xlu0 %613
        %617 = vset.pattern.permute.xlu0 0
        %618 = vperm.xlu0 %617, %v604
        %v619 = vpop.permute.xlu0 %618
        %622 = vset.pattern.permute.xlu0 0
        %623 = vperm.xlu0 %622, %v605
        %v624 = vpop.permute.xlu0 %623
        %v630 = vunpack.c.l.b16 %v598
        %v631 = vunpack.c.h.b16 %v598
        %v632 = vunpack.c.l.b16 %v599
        %v633 = vunpack.c.h.b16 %v599
        %v634 = vunpack.c.l.b16 %v600
        %v635 = vunpack.c.h.b16 %v600
        %v636 = vunpack.c.l.b16 %v601
        %v637 = vunpack.c.h.b16 %v601
        %v638 = vpack.c.b16 %v632, %v630
        %v639 = vpack.c.b16 %v633, %v631
        %v640 = vpack.c.b16 %v636, %v634
        %v641 = vpack.c.b16 %v637, %v635
        %vm644 = vcmask 916480
        %v646 = vsel %vm644, %v639, 0
        %v649 = vsel %vm644, %v641, 0
        %651 = vmatprep.subr.bf16.mxu0 0
        %652 = vmatpush1.bf16.msra.mxu0 %v465
        %653 = vmatprep.subr.bf16.mxu0 0
        %654 = vmatpush1.bf16.msra.mxu0 %v478
        %655 = vmatprep.subr.bf16.mxu0 0
        %656 = vmatpush1.bf16.msra.mxu0 %v487
        %657 = vmatprep.subr.bf16.mxu0 0
        %658 = vmatpush1.bf16.msra.mxu0 %v496
        %659 = vmatprep.subr.bf16.mxu0 0
        %660 = vmatpush1.bf16.msra.mxu0 %v505
        %661 = vmatprep.subr.bf16.mxu0 0
        %662 = vmatpush1.bf16.msra.mxu0 %v514
        %663 = vmatprep.subr.bf16.mxu0 0
        %664 = vmatpush1.bf16.msra.mxu0 %v523
        %665 = vmatprep.subr.bf16.mxu0 0
        %666 = vmatpush1.bf16.msra.mxu0 %v532
        %667 = vmatprep.subr.bf16.mxu0 0
        %668 = vmatpush1.bf16.msra.mxu0 %v541
        %669 = vmatprep.subr.bf16.mxu0 0
        %670 = vmatpush1.bf16.msra.mxu0 %v550
        %671 = vmatprep.subr.bf16.mxu0 0
        %672 = vmatpush1.bf16.msra.mxu0 %v559
        %673 = vmatprep.subr.bf16.mxu0 0
        %674 = vmatpush1.bf16.msra.mxu0 %v568
        %675 = vmatprep.subr.bf16.mxu0 0
        %676 = vmatpush1.bf16.msra.mxu0 %v577
        %677 = vmatprep.subr.bf16.mxu0 0
        %678 = vmatpush1.bf16.msra.mxu0 %v586
        %679 = vmatprep.subr.bf16.mxu0 0
        %680 = vmatpush1.bf16.msra.mxu0 %v595
        %681 = vmatprep.subr.bf16.mxu0 0
        %682 = vmatpush1.bf16.msra.mxu0 0
        %683 = vmatprep.mubr.bf16.mxu0 %v646
        %684 = vmatmul.mubr.bf16.gmra.mrb[0].mxu0 %v638
        %v685 = vpop.f32.mrb[0].mxu0
        %v686 = vadd.f32 %v609, %v685
        %v687 = vpop.f32.mrb[0].mxu0
        %v688 = vpop.f32.mrb[0].mxu0
        %v689 = vadd.f32 %v614, %v688
        %v690 = vpop.f32.mrb[0].mxu0
        %691 = vmatprep.mubr.bf16.mxu0 %v649
        %692 = vmatmul.mubr.bf16.gmra.mrb[0].mxu0 %v640
        %v693 = vpop.f32.mrb[0].mxu0
        %v694 = vadd.f32 %v619, %v693
        %v695 = vpop.f32.mrb[0].mxu0
        %v696 = vpop.f32.mrb[0].mxu0
        %v697 = vadd.f32 %v624, %v696
        %v698 = vpop.f32.mrb[0].mxu0
        %699 = vdwg.mxu0
        %p700 = scmp.eq.s32.totalorder %s24, 0
        // Predicated region
        $region119: #{waveunet_forward.15} parent=109 // pred_check
          %p701 = pneg %p700
        $region120: #{waveunet_forward.15} parent=109 // pred_check_branch
          %703 = sbr.rel (%p701) target = $region122
        $region121: #{waveunet_forward.15} parent=109 // pred_region
          %vm704 = vcmask 7168
          %705 = vst.msk [vmem:[#allocation2] sm:$0xff] %vm704, 0.0
          %706 = vst.msk [vmem:[#allocation2 + $0x8] sm:$0xff] %vm704, 0.0
          %707 = vst.msk [vmem:[#allocation2 + $0x10] sm:$0xff] %vm704, 0.0
          %708 = vst.msk [vmem:[#allocation2 + $0x18] sm:$0xff] %vm704, 0.0
          %709 = vst.msk [vmem:[#allocation3] sm:$0xff] %vm704, 0.0
          %710 = vst.msk [vmem:[#allocation3 + $0x8] sm:$0xff] %vm704, 0.0
          %711 = vst.msk [vmem:[#allocation3 + $0x10] sm:$0xff] %vm704, 0.0
          %712 = vst.msk [vmem:[#allocation3 + $0x18] sm:$0xff] %vm704, 0.0
          %v713 = vlaneseq
          %v714 = vand.u32 %v713, 127
          %s715 = smul.u32 %s24, 128
          %v716 = vstv %s715
          %v717 = vadd.s32 %v716, %v714
          %vm718 = vcmp.lt.s32.totalorder %v717, 25
          %v719 = vsel %vm718, %v686, 0.0
          %v720 = vsel %vm718, %v689, 0.0
          %v721 = vsel %vm718, %v694, 0.0
          %v722 = vsel %vm718, %v697, 0.0
          %v723 = vld [vmem:[#allocation2] sm:$0xff]
          %v724 = vld [vmem:[#allocation2 + $0x8] sm:$0xff]
          %v725 = vld [vmem:[#allocation2 + $0x10] sm:$0xff]
          %v726 = vld [vmem:[#allocation2 + $0x18] sm:$0xff]
          %727 = vadd.xlane.f32.xlu0 %v719
          %v728 = vpop.xlane.xlu0 %727
          %729 = vadd.xlane.f32.xlu0 %v720
          %v730 = vpop.xlane.xlu0 %729
          %731 = vadd.xlane.f32.xlu0 %v721
          %v732 = vpop.xlane.xlu0 %731
          %733 = vadd.xlane.f32.xlu0 %v722
          %v734 = vpop.xlane.xlu0 %733
          %v735 = vadd.f32 %v723, %v728
          %v736 = vadd.f32 %v724, %v730
          %v737 = vadd.f32 %v725, %v732
          %v738 = vadd.f32 %v726, %v734
          %739 = vst.msk [vmem:[#allocation2] sm:$0xff] %vm704, %v735
          %740 = vst.msk [vmem:[#allocation2 + $0x8] sm:$0xff] %vm704, %v736
          %741 = vst.msk [vmem:[#allocation2 + $0x10] sm:$0xff] %vm704, %v737
          %742 = vst.msk [vmem:[#allocation2 + $0x18] sm:$0xff] %vm704, %v738
          %v743 = vld [vmem:[#allocation3] sm:$0xff]
          %v744 = vld [vmem:[#allocation3 + $0x8] sm:$0xff]
          %v745 = vld [vmem:[#allocation3 + $0x10] sm:$0xff]
          %v746 = vld [vmem:[#allocation3 + $0x18] sm:$0xff]
          %v747 = vmul.f32 %v719, %v719
          %v748 = vmul.f32 %v720, %v720
          %v749 = vmul.f32 %v721, %v721
          %v750 = vmul.f32 %v722, %v722
          %751 = vadd.xlane.f32.xlu0 %v747
          %v752 = vpop.xlane.xlu0 %751
          %753 = vadd.xlane.f32.xlu0 %v748
          %v754 = vpop.xlane.xlu0 %753
          %755 = vadd.xlane.f32.xlu0 %v749
          %v756 = vpop.xlane.xlu0 %755
          %757 = vadd.xlane.f32.xlu0 %v750
          %v758 = vpop.xlane.xlu0 %757
          %v759 = vadd.f32 %v743, %v752
          %v760 = vadd.f32 %v744, %v754
          %v761 = vadd.f32 %v745, %v756
          %v762 = vadd.f32 %v746, %v758
          %763 = vst.msk [vmem:[#allocation3] sm:$0xff] %vm704, %v759
          %764 = vst.msk [vmem:[#allocation3 + $0x8] sm:$0xff] %vm704, %v760
          %765 = vst.msk [vmem:[#allocation3 + $0x10] sm:$0xff] %vm704, %v761
          %766 = vst.msk [vmem:[#allocation3 + $0x18] sm:$0xff] %vm704, %v762
        $region122: #{waveunet_forward.15} parent=109 // pred_fallthru
          _
        %p767 = scmp.lt.s32.totalorder %s24, 0
        // Predicated region
        $region123: #{waveunet_forward.15} parent=109 // pred_check
          %p768 = pneg %p767
        $region124: #{waveunet_forward.15} parent=109 // pred_check_branch
          %770 = sbr.rel (%p768) target = $region126
        $region125: #{waveunet_forward.15} parent=109 // pred_region
          %v771 = vld [vmem:[#allocation2] sm:$0xff]
          %v772 = vld [vmem:[#allocation2 + $0x8] sm:$0xff]
          %v773 = vld [vmem:[#allocation2 + $0x10] sm:$0xff]
          %v774 = vld [vmem:[#allocation2 + $0x18] sm:$0xff]
          %775 = vadd.xlane.f32.xlu0 %v686
          %v776 = vpop.xlane.xlu0 %775
          %777 = vadd.xlane.f32.xlu0 %v689
          %v778 = vpop.xlane.xlu0 %777
          %779 = vadd.xlane.f32.xlu0 %v694
          %v780 = vpop.xlane.xlu0 %779
          %781 = vadd.xlane.f32.xlu0 %v697
          %v782 = vpop.xlane.xlu0 %781
          %v783 = vadd.f32 %v771, %v776
          %v784 = vadd.f32 %v772, %v778
          %v785 = vadd.f32 %v773, %v780
          %v786 = vadd.f32 %v774, %v782
          %vm787 = vcmask 7168
          %788 = vst.msk [vmem:[#allocation2] sm:$0xff] %vm787, %v783
          %789 = vst.msk [vmem:[#allocation2 + $0x8] sm:$0xff] %vm787, %v784
          %790 = vst.msk [vmem:[#allocation2 + $0x10] sm:$0xff] %vm787, %v785
          %791 = vst.msk [vmem:[#allocation2 + $0x18] sm:$0xff] %vm787, %v786
          %v792 = vld [vmem:[#allocation3] sm:$0xff]
          %v793 = vld [vmem:[#allocation3 + $0x8] sm:$0xff]
          %v794 = vld [vmem:[#allocation3 + $0x10] sm:$0xff]
          %v795 = vld [vmem:[#allocation3 + $0x18] sm:$0xff]
          %v796 = vmul.f32 %v686, %v686
          %v797 = vmul.f32 %v689, %v689
          %v798 = vmul.f32 %v694, %v694
          %v799 = vmul.f32 %v697, %v697
          %800 = vadd.xlane.f32.xlu0 %v796
          %v801 = vpop.xlane.xlu0 %800
          %802 = vadd.xlane.f32.xlu0 %v797
          %v803 = vpop.xlane.xlu0 %802
          %804 = vadd.xlane.f32.xlu0 %v798
          %v805 = vpop.xlane.xlu0 %804
          %806 = vadd.xlane.f32.xlu0 %v799
          %v807 = vpop.xlane.xlu0 %806
          %v808 = vadd.f32 %v792, %v801
          %v809 = vadd.f32 %v793, %v803
          %v810 = vadd.f32 %v794, %v805
          %v811 = vadd.f32 %v795, %v807
          %812 = vst.msk [vmem:[#allocation3] sm:$0xff] %vm787, %v808
          %813 = vst.msk [vmem:[#allocation3 + $0x8] sm:$0xff] %vm787, %v809
          %814 = vst.msk [vmem:[#allocation3 + $0x10] sm:$0xff] %vm787, %v810
          %815 = vst.msk [vmem:[#allocation3 + $0x18] sm:$0xff] %vm787, %v811
        $region126: #{waveunet_forward.15} parent=109 // pred_fallthru
          _
        // Predicated region
        $region127: #{waveunet_forward.15} parent=109 // pred_check
          %p816 = pneg %p700
        $region128: #{waveunet_forward.15} parent=109 // pred_check_branch
          %818 = sbr.rel (%p816) target = $region130
        $region129: #{waveunet_forward.15} parent=109 // pred_region
          %v819 = vld [vmem:[#allocation2] sm:$0xff]
          %v820 = vld [vmem:[#allocation2 + $0x8] sm:$0xff]
          %v821 = vld [vmem:[#allocation2 + $0x10] sm:$0xff]
          %v822 = vld [vmem:[#allocation2 + $0x18] sm:$0xff]
          %v823 = vld [vmem:[#allocation3] sm:$0xff]
          %v824 = vld [vmem:[#allocation3 + $0x8] sm:$0xff]
          %v825 = vld [vmem:[#allocation3 + $0x10] sm:$0xff]
          %v826 = vld [vmem:[#allocation3 + $0x18] sm:$0xff]
          %831 = vrot.lane.b32.xlu0 %v823, 1
          %v832 = vpop.permute.xlu0 %831
          %833 = vrot.lane.b32.xlu0 %v824, 1
          %v834 = vpop.permute.xlu0 %833
          %835 = vrot.lane.b32.xlu0 %v825, 1
          %v836 = vpop.permute.xlu0 %835
          %837 = vrot.lane.b32.xlu0 %v826, 1
          %v838 = vpop.permute.xlu0 %837
          %vm843 = vcmask 7168
          %v844 = vsel %vm843, %v819, %v832
          %v845 = vsel %vm843, %v820, %v834
          %v846 = vsel %vm843, %v821, %v836
          %v847 = vsel %vm843, %v822, %v838
          %vm848 = vcmask 15360
          %v849 = vsel %vm848, %v844, 0.0
          %v850 = vsel %vm848, %v845, 0.0
          %v851 = vsel %vm848, %v846, 0.0
          %v852 = vsel %vm848, %v847, 0.0
          %853 = vst [vmem:[%s454] sm:$0xff] %v849
          %854 = vst [vmem:[%s454 + $0x8] sm:$0xff] %v850
          %855 = vst [vmem:[%s454 + $0x10] sm:$0xff] %v851
          %856 = vst [vmem:[%s454 + $0x18] sm:$0xff] %v852
        $region130: #{waveunet_forward.15} parent=109 // pred_fallthru
          _
        %v857 = vpack.c.bf16 %v689, %v686
        %v858 = vpack.c.bf16 %v697, %v694
        %v861 = vunpack.c.l.b16 %v857
        %v862 = vunpack.c.h.b16 %v857
        %v863 = vunpack.c.l.b16 %v858
        %v864 = vunpack.c.h.b16 %v858
        %v865 = vpack.c.b16 %v861, %v861
        %v866 = vpack.c.b16 %v862, %v862
        %v867 = vpack.c.b16 %v863, %v863
        %v868 = vpack.c.b16 %v864, %v864
        %873 = vst [vmem:[%s444] sm:$0xf] %v865
        %874 = vst [vmem:[%s444 + $0x4] sm:$0xf] %v866
        %875 = vst [vmem:[%s444 + $0x8] sm:$0xf] %v867
        %876 = vst [vmem:[%s444 + $0xc] sm:$0xf] %v868
        %s877 = smul.u32 4, %s23
        %p878 = scmp.lt.s32.totalorder %s22, 1
        %s879 = scalar_select %p878, %s22, 1
        %p880 = scmp.lt.s32.totalorder %s877, 3
        %s881 = scalar_select %p880, %s877, 3
        %p882 = scmp.lt.s32.totalorder %s24, 0
        %s883 = scalar_select %p882, %s24, 0
        %s884 = sadd.s32 %s883, %s881
        %s885 = smul.addr %s879, 4
        %s886 = sadd.s32 %s884, %s885
        %s887 = smul.addr %s886, 4
        %s888 = scalar_lea.vmem %s4, %s887
        %s889 = smul.u32 4, %s23
        %p890 = scmp.lt.s32.totalorder %s22, 1
        %s891 = scalar_select %p890, %s22, 1
        %p892 = scmp.lt.s32.totalorder %s889, 3
        %s893 = scalar_select %p892, %s889, 3
        %s894 = smul.addr %s891, 4
        %s895 = sadd.s32 %s893, %s894
        %s896 = smul.addr %s895, 8
        %s897 = scalar_lea.vmem %s5, %s896
        // Predicated region
        $region131: #{waveunet_forward.15} parent=109 // pred_check
          %p898 = pneg %p168
        $region132: #{waveunet_forward.15} parent=109 // pred_check_branch
          %900 = sbr.rel (%p898) target = $region134
        $region133: #{waveunet_forward.15} parent=109 // pred_region
          %s901 = smul.u32 4, %s23
        $region134: #{waveunet_forward.15} parent=109 // pred_fallthru
          _
        // Predicated region
        $region135: #{waveunet_forward.15} parent=109 // pred_check
          %p902 = pneg %p196
        $region136: #{waveunet_forward.15} parent=109 // pred_check_branch
          %904 = sbr.rel (%p902) target = $region138
        $region137: #{waveunet_forward.15} parent=109 // pred_region
          %s905 = smul.u32 4, %s23
        $region138: #{waveunet_forward.15} parent=109 // pred_fallthru
          _
      $region110: #{waveunet_forward.15} parent=5 // pred_fallthru
        _
      %p906 = scmp.le.s32.totalorder 2, %s12
      // Predicated region
      $region139: #{waveunet_forward.15} parent=5 // pred_check
        %p907 = pneg %p906
      $region140: #{waveunet_forward.15} parent=5 // pred_check_branch
        %909 = sbr.rel (%p907) target = $region142
      $region141: #{waveunet_forward.15} parent=5 // pred_region
        %s910 = ssub.s32 %s12, 2
        // Predicated region
        $region143: #{waveunet_forward.15} parent=141 // pred_check
          %p911 = pneg %p174
        $region144: #{waveunet_forward.15} parent=141 // pred_check_branch
          %913 = sbr.rel (%p911) target = $region146
        $region145: #{waveunet_forward.15} parent=141 // pred_region
          %s914 = smul.u32 4, %s26
          %p915 = scmp.lt.s32.totalorder %s25, 1
          %s916 = scalar_select %p915, %s25, 1
          %p917 = scmp.lt.s32.totalorder %s914, 3
          %s918 = scalar_select %p917, %s914, 3
          %p919 = scmp.lt.s32.totalorder %s27, 0
          %s920 = scalar_select %p919, %s27, 0
          %s921 = sadd.s32 %s920, %s918
          %s922 = smul.addr %s916, 4
          %s923 = sadd.s32 %s921, %s922
          %s924 = smul.addr %s923, 4
          %s925 = scalar_lea.vmem %s4, %s924
        $region146: #{waveunet_forward.15} parent=141 // pred_fallthru
          _
        // Predicated region
        $region147: #{waveunet_forward.15} parent=141 // pred_check
          %p926 = pneg %p202
        $region148: #{waveunet_forward.15} parent=141 // pred_check_branch
          %928 = sbr.rel (%p926) target = $region150
        $region149: #{waveunet_forward.15} parent=141 // pred_region
          %s929 = smul.u32 4, %s26
          %p930 = scmp.lt.s32.totalorder %s25, 1
          %s931 = scalar_select %p930, %s25, 1
          %p932 = scmp.lt.s32.totalorder %s929, 3
          %s933 = scalar_select %p932, %s929, 3
          %s934 = smul.addr %s931, 4
          %s935 = sadd.s32 %s933, %s934
          %s936 = smul.addr %s935, 8
          %s937 = scalar_lea.vmem %s5, %s936
        $region150: #{waveunet_forward.15} parent=141 // pred_fallthru
          _
      $region142: #{waveunet_forward.15} parent=5 // pred_fallthru
        _
    $region6: #{waveunet_forward.15} parent=1 // loop_footer
      %s16 = sadd.s32 1, %s12
    $region7: #{waveunet_forward.15} parent=1 // loop_footer_branch
      %11 = sbr.rel target = $region3
    $region8: #{waveunet_forward.15} parent=1 // loop_exit
      _

// kernel: waveunet_forward.16
$region0: #{waveunet_forward.16}
  #allocation0 [shape = 'u32[]', space=smem, size = 0x4, offset = 0x4, fixed_abs, tag = 'smem constant byte address 0x4 - core index']
  #allocation1 [shape = 'u32[144,128]{1,0:T(1,128)}', space=vmem, size = 0x12000, scoped, tag = 'internal scratch']
  %s0 = inlined_call_operand.vmem [shape: bf16[2,32,128], index: 0, kind: input, shape index: {}]
  %s1 = inlined_call_operand.vmem [shape: f32[32,1], index: 1, kind: input, shape index: {}]
  %s2 = inlined_call_operand.vmem [shape: f32[32,1], index: 2, kind: input, shape index: {}]
  %s3 = inlined_call_operand.vmem [shape: bf16[2,32,128], index: 3, kind: output, shape index: {}]
  %s4 = sld [smem:[#allocation0]]
  $region45: #{waveunet_forward.16} parent=0
    _
  %s6 = ssub.s32 1, %s4
  %s7 = scalar_select 0, %s6, %s4
  loop: start=0, step=1, limit=4
  $region2: #{waveunet_forward.16} parent=0 // loop_pre_header
    _
  $region3: #{waveunet_forward.16} parent=0 // loop_header
    %s9 = sphi 0, %s13
    %p10 = scmp.ge.s32.totalorder %s9, 4
    %s16 = sphi 0, %s35
    %s17 = sphi 0, %s31
    %s18 = sphi 0, %s27
    %s19 = sphi 0, %s16
    %s20 = sphi 0, %s17
    %s21 = sphi 0, %s18
    %s22 = sphi 0, %s19
    %s23 = sphi 0, %s20
    %s24 = sphi 0, %s21
    %s42 = sphi 0, %s44
    %s45 = sphi 0, %s42
    %s46 = sphi 0, %s45
    %s62 = sphi 0, %s46
    %s68 = sphi 0, %s70
    %s71 = sphi 0, %s68
    %s72 = sphi 0, %s71
    %s88 = sphi 0, %s72
    %s94 = sphi 0, %s96
    %s97 = sphi 0, %s94
    %s98 = sphi 0, %s97
    %s114 = sphi 0, %s98
    %s124 = sphi 0, %s126
    %s127 = sphi 0, %s124
    %s128 = sphi 0, %s127
    %s144 = sphi 0, %s128
  $region4: #{waveunet_forward.16} parent=0 // loop_header_branch
    %12 = sbr.rel (%p10) target = $region8
  $region5: #{waveunet_forward.16} parent=0 // loop_body
    %s14 = ssub.s32 %s9, 1
    %s15 = ssub.s32 %s9, 2
    %s25 = sadd.s32 1, %s18
    %p26 = scmp.ge.s32.totalorder %s25, 1
    %s27 = scalar_select %p26, 0, %s25
    %s28 = sadd.s32 1, %s17
    %s29 = scalar_select %p26, %s28, %s17
    %p30 = scmp.ge.s32.totalorder %s29, 1
    %s31 = scalar_select %p30, 0, %s29
    %s32 = sadd.s32 1, %s16
    %s33 = scalar_select %p30, %s32, %s16
    %p34 = scmp.ge.s32.totalorder %s33, 2
    %s35 = scalar_select %p34, 0, %s33
    %s36 = ssub.s32 %s16, %s35
    %s37 = ssub.s32 %s17, %s31
    %s38 = sor.u32 %s36, %s37
    %s39 = ssub.s32 %s18, %s27
    %s40 = sor.u32 %s38, %s39
    %p41 = scmp.eq.s32.totalorder %s40, 0
    %s43 = sadd.s32 %s42, 1
    %s44 = scalar_select %p41, %s42, %s43
    %p47 = pneg %p41
    %p48 = scmp.eq.s32.totalorder %s9, 1
    %p49 = por %p47, %p48
    %p50 = scmp.ne.s32.totalorder %s42, %s45
    %p51 = scmp.eq.s32.totalorder %s9, 0
    %p52 = por %p50, %p51
    %p53 = scmp.ne.s32.totalorder %s42, %s45
    %p54 = scmp.eq.s32.totalorder %s14, 1
    %p55 = por %p53, %p54
    %p56 = scmp.ne.s32.totalorder %s45, %s46
    %p57 = scmp.eq.s32.totalorder %s14, 0
    %p58 = por %p56, %p57
    %p59 = scmp.ne.s32.totalorder %s45, %s46
    %p60 = scmp.eq.s32.totalorder %s15, 1
    %p61 = por %p59, %p60
    %p63 = scmp.ne.s32.totalorder %s46, %s62
    %p64 = scmp.eq.s32.totalorder %s15, 0
    %p65 = por %p63, %p64
    %s66 = ssub.s32 %s17, %s31
    %p67 = scmp.eq.s32.totalorder %s66, 0
    %s69 = sadd.s32 %s68, 1
    %s70 = scalar_select %p67, %s68, %s69
    %p73 = pneg %p67
    %p74 = scmp.eq.s32.totalorder %s9, 1
    %p75 = por %p73, %p74
    %p76 = scmp.ne.s32.totalorder %s68, %s71
    %p77 = scmp.eq.s32.totalorder %s9, 0
    %p78 = por %p76, %p77
    %p79 = scmp.ne.s32.totalorder %s68, %s71
    %p80 = scmp.eq.s32.totalorder %s14, 1
    %p81 = por %p79, %p80
    %p82 = scmp.ne.s32.totalorder %s71, %s72
    %p83 = scmp.eq.s32.totalorder %s14, 0
    %p84 = por %p82, %p83
    %p85 = scmp.ne.s32.totalorder %s71, %s72
    %p86 = scmp.eq.s32.totalorder %s15, 1
    %p87 = por %p85, %p86
    %p89 = scmp.ne.s32.totalorder %s72, %s88
    %p90 = scmp.eq.s32.totalorder %s15, 0
    %p91 = por %p89, %p90
    %s92 = ssub.s32 %s17, %s31
    %p93 = scmp.eq.s32.totalorder %s92, 0
    %s95 = sadd.s32 %s94, 1
    %s96 = scalar_select %p93, %s94, %s95
    %p99 = pneg %p93
    %p100 = scmp.eq.s32.totalorder %s9, 1
    %p101 = por %p99, %p100
    %p102 = scmp.ne.s32.totalorder %s94, %s97
    %p103 = scmp.eq.s32.totalorder %s9, 0
    %p104 = por %p102, %p103
    %p105 = scmp.ne.s32.totalorder %s94, %s97
    %p106 = scmp.eq.s32.totalorder %s14, 1
    %p107 = por %p105, %p106
    %p108 = scmp.ne.s32.totalorder %s97, %s98
    %p109 = scmp.eq.s32.totalorder %s14, 0
    %p110 = por %p108, %p109
    %p111 = scmp.ne.s32.totalorder %s97, %s98
    %p112 = scmp.eq.s32.totalorder %s15, 1
    %p113 = por %p111, %p112
    %p115 = scmp.ne.s32.totalorder %s98, %s114
    %p116 = scmp.eq.s32.totalorder %s15, 0
    %p117 = por %p115, %p116
    %s118 = ssub.s32 %s16, %s35
    %s119 = ssub.s32 %s17, %s31
    %s120 = sor.u32 %s118, %s119
    %s121 = ssub.s32 %s18, %s27
    %s122 = sor.u32 %s120, %s121
    %p123 = scmp.eq.s32.totalorder %s122, 0
    %s125 = sadd.s32 %s124, 1
    %s126 = scalar_select %p123, %s124, %s125
    %p129 = pneg %p123
    %p130 = scmp.eq.s32.totalorder %s9, 1
    %p131 = por %p129, %p130
    %p132 = scmp.ne.s32.totalorder %s124, %s127
    %p133 = scmp.eq.s32.totalorder %s9, 0
    %p134 = por %p132, %p133
    %p135 = scmp.ne.s32.totalorder %s124, %s127
    %p136 = scmp.eq.s32.totalorder %s14, 1
    %p137 = por %p135, %p136
    %p138 = scmp.ne.s32.totalorder %s127, %s128
    %p139 = scmp.eq.s32.totalorder %s14, 0
    %p140 = por %p138, %p139
    %p141 = scmp.ne.s32.totalorder %s127, %s128
    %p142 = scmp.eq.s32.totalorder %s15, 1
    %p143 = por %p141, %p142
    %p145 = scmp.ne.s32.totalorder %s128, %s144
    %p146 = scmp.eq.s32.totalorder %s15, 0
    %p147 = por %p145, %p146
    %p148 = scmp.le.s32.totalorder 1, %s9
    %p149 = scmp.lt.s32.totalorder %s9, 3
    %p150 = pnand %p148, %p149
    %p151 = pneg %p150
    // Predicated region
    $region9: #{waveunet_forward.16} parent=5 // pred_check
      _
    $region10: #{waveunet_forward.16} parent=5 // pred_check_branch
      %153 = sbr.rel (%p150) target = $region12
    $region11: #{waveunet_forward.16} parent=5 // pred_region
      %s154 = ssub.s32 %s9, 1
      // Predicated region
      $region13: #{waveunet_forward.16} parent=11 // pred_check
        %p155 = pneg %p84
      $region14: #{waveunet_forward.16} parent=11 // pred_check_branch
        %157 = sbr.rel (%p155) target = $region16
      $region15: #{waveunet_forward.16} parent=11 // pred_region
        %s158 = smul.u32 4, %s20
        %p159 = scmp.lt.s32.totalorder %s158, 3
        %s160 = scalar_select %p159, %s158, 3
        %s161 = smul.addr %s160, 8
        %s162 = scalar_lea.vmem %s1, %s161
        %s163 = smul.u32 4, %s20
      $region16: #{waveunet_forward.16} parent=11 // pred_fallthru
        _
      // Predicated region
      $region17: #{waveunet_forward.16} parent=11 // pred_check
        %p164 = pneg %p110
      $region18: #{waveunet_forward.16} parent=11 // pred_check_branch
        %166 = sbr.rel (%p164) target = $region20
      $region19: #{waveunet_forward.16} parent=11 // pred_region
        %s167 = smul.u32 4, %s20
        %p168 = scmp.lt.s32.totalorder %s167, 3
        %s169 = scalar_select %p168, %s167, 3
        %s170 = smul.addr %s169, 8
        %s171 = scalar_lea.vmem %s2, %s170
        %s172 = smul.u32 4, %s20
      $region20: #{waveunet_forward.16} parent=11 // pred_fallthru
        _
    $region12: #{waveunet_forward.16} parent=5 // pred_fallthru
      _
    %p173 = scmp.lt.s32.totalorder %s9, 2
    // Predicated region
    $region21: #{waveunet_forward.16} parent=5 // pred_check
      %p174 = pneg %p173
    $region22: #{waveunet_forward.16} parent=5 // pred_check_branch
      %176 = sbr.rel (%p174) target = $region24
    $region23: #{waveunet_forward.16} parent=5 // pred_region
      // Predicated region
      $region25: #{waveunet_forward.16} parent=23 // pred_check
        %p177 = pneg %p52
      $region26: #{waveunet_forward.16} parent=23 // pred_check_branch
        %179 = sbr.rel (%p177) target = $region28
      $region27: #{waveunet_forward.16} parent=23 // pred_region
        %s180 = smul.u32 4, %s17
        %p181 = scmp.lt.s32.totalorder %s16, 1
        %s182 = scalar_select %p181, %s16, 1
        %p183 = scmp.lt.s32.totalorder %s180, 3
        %s184 = scalar_select %p183, %s180, 3
        %p185 = scmp.lt.s32.totalorder %s18, 0
        %s186 = scalar_select %p185, %s18, 0
        %s187 = sadd.s32 %s186, %s184
        %s188 = smul.addr %s182, 4
        %s189 = sadd.s32 %s187, %s188
        %s190 = smul.addr %s189, 4
        %s191 = scalar_lea.vmem %s0, %s190
        %s192 = smul.u32 4, %s17
      $region28: #{waveunet_forward.16} parent=23 // pred_fallthru
        _
    $region24: #{waveunet_forward.16} parent=5 // pred_fallthru
      _
    %p193 = scmp.le.s32.totalorder 1, %s9
    %p194 = scmp.lt.s32.totalorder %s9, 3
    %p195 = pnand %p193, %p194
    %p196 = pneg %p195
    // Predicated region
    $region29: #{waveunet_forward.16} parent=5 // pred_check
      _
    $region30: #{waveunet_forward.16} parent=5 // pred_check_branch
      %198 = sbr.rel (%p195) target = $region32
    $region31: #{waveunet_forward.16} parent=5 // pred_region
      %s199 = ssub.s32 %s9, 1
      %s200 = smul.u32 4, %s20
      %p201 = scmp.lt.s32.totalorder %s19, 1
      %s202 = scalar_select %p201, %s19, 1
      %p203 = scmp.lt.s32.totalorder %s200, 3
      %s204 = scalar_select %p203, %s200, 3
      %p205 = scmp.lt.s32.totalorder %s21, 0
      %s206 = scalar_select %p205, %s21, 0
      %s207 = sadd.s32 %s206, %s204
      %s208 = smul.addr %s202, 4
      %s209 = sadd.s32 %s207, %s208
      %s210 = smul.addr %s209, 4
      %s211 = scalar_lea.vmem %s0, %s210
      %p212 = pneg %p58
      %p213 = pneg %p55
      %s214 = smul.u32 4, %s20
      %p215 = scmp.lt.s32.totalorder %s214, 3
      %s216 = scalar_select %p215, %s214, 3
      %s217 = smul.addr %s216, 8
      %s218 = scalar_lea.vmem %s1, %s217
      %p219 = pneg %p84
      %p220 = pneg %p81
      %s221 = smul.u32 4, %s20
      %p222 = scmp.lt.s32.totalorder %s221, 3
      %s223 = scalar_select %p222, %s221, 3
      %s224 = smul.addr %s223, 8
      %s225 = scalar_lea.vmem %s2, %s224
      %p226 = pneg %p110
      %p227 = pneg %p107
      %p228 = pneg %p140
      %p229 = pneg %p137
      %s230 = smul.u32 4, %s20
      %p231 = scmp.lt.s32.totalorder %s19, 1
      %s232 = scalar_select %p231, %s19, 1
      %p233 = scmp.lt.s32.totalorder %s230, 3
      %s234 = scalar_select %p233, %s230, 3
      %p235 = scmp.lt.s32.totalorder %s21, 0
      %s236 = scalar_select %p235, %s21, 0
      %s237 = sadd.s32 %s236, %s234
      %s238 = smul.addr %s232, 4
      %s239 = sadd.s32 %s237, %s238
      %s240 = smul.addr %s239, 4
      %s241 = scalar_lea.vmem %s3, %s240
      %s242 = smul.u32 4, %s20
      %p243 = scmp.lt.s32.totalorder %s19, 1
      %s244 = scalar_select %p243, %s19, 1
      %p245 = scmp.lt.s32.totalorder %s242, 3
      %s246 = scalar_select %p245, %s242, 3
      %p247 = scmp.lt.s32.totalorder %s21, 0
      %s248 = scalar_select %p247, %s21, 0
      %s249 = sadd.s32 %s248, %s246
      %s250 = smul.addr %s244, 4
      %s251 = sadd.s32 %s249, %s250
      %s252 = smul.addr %s251, 4
      %s253 = scalar_lea.vmem %s0, %s252
      %s254 = smul.u32 4, %s20
      %s255 = smul.u32 4, %s20
      %p256 = scmp.lt.s32.totalorder %s255, 3
      %s257 = scalar_select %p256, %s255, 3
      %s258 = smul.addr %s257, 8
      %s259 = scalar_lea.vmem %s1, %s258
      %s260 = smul.u32 4, %s20
      %s261 = smul.u32 4, %s20
      %p262 = scmp.lt.s32.totalorder %s261, 3
      %s263 = scalar_select %p262, %s261, 3
      %s264 = smul.addr %s263, 8
      %s265 = scalar_lea.vmem %s2, %s264
      %s266 = smul.u32 4, %s20
      %s267 = smul.u32 4, %s20
      %p268 = scmp.lt.s32.totalorder %s19, 1
      %s269 = scalar_select %p268, %s19, 1
      %p270 = scmp.lt.s32.totalorder %s267, 3
      %s271 = scalar_select %p270, %s267, 3
      %p272 = scmp.lt.s32.totalorder %s21, 0
      %s273 = scalar_select %p272, %s21, 0
      %s274 = sadd.s32 %s273, %s271
      %s275 = smul.addr %s269, 4
      %s276 = sadd.s32 %s274, %s275
      %s277 = smul.addr %s276, 4
      %s278 = scalar_lea.vmem %s3, %s277
      %s279 = smul.u32 4, %s20
      %v280 = vld [vmem:[%s253] sm:$0xf]
      %v281 = vld [vmem:[%s253 + $0x4] sm:$0xf]
      %v282 = vld [vmem:[%s253 + $0x8] sm:$0xf]
      %v283 = vld [vmem:[%s253 + $0xc] sm:$0xf]
      %v284 = vunpack.c.l.bf16 %v280
      %v285 = vunpack.c.l.bf16 %v281
      %v286 = vunpack.c.l.bf16 %v282
      %v287 = vunpack.c.l.bf16 %v283
      %v288 = vld [vmem:[%s259] sm:$0xff]
      %v289 = vld [vmem:[%s259 + $0x8] sm:$0xff]
      %v290 = vld [vmem:[%s259 + $0x10] sm:$0xff]
      %v291 = vld [vmem:[%s259 + $0x18] sm:$0xff]
      %293 = vset.pattern.permute.xlu0 0
      %294 = vperm.xlu0 %293, %v288
      %v295 = vpop.permute.xlu0 %294
      %298 = vset.pattern.permute.xlu0 0
      %299 = vperm.xlu0 %298, %v289
      %v300 = vpop.permute.xlu0 %299
      %303 = vset.pattern.permute.xlu0 0
      %304 = vperm.xlu0 %303, %v290
      %v305 = vpop.permute.xlu0 %304
      %308 = vset.pattern.permute.xlu0 0
      %309 = vperm.xlu0 %308, %v291
      %v310 = vpop.permute.xlu0 %309
      %v312 = vmul.f32 %v284, %v295
      %v313 = vmul.f32 %v285, %v300
      %v314 = vmul.f32 %v286, %v305
      %v315 = vmul.f32 %v287, %v310
      %v316 = vld [vmem:[%s265] sm:$0xff]
      %v317 = vld [vmem:[%s265 + $0x8] sm:$0xff]
      %v318 = vld [vmem:[%s265 + $0x10] sm:$0xff]
      %v319 = vld [vmem:[%s265 + $0x18] sm:$0xff]
      %321 = vset.pattern.permute.xlu0 0
      %322 = vperm.xlu0 %321, %v316
      %v323 = vpop.permute.xlu0 %322
      %326 = vset.pattern.permute.xlu0 0
      %327 = vperm.xlu0 %326, %v317
      %v328 = vpop.permute.xlu0 %327
      %331 = vset.pattern.permute.xlu0 0
      %332 = vperm.xlu0 %331, %v318
      %v333 = vpop.permute.xlu0 %332
      %336 = vset.pattern.permute.xlu0 0
      %337 = vperm.xlu0 %336, %v319
      %v338 = vpop.permute.xlu0 %337
      %v340 = vadd.f32 %v312, %v323
      %v341 = vadd.f32 %v313, %v328
      %v342 = vadd.f32 %v314, %v333
      %v343 = vadd.f32 %v315, %v338
      %vm344 = vcmp.gt.f32.partialorder %v340, 0.0
      %vm345 = vcmp.gt.f32.partialorder %v341, 0.0
      %vm346 = vcmp.gt.f32.partialorder %v342, 0.0
      %vm347 = vcmp.gt.f32.partialorder %v343, 0.0
      %v348 = vmul.f32 %v340, 0.01
      %v349 = vmul.f32 %v341, 0.01
      %v350 = vmul.f32 %v342, 0.01
      %v351 = vmul.f32 %v343, 0.01
      %v352 = vsel %vm344, %v340, %v348
      %v353 = vsel %vm345, %v341, %v349
      %v354 = vsel %vm346, %v342, %v350
      %v355 = vsel %vm347, %v343, %v351
      %v356 = vpack.c.bf16 %v353, %v352
      %v357 = vpack.c.bf16 %v355, %v354
      %v360 = vunpack.c.l.b16 %v356
      %v361 = vunpack.c.h.b16 %v356
      %v362 = vunpack.c.l.b16 %v357
      %v363 = vunpack.c.h.b16 %v357
      %v364 = vpack.c.b16 %v360, %v360
      %v365 = vpack.c.b16 %v361, %v361
      %v366 = vpack.c.b16 %v362, %v362
      %v367 = vpack.c.b16 %v363, %v363
      %372 = vst [vmem:[%s278] sm:$0xf] %v364
      %373 = vst [vmem:[%s278 + $0x4] sm:$0xf] %v365
      %374 = vst [vmem:[%s278 + $0x8] sm:$0xf] %v366
      %375 = vst [vmem:[%s278 + $0xc] sm:$0xf] %v367
      %s376 = smul.u32 4, %s20
      %p377 = scmp.lt.s32.totalorder %s19, 1
      %s378 = scalar_select %p377, %s19, 1
      %p379 = scmp.lt.s32.totalorder %s376, 3
      %s380 = scalar_select %p379, %s376, 3
      %p381 = scmp.lt.s32.totalorder %s21, 0
      %s382 = scalar_select %p381, %s21, 0
      %s383 = sadd.s32 %s382, %s380
      %s384 = smul.addr %s378, 4
      %s385 = sadd.s32 %s383, %s384
      %s386 = smul.addr %s385, 4
      %s387 = scalar_lea.vmem %s3, %s386
      // Predicated region
      $region33: #{waveunet_forward.16} parent=31 // pred_check
        %p388 = pneg %p137
      $region34: #{waveunet_forward.16} parent=31 // pred_check_branch
        %390 = sbr.rel (%p388) target = $region36
      $region35: #{waveunet_forward.16} parent=31 // pred_region
        %s391 = smul.u32 4, %s20
      $region36: #{waveunet_forward.16} parent=31 // pred_fallthru
        _
    $region32: #{waveunet_forward.16} parent=5 // pred_fallthru
      _
    %p392 = scmp.le.s32.totalorder 2, %s9
    // Predicated region
    $region37: #{waveunet_forward.16} parent=5 // pred_check
      %p393 = pneg %p392
    $region38: #{waveunet_forward.16} parent=5 // pred_check_branch
      %395 = sbr.rel (%p393) target = $region40
    $region39: #{waveunet_forward.16} parent=5 // pred_region
      %s396 = ssub.s32 %s9, 2
      // Predicated region
      $region41: #{waveunet_forward.16} parent=39 // pred_check
        %p397 = pneg %p143
      $region42: #{waveunet_forward.16} parent=39 // pred_check_branch
        %399 = sbr.rel (%p397) target = $region44
      $region43: #{waveunet_forward.16} parent=39 // pred_region
        %s400 = smul.u32 4, %s23
        %p401 = scmp.lt.s32.totalorder %s22, 1
        %s402 = scalar_select %p401, %s22, 1
        %p403 = scmp.lt.s32.totalorder %s400, 3
        %s404 = scalar_select %p403, %s400, 3
        %p405 = scmp.lt.s32.totalorder %s24, 0
        %s406 = scalar_select %p405, %s24, 0
        %s407 = sadd.s32 %s406, %s404
        %s408 = smul.addr %s402, 4
        %s409 = sadd.s32 %s407, %s408
        %s410 = smul.addr %s409, 4
        %s411 = scalar_lea.vmem %s3, %s410
      $region44: #{waveunet_forward.16} parent=39 // pred_fallthru
        _
    $region40: #{waveunet_forward.16} parent=5 // pred_fallthru
      _
  $region6: #{waveunet_forward.16} parent=0 // loop_footer
    %s13 = sadd.s32 1, %s9
  $region7: #{waveunet_forward.16} parent=0 // loop_footer_branch
    %8 = sbr.rel target = $region3
  $region8: #{waveunet_forward.16} parent=0 // loop_exit
    _

// kernel: waveunet_forward.17
$region0: #{waveunet_forward.17}
  #allocation0 [shape = 'u32[]', space=smem, size = 0x4, offset = 0x4, fixed_abs, tag = 'smem constant byte address 0x4 - core index']
  #allocation1 [shape = 'u32[144,128]{1,0:T(1,128)}', space=vmem, size = 0x12000, scoped, tag = 'internal scratch']
  #allocation2 [shape = 'f32[16,1]{1,0:T(8,128)}', space=vmem, size = 0x2000, scoped, tag = 'scratch operand']
  #allocation3 [shape = 'f32[16,1]{1,0:T(8,128)}', space=vmem, size = 0x2000, scoped, tag = 'scratch operand']
  %s0 = inlined_call_operand.vmem [shape: bf16[2,16,256], index: 0, kind: input, shape index: {}, may-alias: {0,1}]
  %s1 = inlined_call_operand.vmem [shape: bf16[2,16,256], index: 1, kind: input, shape index: {}, may-alias: {0,1}]
  %s2 = inlined_call_operand.vmem [shape: bf16[2,24,256], index: 2, kind: input, shape index: {}, may-alias: {2,3}]
  %s3 = inlined_call_operand.vmem [shape: bf16[2,24,256], index: 3, kind: input, shape index: {}, may-alias: {2,3}]
  %s4 = inlined_call_operand.vmem [shape: bf16[16,200], index: 4, kind: input, shape index: {}]
  %s5 = inlined_call_operand.vmem [shape: f32[16,1], index: 5, kind: input, shape index: {}]
  %s6 = inlined_call_operand.vmem [shape: bf16[2,16,128], index: 6, kind: output, shape index: {0}]
  %s7 = inlined_call_operand.vmem [shape: f32[2,16,128], index: 7, kind: output, shape index: {1}]
  %8 = xla_tuple %s6, %s7
  %s9 = sld [smem:[#allocation0]]
  $region241: #{waveunet_forward.17} parent=0
    _
  %s11 = ssub.s32 1, %s9
  %s12 = scalar_select 0, %s11, %s9
  $region1: #{waveunet_forward.17} parent=0
    #allocation4 [shape = 'u8[8192]{0}', space=vmem, size = 0x2000, scoped, tag = 'input window, operand 0']
    #allocation5 [shape = 'u8[8192]{0}', space=vmem, size = 0x2000, scoped, tag = 'input window, operand 1']
    #allocation6 [shape = 'u8[12288]{0}', space=vmem, size = 0x3000, scoped, tag = 'input window, operand 2']
    #allocation7 [shape = 'u8[12288]{0}', space=vmem, size = 0x3000, scoped, tag = 'input window, operand 3']
    loop: start=0, step=1, limit=4
    $region2: #{waveunet_forward.17} parent=1 // loop_pre_header
      _
    $region3: #{waveunet_forward.17} parent=1 // loop_header
      %s14 = sphi 0, %s18
      %p15 = scmp.ge.s32.totalorder %s14, 4
      %s21 = sphi 0, %s40
      %s22 = sphi 0, %s36
      %s23 = sphi 0, %s32
      %s24 = sphi 0, %s21
      %s25 = sphi 0, %s22
      %s26 = sphi 0, %s23
      %s27 = sphi 0, %s24
      %s28 = sphi 0, %s25
      %s29 = sphi 0, %s26
      %s45 = sphi 0, %s47
      %s48 = sphi 0, %s45
      %s49 = sphi 0, %s48
      %s65 = sphi 0, %s49
      %s75 = sphi 0, %s77
      %s78 = sphi 0, %s75
      %s79 = sphi 0, %s78
      %s95 = sphi 0, %s79
      %s103 = sphi 0, %s105
      %s106 = sphi 0, %s103
      %s107 = sphi 0, %s106
      %s123 = sphi 0, %s107
      %s133 = sphi 0, %s135
      %s136 = sphi 0, %s133
      %s137 = sphi 0, %s136
      %s153 = sphi 0, %s137
      %s159 = sphi 0, %s161
      %s162 = sphi 0, %s159
      %s163 = sphi 0, %s162
      %s179 = sphi 0, %s163
      %s185 = sphi 0, %s187
      %s188 = sphi 0, %s185
      %s189 = sphi 0, %s188
      %s205 = sphi 0, %s189
      %s215 = sphi 0, %s217
      %s218 = sphi 0, %s215
      %s219 = sphi 0, %s218
      %s235 = sphi 0, %s219
      %s243 = sphi 0, %s245
      %s246 = sphi 0, %s243
      %s247 = sphi 0, %s246
      %s263 = sphi 0, %s247
    $region4: #{waveunet_forward.17} parent=1 // loop_header_branch
      %17 = sbr.rel (%p15) target = $region8
    $region5: #{waveunet_forward.17} parent=1 // loop_body
      %s19 = ssub.s32 %s14, 1
      %s20 = ssub.s32 %s14, 2
      %s30 = sadd.s32 1, %s23
      %p31 = scmp.ge.s32.totalorder %s30, 1
      %s32 = scalar_select %p31, 0, %s30
      %s33 = sadd.s32 1, %s22
      %s34 = scalar_select %p31, %s33, %s22
      %p35 = scmp.ge.s32.totalorder %s34, 1
      %s36 = scalar_select %p35, 0, %s34
      %s37 = sadd.s32 1, %s21
      %s38 = scalar_select %p35, %s37, %s21
      %p39 = scmp.ge.s32.totalorder %s38, 2
      %s40 = scalar_select %p39, 0, %s38
      %s41 = ssub.s32 %s21, %s40
      %s42 = ssub.s32 %s23, %s32
      %s43 = sor.u32 %s41, %s42
      %p44 = scmp.eq.s32.totalorder %s43, 0
      %s46 = sadd.s32 %s45, 1
      %s47 = scalar_select %p44, %s45, %s46
      %p50 = pneg %p44
      %p51 = scmp.eq.s32.totalorder %s14, 1
      %p52 = por %p50, %p51
      %p53 = scmp.ne.s32.totalorder %s45, %s48
      %p54 = scmp.eq.s32.totalorder %s14, 0
      %p55 = por %p53, %p54
      %p56 = scmp.ne.s32.totalorder %s45, %s48
      %p57 = scmp.eq.s32.totalorder %s19, 1
      %p58 = por %p56, %p57
      %p59 = scmp.ne.s32.totalorder %s48, %s49
      %p60 = scmp.eq.s32.totalorder %s19, 0
      %p61 = por %p59, %p60
      %p62 = scmp.ne.s32.totalorder %s48, %s49
      %p63 = scmp.eq.s32.totalorder %s20, 1
      %p64 = por %p62, %p63
      %p66 = scmp.ne.s32.totalorder %s49, %s65
      %p67 = scmp.eq.s32.totalorder %s20, 0
      %p68 = por %p66, %p67
      %s69 = sadd.s32 %s23, 1
      %s70 = sadd.s32 %s32, 1
      %s71 = ssub.s32 %s21, %s40
      %s72 = ssub.s32 %s69, %s70
      %s73 = sor.u32 %s71, %s72
      %p74 = scmp.eq.s32.totalorder %s73, 0
      %s76 = sadd.s32 %s75, 1
      %s77 = scalar_select %p74, %s75, %s76
      %p80 = pneg %p74
      %p81 = scmp.eq.s32.totalorder %s14, 1
      %p82 = por %p80, %p81
      %p83 = scmp.ne.s32.totalorder %s75, %s78
      %p84 = scmp.eq.s32.totalorder %s14, 0
      %p85 = por %p83, %p84
      %p86 = scmp.ne.s32.totalorder %s75, %s78
      %p87 = scmp.eq.s32.totalorder %s19, 1
      %p88 = por %p86, %p87
      %p89 = scmp.ne.s32.totalorder %s78, %s79
      %p90 = scmp.eq.s32.totalorder %s19, 0
      %p91 = por %p89, %p90
      %p92 = scmp.ne.s32.totalorder %s78, %s79
      %p93 = scmp.eq.s32.totalorder %s20, 1
      %p94 = por %p92, %p93
      %p96 = scmp.ne.s32.totalorder %s79, %s95
      %p97 = scmp.eq.s32.totalorder %s20, 0
      %p98 = por %p96, %p97
      %s99 = ssub.s32 %s21, %s40
      %s100 = ssub.s32 %s23, %s32
      %s101 = sor.u32 %s99, %s100
      %p102 = scmp.eq.s32.totalorder %s101, 0
      %s104 = sadd.s32 %s103, 1
      %s105 = scalar_select %p102, %s103, %s104
      %p108 = pneg %p102
      %p109 = scmp.eq.s32.totalorder %s14, 1
      %p110 = por %p108, %p109
      %p111 = scmp.ne.s32.totalorder %s103, %s106
      %p112 = scmp.eq.s32.totalorder %s14, 0
      %p113 = por %p111, %p112
      %p114 = scmp.ne.s32.totalorder %s103, %s106
      %p115 = scmp.eq.s32.totalorder %s19, 1
      %p116 = por %p114, %p115
      %p117 = scmp.ne.s32.totalorder %s106, %s107
      %p118 = scmp.eq.s32.totalorder %s19, 0
      %p119 = por %p117, %p118
      %p120 = scmp.ne.s32.totalorder %s106, %s107
      %p121 = scmp.eq.s32.totalorder %s20, 1
      %p122 = por %p120, %p121
      %p124 = scmp.ne.s32.totalorder %s107, %s123
      %p125 = scmp.eq.s32.totalorder %s20, 0
      %p126 = por %p124, %p125
      %s127 = sadd.s32 %s23, 1
      %s128 = sadd.s32 %s32, 1
      %s129 = ssub.s32 %s21, %s40
      %s130 = ssub.s32 %s127, %s128
      %s131 = sor.u32 %s129, %s130
      %p132 = scmp.eq.s32.totalorder %s131, 0
      %s134 = sadd.s32 %s133, 1
      %s135 = scalar_select %p132, %s133, %s134
      %p138 = pneg %p132
      %p139 = scmp.eq.s32.totalorder %s14, 1
      %p140 = por %p138, %p139
      %p141 = scmp.ne.s32.totalorder %s133, %s136
      %p142 = scmp.eq.s32.totalorder %s14, 0
      %p143 = por %p141, %p142
      %p144 = scmp.ne.s32.totalorder %s133, %s136
      %p145 = scmp.eq.s32.totalorder %s19, 1
      %p146 = por %p144, %p145
      %p147 = scmp.ne.s32.totalorder %s136, %s137
      %p148 = scmp.eq.s32.totalorder %s19, 0
      %p149 = por %p147, %p148
      %p150 = scmp.ne.s32.totalorder %s136, %s137
      %p151 = scmp.eq.s32.totalorder %s20, 1
      %p152 = por %p150, %p151
      %p154 = scmp.ne.s32.totalorder %s137, %s153
      %p155 = scmp.eq.s32.totalorder %s20, 0
      %p156 = por %p154, %p155
      %s157 = ssub.s32 %s22, %s36
      %p158 = scmp.eq.s32.totalorder %s157, 0
      %s160 = sadd.s32 %s159, 1
      %s161 = scalar_select %p158, %s159, %s160
      %p164 = pneg %p158
      %p165 = scmp.eq.s32.totalorder %s14, 1
      %p166 = por %p164, %p165
      %p167 = scmp.ne.s32.totalorder %s159, %s162
      %p168 = scmp.eq.s32.totalorder %s14, 0
      %p169 = por %p167, %p168
      %p170 = scmp.ne.s32.totalorder %s159, %s162
      %p171 = scmp.eq.s32.totalorder %s19, 1
      %p172 = por %p170, %p171
      %p173 = scmp.ne.s32.totalorder %s162, %s163
      %p174 = scmp.eq.s32.totalorder %s19, 0
      %p175 = por %p173, %p174
      %p176 = scmp.ne.s32.totalorder %s162, %s163
      %p177 = scmp.eq.s32.totalorder %s20, 1
      %p178 = por %p176, %p177
      %p180 = scmp.ne.s32.totalorder %s163, %s179
      %p181 = scmp.eq.s32.totalorder %s20, 0
      %p182 = por %p180, %p181
      %s183 = ssub.s32 %s22, %s36
      %p184 = scmp.eq.s32.totalorder %s183, 0
      %s186 = sadd.s32 %s185, 1
      %s187 = scalar_select %p184, %s185, %s186
      %p190 = pneg %p184
      %p191 = scmp.eq.s32.totalorder %s14, 1
      %p192 = por %p190, %p191
      %p193 = scmp.ne.s32.totalorder %s185, %s188
      %p194 = scmp.eq.s32.totalorder %s14, 0
      %p195 = por %p193, %p194
      %p196 = scmp.ne.s32.totalorder %s185, %s188
      %p197 = scmp.eq.s32.totalorder %s19, 1
      %p198 = por %p196, %p197
      %p199 = scmp.ne.s32.totalorder %s188, %s189
      %p200 = scmp.eq.s32.totalorder %s19, 0
      %p201 = por %p199, %p200
      %p202 = scmp.ne.s32.totalorder %s188, %s189
      %p203 = scmp.eq.s32.totalorder %s20, 1
      %p204 = por %p202, %p203
      %p206 = scmp.ne.s32.totalorder %s189, %s205
      %p207 = scmp.eq.s32.totalorder %s20, 0
      %p208 = por %p206, %p207
      %s209 = ssub.s32 %s21, %s40
      %s210 = ssub.s32 %s22, %s36
      %s211 = sor.u32 %s209, %s210
      %s212 = ssub.s32 %s23, %s32
      %s213 = sor.u32 %s211, %s212
      %p214 = scmp.eq.s32.totalorder %s213, 0
      %s216 = sadd.s32 %s215, 1
      %s217 = scalar_select %p214, %s215, %s216
      %p220 = pneg %p214
      %p221 = scmp.eq.s32.totalorder %s14, 1
      %p222 = por %p220, %p221
      %p223 = scmp.ne.s32.totalorder %s215, %s218
      %p224 = scmp.eq.s32.totalorder %s14, 0
      %p225 = por %p223, %p224
      %p226 = scmp.ne.s32.totalorder %s215, %s218
      %p227 = scmp.eq.s32.totalorder %s19, 1
      %p228 = por %p226, %p227
      %p229 = scmp.ne.s32.totalorder %s218, %s219
      %p230 = scmp.eq.s32.totalorder %s19, 0
      %p231 = por %p229, %p230
      %p232 = scmp.ne.s32.totalorder %s218, %s219
      %p233 = scmp.eq.s32.totalorder %s20, 1
      %p234 = por %p232, %p233
      %p236 = scmp.ne.s32.totalorder %s219, %s235
      %p237 = scmp.eq.s32.totalorder %s20, 0
      %p238 = por %p236, %p237
      %s239 = ssub.s32 %s21, %s40
      %s240 = ssub.s32 %s22, %s36
      %s241 = sor.u32 %s239, %s240
      %p242 = scmp.eq.s32.totalorder %s241, 0
      %s244 = sadd.s32 %s243, 1
      %s245 = scalar_select %p242, %s243, %s244
      %p248 = pneg %p242
      %p249 = scmp.eq.s32.totalorder %s14, 1
      %p250 = por %p248, %p249
      %p251 = scmp.ne.s32.totalorder %s243, %s246
      %p252 = scmp.eq.s32.totalorder %s14, 0
      %p253 = por %p251, %p252
      %p254 = scmp.ne.s32.totalorder %s243, %s246
      %p255 = scmp.eq.s32.totalorder %s19, 1
      %p256 = por %p254, %p255
      %p257 = scmp.ne.s32.totalorder %s246, %s247
      %p258 = scmp.eq.s32.totalorder %s19, 0
      %p259 = por %p257, %p258
      %p260 = scmp.ne.s32.totalorder %s246, %s247
      %p261 = scmp.eq.s32.totalorder %s20, 1
      %p262 = por %p260, %p261
      %p264 = scmp.ne.s32.totalorder %s247, %s263
      %p265 = scmp.eq.s32.totalorder %s20, 0
      %p266 = por %p264, %p265
      %p267 = scmp.le.s32.totalorder 1, %s14
      %p268 = scmp.lt.s32.totalorder %s14, 3
      %p269 = pnand %p267, %p268
      %p270 = pneg %p269
      // Predicated region
      $region9: #{waveunet_forward.17} parent=5 // pred_check
        _
      $region10: #{waveunet_forward.17} parent=5 // pred_check_branch
        %272 = sbr.rel (%p269) target = $region12
      $region11: #{waveunet_forward.17} parent=5 // pred_region
        %s273 = ssub.s32 %s14, 1
        // Predicated region
        $region13: #{waveunet_forward.17} parent=11 // pred_check
          %p274 = pneg %p175
        $region14: #{waveunet_forward.17} parent=11 // pred_check_branch
          %276 = sbr.rel (%p274) target = $region16
        $region15: #{waveunet_forward.17} parent=11 // pred_region
          %s277 = smul.u32 2, %s25
          %p278 = scmp.lt.s32.totalorder %s277, 1
          %s279 = scalar_select %p278, %s277, 1
          %s280 = smul.addr %s279, 2
          %s281 = smul.addr %s280, 4
          %s282 = scalar_lea.vmem %s4, %s281
          %s283 = smul.u32 2, %s25
        $region16: #{waveunet_forward.17} parent=11 // pred_fallthru
          _
        // Predicated region
        $region17: #{waveunet_forward.17} parent=11 // pred_check
          %p284 = pneg %p201
        $region18: #{waveunet_forward.17} parent=11 // pred_check_branch
          %286 = sbr.rel (%p284) target = $region20
        $region19: #{waveunet_forward.17} parent=11 // pred_region
          %s287 = smul.u32 2, %s25
          %p288 = scmp.lt.s32.totalorder %s287, 1
          %s289 = scalar_select %p288, %s287, 1
          %s290 = smul.addr %s289, 8
          %s291 = scalar_lea.vmem %s5, %s290
          %s292 = smul.u32 2, %s25
        $region20: #{waveunet_forward.17} parent=11 // pred_fallthru
          _
      $region12: #{waveunet_forward.17} parent=5 // pred_fallthru
        _
      %p293 = scmp.lt.s32.totalorder %s14, 2
      // Predicated region
      $region21: #{waveunet_forward.17} parent=5 // pred_check
        %p294 = pneg %p293
      $region22: #{waveunet_forward.17} parent=5 // pred_check_branch
        %296 = sbr.rel (%p294) target = $region24
      $region23: #{waveunet_forward.17} parent=5 // pred_region
        // Predicated region
        $region25: #{waveunet_forward.17} parent=23 // pred_check
          %p297 = pneg %p55
        $region26: #{waveunet_forward.17} parent=23 // pred_check_branch
          %299 = sbr.rel (%p297) target = $region28
        $region27: #{waveunet_forward.17} parent=23 // pred_region
          %s300 = sand.u32 %s45, 1
          %s301 = sand.u32 %s45, 1
          %s302 = smul.addr %s301, 8
          %s303 = scalar_lea.vmem [#allocation4], %s302
          %s304 = smul.addr %s21, 4
          %s305 = sadd.s32 %s23, %s304
          %s306 = smul.addr %s305, 4
          %s307 = scalar_lea.vmem %s0, %s306
          // Predicated region
          $region29: #{waveunet_forward.17} parent=27 // pred_check
            _
          $region30: #{waveunet_forward.17} parent=27 // pred_check_branch
            %309 = sbr.rel (0) target = $region32
          $region31: #{waveunet_forward.17} parent=27 // pred_region
            // Predicated region
            $region33: #{waveunet_forward.17} parent=31 // pred_check
              _
            $region34: #{waveunet_forward.17} parent=31 // pred_check_branch
              %311 = sbr.rel target = $region36
            $region35: #{waveunet_forward.17} parent=31 // pred_region
              // Predicated region
              $region48: #{waveunet_forward.17} parent=35 // pred_check
                _
              $region49: #{waveunet_forward.17} parent=35 // pred_check_branch
                %328 = sbr.rel (0) target = $region51
              $region50: #{waveunet_forward.17} parent=35 // pred_region
                loop: start=0, step=1, limit=1
                $region52: #{waveunet_forward.17} parent=50 // loop_pre_header
                  _
                $region53: #{waveunet_forward.17} parent=50 // loop_header
                  %s330 = sphi 0, %s334
                  %p331 = scmp.ge.s32.totalorder %s330, 1
                  %s335 = sphi %s307, %s307
                  %s336 = sphi %s303, %s303
                $region54: #{waveunet_forward.17} parent=50 // loop_header_branch
                  %333 = sbr.rel (%p331) target = $region58
                $region55: #{waveunet_forward.17} parent=50 // loop_body
                  _
                $region56: #{waveunet_forward.17} parent=50 // loop_footer
                  %s334 = sadd.s32 1, %s330
                $region57: #{waveunet_forward.17} parent=50 // loop_footer_branch
                  %329 = sbr.rel target = $region53
                $region58: #{waveunet_forward.17} parent=50 // loop_exit
                  _
                loop: start=0, step=1, limit=1
                $region59: #{waveunet_forward.17} parent=50 // loop_pre_header
                  _
                $region60: #{waveunet_forward.17} parent=50 // loop_header
                  %s339 = sphi 0, %s343
                  %p340 = scmp.ge.s32.totalorder %s339, 1
                  %s344 = sphi %s307, %s307
                  %s345 = sphi %s303, %s303
                $region61: #{waveunet_forward.17} parent=50 // loop_header_branch
                  %342 = sbr.rel (%p340) target = $region65
                $region62: #{waveunet_forward.17} parent=50 // loop_body
                  %v346 = vld [vmem:[%s344] sm:$0xf]
                  %347 = vst [vmem:[%s345] sm:$0xf] %v346
                  %v348 = vld [vmem:[%s344 + $0x8] sm:$0xf]
                  %349 = vst [vmem:[%s345 + $0x4] sm:$0xf] %v348
                $region63: #{waveunet_forward.17} parent=50 // loop_footer
                  %s343 = sadd.s32 1, %s339
                $region64: #{waveunet_forward.17} parent=50 // loop_footer_branch
                  %338 = sbr.rel target = $region60
                $region65: #{waveunet_forward.17} parent=50 // loop_exit
                  _
              $region51: #{waveunet_forward.17} parent=35 // pred_fallthru
                _
            $region36: #{waveunet_forward.17} parent=31 // pred_fallthru
              _
            // Predicated region
            $region37: #{waveunet_forward.17} parent=31 // pred_check
              _
            $region38: #{waveunet_forward.17} parent=31 // pred_check_branch
              %313 = sbr.rel (0) target = $region40
            $region39: #{waveunet_forward.17} parent=31 // pred_region
              loop: start=0, step=1, limit=1
              $region41: #{waveunet_forward.17} parent=39 // loop_pre_header
                _
              $region42: #{waveunet_forward.17} parent=39 // loop_header
                %s316 = sphi 0, %s320
                %p317 = scmp.ge.s32.totalorder %s316, 1
                %s321 = sphi %s307, %s307
                %s322 = sphi %s303, %s303
              $region43: #{waveunet_forward.17} parent=39 // loop_header_branch
                %319 = sbr.rel (%p317) target = $region47
              $region44: #{waveunet_forward.17} parent=39 // loop_body
                %v323 = vld [vmem:[%s321] sm:$0xf]
                %324 = vst [vmem:[%s322] sm:$0xf] %v323
                %v325 = vld [vmem:[%s321 + $0x8] sm:$0xf]
                %326 = vst [vmem:[%s322 + $0x4] sm:$0xf] %v325
              $region45: #{waveunet_forward.17} parent=39 // loop_footer
                %s320 = sadd.s32 1, %s316
              $region46: #{waveunet_forward.17} parent=39 // loop_footer_branch
                %315 = sbr.rel target = $region42
              $region47: #{waveunet_forward.17} parent=39 // loop_exit
                _
            $region40: #{waveunet_forward.17} parent=31 // pred_fallthru
              _
          $region32: #{waveunet_forward.17} parent=27 // pred_fallthru
            _
          %350 = vnop
        $region28: #{waveunet_forward.17} parent=23 // pred_fallthru
          _
        // Predicated region
        $region66: #{waveunet_forward.17} parent=23 // pred_check
          %p351 = pneg %p85
        $region67: #{waveunet_forward.17} parent=23 // pred_check_branch
          %353 = sbr.rel (%p351) target = $region69
        $region68: #{waveunet_forward.17} parent=23 // pred_region
          %s354 = sand.u32 %s75, 1
          %s355 = sand.u32 %s75, 1
          %s356 = smul.addr %s355, 8
          %s357 = scalar_lea.vmem [#allocation5], %s356
          %s358 = sadd.s32 %s23, 1
          %s359 = smul.addr %s21, 4
          %s360 = sadd.s32 %s358, %s359
          %s361 = smul.addr %s360, 4
          %s362 = scalar_lea.vmem %s1, %s361
          // Predicated region
          $region70: #{waveunet_forward.17} parent=68 // pred_check
            _
          $region71: #{waveunet_forward.17} parent=68 // pred_check_branch
            %364 = sbr.rel (0) target = $region73
          $region72: #{waveunet_forward.17} parent=68 // pred_region
            // Predicated region
            $region74: #{waveunet_forward.17} parent=72 // pred_check
              _
            $region75: #{waveunet_forward.17} parent=72 // pred_check_branch
              %366 = sbr.rel target = $region77
            $region76: #{waveunet_forward.17} parent=72 // pred_region
              // Predicated region
              $region89: #{waveunet_forward.17} parent=76 // pred_check
                _
              $region90: #{waveunet_forward.17} parent=76 // pred_check_branch
                %383 = sbr.rel (0) target = $region92
              $region91: #{waveunet_forward.17} parent=76 // pred_region
                loop: start=0, step=1, limit=1
                $region93: #{waveunet_forward.17} parent=91 // loop_pre_header
                  _
                $region94: #{waveunet_forward.17} parent=91 // loop_header
                  %s385 = sphi 0, %s389
                  %p386 = scmp.ge.s32.totalorder %s385, 1
                  %s390 = sphi %s362, %s362
                  %s391 = sphi %s357, %s357
                $region95: #{waveunet_forward.17} parent=91 // loop_header_branch
                  %388 = sbr.rel (%p386) target = $region99
                $region96: #{waveunet_forward.17} parent=91 // loop_body
                  _
                $region97: #{waveunet_forward.17} parent=91 // loop_footer
                  %s389 = sadd.s32 1, %s385
                $region98: #{waveunet_forward.17} parent=91 // loop_footer_branch
                  %384 = sbr.rel target = $region94
                $region99: #{waveunet_forward.17} parent=91 // loop_exit
                  _
                loop: start=0, step=1, limit=1
                $region100: #{waveunet_forward.17} parent=91 // loop_pre_header
                  _
                $region101: #{waveunet_forward.17} parent=91 // loop_header
                  %s394 = sphi 0, %s398
                  %p395 = scmp.ge.s32.totalorder %s394, 1
                  %s399 = sphi %s362, %s362
                  %s400 = sphi %s357, %s357
                $region102: #{waveunet_forward.17} parent=91 // loop_header_branch
                  %397 = sbr.rel (%p395) target = $region106
                $region103: #{waveunet_forward.17} parent=91 // loop_body
                  %v401 = vld [vmem:[%s399] sm:$0xf]
                  %402 = vst [vmem:[%s400] sm:$0xf] %v401
                  %v403 = vld [vmem:[%s399 + $0x8] sm:$0xf]
                  %404 = vst [vmem:[%s400 + $0x4] sm:$0xf] %v403
                $region104: #{waveunet_forward.17} parent=91 // loop_footer
                  %s398 = sadd.s32 1, %s394
                $region105: #{waveunet_forward.17} parent=91 // loop_footer_branch
                  %393 = sbr.rel target = $region101
                $region106: #{waveunet_forward.17} parent=91 // loop_exit
                  _
              $region92: #{waveunet_forward.17} parent=76 // pred_fallthru
                _
            $region77: #{waveunet_forward.17} parent=72 // pred_fallthru
              _
            // Predicated region
            $region78: #{waveunet_forward.17} parent=72 // pred_check
              _
            $region79: #{waveunet_forward.17} parent=72 // pred_check_branch
              %368 = sbr.rel (0) target = $region81
            $region80: #{waveunet_forward.17} parent=72 // pred_region
              loop: start=0, step=1, limit=1
              $region82: #{waveunet_forward.17} parent=80 // loop_pre_header
                _
              $region83: #{waveunet_forward.17} parent=80 // loop_header
                %s371 = sphi 0, %s375
                %p372 = scmp.ge.s32.totalorder %s371, 1
                %s376 = sphi %s362, %s362
                %s377 = sphi %s357, %s357
              $region84: #{waveunet_forward.17} parent=80 // loop_header_branch
                %374 = sbr.rel (%p372) target = $region88
              $region85: #{waveunet_forward.17} parent=80 // loop_body
                %v378 = vld [vmem:[%s376] sm:$0xf]
                %379 = vst [vmem:[%s377] sm:$0xf] %v378
                %v380 = vld [vmem:[%s376 + $0x8] sm:$0xf]
                %381 = vst [vmem:[%s377 + $0x4] sm:$0xf] %v380
              $region86: #{waveunet_forward.17} parent=80 // loop_footer
                %s375 = sadd.s32 1, %s371
              $region87: #{waveunet_forward.17} parent=80 // loop_footer_branch
                %370 = sbr.rel target = $region83
              $region88: #{waveunet_forward.17} parent=80 // loop_exit
                _
            $region81: #{waveunet_forward.17} parent=72 // pred_fallthru
              _
          $region73: #{waveunet_forward.17} parent=68 // pred_fallthru
            _
          %405 = vnop
        $region69: #{waveunet_forward.17} parent=23 // pred_fallthru
          _
        // Predicated region
        $region107: #{waveunet_forward.17} parent=23 // pred_check
          %p406 = pneg %p113
        $region108: #{waveunet_forward.17} parent=23 // pred_check_branch
          %408 = sbr.rel (%p406) target = $region110
        $region109: #{waveunet_forward.17} parent=23 // pred_region
          %s409 = sand.u32 %s103, 1
          %s410 = sand.u32 %s103, 1
          %s411 = smul.addr %s410, 12
          %s412 = scalar_lea.vmem [#allocation6], %s411
          %s413 = smul.addr %s21, 6
          %s414 = sadd.s32 %s23, %s413
          %s415 = smul.addr %s414, 4
          %s416 = scalar_lea.vmem %s2, %s415
          // Predicated region
          $region111: #{waveunet_forward.17} parent=109 // pred_check
            _
          $region112: #{waveunet_forward.17} parent=109 // pred_check_branch
            %418 = sbr.rel (0) target = $region114
          $region113: #{waveunet_forward.17} parent=109 // pred_region
            // Predicated region
            $region115: #{waveunet_forward.17} parent=113 // pred_check
              _
            $region116: #{waveunet_forward.17} parent=113 // pred_check_branch
              %420 = sbr.rel target = $region118
            $region117: #{waveunet_forward.17} parent=113 // pred_region
              // Predicated region
              $region130: #{waveunet_forward.17} parent=117 // pred_check
                _
              $region131: #{waveunet_forward.17} parent=117 // pred_check_branch
                %439 = sbr.rel (0) target = $region133
              $region132: #{waveunet_forward.17} parent=117 // pred_region
                loop: start=0, step=1, limit=1
                $region134: #{waveunet_forward.17} parent=132 // loop_pre_header
                  _
                $region135: #{waveunet_forward.17} parent=132 // loop_header
                  %s441 = sphi 0, %s445
                  %p442 = scmp.ge.s32.totalorder %s441, 1
                  %s446 = sphi %s416, %s416
                  %s447 = sphi %s412, %s412
                $region136: #{waveunet_forward.17} parent=132 // loop_header_branch
                  %444 = sbr.rel (%p442) target = $region140
                $region137: #{waveunet_forward.17} parent=132 // loop_body
                  _
                $region138: #{waveunet_forward.17} parent=132 // loop_footer
                  %s445 = sadd.s32 1, %s441
                $region139: #{waveunet_forward.17} parent=132 // loop_footer_branch
                  %440 = sbr.rel target = $region135
                $region140: #{waveunet_forward.17} parent=132 // loop_exit
                  _
                loop: start=0, step=1, limit=1
                $region141: #{waveunet_forward.17} parent=132 // loop_pre_header
                  _
                $region142: #{waveunet_forward.17} parent=132 // loop_header
                  %s450 = sphi 0, %s454
                  %p451 = scmp.ge.s32.totalorder %s450, 1
                  %s455 = sphi %s416, %s416
                  %s456 = sphi %s412, %s412
                $region143: #{waveunet_forward.17} parent=132 // loop_header_branch
                  %453 = sbr.rel (%p451) target = $region147
                $region144: #{waveunet_forward.17} parent=132 // loop_body
                  %v457 = vld [vmem:[%s455] sm:$0xf]
                  %458 = vst [vmem:[%s456] sm:$0xf] %v457
                  %v459 = vld [vmem:[%s455 + $0x8] sm:$0xf]
                  %460 = vst [vmem:[%s456 + $0x4] sm:$0xf] %v459
                  %v461 = vld [vmem:[%s455 + $0x10] sm:$0xf]
                  %462 = vst [vmem:[%s456 + $0x8] sm:$0xf] %v461
                $region145: #{waveunet_forward.17} parent=132 // loop_footer
                  %s454 = sadd.s32 1, %s450
                $region146: #{waveunet_forward.17} parent=132 // loop_footer_branch
                  %449 = sbr.rel target = $region142
                $region147: #{waveunet_forward.17} parent=132 // loop_exit
                  _
              $region133: #{waveunet_forward.17} parent=117 // pred_fallthru
                _
            $region118: #{waveunet_forward.17} parent=113 // pred_fallthru
              _
            // Predicated region
            $region119: #{waveunet_forward.17} parent=113 // pred_check
              _
            $region120: #{waveunet_forward.17} parent=113 // pred_check_branch
              %422 = sbr.rel (0) target = $region122
            $region121: #{waveunet_forward.17} parent=113 // pred_region
              loop: start=0, step=1, limit=1
              $region123: #{waveunet_forward.17} parent=121 // loop_pre_header
                _
              $region124: #{waveunet_forward.17} parent=121 // loop_header
                %s425 = sphi 0, %s429
                %p426 = scmp.ge.s32.totalorder %s425, 1
                %s430 = sphi %s416, %s416
                %s431 = sphi %s412, %s412
              $region125: #{waveunet_forward.17} parent=121 // loop_header_branch
                %428 = sbr.rel (%p426) target = $region129
              $region126: #{waveunet_forward.17} parent=121 // loop_body
                %v432 = vld [vmem:[%s430] sm:$0xf]
                %433 = vst [vmem:[%s431] sm:$0xf] %v432
                %v434 = vld [vmem:[%s430 + $0x8] sm:$0xf]
                %435 = vst [vmem:[%s431 + $0x4] sm:$0xf] %v434
                %v436 = vld [vmem:[%s430 + $0x10] sm:$0xf]
                %437 = vst [vmem:[%s431 + $0x8] sm:$0xf] %v436
              $region127: #{waveunet_forward.17} parent=121 // loop_footer
                %s429 = sadd.s32 1, %s425
              $region128: #{waveunet_forward.17} parent=121 // loop_footer_branch
                %424 = sbr.rel target = $region124
              $region129: #{waveunet_forward.17} parent=121 // loop_exit
                _
            $region122: #{waveunet_forward.17} parent=113 // pred_fallthru
              _
          $region114: #{waveunet_forward.17} parent=109 // pred_fallthru
            _
          %463 = vnop
        $region110: #{waveunet_forward.17} parent=23 // pred_fallthru
          _
        // Predicated region
        $region148: #{waveunet_forward.17} parent=23 // pred_check
          %p464 = pneg %p143
        $region149: #{waveunet_forward.17} parent=23 // pred_check_branch
          %466 = sbr.rel (%p464) target = $region151
        $region150: #{waveunet_forward.17} parent=23 // pred_region
          %s467 = sand.u32 %s133, 1
          %s468 = sand.u32 %s133, 1
          %s469 = smul.addr %s468, 12
          %s470 = scalar_lea.vmem [#allocation7], %s469
          %s471 = sadd.s32 %s23, 1
          %s472 = smul.addr %s21, 6
          %s473 = sadd.s32 %s471, %s472
          %s474 = smul.addr %s473, 4
          %s475 = scalar_lea.vmem %s3, %s474
          // Predicated region
          $region152: #{waveunet_forward.17} parent=150 // pred_check
            _
          $region153: #{waveunet_forward.17} parent=150 // pred_check_branch
            %477 = sbr.rel (0) target = $region155
          $region154: #{waveunet_forward.17} parent=150 // pred_region
            // Predicated region
            $region156: #{waveunet_forward.17} parent=154 // pred_check
              _
            $region157: #{waveunet_forward.17} parent=154 // pred_check_branch
              %479 = sbr.rel target = $region159
            $region158: #{waveunet_forward.17} parent=154 // pred_region
              // Predicated region
              $region171: #{waveunet_forward.17} parent=158 // pred_check
                _
              $region172: #{waveunet_forward.17} parent=158 // pred_check_branch
                %498 = sbr.rel (0) target = $region174
              $region173: #{waveunet_forward.17} parent=158 // pred_region
                loop: start=0, step=1, limit=1
                $region175: #{waveunet_forward.17} parent=173 // loop_pre_header
                  _
                $region176: #{waveunet_forward.17} parent=173 // loop_header
                  %s500 = sphi 0, %s504
                  %p501 = scmp.ge.s32.totalorder %s500, 1
                  %s505 = sphi %s475, %s475
                  %s506 = sphi %s470, %s470
                $region177: #{waveunet_forward.17} parent=173 // loop_header_branch
                  %503 = sbr.rel (%p501) target = $region181
                $region178: #{waveunet_forward.17} parent=173 // loop_body
                  _
                $region179: #{waveunet_forward.17} parent=173 // loop_footer
                  %s504 = sadd.s32 1, %s500
                $region180: #{waveunet_forward.17} parent=173 // loop_footer_branch
                  %499 = sbr.rel target = $region176
                $region181: #{waveunet_forward.17} parent=173 // loop_exit
                  _
                loop: start=0, step=1, limit=1
                $region182: #{waveunet_forward.17} parent=173 // loop_pre_header
                  _
                $region183: #{waveunet_forward.17} parent=173 // loop_header
                  %s509 = sphi 0, %s513
                  %p510 = scmp.ge.s32.totalorder %s509, 1
                  %s514 = sphi %s475, %s475
                  %s515 = sphi %s470, %s470
                $region184: #{waveunet_forward.17} parent=173 // loop_header_branch
                  %512 = sbr.rel (%p510) target = $region188
                $region185: #{waveunet_forward.17} parent=173 // loop_body
                  %v516 = vld [vmem:[%s514] sm:$0xf]
                  %517 = vst [vmem:[%s515] sm:$0xf] %v516
                  %v518 = vld [vmem:[%s514 + $0x8] sm:$0xf]
                  %519 = vst [vmem:[%s515 + $0x4] sm:$0xf] %v518
                  %v520 = vld [vmem:[%s514 + $0x10] sm:$0xf]
                  %521 = vst [vmem:[%s515 + $0x8] sm:$0xf] %v520
                $region186: #{waveunet_forward.17} parent=173 // loop_footer
                  %s513 = sadd.s32 1, %s509
                $region187: #{waveunet_forward.17} parent=173 // loop_footer_branch
                  %508 = sbr.rel target = $region183
                $region188: #{waveunet_forward.17} parent=173 // loop_exit
                  _
              $region174: #{waveunet_forward.17} parent=158 // pred_fallthru
                _
            $region159: #{waveunet_forward.17} parent=154 // pred_fallthru
              _
            // Predicated region
            $region160: #{waveunet_forward.17} parent=154 // pred_check
              _
            $region161: #{waveunet_forward.17} parent=154 // pred_check_branch
              %481 = sbr.rel (0) target = $region163
            $region162: #{waveunet_forward.17} parent=154 // pred_region
              loop: start=0, step=1, limit=1
              $region164: #{waveunet_forward.17} parent=162 // loop_pre_header
                _
              $region165: #{waveunet_forward.17} parent=162 // loop_header
                %s484 = sphi 0, %s488
                %p485 = scmp.ge.s32.totalorder %s484, 1
                %s489 = sphi %s475, %s475
                %s490 = sphi %s470, %s470
              $region166: #{waveunet_forward.17} parent=162 // loop_header_branch
                %487 = sbr.rel (%p485) target = $region170
              $region167: #{waveunet_forward.17} parent=162 // loop_body
                %v491 = vld [vmem:[%s489] sm:$0xf]
                %492 = vst [vmem:[%s490] sm:$0xf] %v491
                %v493 = vld [vmem:[%s489 + $0x8] sm:$0xf]
                %494 = vst [vmem:[%s490 + $0x4] sm:$0xf] %v493
                %v495 = vld [vmem:[%s489 + $0x10] sm:$0xf]
                %496 = vst [vmem:[%s490 + $0x8] sm:$0xf] %v495
              $region168: #{waveunet_forward.17} parent=162 // loop_footer
                %s488 = sadd.s32 1, %s484
              $region169: #{waveunet_forward.17} parent=162 // loop_footer_branch
                %483 = sbr.rel target = $region165
              $region170: #{waveunet_forward.17} parent=162 // loop_exit
                _
            $region163: #{waveunet_forward.17} parent=154 // pred_fallthru
              _
          $region155: #{waveunet_forward.17} parent=150 // pred_fallthru
            _
          %522 = vnop
        $region151: #{waveunet_forward.17} parent=23 // pred_fallthru
          _
      $region24: #{waveunet_forward.17} parent=5 // pred_fallthru
        _
      %p523 = scmp.le.s32.totalorder 1, %s14
      %p524 = scmp.lt.s32.totalorder %s14, 3
      %p525 = pnand %p523, %p524
      %p526 = pneg %p525
      // Predicated region
      $region189: #{waveunet_forward.17} parent=5 // pred_check
        _
      $region190: #{waveunet_forward.17} parent=5 // pred_check_branch
        %528 = sbr.rel (%p525) target = $region192
      $region191: #{waveunet_forward.17} parent=5 // pred_region
        %s529 = ssub.s32 %s14, 1
        %s530 = sand.u32 %s48, 1
        %s531 = sand.u32 %s48, 1
        %s532 = smul.addr %s531, 8
        %s533 = scalar_lea.vmem [#allocation4], %s532
        // Predicated region
        $region193: #{waveunet_forward.17} parent=191 // pred_check
          %p534 = pneg %p61
        $region194: #{waveunet_forward.17} parent=191 // pred_check_branch
          %536 = sbr.rel (%p534) target = $region196
        $region195: #{waveunet_forward.17} parent=191 // pred_region
          _
        $region196: #{waveunet_forward.17} parent=191 // pred_fallthru
          _
        %s537 = sand.u32 %s78, 1
        %s538 = sand.u32 %s78, 1
        %s539 = smul.addr %s538, 8
        %s540 = scalar_lea.vmem [#allocation5], %s539
        // Predicated region
        $region197: #{waveunet_forward.17} parent=191 // pred_check
          %p541 = pneg %p91
        $region198: #{waveunet_forward.17} parent=191 // pred_check_branch
          %543 = sbr.rel (%p541) target = $region200
        $region199: #{waveunet_forward.17} parent=191 // pred_region
          _
        $region200: #{waveunet_forward.17} parent=191 // pred_fallthru
          _
        %s544 = sand.u32 %s106, 1
        %s545 = sand.u32 %s106, 1
        %s546 = smul.addr %s545, 12
        %s547 = scalar_lea.vmem [#allocation6], %s546
        // Predicated region
        $region201: #{waveunet_forward.17} parent=191 // pred_check
          %p548 = pneg %p119
        $region202: #{waveunet_forward.17} parent=191 // pred_check_branch
          %550 = sbr.rel (%p548) target = $region204
        $region203: #{waveunet_forward.17} parent=191 // pred_region
          _
        $region204: #{waveunet_forward.17} parent=191 // pred_fallthru
          _
        %s551 = sand.u32 %s136, 1
        %s552 = sand.u32 %s136, 1
        %s553 = smul.addr %s552, 12
        %s554 = scalar_lea.vmem [#allocation7], %s553
        // Predicated region
        $region205: #{waveunet_forward.17} parent=191 // pred_check
          %p555 = pneg %p149
        $region206: #{waveunet_forward.17} parent=191 // pred_check_branch
          %557 = sbr.rel (%p555) target = $region208
        $region207: #{waveunet_forward.17} parent=191 // pred_region
          _
        $region208: #{waveunet_forward.17} parent=191 // pred_fallthru
          _
        %s558 = sand.u32 %s48, 1
        %s559 = sand.u32 %s48, 1
        %s560 = smul.addr %s559, 8
        %s561 = scalar_lea.vmem [#allocation4], %s560
        %p562 = pneg %p61
        %p563 = pneg %p58
        %s564 = sand.u32 %s78, 1
        %s565 = sand.u32 %s78, 1
        %s566 = smul.addr %s565, 8
        %s567 = scalar_lea.vmem [#allocation5], %s566
        %p568 = pneg %p91
        %p569 = pneg %p88
        %s570 = sand.u32 %s106, 1
        %s571 = sand.u32 %s106, 1
        %s572 = smul.addr %s571, 12
        %s573 = scalar_lea.vmem [#allocation6], %s572
        %p574 = pneg %p119
        %p575 = pneg %p116
        %s576 = sand.u32 %s136, 1
        %s577 = sand.u32 %s136, 1
        %s578 = smul.addr %s577, 12
        %s579 = scalar_lea.vmem [#allocation7], %s578
        %p580 = pneg %p149
        %p581 = pneg %p146
        %s582 = smul.u32 2, %s25
        %p583 = scmp.lt.s32.totalorder %s582, 1
        %s584 = scalar_select %p583, %s582, 1
        %s585 = smul.addr %s584, 2
        %s586 = smul.addr %s585, 4
        %s587 = scalar_lea.vmem %s4, %s586
        %p588 = pneg %p175
        %p589 = pneg %p172
        %s590 = smul.u32 2, %s25
        %p591 = scmp.lt.s32.totalorder %s590, 1
        %s592 = scalar_select %p591, %s590, 1
        %s593 = smul.addr %s592, 8
        %s594 = scalar_lea.vmem %s5, %s593
        %p595 = pneg %p201
        %p596 = pneg %p198
        %p597 = pneg %p231
        %p598 = pneg %p228
        %s599 = smul.u32 2, %s25
        %p600 = scmp.lt.s32.totalorder %s24, 1
        %s601 = scalar_select %p600, %s24, 1
        %p602 = scmp.lt.s32.totalorder %s599, 1
        %s603 = scalar_select %p602, %s599, 1
        %p604 = scmp.lt.s32.totalorder %s26, 0
        %s605 = scalar_select %p604, %s26, 0
        %s606 = sadd.s32 %s605, %s603
        %s607 = smul.addr %s601, 2
        %s608 = sadd.s32 %s606, %s607
        %s609 = smul.addr %s608, 4
        %s610 = scalar_lea.vmem %s6, %s609
        %p611 = pneg %p259
        %p612 = pneg %p256
        %s613 = smul.u32 2, %s25
        %p614 = scmp.lt.s32.totalorder %s24, 1
        %s615 = scalar_select %p614, %s24, 1
        %p616 = scmp.lt.s32.totalorder %s613, 1
        %s617 = scalar_select %p616, %s613, 1
        %s618 = smul.addr %s615, 2
        %s619 = sadd.s32 %s617, %s618
        %s620 = smul.addr %s619, 8
        %s621 = scalar_lea.vmem %s7, %s620
        %s622 = sadd.s32 %s26, 1
        %s623 = sadd.s32 %s26, 1
        %s624 = smul.u32 2, %s25
        %p625 = scmp.lt.s32.totalorder %s624, 1
        %s626 = scalar_select %p625, %s624, 1
        %s627 = smul.addr %s626, 2
        %s628 = smul.addr %s627, 4
        %s629 = scalar_lea.vmem %s4, %s628
        %s630 = smul.u32 2, %s25
        %s631 = smul.u32 2, %s25
        %p632 = scmp.lt.s32.totalorder %s631, 1
        %s633 = scalar_select %p632, %s631, 1
        %s634 = smul.addr %s633, 8
        %s635 = scalar_lea.vmem %s5, %s634
        %s636 = smul.u32 2, %s25
        %s637 = smul.u32 2, %s25
        %p638 = scmp.lt.s32.totalorder %s24, 1
        %s639 = scalar_select %p638, %s24, 1
        %p640 = scmp.lt.s32.totalorder %s637, 1
        %s641 = scalar_select %p640, %s637, 1
        %p642 = scmp.lt.s32.totalorder %s26, 0
        %s643 = scalar_select %p642, %s26, 0
        %s644 = sadd.s32 %s643, %s641
        %s645 = smul.addr %s639, 2
        %s646 = sadd.s32 %s644, %s645
        %s647 = smul.addr %s646, 4
        %s648 = scalar_lea.vmem %s6, %s647
        %s649 = smul.u32 2, %s25
        %s650 = smul.u32 2, %s25
        %p651 = scmp.lt.s32.totalorder %s24, 1
        %s652 = scalar_select %p651, %s24, 1
        %p653 = scmp.lt.s32.totalorder %s650, 1
        %s654 = scalar_select %p653, %s650, 1
        %s655 = smul.addr %s652, 2
        %s656 = sadd.s32 %s654, %s655
        %s657 = smul.addr %s656, 8
        %s658 = scalar_lea.vmem %s7, %s657
        %s659 = smul.u32 2, %s25
        %v661 = vld [vmem:[%s533] sm:$0xf]
        %v662 = vld [vmem:[%s533 + $0x4] sm:$0xf]
        %v663 = vld [vmem:[%s547] sm:$0xf]
        %v664 = vld [vmem:[%s547 + $0x4] sm:$0xf]
        %v665 = vld [vmem:[%s547 + $0x8] sm:$0xf]
        %v666 = vld [vmem:[%s540] sm:$0xf]
        %v667 = vld [vmem:[%s540 + $0x4] sm:$0xf]
        %v668 = vld [vmem:[%s554] sm:$0xf]
        %v669 = vld [vmem:[%s554 + $0x4] sm:$0xf]
        %v670 = vld [vmem:[%s554 + $0x8] sm:$0xf]
        %v673 = vunpack.c.l.b16 %v661
        %v674 = vunpack.c.l.b16 %v662
        %v675 = vpack.c.b16 %v674, %v673
        %676 = vrot.lane.b32.xlu0 %v675, 127
        %v677 = vpop.permute.xlu0 %676
        %v680 = vunpack.c.l.b16 %v666
        %v681 = vunpack.c.l.b16 %v667
        %v682 = vpack.c.b16 %v681, %v680
        %683 = vrot.lane.b32.xlu0 %v682, 127
        %v684 = vpop.permute.xlu0 %683
        %vm685 = vcmask 1039360
        %v688 = vsel %vm685, %v677, %v684
        %690 = vrot.lane.b32.xlu0 %v675, 126
        %v691 = vpop.permute.xlu0 %690
        %692 = vrot.lane.b32.xlu0 %v682, 126
        %v693 = vpop.permute.xlu0 %692
        %vm694 = vcmask 1031168
        %v697 = vsel %vm694, %v691, %v693
        %699 = vrot.lane.b32.xlu0 %v675, 125
        %v700 = vpop.permute.xlu0 %699
        %701 = vrot.lane.b32.xlu0 %v682, 125
        %v702 = vpop.permute.xlu0 %701
        %vm703 = vcmask 1022976
        %v706 = vsel %vm703, %v700, %v702
        %708 = vrot.lane.b32.xlu0 %v675, 124
        %v709 = vpop.permute.xlu0 %708
        %710 = vrot.lane.b32.xlu0 %v682, 124
        %v711 = vpop.permute.xlu0 %710
        %vm712 = vcmask 1014784
        %v715 = vsel %vm712, %v709, %v711
        %v720 = vunpack.c.l.b16 %v663
        %v721 = vunpack.c.l.b16 %v664
        %v722 = vunpack.c.l.b16 %v665
        %v723 = vpack.c.b16 %v721, %v720
        %v724 = vpack.c.b16 %v722, %v722
        %725 = vrot.lane.b32.xlu0 %v723, 127
        %v726 = vpop.permute.xlu0 %725
        %727 = vrot.lane.b32.xlu0 %v724, 127
        %v728 = vpop.permute.xlu0 %727
        %v732 = vunpack.c.l.b16 %v668
        %v733 = vunpack.c.l.b16 %v669
        %v734 = vunpack.c.l.b16 %v670
        %v735 = vpack.c.b16 %v733, %v732
        %v736 = vpack.c.b16 %v734, %v734
        %737 = vrot.lane.b32.xlu0 %v735, 127
        %v738 = vpop.permute.xlu0 %737
        %739 = vrot.lane.b32.xlu0 %v736, 127
        %v740 = vpop.permute.xlu0 %739
        %v743 = vsel %vm685, %v726, %v738
        %v746 = vsel %vm685, %v728, %v740
        %747 = vrot.lane.b32.xlu0 %v723, 126
        %v748 = vpop.permute.xlu0 %747
        %749 = vrot.lane.b32.xlu0 %v724, 126
        %v750 = vpop.permute.xlu0 %749
        %751 = vrot.lane.b32.xlu0 %v735, 126
        %v752 = vpop.permute.xlu0 %751
        %753 = vrot.lane.b32.xlu0 %v736, 126
        %v754 = vpop.permute.xlu0 %753
        %v757 = vsel %vm694, %v748, %v752
        %v761 = vsel %vm694, %v750, %v754
        %762 = vrot.lane.b32.xlu0 %v723, 125
        %v763 = vpop.permute.xlu0 %762
        %764 = vrot.lane.b32.xlu0 %v724, 125
        %v765 = vpop.permute.xlu0 %764
        %766 = vrot.lane.b32.xlu0 %v735, 125
        %v767 = vpop.permute.xlu0 %766
        %768 = vrot.lane.b32.xlu0 %v736, 125
        %v769 = vpop.permute.xlu0 %768
        %v772 = vsel %vm703, %v763, %v767
        %v775 = vsel %vm703, %v765, %v769
        %776 = vrot.lane.b32.xlu0 %v723, 124
        %v777 = vpop.permute.xlu0 %776
        %778 = vrot.lane.b32.xlu0 %v724, 124
        %v779 = vpop.permute.xlu0 %778
        %780 = vrot.lane.b32.xlu0 %v735, 124
        %v781 = vpop.permute.xlu0 %780
        %782 = vrot.lane.b32.xlu0 %v736, 124
        %v783 = vpop.permute.xlu0 %782
        %v786 = vsel %vm712, %v777, %v781
        %v790 = vsel %vm712, %v779, %v783
        %vm795 = vcmask 1043456
        %v796 = vrot.slane %v743, 4
        %v797 = vrot.slane %v746, 4
        %v798 = vsel %vm795, %v796, %v797
        %v802 = vrot.slane %v772, 4
        %v803 = vrot.slane %v775, 4
        %v804 = vsel %vm795, %v802, %v803
        %vm806 = vcmask 1043456
        %v809 = vsel %vm806, %v724, %v796
        %v812 = vsel %vm806, %v761, %v802
        %v814 = vld [vmem:[%s629] sm:$0xff]
        %v815 = vld [vmem:[%s629 + $0x8] sm:$0xff]
        %v816 = vld [vmem:[%s635] sm:$0xff]
        %v817 = vld [vmem:[%s635 + $0x8] sm:$0xff]
        %819 = vset.pattern.permute.xlu0 0
        %820 = vperm.xlu0 %819, %v816
        %v821 = vpop.permute.xlu0 %820
        %824 = vset.pattern.permute.xlu0 0
        %825 = vperm.xlu0 %824, %v817
        %v826 = vpop.permute.xlu0 %825
        %v830 = vunpack.c.l.b16 %v814
        %v831 = vunpack.c.h.b16 %v814
        %v832 = vunpack.c.l.b16 %v815
        %v833 = vunpack.c.h.b16 %v815
        %v834 = vpack.c.b16 %v832, %v830
        %v835 = vpack.c.b16 %v833, %v831
        %vm837 = vcmask 588800
        %v839 = vsel %vm837, %v835, 0
        %v841 = vsel %vm806, %v790, 0
        %843 = vmatprep.subr.bf16.mxu0 0
        %844 = vmatpush1.bf16.msra.mxu0 %v675
        %845 = vmatprep.subr.bf16.mxu0 0
        %846 = vmatpush1.bf16.msra.mxu0 %v688
        %847 = vmatprep.subr.bf16.mxu0 0
        %848 = vmatpush1.bf16.msra.mxu0 %v697
        %849 = vmatprep.subr.bf16.mxu0 0
        %850 = vmatpush1.bf16.msra.mxu0 %v706
        %851 = vmatprep.subr.bf16.mxu0 0
        %852 = vmatpush1.bf16.msra.mxu0 %v715
        %853 = vmatprep.subr.bf16.mxu0 0
        %854 = vmatpush1.bf16.msra.mxu0 %v723
        %855 = vmatprep.subr.bf16.mxu0 0
        %856 = vmatpush1.bf16.msra.mxu0 %v809
        %857 = vmatprep.subr.bf16.mxu0 0
        %858 = vmatpush1.bf16.msra.mxu0 %v798
        %859 = vmatprep.subr.bf16.mxu0 0
        %860 = vmatpush1.bf16.msra.mxu0 %v757
        %861 = vmatprep.subr.bf16.mxu0 0
        %862 = vmatpush1.bf16.msra.mxu0 %v812
        %863 = vmatprep.subr.bf16.mxu0 0
        %864 = vmatpush1.bf16.msra.mxu0 %v804
        %865 = vmatprep.subr.bf16.mxu0 0
        %866 = vmatpush1.bf16.msra.mxu0 %v786
        %867 = vmatprep.subr.bf16.mxu0 0
        %868 = vmatpush1.bf16.msra.mxu0 %v841
        %869 = vmatprep.subr.bf16.mxu0 0
        %870 = vmatpush1.bf16.msra.mxu0 0
        %871 = vmatprep.subr.bf16.mxu0 0
        %872 = vmatpush1.bf16.msra.mxu0 0
        %873 = vmatprep.subr.bf16.mxu0 0
        %874 = vmatpush1.bf16.msra.mxu0 0
        %875 = vmatprep.mubr.bf16.mxu0 %v839
        %876 = vmatmul.mubr.bf16.gmra.mrb[0].mxu0 %v834
        %v877 = vpop.f32.mrb[0].mxu0
        %v878 = vadd.f32 %v821, %v877
        %v879 = vpop.f32.mrb[0].mxu0
        %v880 = vpop.f32.mrb[0].mxu0
        %v881 = vadd.f32 %v826, %v880
        %v882 = vpop.f32.mrb[0].mxu0
        %883 = vdwg.mxu0
        %p884 = scmp.eq.s32.totalorder %s26, 0
        // Predicated region
        $region209: #{waveunet_forward.17} parent=191 // pred_check
          %p885 = pneg %p884
        $region210: #{waveunet_forward.17} parent=191 // pred_check_branch
          %887 = sbr.rel (%p885) target = $region212
        $region211: #{waveunet_forward.17} parent=191 // pred_region
          %vm888 = vcmask 7168
          %889 = vst.msk [vmem:[#allocation2] sm:$0xff] %vm888, 0.0
          %890 = vst.msk [vmem:[#allocation2 + $0x8] sm:$0xff] %vm888, 0.0
          %891 = vst.msk [vmem:[#allocation3] sm:$0xff] %vm888, 0.0
          %892 = vst.msk [vmem:[#allocation3 + $0x8] sm:$0xff] %vm888, 0.0
          %v893 = vlaneseq
          %v894 = vand.u32 %v893, 127
          %s895 = smul.u32 %s26, 128
          %v896 = vstv %s895
          %v897 = vadd.s32 %v896, %v894
          %vm898 = vcmp.lt.s32.totalorder %v897, 46
          %v899 = vsel %vm898, %v878, 0.0
          %v900 = vsel %vm898, %v881, 0.0
          %v901 = vld [vmem:[#allocation2] sm:$0xff]
          %v902 = vld [vmem:[#allocation2 + $0x8] sm:$0xff]
          %903 = vadd.xlane.f32.xlu0 %v899
          %v904 = vpop.xlane.xlu0 %903
          %905 = vadd.xlane.f32.xlu0 %v900
          %v906 = vpop.xlane.xlu0 %905
          %v907 = vadd.f32 %v901, %v904
          %v908 = vadd.f32 %v902, %v906
          %909 = vst.msk [vmem:[#allocation2] sm:$0xff] %vm888, %v907
          %910 = vst.msk [vmem:[#allocation2 + $0x8] sm:$0xff] %vm888, %v908
          %v911 = vld [vmem:[#allocation3] sm:$0xff]
          %v912 = vld [vmem:[#allocation3 + $0x8] sm:$0xff]
          %v913 = vmul.f32 %v899, %v899
          %v914 = vmul.f32 %v900, %v900
          %915 = vadd.xlane.f32.xlu0 %v913
          %v916 = vpop.xlane.xlu0 %915
          %917 = vadd.xlane.f32.xlu0 %v914
          %v918 = vpop.xlane.xlu0 %917
          %v919 = vadd.f32 %v911, %v916
          %v920 = vadd.f32 %v912, %v918
          %921 = vst.msk [vmem:[#allocation3] sm:$0xff] %vm888, %v919
          %922 = vst.msk [vmem:[#allocation3 + $0x8] sm:$0xff] %vm888, %v920
        $region212: #{waveunet_forward.17} parent=191 // pred_fallthru
          _
        %p923 = scmp.lt.s32.totalorder %s26, 0
        // Predicated region
        $region213: #{waveunet_forward.17} parent=191 // pred_check
          %p924 = pneg %p923
        $region214: #{waveunet_forward.17} parent=191 // pred_check_branch
          %926 = sbr.rel (%p924) target = $region216
        $region215: #{waveunet_forward.17} parent=191 // pred_region
          %v927 = vld [vmem:[#allocation2] sm:$0xff]
          %v928 = vld [vmem:[#allocation2 + $0x8] sm:$0xff]
          %929 = vadd.xlane.f32.xlu0 %v878
          %v930 = vpop.xlane.xlu0 %929
          %931 = vadd.xlane.f32.xlu0 %v881
          %v932 = vpop.xlane.xlu0 %931
          %v933 = vadd.f32 %v927, %v930
          %v934 = vadd.f32 %v928, %v932
          %vm935 = vcmask 7168
          %936 = vst.msk [vmem:[#allocation2] sm:$0xff] %vm935, %v933
          %937 = vst.msk [vmem:[#allocation2 + $0x8] sm:$0xff] %vm935, %v934
          %v938 = vld [vmem:[#allocation3] sm:$0xff]
          %v939 = vld [vmem:[#allocation3 + $0x8] sm:$0xff]
          %v940 = vmul.f32 %v878, %v878
          %v941 = vmul.f32 %v881, %v881
          %942 = vadd.xlane.f32.xlu0 %v940
          %v943 = vpop.xlane.xlu0 %942
          %944 = vadd.xlane.f32.xlu0 %v941
          %v945 = vpop.xlane.xlu0 %944
          %v946 = vadd.f32 %v938, %v943
          %v947 = vadd.f32 %v939, %v945
          %948 = vst.msk [vmem:[#allocation3] sm:$0xff] %vm935, %v946
          %949 = vst.msk [vmem:[#allocation3 + $0x8] sm:$0xff] %vm935, %v947
        $region216: #{waveunet_forward.17} parent=191 // pred_fallthru
          _
        // Predicated region
        $region217: #{waveunet_forward.17} parent=191 // pred_check
          %p950 = pneg %p884
        $region218: #{waveunet_forward.17} parent=191 // pred_check_branch
          %952 = sbr.rel (%p950) target = $region220
        $region219: #{waveunet_forward.17} parent=191 // pred_region
          %v953 = vld [vmem:[#allocation2] sm:$0xff]
          %v954 = vld [vmem:[#allocation2 + $0x8] sm:$0xff]
          %v955 = vld [vmem:[#allocation3] sm:$0xff]
          %v956 = vld [vmem:[#allocation3 + $0x8] sm:$0xff]
          %959 = vrot.lane.b32.xlu0 %v955, 1
          %v960 = vpop.permute.xlu0 %959
          %961 = vrot.lane.b32.xlu0 %v956, 1
          %v962 = vpop.permute.xlu0 %961
          %vm965 = vcmask 7168
          %v966 = vsel %vm965, %v953, %v960
          %v967 = vsel %vm965, %v954, %v962
          %vm968 = vcmask 15360
          %v969 = vsel %vm968, %v966, 0.0
          %v970 = vsel %vm968, %v967, 0.0
          %971 = vst [vmem:[%s658] sm:$0xff] %v969
          %972 = vst [vmem:[%s658 + $0x8] sm:$0xff] %v970
        $region220: #{waveunet_forward.17} parent=191 // pred_fallthru
          _
        %v973 = vpack.c.bf16 %v881, %v878
        %v975 = vunpack.c.l.b16 %v973
        %v976 = vunpack.c.h.b16 %v973
        %v977 = vpack.c.b16 %v975, %v975
        %v978 = vpack.c.b16 %v976, %v976
        %981 = vst [vmem:[%s648] sm:$0xf] %v977
        %982 = vst [vmem:[%s648 + $0x4] sm:$0xf] %v978
        %s983 = smul.u32 2, %s25
        %p984 = scmp.lt.s32.totalorder %s24, 1
        %s985 = scalar_select %p984, %s24, 1
        %p986 = scmp.lt.s32.totalorder %s983, 1
        %s987 = scalar_select %p986, %s983, 1
        %p988 = scmp.lt.s32.totalorder %s26, 0
        %s989 = scalar_select %p988, %s26, 0
        %s990 = sadd.s32 %s989, %s987
        %s991 = smul.addr %s985, 2
        %s992 = sadd.s32 %s990, %s991
        %s993 = smul.addr %s992, 4
        %s994 = scalar_lea.vmem %s6, %s993
        %s995 = smul.u32 2, %s25
        %p996 = scmp.lt.s32.totalorder %s24, 1
        %s997 = scalar_select %p996, %s24, 1
        %p998 = scmp.lt.s32.totalorder %s995, 1
        %s999 = scalar_select %p998, %s995, 1
        %s1000 = smul.addr %s997, 2
        %s1001 = sadd.s32 %s999, %s1000
        %s1002 = smul.addr %s1001, 8
        %s1003 = scalar_lea.vmem %s7, %s1002
        // Predicated region
        $region221: #{waveunet_forward.17} parent=191 // pred_check
          %p1004 = pneg %p228
        $region222: #{waveunet_forward.17} parent=191 // pred_check_branch
          %1006 = sbr.rel (%p1004) target = $region224
        $region223: #{waveunet_forward.17} parent=191 // pred_region
          %s1007 = smul.u32 2, %s25
        $region224: #{waveunet_forward.17} parent=191 // pred_fallthru
          _
        // Predicated region
        $region225: #{waveunet_forward.17} parent=191 // pred_check
          %p1008 = pneg %p256
        $region226: #{waveunet_forward.17} parent=191 // pred_check_branch
          %1010 = sbr.rel (%p1008) target = $region228
        $region227: #{waveunet_forward.17} parent=191 // pred_region
          %s1011 = smul.u32 2, %s25
        $region228: #{waveunet_forward.17} parent=191 // pred_fallthru
          _
      $region192: #{waveunet_forward.17} parent=5 // pred_fallthru
        _
      %p1012 = scmp.le.s32.totalorder 2, %s14
      // Predicated region
      $region229: #{waveunet_forward.17} parent=5 // pred_check
        %p1013 = pneg %p1012
      $region230: #{waveunet_forward.17} parent=5 // pred_check_branch
        %1015 = sbr.rel (%p1013) target = $region232
      $region231: #{waveunet_forward.17} parent=5 // pred_region
        %s1016 = ssub.s32 %s14, 2
        // Predicated region
        $region233: #{waveunet_forward.17} parent=231 // pred_check
          %p1017 = pneg %p234
        $region234: #{waveunet_forward.17} parent=231 // pred_check_branch
          %1019 = sbr.rel (%p1017) target = $region236
        $region235: #{waveunet_forward.17} parent=231 // pred_region
          %s1020 = smul.u32 2, %s28
          %p1021 = scmp.lt.s32.totalorder %s27, 1
          %s1022 = scalar_select %p1021, %s27, 1
          %p1023 = scmp.lt.s32.totalorder %s1020, 1
          %s1024 = scalar_select %p1023, %s1020, 1
          %p1025 = scmp.lt.s32.totalorder %s29, 0
          %s1026 = scalar_select %p1025, %s29, 0
          %s1027 = sadd.s32 %s1026, %s1024
          %s1028 = smul.addr %s1022, 2
          %s1029 = sadd.s32 %s1027, %s1028
          %s1030 = smul.addr %s1029, 4
          %s1031 = scalar_lea.vmem %s6, %s1030
        $region236: #{waveunet_forward.17} parent=231 // pred_fallthru
          _
        // Predicated region
        $region237: #{waveunet_forward.17} parent=231 // pred_check
          %p1032 = pneg %p262
        $region238: #{waveunet_forward.17} parent=231 // pred_check_branch
          %1034 = sbr.rel (%p1032) target = $region240
        $region239: #{waveunet_forward.17} parent=231 // pred_region
          %s1035 = smul.u32 2, %s28
          %p1036 = scmp.lt.s32.totalorder %s27, 1
          %s1037 = scalar_select %p1036, %s27, 1
          %p1038 = scmp.lt.s32.totalorder %s1035, 1
          %s1039 = scalar_select %p1038, %s1035, 1
          %s1040 = smul.addr %s1037, 2
          %s1041 = sadd.s32 %s1039, %s1040
          %s1042 = smul.addr %s1041, 8
          %s1043 = scalar_lea.vmem %s7, %s1042
        $region240: #{waveunet_forward.17} parent=231 // pred_fallthru
          _
      $region232: #{waveunet_forward.17} parent=5 // pred_fallthru
        _
    $region6: #{waveunet_forward.17} parent=1 // loop_footer
      %s18 = sadd.s32 1, %s14
    $region7: #{waveunet_forward.17} parent=1 // loop_footer_branch
      %13 = sbr.rel target = $region3
    $region8: #{waveunet_forward.17} parent=1 // loop_exit
      _

// kernel: waveunet_forward.19
$region0: #{waveunet_forward.19}
  #allocation0 [shape = 'u32[]', space=smem, size = 0x4, offset = 0x4, fixed_abs, tag = 'smem constant byte address 0x4 - core index']
  #allocation1 [shape = 'u32[144,128]{1,0:T(1,128)}', space=vmem, size = 0x12000, scoped, tag = 'internal scratch']
  #allocation2 [shape = 'f32[16,1]{1,0:T(8,128)}', space=vmem, size = 0x2000, scoped, tag = 'scratch operand']
  #allocation3 [shape = 'f32[16,1]{1,0:T(8,128)}', space=vmem, size = 0x2000, scoped, tag = 'scratch operand']
  %s0 = inlined_call_operand.vmem [shape: bf16[2,8,256], index: 0, kind: input, shape index: {}, may-alias: {0,1}]
  %s1 = inlined_call_operand.vmem [shape: bf16[2,8,256], index: 1, kind: input, shape index: {}, may-alias: {0,1}]
  %s2 = inlined_call_operand.vmem [shape: bf16[2,16,256], index: 2, kind: input, shape index: {}, may-alias: {2,3}]
  %s3 = inlined_call_operand.vmem [shape: bf16[2,16,256], index: 3, kind: input, shape index: {}, may-alias: {2,3}]
  %s4 = inlined_call_operand.vmem [shape: bf16[16,120], index: 4, kind: input, shape index: {}]
  %s5 = inlined_call_operand.vmem [shape: f32[16,1], index: 5, kind: input, shape index: {}]
  %s6 = inlined_call_operand.vmem [shape: bf16[2,16,128], index: 6, kind: output, shape index: {0}]
  %s7 = inlined_call_operand.vmem [shape: f32[2,16,128], index: 7, kind: output, shape index: {1}]
  %8 = xla_tuple %s6, %s7
  %s9 = sld [smem:[#allocation0]]
  $region159: #{waveunet_forward.19} parent=0
    _
  %s11 = ssub.s32 1, %s9
  %s12 = scalar_select 0, %s11, %s9
  $region1: #{waveunet_forward.19} parent=0
    #allocation4 [shape = 'u8[8192]{0}', space=vmem, size = 0x2000, scoped, tag = 'input window, operand 2']
    #allocation5 [shape = 'u8[8192]{0}', space=vmem, size = 0x2000, scoped, tag = 'input window, operand 3']
    loop: start=0, step=1, limit=4
    $region2: #{waveunet_forward.19} parent=1 // loop_pre_header
      _
    $region3: #{waveunet_forward.19} parent=1 // loop_header
      %s14 = sphi 0, %s18
      %p15 = scmp.ge.s32.totalorder %s14, 4
      %s21 = sphi 0, %s40
      %s22 = sphi 0, %s36
      %s23 = sphi 0, %s32
      %s24 = sphi 0, %s21
      %s25 = sphi 0, %s22
      %s26 = sphi 0, %s23
      %s27 = sphi 0, %s24
      %s28 = sphi 0, %s25
      %s29 = sphi 0, %s26
      %s45 = sphi 0, %s47
      %s48 = sphi 0, %s45
      %s49 = sphi 0, %s48
      %s65 = sphi 0, %s49
      %s75 = sphi 0, %s77
      %s78 = sphi 0, %s75
      %s79 = sphi 0, %s78
      %s95 = sphi 0, %s79
      %s103 = sphi 0, %s105
      %s106 = sphi 0, %s103
      %s107 = sphi 0, %s106
      %s123 = sphi 0, %s107
      %s133 = sphi 0, %s135
      %s136 = sphi 0, %s133
      %s137 = sphi 0, %s136
      %s153 = sphi 0, %s137
      %s159 = sphi 0, %s161
      %s162 = sphi 0, %s159
      %s163 = sphi 0, %s162
      %s179 = sphi 0, %s163
      %s185 = sphi 0, %s187
      %s188 = sphi 0, %s185
      %s189 = sphi 0, %s188
      %s205 = sphi 0, %s189
      %s215 = sphi 0, %s217
      %s218 = sphi 0, %s215
      %s219 = sphi 0, %s218
      %s235 = sphi 0, %s219
      %s243 = sphi 0, %s245
      %s246 = sphi 0, %s243
      %s247 = sphi 0, %s246
      %s263 = sphi 0, %s247
    $region4: #{waveunet_forward.19} parent=1 // loop_header_branch
      %17 = sbr.rel (%p15) target = $region8
    $region5: #{waveunet_forward.19} parent=1 // loop_body
      %s19 = ssub.s32 %s14, 1
      %s20 = ssub.s32 %s14, 2
      %s30 = sadd.s32 1, %s23
      %p31 = scmp.ge.s32.totalorder %s30, 1
      %s32 = scalar_select %p31, 0, %s30
      %s33 = sadd.s32 1, %s22
      %s34 = scalar_select %p31, %s33, %s22
      %p35 = scmp.ge.s32.totalorder %s34, 1
      %s36 = scalar_select %p35, 0, %s34
      %s37 = sadd.s32 1, %s21
      %s38 = scalar_select %p35, %s37, %s21
      %p39 = scmp.ge.s32.totalorder %s38, 2
      %s40 = scalar_select %p39, 0, %s38
      %s41 = ssub.s32 %s21, %s40
      %s42 = ssub.s32 %s23, %s32
      %s43 = sor.u32 %s41, %s42
      %p44 = scmp.eq.s32.totalorder %s43, 0
      %s46 = sadd.s32 %s45, 1
      %s47 = scalar_select %p44, %s45, %s46
      %p50 = pneg %p44
      %p51 = scmp.eq.s32.totalorder %s14, 1
      %p52 = por %p50, %p51
      %p53 = scmp.ne.s32.totalorder %s45, %s48
      %p54 = scmp.eq.s32.totalorder %s14, 0
      %p55 = por %p53, %p54
      %p56 = scmp.ne.s32.totalorder %s45, %s48
      %p57 = scmp.eq.s32.totalorder %s19, 1
      %p58 = por %p56, %p57
      %p59 = scmp.ne.s32.totalorder %s48, %s49
      %p60 = scmp.eq.s32.totalorder %s19, 0
      %p61 = por %p59, %p60
      %p62 = scmp.ne.s32.totalorder %s48, %s49
      %p63 = scmp.eq.s32.totalorder %s20, 1
      %p64 = por %p62, %p63
      %p66 = scmp.ne.s32.totalorder %s49, %s65
      %p67 = scmp.eq.s32.totalorder %s20, 0
      %p68 = por %p66, %p67
      %s69 = sadd.s32 %s23, 1
      %s70 = sadd.s32 %s32, 1
      %s71 = ssub.s32 %s21, %s40
      %s72 = ssub.s32 %s69, %s70
      %s73 = sor.u32 %s71, %s72
      %p74 = scmp.eq.s32.totalorder %s73, 0
      %s76 = sadd.s32 %s75, 1
      %s77 = scalar_select %p74, %s75, %s76
      %p80 = pneg %p74
      %p81 = scmp.eq.s32.totalorder %s14, 1
      %p82 = por %p80, %p81
      %p83 = scmp.ne.s32.totalorder %s75, %s78
      %p84 = scmp.eq.s32.totalorder %s14, 0
      %p85 = por %p83, %p84
      %p86 = scmp.ne.s32.totalorder %s75, %s78
      %p87 = scmp.eq.s32.totalorder %s19, 1
      %p88 = por %p86, %p87
      %p89 = scmp.ne.s32.totalorder %s78, %s79
      %p90 = scmp.eq.s32.totalorder %s19, 0
      %p91 = por %p89, %p90
      %p92 = scmp.ne.s32.totalorder %s78, %s79
      %p93 = scmp.eq.s32.totalorder %s20, 1
      %p94 = por %p92, %p93
      %p96 = scmp.ne.s32.totalorder %s79, %s95
      %p97 = scmp.eq.s32.totalorder %s20, 0
      %p98 = por %p96, %p97
      %s99 = ssub.s32 %s21, %s40
      %s100 = ssub.s32 %s23, %s32
      %s101 = sor.u32 %s99, %s100
      %p102 = scmp.eq.s32.totalorder %s101, 0
      %s104 = sadd.s32 %s103, 1
      %s105 = scalar_select %p102, %s103, %s104
      %p108 = pneg %p102
      %p109 = scmp.eq.s32.totalorder %s14, 1
      %p110 = por %p108, %p109
      %p111 = scmp.ne.s32.totalorder %s103, %s106
      %p112 = scmp.eq.s32.totalorder %s14, 0
      %p113 = por %p111, %p112
      %p114 = scmp.ne.s32.totalorder %s103, %s106
      %p115 = scmp.eq.s32.totalorder %s19, 1
      %p116 = por %p114, %p115
      %p117 = scmp.ne.s32.totalorder %s106, %s107
      %p118 = scmp.eq.s32.totalorder %s19, 0
      %p119 = por %p117, %p118
      %p120 = scmp.ne.s32.totalorder %s106, %s107
      %p121 = scmp.eq.s32.totalorder %s20, 1
      %p122 = por %p120, %p121
      %p124 = scmp.ne.s32.totalorder %s107, %s123
      %p125 = scmp.eq.s32.totalorder %s20, 0
      %p126 = por %p124, %p125
      %s127 = sadd.s32 %s23, 1
      %s128 = sadd.s32 %s32, 1
      %s129 = ssub.s32 %s21, %s40
      %s130 = ssub.s32 %s127, %s128
      %s131 = sor.u32 %s129, %s130
      %p132 = scmp.eq.s32.totalorder %s131, 0
      %s134 = sadd.s32 %s133, 1
      %s135 = scalar_select %p132, %s133, %s134
      %p138 = pneg %p132
      %p139 = scmp.eq.s32.totalorder %s14, 1
      %p140 = por %p138, %p139
      %p141 = scmp.ne.s32.totalorder %s133, %s136
      %p142 = scmp.eq.s32.totalorder %s14, 0
      %p143 = por %p141, %p142
      %p144 = scmp.ne.s32.totalorder %s133, %s136
      %p145 = scmp.eq.s32.totalorder %s19, 1
      %p146 = por %p144, %p145
      %p147 = scmp.ne.s32.totalorder %s136, %s137
      %p148 = scmp.eq.s32.totalorder %s19, 0
      %p149 = por %p147, %p148
      %p150 = scmp.ne.s32.totalorder %s136, %s137
      %p151 = scmp.eq.s32.totalorder %s20, 1
      %p152 = por %p150, %p151
      %p154 = scmp.ne.s32.totalorder %s137, %s153
      %p155 = scmp.eq.s32.totalorder %s20, 0
      %p156 = por %p154, %p155
      %s157 = ssub.s32 %s22, %s36
      %p158 = scmp.eq.s32.totalorder %s157, 0
      %s160 = sadd.s32 %s159, 1
      %s161 = scalar_select %p158, %s159, %s160
      %p164 = pneg %p158
      %p165 = scmp.eq.s32.totalorder %s14, 1
      %p166 = por %p164, %p165
      %p167 = scmp.ne.s32.totalorder %s159, %s162
      %p168 = scmp.eq.s32.totalorder %s14, 0
      %p169 = por %p167, %p168
      %p170 = scmp.ne.s32.totalorder %s159, %s162
      %p171 = scmp.eq.s32.totalorder %s19, 1
      %p172 = por %p170, %p171
      %p173 = scmp.ne.s32.totalorder %s162, %s163
      %p174 = scmp.eq.s32.totalorder %s19, 0
      %p175 = por %p173, %p174
      %p176 = scmp.ne.s32.totalorder %s162, %s163
      %p177 = scmp.eq.s32.totalorder %s20, 1
      %p178 = por %p176, %p177
      %p180 = scmp.ne.s32.totalorder %s163, %s179
      %p181 = scmp.eq.s32.totalorder %s20, 0
      %p182 = por %p180, %p181
      %s183 = ssub.s32 %s22, %s36
      %p184 = scmp.eq.s32.totalorder %s183, 0
      %s186 = sadd.s32 %s185, 1
      %s187 = scalar_select %p184, %s185, %s186
      %p190 = pneg %p184
      %p191 = scmp.eq.s32.totalorder %s14, 1
      %p192 = por %p190, %p191
      %p193 = scmp.ne.s32.totalorder %s185, %s188
      %p194 = scmp.eq.s32.totalorder %s14, 0
      %p195 = por %p193, %p194
      %p196 = scmp.ne.s32.totalorder %s185, %s188
      %p197 = scmp.eq.s32.totalorder %s19, 1
      %p198 = por %p196, %p197
      %p199 = scmp.ne.s32.totalorder %s188, %s189
      %p200 = scmp.eq.s32.totalorder %s19, 0
      %p201 = por %p199, %p200
      %p202 = scmp.ne.s32.totalorder %s188, %s189
      %p203 = scmp.eq.s32.totalorder %s20, 1
      %p204 = por %p202, %p203
      %p206 = scmp.ne.s32.totalorder %s189, %s205
      %p207 = scmp.eq.s32.totalorder %s20, 0
      %p208 = por %p206, %p207
      %s209 = ssub.s32 %s21, %s40
      %s210 = ssub.s32 %s22, %s36
      %s211 = sor.u32 %s209, %s210
      %s212 = ssub.s32 %s23, %s32
      %s213 = sor.u32 %s211, %s212
      %p214 = scmp.eq.s32.totalorder %s213, 0
      %s216 = sadd.s32 %s215, 1
      %s217 = scalar_select %p214, %s215, %s216
      %p220 = pneg %p214
      %p221 = scmp.eq.s32.totalorder %s14, 1
      %p222 = por %p220, %p221
      %p223 = scmp.ne.s32.totalorder %s215, %s218
      %p224 = scmp.eq.s32.totalorder %s14, 0
      %p225 = por %p223, %p224
      %p226 = scmp.ne.s32.totalorder %s215, %s218
      %p227 = scmp.eq.s32.totalorder %s19, 1
      %p228 = por %p226, %p227
      %p229 = scmp.ne.s32.totalorder %s218, %s219
      %p230 = scmp.eq.s32.totalorder %s19, 0
      %p231 = por %p229, %p230
      %p232 = scmp.ne.s32.totalorder %s218, %s219
      %p233 = scmp.eq.s32.totalorder %s20, 1
      %p234 = por %p232, %p233
      %p236 = scmp.ne.s32.totalorder %s219, %s235
      %p237 = scmp.eq.s32.totalorder %s20, 0
      %p238 = por %p236, %p237
      %s239 = ssub.s32 %s21, %s40
      %s240 = ssub.s32 %s22, %s36
      %s241 = sor.u32 %s239, %s240
      %p242 = scmp.eq.s32.totalorder %s241, 0
      %s244 = sadd.s32 %s243, 1
      %s245 = scalar_select %p242, %s243, %s244
      %p248 = pneg %p242
      %p249 = scmp.eq.s32.totalorder %s14, 1
      %p250 = por %p248, %p249
      %p251 = scmp.ne.s32.totalorder %s243, %s246
      %p252 = scmp.eq.s32.totalorder %s14, 0
      %p253 = por %p251, %p252
      %p254 = scmp.ne.s32.totalorder %s243, %s246
      %p255 = scmp.eq.s32.totalorder %s19, 1
      %p256 = por %p254, %p255
      %p257 = scmp.ne.s32.totalorder %s246, %s247
      %p258 = scmp.eq.s32.totalorder %s19, 0
      %p259 = por %p257, %p258
      %p260 = scmp.ne.s32.totalorder %s246, %s247
      %p261 = scmp.eq.s32.totalorder %s20, 1
      %p262 = por %p260, %p261
      %p264 = scmp.ne.s32.totalorder %s247, %s263
      %p265 = scmp.eq.s32.totalorder %s20, 0
      %p266 = por %p264, %p265
      %p267 = scmp.le.s32.totalorder 1, %s14
      %p268 = scmp.lt.s32.totalorder %s14, 3
      %p269 = pnand %p267, %p268
      %p270 = pneg %p269
      // Predicated region
      $region9: #{waveunet_forward.19} parent=5 // pred_check
        _
      $region10: #{waveunet_forward.19} parent=5 // pred_check_branch
        %272 = sbr.rel (%p269) target = $region12
      $region11: #{waveunet_forward.19} parent=5 // pred_region
        %s273 = ssub.s32 %s14, 1
        // Predicated region
        $region13: #{waveunet_forward.19} parent=11 // pred_check
          %p274 = pneg %p175
        $region14: #{waveunet_forward.19} parent=11 // pred_check_branch
          %276 = sbr.rel (%p274) target = $region16
        $region15: #{waveunet_forward.19} parent=11 // pred_region
          %s277 = smul.u32 2, %s25
          %p278 = scmp.lt.s32.totalorder %s277, 1
          %s279 = scalar_select %p278, %s277, 1
          %s280 = smul.addr %s279, 4
          %s281 = scalar_lea.vmem %s4, %s280
          %s282 = smul.u32 2, %s25
        $region16: #{waveunet_forward.19} parent=11 // pred_fallthru
          _
        // Predicated region
        $region17: #{waveunet_forward.19} parent=11 // pred_check
          %p283 = pneg %p201
        $region18: #{waveunet_forward.19} parent=11 // pred_check_branch
          %285 = sbr.rel (%p283) target = $region20
        $region19: #{waveunet_forward.19} parent=11 // pred_region
          %s286 = smul.u32 2, %s25
          %p287 = scmp.lt.s32.totalorder %s286, 1
          %s288 = scalar_select %p287, %s286, 1
          %s289 = smul.addr %s288, 8
          %s290 = scalar_lea.vmem %s5, %s289
          %s291 = smul.u32 2, %s25
        $region20: #{waveunet_forward.19} parent=11 // pred_fallthru
          _
      $region12: #{waveunet_forward.19} parent=5 // pred_fallthru
        _
      %p292 = scmp.lt.s32.totalorder %s14, 2
      // Predicated region
      $region21: #{waveunet_forward.19} parent=5 // pred_check
        %p293 = pneg %p292
      $region22: #{waveunet_forward.19} parent=5 // pred_check_branch
        %295 = sbr.rel (%p293) target = $region24
      $region23: #{waveunet_forward.19} parent=5 // pred_region
        // Predicated region
        $region25: #{waveunet_forward.19} parent=23 // pred_check
          %p296 = pneg %p55
        $region26: #{waveunet_forward.19} parent=23 // pred_check_branch
          %298 = sbr.rel (%p296) target = $region28
        $region27: #{waveunet_forward.19} parent=23 // pred_region
          %p299 = scmp.lt.s32.totalorder %s21, 1
          %s300 = scalar_select %p299, %s21, 1
          %p301 = scmp.lt.s32.totalorder %s23, 1
          %s302 = scalar_select %p301, %s23, 1
          %s303 = smul.addr %s300, 2
          %s304 = sadd.s32 %s302, %s303
          %s305 = smul.addr %s304, 4
          %s306 = scalar_lea.vmem %s0, %s305
        $region28: #{waveunet_forward.19} parent=23 // pred_fallthru
          _
        // Predicated region
        $region29: #{waveunet_forward.19} parent=23 // pred_check
          %p307 = pneg %p85
        $region30: #{waveunet_forward.19} parent=23 // pred_check_branch
          %309 = sbr.rel (%p307) target = $region32
        $region31: #{waveunet_forward.19} parent=23 // pred_region
          %s310 = sadd.s32 %s23, 1
          %p311 = scmp.lt.s32.totalorder %s21, 1
          %s312 = scalar_select %p311, %s21, 1
          %p313 = scmp.lt.s32.totalorder %s310, 1
          %s314 = scalar_select %p313, %s310, 1
          %s315 = smul.addr %s312, 2
          %s316 = sadd.s32 %s314, %s315
          %s317 = smul.addr %s316, 4
          %s318 = scalar_lea.vmem %s1, %s317
          %s319 = sadd.s32 %s23, 1
        $region32: #{waveunet_forward.19} parent=23 // pred_fallthru
          _
        // Predicated region
        $region33: #{waveunet_forward.19} parent=23 // pred_check
          %p320 = pneg %p113
        $region34: #{waveunet_forward.19} parent=23 // pred_check_branch
          %322 = sbr.rel (%p320) target = $region36
        $region35: #{waveunet_forward.19} parent=23 // pred_region
          %s323 = sand.u32 %s103, 1
          %s324 = sand.u32 %s103, 1
          %s325 = smul.addr %s324, 8
          %s326 = scalar_lea.vmem [#allocation4], %s325
          %s327 = smul.addr %s21, 4
          %s328 = sadd.s32 %s23, %s327
          %s329 = smul.addr %s328, 4
          %s330 = scalar_lea.vmem %s2, %s329
          // Predicated region
          $region37: #{waveunet_forward.19} parent=35 // pred_check
            _
          $region38: #{waveunet_forward.19} parent=35 // pred_check_branch
            %332 = sbr.rel (0) target = $region40
          $region39: #{waveunet_forward.19} parent=35 // pred_region
            // Predicated region
            $region41: #{waveunet_forward.19} parent=39 // pred_check
              _
            $region42: #{waveunet_forward.19} parent=39 // pred_check_branch
              %334 = sbr.rel target = $region44
            $region43: #{waveunet_forward.19} parent=39 // pred_region
              // Predicated region
              $region56: #{waveunet_forward.19} parent=43 // pred_check
                _
              $region57: #{waveunet_forward.19} parent=43 // pred_check_branch
                %351 = sbr.rel (0) target = $region59
              $region58: #{waveunet_forward.19} parent=43 // pred_region
                loop: start=0, step=1, limit=1
                $region60: #{waveunet_forward.19} parent=58 // loop_pre_header
                  _
                $region61: #{waveunet_forward.19} parent=58 // loop_header
                  %s353 = sphi 0, %s357
                  %p354 = scmp.ge.s32.totalorder %s353, 1
                  %s358 = sphi %s330, %s330
                  %s359 = sphi %s326, %s326
                $region62: #{waveunet_forward.19} parent=58 // loop_header_branch
                  %356 = sbr.rel (%p354) target = $region66
                $region63: #{waveunet_forward.19} parent=58 // loop_body
                  _
                $region64: #{waveunet_forward.19} parent=58 // loop_footer
                  %s357 = sadd.s32 1, %s353
                $region65: #{waveunet_forward.19} parent=58 // loop_footer_branch
                  %352 = sbr.rel target = $region61
                $region66: #{waveunet_forward.19} parent=58 // loop_exit
                  _
                loop: start=0, step=1, limit=1
                $region67: #{waveunet_forward.19} parent=58 // loop_pre_header
                  _
                $region68: #{waveunet_forward.19} parent=58 // loop_header
                  %s362 = sphi 0, %s366
                  %p363 = scmp.ge.s32.totalorder %s362, 1
                  %s367 = sphi %s330, %s330
                  %s368 = sphi %s326, %s326
                $region69: #{waveunet_forward.19} parent=58 // loop_header_branch
                  %365 = sbr.rel (%p363) target = $region73
                $region70: #{waveunet_forward.19} parent=58 // loop_body
                  %v369 = vld [vmem:[%s367] sm:$0xf]
                  %370 = vst [vmem:[%s368] sm:$0xf] %v369
                  %v371 = vld [vmem:[%s367 + $0x8] sm:$0xf]
                  %372 = vst [vmem:[%s368 + $0x4] sm:$0xf] %v371
                $region71: #{waveunet_forward.19} parent=58 // loop_footer
                  %s366 = sadd.s32 1, %s362
                $region72: #{waveunet_forward.19} parent=58 // loop_footer_branch
                  %361 = sbr.rel target = $region68
                $region73: #{waveunet_forward.19} parent=58 // loop_exit
                  _
              $region59: #{waveunet_forward.19} parent=43 // pred_fallthru
                _
            $region44: #{waveunet_forward.19} parent=39 // pred_fallthru
              _
            // Predicated region
            $region45: #{waveunet_forward.19} parent=39 // pred_check
              _
            $region46: #{waveunet_forward.19} parent=39 // pred_check_branch
              %336 = sbr.rel (0) target = $region48
            $region47: #{waveunet_forward.19} parent=39 // pred_region
              loop: start=0, step=1, limit=1
              $region49: #{waveunet_forward.19} parent=47 // loop_pre_header
                _
              $region50: #{waveunet_forward.19} parent=47 // loop_header
                %s339 = sphi 0, %s343
                %p340 = scmp.ge.s32.totalorder %s339, 1
                %s344 = sphi %s330, %s330
                %s345 = sphi %s326, %s326
              $region51: #{waveunet_forward.19} parent=47 // loop_header_branch
                %342 = sbr.rel (%p340) target = $region55
              $region52: #{waveunet_forward.19} parent=47 // loop_body
                %v346 = vld [vmem:[%s344] sm:$0xf]
                %347 = vst [vmem:[%s345] sm:$0xf] %v346
                %v348 = vld [vmem:[%s344 + $0x8] sm:$0xf]
                %349 = vst [vmem:[%s345 + $0x4] sm:$0xf] %v348
              $region53: #{waveunet_forward.19} parent=47 // loop_footer
                %s343 = sadd.s32 1, %s339
              $region54: #{waveunet_forward.19} parent=47 // loop_footer_branch
                %338 = sbr.rel target = $region50
              $region55: #{waveunet_forward.19} parent=47 // loop_exit
                _
            $region48: #{waveunet_forward.19} parent=39 // pred_fallthru
              _
          $region40: #{waveunet_forward.19} parent=35 // pred_fallthru
            _
          %373 = vnop
        $region36: #{waveunet_forward.19} parent=23 // pred_fallthru
          _
        // Predicated region
        $region74: #{waveunet_forward.19} parent=23 // pred_check
          %p374 = pneg %p143
        $region75: #{waveunet_forward.19} parent=23 // pred_check_branch
          %376 = sbr.rel (%p374) target = $region77
        $region76: #{waveunet_forward.19} parent=23 // pred_region
          %s377 = sand.u32 %s133, 1
          %s378 = sand.u32 %s133, 1
          %s379 = smul.addr %s378, 8
          %s380 = scalar_lea.vmem [#allocation5], %s379
          %s381 = sadd.s32 %s23, 1
          %s382 = smul.addr %s21, 4
          %s383 = sadd.s32 %s381, %s382
          %s384 = smul.addr %s383, 4
          %s385 = scalar_lea.vmem %s3, %s384
          // Predicated region
          $region78: #{waveunet_forward.19} parent=76 // pred_check
            _
          $region79: #{waveunet_forward.19} parent=76 // pred_check_branch
            %387 = sbr.rel (0) target = $region81
          $region80: #{waveunet_forward.19} parent=76 // pred_region
            // Predicated region
            $region82: #{waveunet_forward.19} parent=80 // pred_check
              _
            $region83: #{waveunet_forward.19} parent=80 // pred_check_branch
              %389 = sbr.rel target = $region85
            $region84: #{waveunet_forward.19} parent=80 // pred_region
              // Predicated region
              $region97: #{waveunet_forward.19} parent=84 // pred_check
                _
              $region98: #{waveunet_forward.19} parent=84 // pred_check_branch
                %406 = sbr.rel (0) target = $region100
              $region99: #{waveunet_forward.19} parent=84 // pred_region
                loop: start=0, step=1, limit=1
                $region101: #{waveunet_forward.19} parent=99 // loop_pre_header
                  _
                $region102: #{waveunet_forward.19} parent=99 // loop_header
                  %s408 = sphi 0, %s412
                  %p409 = scmp.ge.s32.totalorder %s408, 1
                  %s413 = sphi %s385, %s385
                  %s414 = sphi %s380, %s380
                $region103: #{waveunet_forward.19} parent=99 // loop_header_branch
                  %411 = sbr.rel (%p409) target = $region107
                $region104: #{waveunet_forward.19} parent=99 // loop_body
                  _
                $region105: #{waveunet_forward.19} parent=99 // loop_footer
                  %s412 = sadd.s32 1, %s408
                $region106: #{waveunet_forward.19} parent=99 // loop_footer_branch
                  %407 = sbr.rel target = $region102
                $region107: #{waveunet_forward.19} parent=99 // loop_exit
                  _
                loop: start=0, step=1, limit=1
                $region108: #{waveunet_forward.19} parent=99 // loop_pre_header
                  _
                $region109: #{waveunet_forward.19} parent=99 // loop_header
                  %s417 = sphi 0, %s421
                  %p418 = scmp.ge.s32.totalorder %s417, 1
                  %s422 = sphi %s385, %s385
                  %s423 = sphi %s380, %s380
                $region110: #{waveunet_forward.19} parent=99 // loop_header_branch
                  %420 = sbr.rel (%p418) target = $region114
                $region111: #{waveunet_forward.19} parent=99 // loop_body
                  %v424 = vld [vmem:[%s422] sm:$0xf]
                  %425 = vst [vmem:[%s423] sm:$0xf] %v424
                  %v426 = vld [vmem:[%s422 + $0x8] sm:$0xf]
                  %427 = vst [vmem:[%s423 + $0x4] sm:$0xf] %v426
                $region112: #{waveunet_forward.19} parent=99 // loop_footer
                  %s421 = sadd.s32 1, %s417
                $region113: #{waveunet_forward.19} parent=99 // loop_footer_branch
                  %416 = sbr.rel target = $region109
                $region114: #{waveunet_forward.19} parent=99 // loop_exit
                  _
              $region100: #{waveunet_forward.19} parent=84 // pred_fallthru
                _
            $region85: #{waveunet_forward.19} parent=80 // pred_fallthru
              _
            // Predicated region
            $region86: #{waveunet_forward.19} parent=80 // pred_check
              _
            $region87: #{waveunet_forward.19} parent=80 // pred_check_branch
              %391 = sbr.rel (0) target = $region89
            $region88: #{waveunet_forward.19} parent=80 // pred_region
              loop: start=0, step=1, limit=1
              $region90: #{waveunet_forward.19} parent=88 // loop_pre_header
                _
              $region91: #{waveunet_forward.19} parent=88 // loop_header
                %s394 = sphi 0, %s398
                %p395 = scmp.ge.s32.totalorder %s394, 1
                %s399 = sphi %s385, %s385
                %s400 = sphi %s380, %s380
              $region92: #{waveunet_forward.19} parent=88 // loop_header_branch
                %397 = sbr.rel (%p395) target = $region96
              $region93: #{waveunet_forward.19} parent=88 // loop_body
                %v401 = vld [vmem:[%s399] sm:$0xf]
                %402 = vst [vmem:[%s400] sm:$0xf] %v401
                %v403 = vld [vmem:[%s399 + $0x8] sm:$0xf]
                %404 = vst [vmem:[%s400 + $0x4] sm:$0xf] %v403
              $region94: #{waveunet_forward.19} parent=88 // loop_footer
                %s398 = sadd.s32 1, %s394
              $region95: #{waveunet_forward.19} parent=88 // loop_footer_branch
                %393 = sbr.rel target = $region91
              $region96: #{waveunet_forward.19} parent=88 // loop_exit
                _
            $region89: #{waveunet_forward.19} parent=80 // pred_fallthru
              _
          $region81: #{waveunet_forward.19} parent=76 // pred_fallthru
            _
          %428 = vnop
        $region77: #{waveunet_forward.19} parent=23 // pred_fallthru
          _
      $region24: #{waveunet_forward.19} parent=5 // pred_fallthru
        _
      %p429 = scmp.le.s32.totalorder 1, %s14
      %p430 = scmp.lt.s32.totalorder %s14, 3
      %p431 = pnand %p429, %p430
      %p432 = pneg %p431
      // Predicated region
      $region115: #{waveunet_forward.19} parent=5 // pred_check
        _
      $region116: #{waveunet_forward.19} parent=5 // pred_check_branch
        %434 = sbr.rel (%p431) target = $region118
      $region117: #{waveunet_forward.19} parent=5 // pred_region
        %s435 = ssub.s32 %s14, 1
        %s436 = sand.u32 %s106, 1
        %s437 = sand.u32 %s106, 1
        %s438 = smul.addr %s437, 8
        %s439 = scalar_lea.vmem [#allocation4], %s438
        // Predicated region
        $region119: #{waveunet_forward.19} parent=117 // pred_check
          %p440 = pneg %p119
        $region120: #{waveunet_forward.19} parent=117 // pred_check_branch
          %442 = sbr.rel (%p440) target = $region122
        $region121: #{waveunet_forward.19} parent=117 // pred_region
          _
        $region122: #{waveunet_forward.19} parent=117 // pred_fallthru
          _
        %s443 = sand.u32 %s136, 1
        %s444 = sand.u32 %s136, 1
        %s445 = smul.addr %s444, 8
        %s446 = scalar_lea.vmem [#allocation5], %s445
        // Predicated region
        $region123: #{waveunet_forward.19} parent=117 // pred_check
          %p447 = pneg %p149
        $region124: #{waveunet_forward.19} parent=117 // pred_check_branch
          %449 = sbr.rel (%p447) target = $region126
        $region125: #{waveunet_forward.19} parent=117 // pred_region
          _
        $region126: #{waveunet_forward.19} parent=117 // pred_fallthru
          _
        %p450 = scmp.lt.s32.totalorder %s24, 1
        %s451 = scalar_select %p450, %s24, 1
        %p452 = scmp.lt.s32.totalorder %s26, 1
        %s453 = scalar_select %p452, %s26, 1
        %s454 = smul.addr %s451, 2
        %s455 = sadd.s32 %s453, %s454
        %s456 = smul.addr %s455, 4
        %s457 = scalar_lea.vmem %s0, %s456
        %p458 = pneg %p61
        %p459 = pneg %p58
        %s460 = sadd.s32 %s26, 1
        %p461 = scmp.lt.s32.totalorder %s24, 1
        %s462 = scalar_select %p461, %s24, 1
        %p463 = scmp.lt.s32.totalorder %s460, 1
        %s464 = scalar_select %p463, %s460, 1
        %s465 = smul.addr %s462, 2
        %s466 = sadd.s32 %s464, %s465
        %s467 = smul.addr %s466, 4
        %s468 = scalar_lea.vmem %s1, %s467
        %p469 = pneg %p91
        %p470 = pneg %p88
        %s471 = sand.u32 %s106, 1
        %s472 = sand.u32 %s106, 1
        %s473 = smul.addr %s472, 8
        %s474 = scalar_lea.vmem [#allocation4], %s473
        %p475 = pneg %p119
        %p476 = pneg %p116
        %s477 = sand.u32 %s136, 1
        %s478 = sand.u32 %s136, 1
        %s479 = smul.addr %s478, 8
        %s480 = scalar_lea.vmem [#allocation5], %s479
        %p481 = pneg %p149
        %p482 = pneg %p146
        %s483 = smul.u32 2, %s25
        %p484 = scmp.lt.s32.totalorder %s483, 1
        %s485 = scalar_select %p484, %s483, 1
        %s486 = smul.addr %s485, 4
        %s487 = scalar_lea.vmem %s4, %s486
        %p488 = pneg %p175
        %p489 = pneg %p172
        %s490 = smul.u32 2, %s25
        %p491 = scmp.lt.s32.totalorder %s490, 1
        %s492 = scalar_select %p491, %s490, 1
        %s493 = smul.addr %s492, 8
        %s494 = scalar_lea.vmem %s5, %s493
        %p495 = pneg %p201
        %p496 = pneg %p198
        %p497 = pneg %p231
        %p498 = pneg %p228
        %s499 = smul.u32 2, %s25
        %p500 = scmp.lt.s32.totalorder %s24, 1
        %s501 = scalar_select %p500, %s24, 1
        %p502 = scmp.lt.s32.totalorder %s499, 1
        %s503 = scalar_select %p502, %s499, 1
        %p504 = scmp.lt.s32.totalorder %s26, 0
        %s505 = scalar_select %p504, %s26, 0
        %s506 = sadd.s32 %s505, %s503
        %s507 = smul.addr %s501, 2
        %s508 = sadd.s32 %s506, %s507
        %s509 = smul.addr %s508, 4
        %s510 = scalar_lea.vmem %s6, %s509
        %p511 = pneg %p259
        %p512 = pneg %p256
        %s513 = smul.u32 2, %s25
        %p514 = scmp.lt.s32.totalorder %s24, 1
        %s515 = scalar_select %p514, %s24, 1
        %p516 = scmp.lt.s32.totalorder %s513, 1
        %s517 = scalar_select %p516, %s513, 1
        %s518 = smul.addr %s515, 2
        %s519 = sadd.s32 %s517, %s518
        %s520 = smul.addr %s519, 8
        %s521 = scalar_lea.vmem %s7, %s520
        %p522 = scmp.lt.s32.totalorder %s24, 1
        %s523 = scalar_select %p522, %s24, 1
        %p524 = scmp.lt.s32.totalorder %s26, 1
        %s525 = scalar_select %p524, %s26, 1
        %s526 = smul.addr %s523, 2
        %s527 = sadd.s32 %s525, %s526
        %s528 = smul.addr %s527, 4
        %s529 = scalar_lea.vmem %s0, %s528
        %s530 = sadd.s32 %s26, 1
        %p531 = scmp.lt.s32.totalorder %s24, 1
        %s532 = scalar_select %p531, %s24, 1
        %p533 = scmp.lt.s32.totalorder %s530, 1
        %s534 = scalar_select %p533, %s530, 1
        %s535 = smul.addr %s532, 2
        %s536 = sadd.s32 %s534, %s535
        %s537 = smul.addr %s536, 4
        %s538 = scalar_lea.vmem %s1, %s537
        %s539 = sadd.s32 %s26, 1
        %s540 = sadd.s32 %s26, 1
        %s541 = smul.u32 2, %s25
        %p542 = scmp.lt.s32.totalorder %s541, 1
        %s543 = scalar_select %p542, %s541, 1
        %s544 = smul.addr %s543, 4
        %s545 = scalar_lea.vmem %s4, %s544
        %s546 = smul.u32 2, %s25
        %s547 = smul.u32 2, %s25
        %p548 = scmp.lt.s32.totalorder %s547, 1
        %s549 = scalar_select %p548, %s547, 1
        %s550 = smul.addr %s549, 8
        %s551 = scalar_lea.vmem %s5, %s550
        %s552 = smul.u32 2, %s25
        %s553 = smul.u32 2, %s25
        %p554 = scmp.lt.s32.totalorder %s24, 1
        %s555 = scalar_select %p554, %s24, 1
        %p556 = scmp.lt.s32.totalorder %s553, 1
        %s557 = scalar_select %p556, %s553, 1
        %p558 = scmp.lt.s32.totalorder %s26, 0
        %s559 = scalar_select %p558, %s26, 0
        %s560 = sadd.s32 %s559, %s557
        %s561 = smul.addr %s555, 2
        %s562 = sadd.s32 %s560, %s561
        %s563 = smul.addr %s562, 4
        %s564 = scalar_lea.vmem %s6, %s563
        %s565 = smul.u32 2, %s25
        %s566 = smul.u32 2, %s25
        %p567 = scmp.lt.s32.totalorder %s24, 1
        %s568 = scalar_select %p567, %s24, 1
        %p569 = scmp.lt.s32.totalorder %s566, 1
        %s570 = scalar_select %p569, %s566, 1
        %s571 = smul.addr %s568, 2
        %s572 = sadd.s32 %s570, %s571
        %s573 = smul.addr %s572, 8
        %s574 = scalar_lea.vmem %s7, %s573
        %s575 = smul.u32 2, %s25
        %v577 = vld [vmem:[%s529] sm:$0xf]
        %v578 = vld [vmem:[%s439] sm:$0xf]
        %v579 = vld [vmem:[%s439 + $0x4] sm:$0xf]
        %v580 = vld [vmem:[%s538] sm:$0xf]
        %v581 = vld [vmem:[%s446] sm:$0xf]
        %v582 = vld [vmem:[%s446 + $0x4] sm:$0xf]
        %v584 = vunpack.c.l.b16 %v577
        %v585 = vpack.c.b16 %v584, %v584
        %586 = vrot.lane.b32.xlu0 %v585, 127
        %v587 = vpop.permute.xlu0 %586
        %v589 = vunpack.c.l.b16 %v580
        %v590 = vpack.c.b16 %v589, %v589
        %591 = vrot.lane.b32.xlu0 %v590, 127
        %v592 = vpop.permute.xlu0 %591
        %vm593 = vcmask 1039360
        %v596 = vsel %vm593, %v587, %v592
        %597 = vrot.lane.b32.xlu0 %v585, 126
        %v598 = vpop.permute.xlu0 %597
        %599 = vrot.lane.b32.xlu0 %v590, 126
        %v600 = vpop.permute.xlu0 %599
        %vm601 = vcmask 1031168
        %v604 = vsel %vm601, %v598, %v600
        %605 = vrot.lane.b32.xlu0 %v585, 125
        %v606 = vpop.permute.xlu0 %605
        %607 = vrot.lane.b32.xlu0 %v590, 125
        %v608 = vpop.permute.xlu0 %607
        %vm609 = vcmask 1022976
        %v612 = vsel %vm609, %v606, %v608
        %613 = vrot.lane.b32.xlu0 %v585, 124
        %v614 = vpop.permute.xlu0 %613
        %615 = vrot.lane.b32.xlu0 %v590, 124
        %v616 = vpop.permute.xlu0 %615
        %vm617 = vcmask 1014784
        %v620 = vsel %vm617, %v614, %v616
        %v623 = vunpack.c.l.b16 %v578
        %v624 = vunpack.c.l.b16 %v579
        %v625 = vpack.c.b16 %v624, %v623
        %626 = vrot.lane.b32.xlu0 %v625, 127
        %v627 = vpop.permute.xlu0 %626
        %v630 = vunpack.c.l.b16 %v581
        %v631 = vunpack.c.l.b16 %v582
        %v632 = vpack.c.b16 %v631, %v630
        %633 = vrot.lane.b32.xlu0 %v632, 127
        %v634 = vpop.permute.xlu0 %633
        %v637 = vsel %vm593, %v627, %v634
        %638 = vrot.lane.b32.xlu0 %v625, 126
        %v639 = vpop.permute.xlu0 %638
        %640 = vrot.lane.b32.xlu0 %v632, 126
        %v641 = vpop.permute.xlu0 %640
        %v644 = vsel %vm601, %v639, %v641
        %645 = vrot.lane.b32.xlu0 %v625, 125
        %v646 = vpop.permute.xlu0 %645
        %647 = vrot.lane.b32.xlu0 %v632, 125
        %v648 = vpop.permute.xlu0 %647
        %v651 = vsel %vm609, %v646, %v648
        %652 = vrot.lane.b32.xlu0 %v625, 124
        %v653 = vpop.permute.xlu0 %652
        %654 = vrot.lane.b32.xlu0 %v632, 124
        %v655 = vpop.permute.xlu0 %654
        %v658 = vsel %vm617, %v653, %v655
        %v660 = vrot.slane %v596, 4
        %v662 = vrot.slane %v612, 4
        %v663 = vpack.c.b16 %v623, %v623
        %v664 = vpack.c.b16 %v624, %v624
        %v666 = vrot.slane %v637, 4
        %v668 = vrot.slane %v644, 4
        %v670 = vrot.slane %v651, 4
        %v672 = vrot.slane %v658, 4
        %vm673 = vcmask 1043456
        %v676 = vsel %vm673, %v577, %v660
        %v679 = vsel %vm673, %v604, %v662
        %v682 = vsel %vm673, %v620, %v663
        %v686 = vsel %vm673, %v664, %v666
        %v689 = vsel %vm673, %v666, %v668
        %v692 = vsel %vm673, %v668, %v670
        %v695 = vsel %vm673, %v670, %v672
        %v697 = vld [vmem:[%s545] sm:$0xf]
        %v698 = vld [vmem:[%s545 + $0x4] sm:$0xf]
        %v699 = vld [vmem:[%s551] sm:$0xff]
        %v700 = vld [vmem:[%s551 + $0x8] sm:$0xff]
        %702 = vset.pattern.permute.xlu0 0
        %703 = vperm.xlu0 %702, %v699
        %v704 = vpop.permute.xlu0 %703
        %707 = vset.pattern.permute.xlu0 0
        %708 = vperm.xlu0 %707, %v700
        %v709 = vpop.permute.xlu0 %708
        %v713 = vunpack.c.l.b16 %v697
        %v714 = vunpack.c.l.b16 %v698
        %v715 = vpack.c.b16 %v714, %v713
        %vm716 = vcmask 982016
        %v718 = vsel %vm716, %v715, 0
        %v720 = vsel %vm673, %v672, 0
        %722 = vmatprep.subr.bf16.mxu0 0
        %723 = vmatpush1.bf16.msra.mxu0 %v676
        %724 = vmatprep.subr.bf16.mxu0 0
        %725 = vmatpush1.bf16.msra.mxu0 %v679
        %726 = vmatprep.subr.bf16.mxu0 0
        %727 = vmatpush1.bf16.msra.mxu0 %v682
        %728 = vmatprep.subr.bf16.mxu0 0
        %729 = vmatpush1.bf16.msra.mxu0 %v686
        %730 = vmatprep.subr.bf16.mxu0 0
        %731 = vmatpush1.bf16.msra.mxu0 %v689
        %732 = vmatprep.subr.bf16.mxu0 0
        %733 = vmatpush1.bf16.msra.mxu0 %v692
        %734 = vmatprep.subr.bf16.mxu0 0
        %735 = vmatpush1.bf16.msra.mxu0 %v695
        %736 = vmatprep.subr.bf16.mxu0 0
        %737 = vmatpush1.bf16.msra.mxu0 %v720
        %738 = vmatprep.subr.bf16.mxu0 0
        %739 = vmatpush1.bf16.msra.mxu0 0
        %740 = vmatprep.subr.bf16.mxu0 0
        %741 = vmatpush1.bf16.msra.mxu0 0
        %742 = vmatprep.subr.bf16.mxu0 0
        %743 = vmatpush1.bf16.msra.mxu0 0
        %744 = vmatprep.subr.bf16.mxu0 0
        %745 = vmatpush1.bf16.msra.mxu0 0
        %746 = vmatprep.subr.bf16.mxu0 0
        %747 = vmatpush1.bf16.msra.mxu0 0
        %748 = vmatprep.subr.bf16.mxu0 0
        %749 = vmatpush1.bf16.msra.mxu0 0
        %750 = vmatprep.subr.bf16.mxu0 0
        %751 = vmatpush1.bf16.msra.mxu0 0
        %752 = vmatprep.subr.bf16.mxu0 0
        %753 = vmatpush1.bf16.msra.mxu0 0
        %754 = vmatprep.mubr.bf16.mxu0 0
        %755 = vmatmul.mubr.bf16.gmra.mrb[0].mxu0 %v718
        %v756 = vpop.f32.mrb[0].mxu0
        %v757 = vadd.f32 %v704, %v756
        %v758 = vpop.f32.mrb[0].mxu0
        %v759 = vpop.f32.mrb[0].mxu0
        %v760 = vadd.f32 %v709, %v759
        %v761 = vpop.f32.mrb[0].mxu0
        %762 = vdwg.mxu0
        %p763 = scmp.eq.s32.totalorder %s26, 0
        // Predicated region
        $region127: #{waveunet_forward.19} parent=117 // pred_check
          %p764 = pneg %p763
        $region128: #{waveunet_forward.19} parent=117 // pred_check_branch
          %766 = sbr.rel (%p764) target = $region130
        $region129: #{waveunet_forward.19} parent=117 // pred_region
          %vm767 = vcmask 7168
          %768 = vst.msk [vmem:[#allocation2] sm:$0xff] %vm767, 0.0
          %769 = vst.msk [vmem:[#allocation2 + $0x8] sm:$0xff] %vm767, 0.0
          %770 = vst.msk [vmem:[#allocation3] sm:$0xff] %vm767, 0.0
          %771 = vst.msk [vmem:[#allocation3 + $0x8] sm:$0xff] %vm767, 0.0
          %v772 = vlaneseq
          %v773 = vand.u32 %v772, 127
          %s774 = smul.u32 %s26, 128
          %v775 = vstv %s774
          %v776 = vadd.s32 %v775, %v773
          %vm777 = vcmp.lt.s32.totalorder %v776, 88
          %v778 = vsel %vm777, %v757, 0.0
          %v779 = vsel %vm777, %v760, 0.0
          %v780 = vld [vmem:[#allocation2] sm:$0xff]
          %v781 = vld [vmem:[#allocation2 + $0x8] sm:$0xff]
          %782 = vadd.xlane.f32.xlu0 %v778
          %v783 = vpop.xlane.xlu0 %782
          %784 = vadd.xlane.f32.xlu0 %v779
          %v785 = vpop.xlane.xlu0 %784
          %v786 = vadd.f32 %v780, %v783
          %v787 = vadd.f32 %v781, %v785
          %788 = vst.msk [vmem:[#allocation2] sm:$0xff] %vm767, %v786
          %789 = vst.msk [vmem:[#allocation2 + $0x8] sm:$0xff] %vm767, %v787
          %v790 = vld [vmem:[#allocation3] sm:$0xff]
          %v791 = vld [vmem:[#allocation3 + $0x8] sm:$0xff]
          %v792 = vmul.f32 %v778, %v778
          %v793 = vmul.f32 %v779, %v779
          %794 = vadd.xlane.f32.xlu0 %v792
          %v795 = vpop.xlane.xlu0 %794
          %796 = vadd.xlane.f32.xlu0 %v793
          %v797 = vpop.xlane.xlu0 %796
          %v798 = vadd.f32 %v790, %v795
          %v799 = vadd.f32 %v791, %v797
          %800 = vst.msk [vmem:[#allocation3] sm:$0xff] %vm767, %v798
          %801 = vst.msk [vmem:[#allocation3 + $0x8] sm:$0xff] %vm767, %v799
        $region130: #{waveunet_forward.19} parent=117 // pred_fallthru
          _
        %p802 = scmp.lt.s32.totalorder %s26, 0
        // Predicated region
        $region131: #{waveunet_forward.19} parent=117 // pred_check
          %p803 = pneg %p802
        $region132: #{waveunet_forward.19} parent=117 // pred_check_branch
          %805 = sbr.rel (%p803) target = $region134
        $region133: #{waveunet_forward.19} parent=117 // pred_region
          %v806 = vld [vmem:[#allocation2] sm:$0xff]
          %v807 = vld [vmem:[#allocation2 + $0x8] sm:$0xff]
          %808 = vadd.xlane.f32.xlu0 %v757
          %v809 = vpop.xlane.xlu0 %808
          %810 = vadd.xlane.f32.xlu0 %v760
          %v811 = vpop.xlane.xlu0 %810
          %v812 = vadd.f32 %v806, %v809
          %v813 = vadd.f32 %v807, %v811
          %vm814 = vcmask 7168
          %815 = vst.msk [vmem:[#allocation2] sm:$0xff] %vm814, %v812
          %816 = vst.msk [vmem:[#allocation2 + $0x8] sm:$0xff] %vm814, %v813
          %v817 = vld [vmem:[#allocation3] sm:$0xff]
          %v818 = vld [vmem:[#allocation3 + $0x8] sm:$0xff]
          %v819 = vmul.f32 %v757, %v757
          %v820 = vmul.f32 %v760, %v760
          %821 = vadd.xlane.f32.xlu0 %v819
          %v822 = vpop.xlane.xlu0 %821
          %823 = vadd.xlane.f32.xlu0 %v820
          %v824 = vpop.xlane.xlu0 %823
          %v825 = vadd.f32 %v817, %v822
          %v826 = vadd.f32 %v818, %v824
          %827 = vst.msk [vmem:[#allocation3] sm:$0xff] %vm814, %v825
          %828 = vst.msk [vmem:[#allocation3 + $0x8] sm:$0xff] %vm814, %v826
        $region134: #{waveunet_forward.19} parent=117 // pred_fallthru
          _
        // Predicated region
        $region135: #{waveunet_forward.19} parent=117 // pred_check
          %p829 = pneg %p763
        $region136: #{waveunet_forward.19} parent=117 // pred_check_branch
          %831 = sbr.rel (%p829) target = $region138
        $region137: #{waveunet_forward.19} parent=117 // pred_region
          %v832 = vld [vmem:[#allocation2] sm:$0xff]
          %v833 = vld [vmem:[#allocation2 + $0x8] sm:$0xff]
          %v834 = vld [vmem:[#allocation3] sm:$0xff]
          %v835 = vld [vmem:[#allocation3 + $0x8] sm:$0xff]
          %838 = vrot.lane.b32.xlu0 %v834, 1
          %v839 = vpop.permute.xlu0 %838
          %840 = vrot.lane.b32.xlu0 %v835, 1
          %v841 = vpop.permute.xlu0 %840
          %vm844 = vcmask 7168
          %v845 = vsel %vm844, %v832, %v839
          %v846 = vsel %vm844, %v833, %v841
          %vm847 = vcmask 15360
          %v848 = vsel %vm847, %v845, 0.0
          %v849 = vsel %vm847, %v846, 0.0
          %850 = vst [vmem:[%s574] sm:$0xff] %v848
          %851 = vst [vmem:[%s574 + $0x8] sm:$0xff] %v849
        $region138: #{waveunet_forward.19} parent=117 // pred_fallthru
          _
        %v852 = vpack.c.bf16 %v760, %v757
        %v854 = vunpack.c.l.b16 %v852
        %v855 = vunpack.c.h.b16 %v852
        %v856 = vpack.c.b16 %v854, %v854
        %v857 = vpack.c.b16 %v855, %v855
        %860 = vst [vmem:[%s564] sm:$0xf] %v856
        %861 = vst [vmem:[%s564 + $0x4] sm:$0xf] %v857
        %s862 = smul.u32 2, %s25
        %p863 = scmp.lt.s32.totalorder %s24, 1
        %s864 = scalar_select %p863, %s24, 1
        %p865 = scmp.lt.s32.totalorder %s862, 1
        %s866 = scalar_select %p865, %s862, 1
        %p867 = scmp.lt.s32.totalorder %s26, 0
        %s868 = scalar_select %p867, %s26, 0
        %s869 = sadd.s32 %s868, %s866
        %s870 = smul.addr %s864, 2
        %s871 = sadd.s32 %s869, %s870
        %s872 = smul.addr %s871, 4
        %s873 = scalar_lea.vmem %s6, %s872
        %s874 = smul.u32 2, %s25
        %p875 = scmp.lt.s32.totalorder %s24, 1
        %s876 = scalar_select %p875, %s24, 1
        %p877 = scmp.lt.s32.totalorder %s874, 1
        %s878 = scalar_select %p877, %s874, 1
        %s879 = smul.addr %s876, 2
        %s880 = sadd.s32 %s878, %s879
        %s881 = smul.addr %s880, 8
        %s882 = scalar_lea.vmem %s7, %s881
        // Predicated region
        $region139: #{waveunet_forward.19} parent=117 // pred_check
          %p883 = pneg %p228
        $region140: #{waveunet_forward.19} parent=117 // pred_check_branch
          %885 = sbr.rel (%p883) target = $region142
        $region141: #{waveunet_forward.19} parent=117 // pred_region
          %s886 = smul.u32 2, %s25
        $region142: #{waveunet_forward.19} parent=117 // pred_fallthru
          _
        // Predicated region
        $region143: #{waveunet_forward.19} parent=117 // pred_check
          %p887 = pneg %p256
        $region144: #{waveunet_forward.19} parent=117 // pred_check_branch
          %889 = sbr.rel (%p887) target = $region146
        $region145: #{waveunet_forward.19} parent=117 // pred_region
          %s890 = smul.u32 2, %s25
        $region146: #{waveunet_forward.19} parent=117 // pred_fallthru
          _
      $region118: #{waveunet_forward.19} parent=5 // pred_fallthru
        _
      %p891 = scmp.le.s32.totalorder 2, %s14
      // Predicated region
      $region147: #{waveunet_forward.19} parent=5 // pred_check
        %p892 = pneg %p891
      $region148: #{waveunet_forward.19} parent=5 // pred_check_branch
        %894 = sbr.rel (%p892) target = $region150
      $region149: #{waveunet_forward.19} parent=5 // pred_region
        %s895 = ssub.s32 %s14, 2
        // Predicated region
        $region151: #{waveunet_forward.19} parent=149 // pred_check
          %p896 = pneg %p234
        $region152: #{waveunet_forward.19} parent=149 // pred_check_branch
          %898 = sbr.rel (%p896) target = $region154
        $region153: #{waveunet_forward.19} parent=149 // pred_region
          %s899 = smul.u32 2, %s28
          %p900 = scmp.lt.s32.totalorder %s27, 1
          %s901 = scalar_select %p900, %s27, 1
          %p902 = scmp.lt.s32.totalorder %s899, 1
          %s903 = scalar_select %p902, %s899, 1
          %p904 = scmp.lt.s32.totalorder %s29, 0
          %s905 = scalar_select %p904, %s29, 0
          %s906 = sadd.s32 %s905, %s903
          %s907 = smul.addr %s901, 2
          %s908 = sadd.s32 %s906, %s907
          %s909 = smul.addr %s908, 4
          %s910 = scalar_lea.vmem %s6, %s909
        $region154: #{waveunet_forward.19} parent=149 // pred_fallthru
          _
        // Predicated region
        $region155: #{waveunet_forward.19} parent=149 // pred_check
          %p911 = pneg %p262
        $region156: #{waveunet_forward.19} parent=149 // pred_check_branch
          %913 = sbr.rel (%p911) target = $region158
        $region157: #{waveunet_forward.19} parent=149 // pred_region
          %s914 = smul.u32 2, %s28
          %p915 = scmp.lt.s32.totalorder %s27, 1
          %s916 = scalar_select %p915, %s27, 1
          %p917 = scmp.lt.s32.totalorder %s914, 1
          %s918 = scalar_select %p917, %s914, 1
          %s919 = smul.addr %s916, 2
          %s920 = sadd.s32 %s918, %s919
          %s921 = smul.addr %s920, 8
          %s922 = scalar_lea.vmem %s7, %s921
        $region158: #{waveunet_forward.19} parent=149 // pred_fallthru
          _
      $region150: #{waveunet_forward.19} parent=5 // pred_fallthru
        _
    $region6: #{waveunet_forward.19} parent=1 // loop_footer
      %s18 = sadd.s32 1, %s14
    $region7: #{waveunet_forward.19} parent=1 // loop_footer_branch
      %13 = sbr.rel target = $region3
    $region8: #{waveunet_forward.19} parent=1 // loop_exit
      _

// kernel: waveunet_forward.21
$region0: #{waveunet_forward.21}
  #allocation0 [shape = 'u32[]', space=smem, size = 0x4, offset = 0x4, fixed_abs, tag = 'smem constant byte address 0x4 - core index']
  #allocation1 [shape = 'u32[144,128]{1,0:T(1,128)}', space=vmem, size = 0x12000, scoped, tag = 'internal scratch']
  %s0 = inlined_call_operand.vmem [shape: bf16[2,1,256], index: 0, kind: input, shape index: {}, may-alias: {0,1}]
  %s1 = inlined_call_operand.vmem [shape: bf16[2,1,256], index: 1, kind: input, shape index: {}, may-alias: {0,1}]
  %s2 = inlined_call_operand.vmem [shape: bf16[2,8,256], index: 2, kind: input, shape index: {}, may-alias: {2,3}]
  %s3 = inlined_call_operand.vmem [shape: bf16[2,8,256], index: 3, kind: input, shape index: {}, may-alias: {2,3}]
  %s4 = inlined_call_operand.vmem [shape: bf16[16,9], index: 4, kind: input, shape index: {}]
  %s5 = inlined_call_operand.vmem [shape: f32[16,1], index: 5, kind: input, shape index: {}]
  %s6 = inlined_call_operand.vmem [shape: f32[2,16,128], index: 6, kind: output, shape index: {}]
  %s7 = sld [smem:[#allocation0]]
  $region57: #{waveunet_forward.21} parent=0
    _
  %s9 = ssub.s32 1, %s7
  %s10 = scalar_select 0, %s9, %s7
  loop: start=0, step=1, limit=4
  $region2: #{waveunet_forward.21} parent=0 // loop_pre_header
    _
  $region3: #{waveunet_forward.21} parent=0 // loop_header
    %s12 = sphi 0, %s16
    %p13 = scmp.ge.s32.totalorder %s12, 4
    %s19 = sphi 0, %s38
    %s20 = sphi 0, %s34
    %s21 = sphi 0, %s30
    %s22 = sphi 0, %s19
    %s23 = sphi 0, %s20
    %s24 = sphi 0, %s21
    %s25 = sphi 0, %s22
    %s26 = sphi 0, %s23
    %s27 = sphi 0, %s24
    %s43 = sphi 0, %s45
    %s46 = sphi 0, %s43
    %s47 = sphi 0, %s46
    %s63 = sphi 0, %s47
    %s73 = sphi 0, %s75
    %s76 = sphi 0, %s73
    %s77 = sphi 0, %s76
    %s93 = sphi 0, %s77
    %s101 = sphi 0, %s103
    %s104 = sphi 0, %s101
    %s105 = sphi 0, %s104
    %s121 = sphi 0, %s105
    %s131 = sphi 0, %s133
    %s134 = sphi 0, %s131
    %s135 = sphi 0, %s134
    %s151 = sphi 0, %s135
    %s157 = sphi 0, %s159
    %s160 = sphi 0, %s157
    %s161 = sphi 0, %s160
    %s177 = sphi 0, %s161
    %s183 = sphi 0, %s185
    %s186 = sphi 0, %s183
    %s187 = sphi 0, %s186
    %s203 = sphi 0, %s187
    %s213 = sphi 0, %s215
    %s216 = sphi 0, %s213
    %s217 = sphi 0, %s216
    %s233 = sphi 0, %s217
  $region4: #{waveunet_forward.21} parent=0 // loop_header_branch
    %15 = sbr.rel (%p13) target = $region8
  $region5: #{waveunet_forward.21} parent=0 // loop_body
    %s17 = ssub.s32 %s12, 1
    %s18 = ssub.s32 %s12, 2
    %s28 = sadd.s32 1, %s21
    %p29 = scmp.ge.s32.totalorder %s28, 1
    %s30 = scalar_select %p29, 0, %s28
    %s31 = sadd.s32 1, %s20
    %s32 = scalar_select %p29, %s31, %s20
    %p33 = scmp.ge.s32.totalorder %s32, 1
    %s34 = scalar_select %p33, 0, %s32
    %s35 = sadd.s32 1, %s19
    %s36 = scalar_select %p33, %s35, %s19
    %p37 = scmp.ge.s32.totalorder %s36, 2
    %s38 = scalar_select %p37, 0, %s36
    %s39 = ssub.s32 %s19, %s38
    %s40 = ssub.s32 %s21, %s30
    %s41 = sor.u32 %s39, %s40
    %p42 = scmp.eq.s32.totalorder %s41, 0
    %s44 = sadd.s32 %s43, 1
    %s45 = scalar_select %p42, %s43, %s44
    %p48 = pneg %p42
    %p49 = scmp.eq.s32.totalorder %s12, 1
    %p50 = por %p48, %p49
    %p51 = scmp.ne.s32.totalorder %s43, %s46
    %p52 = scmp.eq.s32.totalorder %s12, 0
    %p53 = por %p51, %p52
    %p54 = scmp.ne.s32.totalorder %s43, %s46
    %p55 = scmp.eq.s32.totalorder %s17, 1
    %p56 = por %p54, %p55
    %p57 = scmp.ne.s32.totalorder %s46, %s47
    %p58 = scmp.eq.s32.totalorder %s17, 0
    %p59 = por %p57, %p58
    %p60 = scmp.ne.s32.totalorder %s46, %s47
    %p61 = scmp.eq.s32.totalorder %s18, 1
    %p62 = por %p60, %p61
    %p64 = scmp.ne.s32.totalorder %s47, %s63
    %p65 = scmp.eq.s32.totalorder %s18, 0
    %p66 = por %p64, %p65
    %s67 = sadd.s32 %s21, 1
    %s68 = sadd.s32 %s30, 1
    %s69 = ssub.s32 %s19, %s38
    %s70 = ssub.s32 %s67, %s68
    %s71 = sor.u32 %s69, %s70
    %p72 = scmp.eq.s32.totalorder %s71, 0
    %s74 = sadd.s32 %s73, 1
    %s75 = scalar_select %p72, %s73, %s74
    %p78 = pneg %p72
    %p79 = scmp.eq.s32.totalorder %s12, 1
    %p80 = por %p78, %p79
    %p81 = scmp.ne.s32.totalorder %s73, %s76
    %p82 = scmp.eq.s32.totalorder %s12, 0
    %p83 = por %p81, %p82
    %p84 = scmp.ne.s32.totalorder %s73, %s76
    %p85 = scmp.eq.s32.totalorder %s17, 1
    %p86 = por %p84, %p85
    %p87 = scmp.ne.s32.totalorder %s76, %s77
    %p88 = scmp.eq.s32.totalorder %s17, 0
    %p89 = por %p87, %p88
    %p90 = scmp.ne.s32.totalorder %s76, %s77
    %p91 = scmp.eq.s32.totalorder %s18, 1
    %p92 = por %p90, %p91
    %p94 = scmp.ne.s32.totalorder %s77, %s93
    %p95 = scmp.eq.s32.totalorder %s18, 0
    %p96 = por %p94, %p95
    %s97 = ssub.s32 %s19, %s38
    %s98 = ssub.s32 %s21, %s30
    %s99 = sor.u32 %s97, %s98
    %p100 = scmp.eq.s32.totalorder %s99, 0
    %s102 = sadd.s32 %s101, 1
    %s103 = scalar_select %p100, %s101, %s102
    %p106 = pneg %p100
    %p107 = scmp.eq.s32.totalorder %s12, 1
    %p108 = por %p106, %p107
    %p109 = scmp.ne.s32.totalorder %s101, %s104
    %p110 = scmp.eq.s32.totalorder %s12, 0
    %p111 = por %p109, %p110
    %p112 = scmp.ne.s32.totalorder %s101, %s104
    %p113 = scmp.eq.s32.totalorder %s17, 1
    %p114 = por %p112, %p113
    %p115 = scmp.ne.s32.totalorder %s104, %s105
    %p116 = scmp.eq.s32.totalorder %s17, 0
    %p117 = por %p115, %p116
    %p118 = scmp.ne.s32.totalorder %s104, %s105
    %p119 = scmp.eq.s32.totalorder %s18, 1
    %p120 = por %p118, %p119
    %p122 = scmp.ne.s32.totalorder %s105, %s121
    %p123 = scmp.eq.s32.totalorder %s18, 0
    %p124 = por %p122, %p123
    %s125 = sadd.s32 %s21, 1
    %s126 = sadd.s32 %s30, 1
    %s127 = ssub.s32 %s19, %s38
    %s128 = ssub.s32 %s125, %s126
    %s129 = sor.u32 %s127, %s128
    %p130 = scmp.eq.s32.totalorder %s129, 0
    %s132 = sadd.s32 %s131, 1
    %s133 = scalar_select %p130, %s131, %s132
    %p136 = pneg %p130
    %p137 = scmp.eq.s32.totalorder %s12, 1
    %p138 = por %p136, %p137
    %p139 = scmp.ne.s32.totalorder %s131, %s134
    %p140 = scmp.eq.s32.totalorder %s12, 0
    %p141 = por %p139, %p140
    %p142 = scmp.ne.s32.totalorder %s131, %s134
    %p143 = scmp.eq.s32.totalorder %s17, 1
    %p144 = por %p142, %p143
    %p145 = scmp.ne.s32.totalorder %s134, %s135
    %p146 = scmp.eq.s32.totalorder %s17, 0
    %p147 = por %p145, %p146
    %p148 = scmp.ne.s32.totalorder %s134, %s135
    %p149 = scmp.eq.s32.totalorder %s18, 1
    %p150 = por %p148, %p149
    %p152 = scmp.ne.s32.totalorder %s135, %s151
    %p153 = scmp.eq.s32.totalorder %s18, 0
    %p154 = por %p152, %p153
    %s155 = ssub.s32 %s20, %s34
    %p156 = scmp.eq.s32.totalorder %s155, 0
    %s158 = sadd.s32 %s157, 1
    %s159 = scalar_select %p156, %s157, %s158
    %p162 = pneg %p156
    %p163 = scmp.eq.s32.totalorder %s12, 1
    %p164 = por %p162, %p163
    %p165 = scmp.ne.s32.totalorder %s157, %s160
    %p166 = scmp.eq.s32.totalorder %s12, 0
    %p167 = por %p165, %p166
    %p168 = scmp.ne.s32.totalorder %s157, %s160
    %p169 = scmp.eq.s32.totalorder %s17, 1
    %p170 = por %p168, %p169
    %p171 = scmp.ne.s32.totalorder %s160, %s161
    %p172 = scmp.eq.s32.totalorder %s17, 0
    %p173 = por %p171, %p172
    %p174 = scmp.ne.s32.totalorder %s160, %s161
    %p175 = scmp.eq.s32.totalorder %s18, 1
    %p176 = por %p174, %p175
    %p178 = scmp.ne.s32.totalorder %s161, %s177
    %p179 = scmp.eq.s32.totalorder %s18, 0
    %p180 = por %p178, %p179
    %s181 = ssub.s32 %s20, %s34
    %p182 = scmp.eq.s32.totalorder %s181, 0
    %s184 = sadd.s32 %s183, 1
    %s185 = scalar_select %p182, %s183, %s184
    %p188 = pneg %p182
    %p189 = scmp.eq.s32.totalorder %s12, 1
    %p190 = por %p188, %p189
    %p191 = scmp.ne.s32.totalorder %s183, %s186
    %p192 = scmp.eq.s32.totalorder %s12, 0
    %p193 = por %p191, %p192
    %p194 = scmp.ne.s32.totalorder %s183, %s186
    %p195 = scmp.eq.s32.totalorder %s17, 1
    %p196 = por %p194, %p195
    %p197 = scmp.ne.s32.totalorder %s186, %s187
    %p198 = scmp.eq.s32.totalorder %s17, 0
    %p199 = por %p197, %p198
    %p200 = scmp.ne.s32.totalorder %s186, %s187
    %p201 = scmp.eq.s32.totalorder %s18, 1
    %p202 = por %p200, %p201
    %p204 = scmp.ne.s32.totalorder %s187, %s203
    %p205 = scmp.eq.s32.totalorder %s18, 0
    %p206 = por %p204, %p205
    %s207 = ssub.s32 %s19, %s38
    %s208 = ssub.s32 %s20, %s34
    %s209 = sor.u32 %s207, %s208
    %s210 = ssub.s32 %s21, %s30
    %s211 = sor.u32 %s209, %s210
    %p212 = scmp.eq.s32.totalorder %s211, 0
    %s214 = sadd.s32 %s213, 1
    %s215 = scalar_select %p212, %s213, %s214
    %p218 = pneg %p212
    %p219 = scmp.eq.s32.totalorder %s12, 1
    %p220 = por %p218, %p219
    %p221 = scmp.ne.s32.totalorder %s213, %s216
    %p222 = scmp.eq.s32.totalorder %s12, 0
    %p223 = por %p221, %p222
    %p224 = scmp.ne.s32.totalorder %s213, %s216
    %p225 = scmp.eq.s32.totalorder %s17, 1
    %p226 = por %p224, %p225
    %p227 = scmp.ne.s32.totalorder %s216, %s217
    %p228 = scmp.eq.s32.totalorder %s17, 0
    %p229 = por %p227, %p228
    %p230 = scmp.ne.s32.totalorder %s216, %s217
    %p231 = scmp.eq.s32.totalorder %s18, 1
    %p232 = por %p230, %p231
    %p234 = scmp.ne.s32.totalorder %s217, %s233
    %p235 = scmp.eq.s32.totalorder %s18, 0
    %p236 = por %p234, %p235
    %p237 = scmp.le.s32.totalorder 1, %s12
    %p238 = scmp.lt.s32.totalorder %s12, 3
    %p239 = pnand %p237, %p238
    %p240 = pneg %p239
    // Predicated region
    $region9: #{waveunet_forward.21} parent=5 // pred_check
      _
    $region10: #{waveunet_forward.21} parent=5 // pred_check_branch
      %242 = sbr.rel (%p239) target = $region12
    $region11: #{waveunet_forward.21} parent=5 // pred_region
      %s243 = ssub.s32 %s12, 1
      // Predicated region
      $region13: #{waveunet_forward.21} parent=11 // pred_check
        %p244 = pneg %p173
      $region14: #{waveunet_forward.21} parent=11 // pred_check_branch
        %246 = sbr.rel (%p244) target = $region16
      $region15: #{waveunet_forward.21} parent=11 // pred_region
        %s247 = smul.u32 2, %s23
        %p248 = scmp.lt.s32.totalorder %s247, 1
        %s249 = scalar_select %p248, %s247, 1
        %s250 = smul.addr %s249, 4
        %s251 = scalar_lea.vmem %s4, %s250
        %s252 = smul.u32 2, %s23
      $region16: #{waveunet_forward.21} parent=11 // pred_fallthru
        _
      // Predicated region
      $region17: #{waveunet_forward.21} parent=11 // pred_check
        %p253 = pneg %p199
      $region18: #{waveunet_forward.21} parent=11 // pred_check_branch
        %255 = sbr.rel (%p253) target = $region20
      $region19: #{waveunet_forward.21} parent=11 // pred_region
        %s256 = smul.u32 2, %s23
        %p257 = scmp.lt.s32.totalorder %s256, 1
        %s258 = scalar_select %p257, %s256, 1
        %s259 = smul.addr %s258, 8
        %s260 = scalar_lea.vmem %s5, %s259
        %s261 = smul.u32 2, %s23
      $region20: #{waveunet_forward.21} parent=11 // pred_fallthru
        _
    $region12: #{waveunet_forward.21} parent=5 // pred_fallthru
      _
    %p262 = scmp.lt.s32.totalorder %s12, 2
    // Predicated region
    $region21: #{waveunet_forward.21} parent=5 // pred_check
      %p263 = pneg %p262
    $region22: #{waveunet_forward.21} parent=5 // pred_check_branch
      %265 = sbr.rel (%p263) target = $region24
    $region23: #{waveunet_forward.21} parent=5 // pred_region
      // Predicated region
      $region25: #{waveunet_forward.21} parent=23 // pred_check
        %p266 = pneg %p53
      $region26: #{waveunet_forward.21} parent=23 // pred_check_branch
        %268 = sbr.rel (%p266) target = $region28
      $region27: #{waveunet_forward.21} parent=23 // pred_region
        %p269 = scmp.lt.s32.totalorder %s19, 1
        %s270 = scalar_select %p269, %s19, 1
        %p271 = scmp.lt.s32.totalorder %s21, 1
        %s272 = scalar_select %p271, %s21, 1
        %s273 = smul.addr %s270, 2
        %s274 = sadd.s32 %s272, %s273
        %s275 = scalar_lea.vmem %s0, %s274
      $region28: #{waveunet_forward.21} parent=23 // pred_fallthru
        _
      // Predicated region
      $region29: #{waveunet_forward.21} parent=23 // pred_check
        %p276 = pneg %p83
      $region30: #{waveunet_forward.21} parent=23 // pred_check_branch
        %278 = sbr.rel (%p276) target = $region32
      $region31: #{waveunet_forward.21} parent=23 // pred_region
        %s279 = sadd.s32 %s21, 1
        %p280 = scmp.lt.s32.totalorder %s19, 1
        %s281 = scalar_select %p280, %s19, 1
        %p282 = scmp.lt.s32.totalorder %s279, 1
        %s283 = scalar_select %p282, %s279, 1
        %s284 = smul.addr %s281, 2
        %s285 = sadd.s32 %s283, %s284
        %s286 = scalar_lea.vmem %s1, %s285
        %s287 = sadd.s32 %s21, 1
      $region32: #{waveunet_forward.21} parent=23 // pred_fallthru
        _
      // Predicated region
      $region33: #{waveunet_forward.21} parent=23 // pred_check
        %p288 = pneg %p111
      $region34: #{waveunet_forward.21} parent=23 // pred_check_branch
        %290 = sbr.rel (%p288) target = $region36
      $region35: #{waveunet_forward.21} parent=23 // pred_region
        %p291 = scmp.lt.s32.totalorder %s19, 1
        %s292 = scalar_select %p291, %s19, 1
        %p293 = scmp.lt.s32.totalorder %s21, 1
        %s294 = scalar_select %p293, %s21, 1
        %s295 = smul.addr %s292, 2
        %s296 = sadd.s32 %s294, %s295
        %s297 = smul.addr %s296, 4
        %s298 = scalar_lea.vmem %s2, %s297
      $region36: #{waveunet_forward.21} parent=23 // pred_fallthru
        _
      // Predicated region
      $region37: #{waveunet_forward.21} parent=23 // pred_check
        %p299 = pneg %p141
      $region38: #{waveunet_forward.21} parent=23 // pred_check_branch
        %301 = sbr.rel (%p299) target = $region40
      $region39: #{waveunet_forward.21} parent=23 // pred_region
        %s302 = sadd.s32 %s21, 1
        %p303 = scmp.lt.s32.totalorder %s19, 1
        %s304 = scalar_select %p303, %s19, 1
        %p305 = scmp.lt.s32.totalorder %s302, 1
        %s306 = scalar_select %p305, %s302, 1
        %s307 = smul.addr %s304, 2
        %s308 = sadd.s32 %s306, %s307
        %s309 = smul.addr %s308, 4
        %s310 = scalar_lea.vmem %s3, %s309
        %s311 = sadd.s32 %s21, 1
      $region40: #{waveunet_forward.21} parent=23 // pred_fallthru
        _
    $region24: #{waveunet_forward.21} parent=5 // pred_fallthru
      _
    %p312 = scmp.le.s32.totalorder 1, %s12
    %p313 = scmp.lt.s32.totalorder %s12, 3
    %p314 = pnand %p312, %p313
    %p315 = pneg %p314
    // Predicated region
    $region41: #{waveunet_forward.21} parent=5 // pred_check
      _
    $region42: #{waveunet_forward.21} parent=5 // pred_check_branch
      %317 = sbr.rel (%p314) target = $region44
    $region43: #{waveunet_forward.21} parent=5 // pred_region
      %s318 = ssub.s32 %s12, 1
      %p319 = scmp.lt.s32.totalorder %s22, 1
      %s320 = scalar_select %p319, %s22, 1
      %p321 = scmp.lt.s32.totalorder %s24, 1
      %s322 = scalar_select %p321, %s24, 1
      %s323 = smul.addr %s320, 2
      %s324 = sadd.s32 %s322, %s323
      %s325 = scalar_lea.vmem %s0, %s324
      %p326 = pneg %p59
      %p327 = pneg %p56
      %s328 = sadd.s32 %s24, 1
      %p329 = scmp.lt.s32.totalorder %s22, 1
      %s330 = scalar_select %p329, %s22, 1
      %p331 = scmp.lt.s32.totalorder %s328, 1
      %s332 = scalar_select %p331, %s328, 1
      %s333 = smul.addr %s330, 2
      %s334 = sadd.s32 %s332, %s333
      %s335 = scalar_lea.vmem %s1, %s334
      %p336 = pneg %p89
      %p337 = pneg %p86
      %p338 = scmp.lt.s32.totalorder %s22, 1
      %s339 = scalar_select %p338, %s22, 1
      %p340 = scmp.lt.s32.totalorder %s24, 1
      %s341 = scalar_select %p340, %s24, 1
      %s342 = smul.addr %s339, 2
      %s343 = sadd.s32 %s341, %s342
      %s344 = smul.addr %s343, 4
      %s345 = scalar_lea.vmem %s2, %s344
      %p346 = pneg %p117
      %p347 = pneg %p114
      %s348 = sadd.s32 %s24, 1
      %p349 = scmp.lt.s32.totalorder %s22, 1
      %s350 = scalar_select %p349, %s22, 1
      %p351 = scmp.lt.s32.totalorder %s348, 1
      %s352 = scalar_select %p351, %s348, 1
      %s353 = smul.addr %s350, 2
      %s354 = sadd.s32 %s352, %s353
      %s355 = smul.addr %s354, 4
      %s356 = scalar_lea.vmem %s3, %s355
      %p357 = pneg %p147
      %p358 = pneg %p144
      %s359 = smul.u32 2, %s23
      %p360 = scmp.lt.s32.totalorder %s359, 1
      %s361 = scalar_select %p360, %s359, 1
      %s362 = smul.addr %s361, 4
      %s363 = scalar_lea.vmem %s4, %s362
      %p364 = pneg %p173
      %p365 = pneg %p170
      %s366 = smul.u32 2, %s23
      %p367 = scmp.lt.s32.totalorder %s366, 1
      %s368 = scalar_select %p367, %s366, 1
      %s369 = smul.addr %s368, 8
      %s370 = scalar_lea.vmem %s5, %s369
      %p371 = pneg %p199
      %p372 = pneg %p196
      %p373 = pneg %p229
      %p374 = pneg %p226
      %s375 = smul.u32 2, %s23
      %p376 = scmp.lt.s32.totalorder %s22, 1
      %s377 = scalar_select %p376, %s22, 1
      %p378 = scmp.lt.s32.totalorder %s375, 1
      %s379 = scalar_select %p378, %s375, 1
      %p380 = scmp.lt.s32.totalorder %s24, 0
      %s381 = scalar_select %p380, %s24, 0
      %s382 = sadd.s32 %s381, %s379
      %s383 = smul.addr %s377, 2
      %s384 = sadd.s32 %s382, %s383
      %s385 = smul.addr %s384, 8
      %s386 = scalar_lea.vmem %s6, %s385
      %p387 = scmp.lt.s32.totalorder %s22, 1
      %s388 = scalar_select %p387, %s22, 1
      %p389 = scmp.lt.s32.totalorder %s24, 1
      %s390 = scalar_select %p389, %s24, 1
      %s391 = smul.addr %s388, 2
      %s392 = sadd.s32 %s390, %s391
      %s393 = scalar_lea.vmem %s0, %s392
      %s394 = sadd.s32 %s24, 1
      %p395 = scmp.lt.s32.totalorder %s22, 1
      %s396 = scalar_select %p395, %s22, 1
      %p397 = scmp.lt.s32.totalorder %s394, 1
      %s398 = scalar_select %p397, %s394, 1
      %s399 = smul.addr %s396, 2
      %s400 = sadd.s32 %s398, %s399
      %s401 = scalar_lea.vmem %s1, %s400
      %s402 = sadd.s32 %s24, 1
      %p403 = scmp.lt.s32.totalorder %s22, 1
      %s404 = scalar_select %p403, %s22, 1
      %p405 = scmp.lt.s32.totalorder %s24, 1
      %s406 = scalar_select %p405, %s24, 1
      %s407 = smul.addr %s404, 2
      %s408 = sadd.s32 %s406, %s407
      %s409 = smul.addr %s408, 4
      %s410 = scalar_lea.vmem %s2, %s409
      %s411 = sadd.s32 %s24, 1
      %p412 = scmp.lt.s32.totalorder %s22, 1
      %s413 = scalar_select %p412, %s22, 1
      %p414 = scmp.lt.s32.totalorder %s411, 1
      %s415 = scalar_select %p414, %s411, 1
      %s416 = smul.addr %s413, 2
      %s417 = sadd.s32 %s415, %s416
      %s418 = smul.addr %s417, 4
      %s419 = scalar_lea.vmem %s3, %s418
      %s420 = sadd.s32 %s24, 1
      %s421 = smul.u32 2, %s23
      %p422 = scmp.lt.s32.totalorder %s421, 1
      %s423 = scalar_select %p422, %s421, 1
      %s424 = smul.addr %s423, 4
      %s425 = scalar_lea.vmem %s4, %s424
      %s426 = smul.u32 2, %s23
      %s427 = smul.u32 2, %s23
      %p428 = scmp.lt.s32.totalorder %s427, 1
      %s429 = scalar_select %p428, %s427, 1
      %s430 = smul.addr %s429, 8
      %s431 = scalar_lea.vmem %s5, %s430
      %s432 = smul.u32 2, %s23
      %s433 = smul.u32 2, %s23
      %p434 = scmp.lt.s32.totalorder %s22, 1
      %s435 = scalar_select %p434, %s22, 1
      %p436 = scmp.lt.s32.totalorder %s433, 1
      %s437 = scalar_select %p436, %s433, 1
      %p438 = scmp.lt.s32.totalorder %s24, 0
      %s439 = scalar_select %p438, %s24, 0
      %s440 = sadd.s32 %s439, %s437
      %s441 = smul.addr %s435, 2
      %s442 = sadd.s32 %s440, %s441
      %s443 = smul.addr %s442, 8
      %s444 = scalar_lea.vmem %s6, %s443
      %s445 = smul.u32 2, %s23
      %v447 = vld [vmem:[%s393] sm:$0x1]
      %v448 = vld [vmem:[%s410] sm:$0xf]
      %v450 = vunpack.c.l.b16 %v448
      %v451 = vpack.c.b16 %v450, %v450
      %v453 = vshrl.u32 %v451, 16
      %v455 = vrot.slane %v453, 7
      %v456 = vshll.u32 %v451, 16
      %v458 = vor.u32 %v455, %v456
      %vm460 = vcmask 1040384
      %vm461 = vsmask.f32 256
      %vm462 = vmand %vm460, %vm461
      %v463 = vsel %vm462, %v447, %v458
      %v464 = vld [vmem:[%s425] sm:$0xf]
      %v465 = vld [vmem:[%s425 + $0x4] sm:$0xf]
      %v466 = vld [vmem:[%s431] sm:$0xff]
      %v467 = vld [vmem:[%s431 + $0x8] sm:$0xff]
      %469 = vset.pattern.permute.xlu0 0
      %470 = vperm.xlu0 %469, %v466
      %v471 = vpop.permute.xlu0 %470
      %474 = vset.pattern.permute.xlu0 0
      %475 = vperm.xlu0 %474, %v467
      %v476 = vpop.permute.xlu0 %475
      %v480 = vunpack.c.l.b16 %v464
      %v481 = vunpack.c.l.b16 %v465
      %v482 = vpack.c.b16 %v481, %v480
      %vm483 = vcmask 72704
      %v485 = vsel %vm483, %v482, 0
      %vm487 = vcmask 1043456
      %vm488 = vcmask 1044480
      %v489 = vsel %vm487, 4294967295, 65535
      %v490 = vsel %vm488, %v489, 0
      %v492 = vand.u32 %v463, %v490
      %494 = vmatprep.subr.bf16.mxu0 0
      %495 = vmatpush1.bf16.msra.mxu0 %v492
      %496 = vmatprep.subr.bf16.mxu0 0
      %497 = vmatpush1.bf16.msra.mxu0 0
      %498 = vmatprep.subr.bf16.mxu0 0
      %499 = vmatpush1.bf16.msra.mxu0 0
      %500 = vmatprep.subr.bf16.mxu0 0
      %501 = vmatpush1.bf16.msra.mxu0 0
      %502 = vmatprep.subr.bf16.mxu0 0
      %503 = vmatpush1.bf16.msra.mxu0 0
      %504 = vmatprep.subr.bf16.mxu0 0
      %505 = vmatpush1.bf16.msra.mxu0 0
      %506 = vmatprep.subr.bf16.mxu0 0
      %507 = vmatpush1.bf16.msra.mxu0 0
      %508 = vmatprep.subr.bf16.mxu0 0
      %509 = vmatpush1.bf16.msra.mxu0 0
      %510 = vmatprep.subr.bf16.mxu0 0
      %511 = vmatpush1.bf16.msra.mxu0 0
      %512 = vmatprep.subr.bf16.mxu0 0
      %513 = vmatpush1.bf16.msra.mxu0 0
      %514 = vmatprep.subr.bf16.mxu0 0
      %515 = vmatpush1.bf16.msra.mxu0 0
      %516 = vmatprep.subr.bf16.mxu0 0
      %517 = vmatpush1.bf16.msra.mxu0 0
      %518 = vmatprep.subr.bf16.mxu0 0
      %519 = vmatpush1.bf16.msra.mxu0 0
      %520 = vmatprep.subr.bf16.mxu0 0
      %521 = vmatpush1.bf16.msra.mxu0 0
      %522 = vmatprep.subr.bf16.mxu0 0
      %523 = vmatpush1.bf16.msra.mxu0 0
      %524 = vmatprep.subr.bf16.mxu0 0
      %525 = vmatpush1.bf16.msra.mxu0 0
      %526 = vmatprep.mubr.bf16.mxu0 0
      %527 = vmatmul.mubr.bf16.gmra.mrb[0].mxu0 %v485
      %v528 = vpop.f32.mrb[0].mxu0
      %v529 = vadd.f32 %v471, %v528
      %v530 = vpop.f32.mrb[0].mxu0
      %v531 = vpop.f32.mrb[0].mxu0
      %v532 = vadd.f32 %v476, %v531
      %v533 = vpop.f32.mrb[0].mxu0
      %534 = vdwg.mxu0
      %v535 = vtanh.pop %v529
      %v536 = vtanh.pop %v532
      %537 = vst [vmem:[%s444] sm:$0xff] %v535
      %538 = vst [vmem:[%s444 + $0x8] sm:$0xff] %v536
      %s539 = smul.u32 2, %s23
      %p540 = scmp.lt.s32.totalorder %s22, 1
      %s541 = scalar_select %p540, %s22, 1
      %p542 = scmp.lt.s32.totalorder %s539, 1
      %s543 = scalar_select %p542, %s539, 1
      %p544 = scmp.lt.s32.totalorder %s24, 0
      %s545 = scalar_select %p544, %s24, 0
      %s546 = sadd.s32 %s545, %s543
      %s547 = smul.addr %s541, 2
      %s548 = sadd.s32 %s546, %s547
      %s549 = smul.addr %s548, 8
      %s550 = scalar_lea.vmem %s6, %s549
      // Predicated region
      $region45: #{waveunet_forward.21} parent=43 // pred_check
        %p551 = pneg %p226
      $region46: #{waveunet_forward.21} parent=43 // pred_check_branch
        %553 = sbr.rel (%p551) target = $region48
      $region47: #{waveunet_forward.21} parent=43 // pred_region
        %s554 = smul.u32 2, %s23
      $region48: #{waveunet_forward.21} parent=43 // pred_fallthru
        _
    $region44: #{waveunet_forward.21} parent=5 // pred_fallthru
      _
    %p555 = scmp.le.s32.totalorder 2, %s12
    // Predicated region
    $region49: #{waveunet_forward.21} parent=5 // pred_check
      %p556 = pneg %p555
    $region50: #{waveunet_forward.21} parent=5 // pred_check_branch
      %558 = sbr.rel (%p556) target = $region52
    $region51: #{waveunet_forward.21} parent=5 // pred_region
      %s559 = ssub.s32 %s12, 2
      // Predicated region
      $region53: #{waveunet_forward.21} parent=51 // pred_check
        %p560 = pneg %p232
      $region54: #{waveunet_forward.21} parent=51 // pred_check_branch
        %562 = sbr.rel (%p560) target = $region56
      $region55: #{waveunet_forward.21} parent=51 // pred_region
        %s563 = smul.u32 2, %s26
        %p564 = scmp.lt.s32.totalorder %s25, 1
        %s565 = scalar_select %p564, %s25, 1
        %p566 = scmp.lt.s32.totalorder %s563, 1
        %s567 = scalar_select %p566, %s563, 1
        %p568 = scmp.lt.s32.totalorder %s27, 0
        %s569 = scalar_select %p568, %s27, 0
        %s570 = sadd.s32 %s569, %s567
        %s571 = smul.addr %s565, 2
        %s572 = sadd.s32 %s570, %s571
        %s573 = smul.addr %s572, 8
        %s574 = scalar_lea.vmem %s6, %s573
      $region56: #{waveunet_forward.21} parent=51 // pred_fallthru
        _
    $region52: #{waveunet_forward.21} parent=5 // pred_fallthru
      _
  $region6: #{waveunet_forward.21} parent=0 // loop_footer
    %s16 = sadd.s32 1, %s12
  $region7: #{waveunet_forward.21} parent=0 // loop_footer_branch
    %11 = sbr.rel target = $region3
  $region8: #{waveunet_forward.21} parent=0 // loop_exit
    _

</llo_original>
